<compile_context>
chip_gen: v7x
topology: tpu7x:2x2x1
jax: 0.10.0
libtpu: 0.0.40
codegen_flags: <defaults>
</compile_context>

<pallas_src>
import math

import numpy as np
import jax
import jax.numpy as jnp
from jax.experimental import pallas as pl
from jax.experimental.pallas import tpu as pltpu


# ----------------------------------------------------------------------------
# Fused 3-stage kernel.  Works entirely on the H x W "base" grid; the stride-2
# upsamplings are carried as channel blocks (folded into the weights).
# ----------------------------------------------------------------------------
def _hyper_dec_fused_kernel(x0p_ref, w1_ref, b1_ref, w2_ref, b2_ref,
                            w3_ref, b3_ref, o_ref, y1p_ref, y2p_ref):
    # x0p_ref : (H+2, W+2, N2)        f32   input, 1-pixel zero padded
    # w1_ref  : (9, N2, 4*M)          bf16  stage-1 subpixel taps
    # w2_ref  : (9*4*M, 16*M)         bf16  stage-2 taps (consumes parity blocks)
    # w3_ref  : (9*16*M, 16*N2)       bf16  stage-3 taps (consumes 4x4 blocks)
    # b*_ref  : (1, C)                f32   pre-tiled biases
    # o_ref   : (H*W, 16*N2)          f32   blocked final output
    # y1p_ref : (H+2, W+2, 4*M)       f32   VMEM scratch (padded stage-1 out)
    # y2p_ref : (H+2, W+2, 16*M)      f32   VMEM scratch (padded stage-2 out)
    hp, wp, cin0 = x0p_ref.shape
    h, w = hp - 2, wp - 2
    hw = h * w
    c1 = y1p_ref.shape[-1]            # 4*M
    c2 = y2p_ref.shape[-1]            # 16*M

    # ---- Stage 1: ConvT(N2->M, k=5, s=2, op=1) + ReLU (subpixel decomposed).
    # 9-tap loop; accumulator (hw, 4*M) f32 = 8 vregs, stays in registers.
    acc1 = jnp.zeros((hw, c1), jnp.float32)
    for dy in range(3):
        for dx in range(3):
            sl = x0p_ref[dy:dy + h, dx:dx + w, :].reshape(hw, cin0)
            acc1 = acc1 + jnp.dot(sl.astype(jnp.bfloat16),
                                  w1_ref[dy * 3 + dx],
                                  preferred_element_type=jnp.float32)
    y1 = jnp.maximum(acc1 + b1_ref[...], 0.0)

    # Zero-pad y1 by one base pixel in VMEM (pixel shuffle folded into w2).
    y1p_ref[...] = jnp.zeros(y1p_ref.shape, y1p_ref.dtype)
    y1p_ref[1:1 + h, 1:1 + w, :] = y1.reshape(h, w, c1)

    # ---- Stage 2: ConvT(M->M, k=5, s=2, op=1) + ReLU.
    # One K = 9*4*M matmul over an im2col of the parity-blocked stage-1 output.
    cols2 = jnp.concatenate(
        [y1p_ref[dy:dy + h, dx:dx + w, :].reshape(hw, c1).astype(jnp.bfloat16)
         for dy in range(3) for dx in range(3)], axis=-1)        # (hw, 9*c1)
    y2 = jnp.dot(cols2, w2_ref[...], preferred_element_type=jnp.float32)
    y2 = jnp.maximum(y2 + b2_ref[...], 0.0)

    y2p_ref[...] = jnp.zeros(y2p_ref.shape, y2p_ref.dtype)
    y2p_ref[1:1 + h, 1:1 + w, :] = y2.reshape(h, w, c2)

    # ---- Stage 3: ConvT(M->N2, k=3, s=1, p=1) + ReLU.
    # One K = 9*16*M matmul over an im2col of the 4x4-blocked stage-2 output.
    cols3 = jnp.concatenate(
        [y2p_ref[dy:dy + h, dx:dx + w, :].reshape(hw, c2).astype(jnp.bfloat16)
         for dy in range(3) for dx in range(3)], axis=-1)        # (hw, 9*c2)
    y3 = jnp.dot(cols3, w3_ref[...], preferred_element_type=jnp.float32)
    o_ref[...] = jnp.maximum(y3 + b3_ref[...], 0.0)


# ----------------------------------------------------------------------------
# Effective tap-weight construction (host-side numpy, once per parameter set).
# ----------------------------------------------------------------------------
def _taps_stage1(w1):
    """ConvT(k=5,s=2,p=2,op=1) weight (Cin,Cout,5,5) -> (9, Cin, 4*Cout).
    Output block p = 2*ry+rx holds output pixel (2m+ry, 2n+rx); tap (dy,dx)
    reads the 1-padded input at base position (m+dy, n+dx)."""
    cin, cout = w1.shape[0], w1.shape[1]
    t = np.zeros((9, cin, 4 * cout), np.float32)
    for dy in range(3):
        for dx in range(3):
            for ry in range(2):
                ky = ry + 4 - 2 * dy
                if not 0 <= ky <= 4:
                    continue
                for rx in range(2):
                    kx = rx + 4 - 2 * dx
                    if not 0 <= kx <= 4:
                        continue
                    p = 2 * ry + rx
                    t[dy * 3 + dx, :, p * cout:(p + 1) * cout] = w1[:, :, ky, kx]
    return t


def _taps_stage2(w2):
    """ConvT(k=5,s=2,p=2,op=1) weight (Cin,Cout,5,5), consuming the
    parity-blocked (4*Cin) stage-1 output on the base grid and producing the
    4x4-blocked (16*Cout) stage-2 output.  Returns (9*4*Cin, 16*Cout)."""
    cin, cout = w2.shape[0], w2.shape[1]
    t = np.zeros((9, 4 * cin, 16 * cout), np.float32)
    for dy in range(3):
        for dx in range(3):
            for qy in range(4):
                for ry in range(2):
                    ky = qy + 6 - 4 * dy - 2 * ry
                    if not 0 <= ky <= 4:
                        continue
                    for qx in range(4):
                        for rx in range(2):
                            kx = qx + 6 - 4 * dx - 2 * rx
                            if not 0 <= kx <= 4:
                                continue
                            pi = 2 * ry + rx
                            qo = 4 * qy + qx
                            t[dy * 3 + dx,
                              pi * cin:(pi + 1) * cin,
                              qo * cout:(qo + 1) * cout] = w2[:, :, ky, kx]
    return t.reshape(9 * 4 * cin, 16 * cout)


def _taps_stage3(w3):
    """ConvT(k=3,s=1,p=1) (== 3x3 conv with the flipped kernel), consuming the
    4x4-blocked (16*Cin) stage-2 output on the base grid and producing the
    4x4-blocked (16*Cout) final output.  Returns (9*16*Cin, 16*Cout)."""
    cin, cout = w3.shape[0], w3.shape[1]
    t = np.zeros((9, 16 * cin, 16 * cout), np.float32)
    for dy in range(3):
        for dx in range(3):
            for qy in range(4):
                for py in range(4):
                    ddy = 4 * dy + py - qy - 3
                    if not 0 <= ddy <= 2:
                        continue
                    for qx in range(4):
                        for px in range(4):
                            ddx = 4 * dx + px - qx - 3
                            if not 0 <= ddx <= 2:
                                continue
                            qi = 4 * py + px
                            qo = 4 * qy + qx
                            t[dy * 3 + dx,
                              qi * cin:(qi + 1) * cin,
                              qo * cout:(qo + 1) * cout] = w3[:, :, 2 - ddy, 2 - ddx]
    return t.reshape(9 * 16 * cin, 16 * cout)


def prepare_weights(params):
    """Precompute effective tap weights / tiled biases ONCE per parameter set
    (hoisted out of the jitted forward, per perf review)."""
    w1, b1 = (np.asarray(a) for a in params["conv1"])
    w2, b2 = (np.asarray(a) for a in params["conv2"])
    w3, b3 = (np.asarray(a) for a in params["conv3"])
    return {
        "t1": jnp.asarray(_taps_stage1(w1), jnp.bfloat16),
        "b1": jnp.asarray(np.tile(b1, 4)[None, :], jnp.float32),
        "t2": jnp.asarray(_taps_stage2(w2), jnp.bfloat16),
        "b2": jnp.asarray(np.tile(b2, 16)[None, :], jnp.float32),
        "t3": jnp.asarray(_taps_stage3(w3), jnp.bfloat16),
        "b3": jnp.asarray(np.tile(b3, 16)[None, :], jnp.float32),
    }


# ----------------------------------------------------------------------------
# Forward pass (single fused pallas_call + tiny XLA unblock to NCHW).
# ----------------------------------------------------------------------------
def hyper_dec_forward_pallas(prep, x_nchw):
    x = jnp.transpose(x_nchw, (0, 2, 3, 1)).astype(jnp.float32)   # NCHW -> NHWC
    n, h, w, n2 = x.shape
    hw = h * w
    m4 = prep["t1"].shape[-1]          # 4*M
    m = m4 // 4
    c3 = prep["t3"].shape[-1]          # 16*N2
    n2_out = c3 // 16

    xp = jnp.pad(x, ((0, 0), (1, 1), (1, 1), (0, 0)))              # tiny pad

    y_blk = pl.pallas_call(
        _hyper_dec_fused_kernel,
        out_shape=jax.ShapeDtypeStruct((n, hw, c3), jnp.float32),
        grid=(n,),
        in_specs=[
            pl.BlockSpec((None, h + 2, w + 2, n2), lambda i: (i, 0, 0, 0)),
            pl.BlockSpec(prep["t1"].shape, lambda i: (0, 0, 0)),
            pl.BlockSpec(prep["b1"].shape, lambda i: (0, 0)),
            pl.BlockSpec(prep["t2"].shape, lambda i: (0, 0)),
            pl.BlockSpec(prep["b2"].shape, lambda i: (0, 0)),
            pl.BlockSpec(prep["t3"].shape, lambda i: (0, 0)),
            pl.BlockSpec(prep["b3"].shape, lambda i: (0, 0)),
        ],
        out_specs=pl.BlockSpec((None, hw, c3), lambda i: (i, 0, 0)),
        scratch_shapes=[
            pltpu.VMEM((h + 2, w + 2, m4), jnp.float32),        # padded y1
            pltpu.VMEM((h + 2, w + 2, 16 * m), jnp.float32),    # padded y2
        ],
        compiler_params=pltpu.CompilerParams(
            dimension_semantics=("parallel",),
            vmem_limit_bytes=32 * 1024 * 1024),
    )(xp, prep["t1"], prep["b1"], prep["t2"], prep["b2"],
      prep["t3"], prep["b3"])

    # Unblock (N, H*W, 4*4*N2) -> NCHW (N, N2, 4H, 4W): one small XLA transpose.
    y = y_blk.reshape(n, h, w, 4, 4, n2_out)
    y = jnp.transpose(y, (0, 5, 1, 3, 2, 4))
    return y.reshape(n, n2_out, 4 * h, 4 * w)


# ----------------------------------------------------------------------------
# Independent reference (lax.conv_general_dilated), kept from the validated
# previous version.
# ----------------------------------------------------------------------------
def _convT_ref(x_nhwc, w_t, b, stride, pad, opad):
    k = int(w_t.shape[2])
    w_hwio = jnp.transpose(w_t, (2, 3, 0, 1))[::-1, ::-1, :, :]   # flipped
    lo = k - 1 - pad
    hi = k - 1 - pad + opad
    y = jax.lax.conv_general_dilated(
        x_nhwc, w_hwio, window_strides=(1, 1),
        padding=((lo, hi), (lo, hi)),
        lhs_dilation=(stride, stride), rhs_dilation=(1, 1),
        dimension_numbers=("NHWC", "HWIO", "NHWC"))
    return jnp.maximum(y + b[None, None, None, :], 0.0)


def hyper_dec_forward_ref(params, x_nchw):
    x = jnp.transpose(x_nchw, (0, 2, 3, 1)).astype(jnp.float32)
    x1 = _convT_ref(x, *params["conv1"], stride=2, pad=2, opad=1)
    x2 = _convT_ref(x1, *params["conv2"], stride=2, pad=2, opad=1)
    x3 = _convT_ref(x2, *params["conv3"], stride=1, pad=1, opad=0)
    return jnp.transpose(x3, (0, 3, 1, 2))


# ----------------------------------------------------------------------------
# Deterministic synthetic parameters (PyTorch-style uniform init).
# ----------------------------------------------------------------------------
def init_params(key, n2, m):
    def convT_param(k, cin, cout, ksz):
        k1, k2 = jax.random.split(k)
        bound = 1.0 / math.sqrt(cin * ksz * ksz)
        wt = jax.random.uniform(k1, (cin, cout, ksz, ksz), jnp.float32,
                                -bound, bound)
        b = jax.random.uniform(k2, (cout,), jnp.float32, -bound, bound)
        return wt, b

    ks = jax.random.split(key, 3)
    return {
        "conv1": convT_param(ks[0], n2, m, 5),
        "conv2": convT_param(ks[1], m, m, 5),
        "conv3": convT_param(ks[2], m, n2, 3),
    }


# ----------------------------------------------------------------------------
if __name__ == "__main__":
    # Hyper_Dec(N2=16, M=32); decoder input is a small latent: (2, 16, 8, 8).
    N, N2, M, H, W = 2, 16, 32, 8, 8

    key = jax.random.PRNGKey(0)
    kx, kp = jax.random.split(key)
    x = jax.random.normal(kx, (N, N2, H, W), jnp.float32)
    params = init_params(kp, N2, M)

    prep = prepare_weights(params)            # once per parameter set
    fwd = jax.jit(hyper_dec_forward_pallas)
    out = jax.block_until_ready(fwd(prep, x))

    ref = jax.block_until_ready(jax.jit(hyper_dec_forward_ref)(params, x))

    assert out.shape == (N, N2, 4 * H, 4 * W), out.shape
    # bf16 MXU operands (f32 accumulation) -> bf16-appropriate tolerance.
    max_err = float(jnp.max(jnp.abs(out - ref)))
    assert jnp.allclose(out, ref, rtol=2e-2, atol=2e-2), max_err

    print("KERNEL_OK")
</pallas_src>

<mosaic_0001>
module attributes {stable_mosaic.version = 11 : i64} {
  func.func @_hyper_dec_fused_kernel(%arg0: i32, %arg1: memref<1x10x10x16xf32, #tpu.memory_space<vmem>>, %arg2: memref<9x16x128xbf16, #tpu.memory_space<vmem>>, %arg3: memref<1x128xf32, #tpu.memory_space<vmem>>, %arg4: memref<1152x512xbf16, #tpu.memory_space<vmem>>, %arg5: memref<1x512xf32, #tpu.memory_space<vmem>>, %arg6: memref<4608x256xbf16, #tpu.memory_space<vmem>>, %arg7: memref<1x256xf32, #tpu.memory_space<vmem>>, %arg8: memref<1x64x256xf32, #tpu.memory_space<vmem>>, %arg9: memref<10x10x128xf32, #tpu.memory_space<vmem>>, %arg10: memref<10x10x512xf32, #tpu.memory_space<vmem>>) attributes {dimension_semantics = [#tpu.dimension_semantics<parallel>], iteration_bounds = array<i64: 2>, scalar_prefetch = 0 : i64, scratch_operands = 2 : i64, tpu.core_type = #tpu.core_type<tc>, window_params = [{transform_indices = @transform_0, window_bounds = array<i64: 1, 10, 10, 16>}, {pipeline_mode = #tpu.pipeline_mode<synchronous>, transform_indices = @transform_1, window_bounds = array<i64: 9, 16, 128>}, {pipeline_mode = #tpu.pipeline_mode<synchronous>, transform_indices = @transform_2, window_bounds = array<i64: 1, 128>}, {pipeline_mode = #tpu.pipeline_mode<synchronous>, transform_indices = @transform_3, window_bounds = array<i64: 1152, 512>}, {pipeline_mode = #tpu.pipeline_mode<synchronous>, transform_indices = @transform_4, window_bounds = array<i64: 1, 512>}, {pipeline_mode = #tpu.pipeline_mode<synchronous>, transform_indices = @transform_5, window_bounds = array<i64: 4608, 256>}, {pipeline_mode = #tpu.pipeline_mode<synchronous>, transform_indices = @transform_6, window_bounds = array<i64: 1, 256>}, {transform_indices = @transform_7, window_bounds = array<i64: 1, 64, 256>}]} {
    %cst = arith.constant 0.000000e+00 : f32
    %0 = vector.broadcast %cst : f32 to vector<64x128xf32>
    %c0 = arith.constant 0 : index
    %c0_0 = arith.constant 0 : index
    %c0_1 = arith.constant 0 : index
    %c0_2 = arith.constant 0 : index
    %1 = vector.load %arg1[%c0, %c0_0, %c0_1, %c0_2] : memref<1x10x10x16xf32, #tpu.memory_space<vmem>>, vector<1x8x8x16xf32>
    %2 = vector.shape_cast %1 : vector<1x8x8x16xf32> to vector<8x8x16xf32>
    %3 = vector.shape_cast %2 : vector<8x8x16xf32> to vector<64x16xf32>
    %4 = arith.truncf %3 : vector<64x16xf32> to vector<64x16xbf16>
    %c0_3 = arith.constant 0 : index
    %c0_4 = arith.constant 0 : index
    %c0_5 = arith.constant 0 : index
    %5 = vector.load %arg2[%c0_3, %c0_4, %c0_5] : memref<9x16x128xbf16, #tpu.memory_space<vmem>>, vector<1x16x128xbf16>
    %6 = vector.shape_cast %5 : vector<1x16x128xbf16> to vector<16x128xbf16>
    %cst_6 = arith.constant dense<0.000000e+00> : vector<64x128xf32>
    %7 = tpu.matmul %4, %6, %cst_6 {dimension_numbers = #tpu.dot_dimension_numbers<[1], [0], [0], [1], [0, 0, 1, 1], [], []>} : vector<64x16xbf16>, vector<16x128xbf16>, vector<64x128xf32> -> vector<64x128xf32>
    %8 = arith.addf %0, %7 : vector<64x128xf32>
    %c0_7 = arith.constant 0 : index
    %c0_8 = arith.constant 0 : index
    %c1 = arith.constant 1 : index
    %c0_9 = arith.constant 0 : index
    %9 = vector.load %arg1[%c0_7, %c0_8, %c1, %c0_9] : memref<1x10x10x16xf32, #tpu.memory_space<vmem>>, vector<1x8x8x16xf32>
    %10 = vector.shape_cast %9 : vector<1x8x8x16xf32> to vector<8x8x16xf32>
    %11 = vector.shape_cast %10 : vector<8x8x16xf32> to vector<64x16xf32>
    %12 = arith.truncf %11 : vector<64x16xf32> to vector<64x16xbf16>
    %c1_10 = arith.constant 1 : index
    %c0_11 = arith.constant 0 : index
    %c0_12 = arith.constant 0 : index
    %13 = vector.load %arg2[%c1_10, %c0_11, %c0_12] : memref<9x16x128xbf16, #tpu.memory_space<vmem>>, vector<1x16x128xbf16>
    %14 = vector.shape_cast %13 : vector<1x16x128xbf16> to vector<16x128xbf16>
    %cst_13 = arith.constant dense<0.000000e+00> : vector<64x128xf32>
    %15 = tpu.matmul %12, %14, %cst_13 {dimension_numbers = #tpu.dot_dimension_numbers<[1], [0], [0], [1], [0, 0, 1, 1], [], []>} : vector<64x16xbf16>, vector<16x128xbf16>, vector<64x128xf32> -> vector<64x128xf32>
    %16 = arith.addf %8, %15 : vector<64x128xf32>
    %c0_14 = arith.constant 0 : index
    %c0_15 = arith.constant 0 : index
    %c2 = arith.constant 2 : index
    %c0_16 = arith.constant 0 : index
    %17 = vector.load %arg1[%c0_14, %c0_15, %c2, %c0_16] : memref<1x10x10x16xf32, #tpu.memory_space<vmem>>, vector<1x8x8x16xf32>
    %18 = vector.shape_cast %17 : vector<1x8x8x16xf32> to vector<8x8x16xf32>
    %19 = vector.shape_cast %18 : vector<8x8x16xf32> to vector<64x16xf32>
    %20 = arith.truncf %19 : vector<64x16xf32> to vector<64x16xbf16>
    %c2_17 = arith.constant 2 : index
    %c0_18 = arith.constant 0 : index
    %c0_19 = arith.constant 0 : index
    %21 = vector.load %arg2[%c2_17, %c0_18, %c0_19] : memref<9x16x128xbf16, #tpu.memory_space<vmem>>, vector<1x16x128xbf16>
    %22 = vector.shape_cast %21 : vector<1x16x128xbf16> to vector<16x128xbf16>
    %cst_20 = arith.constant dense<0.000000e+00> : vector<64x128xf32>
    %23 = tpu.matmul %20, %22, %cst_20 {dimension_numbers = #tpu.dot_dimension_numbers<[1], [0], [0], [1], [0, 0, 1, 1], [], []>} : vector<64x16xbf16>, vector<16x128xbf16>, vector<64x128xf32> -> vector<64x128xf32>
    %24 = arith.addf %16, %23 : vector<64x128xf32>
    %c0_21 = arith.constant 0 : index
    %c1_22 = arith.constant 1 : index
    %c0_23 = arith.constant 0 : index
    %c0_24 = arith.constant 0 : index
    %25 = vector.load %arg1[%c0_21, %c1_22, %c0_23, %c0_24] : memref<1x10x10x16xf32, #tpu.memory_space<vmem>>, vector<1x8x8x16xf32>
    %26 = vector.shape_cast %25 : vector<1x8x8x16xf32> to vector<8x8x16xf32>
    %27 = vector.shape_cast %26 : vector<8x8x16xf32> to vector<64x16xf32>
    %28 = arith.truncf %27 : vector<64x16xf32> to vector<64x16xbf16>
    %c3 = arith.constant 3 : index
    %c0_25 = arith.constant 0 : index
    %c0_26 = arith.constant 0 : index
    %29 = vector.load %arg2[%c3, %c0_25, %c0_26] : memref<9x16x128xbf16, #tpu.memory_space<vmem>>, vector<1x16x128xbf16>
    %30 = vector.shape_cast %29 : vector<1x16x128xbf16> to vector<16x128xbf16>
    %cst_27 = arith.constant dense<0.000000e+00> : vector<64x128xf32>
    %31 = tpu.matmul %28, %30, %cst_27 {dimension_numbers = #tpu.dot_dimension_numbers<[1], [0], [0], [1], [0, 0, 1, 1], [], []>} : vector<64x16xbf16>, vector<16x128xbf16>, vector<64x128xf32> -> vector<64x128xf32>
    %32 = arith.addf %24, %31 : vector<64x128xf32>
    %c0_28 = arith.constant 0 : index
    %c1_29 = arith.constant 1 : index
    %c1_30 = arith.constant 1 : index
    %c0_31 = arith.constant 0 : index
    %33 = vector.load %arg1[%c0_28, %c1_29, %c1_30, %c0_31] : memref<1x10x10x16xf32, #tpu.memory_space<vmem>>, vector<1x8x8x16xf32>
    %34 = vector.shape_cast %33 : vector<1x8x8x16xf32> to vector<8x8x16xf32>
    %35 = vector.shape_cast %34 : vector<8x8x16xf32> to vector<64x16xf32>
    %36 = arith.truncf %35 : vector<64x16xf32> to vector<64x16xbf16>
    %c4 = arith.constant 4 : index
    %c0_32 = arith.constant 0 : index
    %c0_33 = arith.constant 0 : index
    %37 = vector.load %arg2[%c4, %c0_32, %c0_33] : memref<9x16x128xbf16, #tpu.memory_space<vmem>>, vector<1x16x128xbf16>
    %38 = vector.shape_cast %37 : vector<1x16x128xbf16> to vector<16x128xbf16>
    %cst_34 = arith.constant dense<0.000000e+00> : vector<64x128xf32>
    %39 = tpu.matmul %36, %38, %cst_34 {dimension_numbers = #tpu.dot_dimension_numbers<[1], [0], [0], [1], [0, 0, 1, 1], [], []>} : vector<64x16xbf16>, vector<16x128xbf16>, vector<64x128xf32> -> vector<64x128xf32>
    %40 = arith.addf %32, %39 : vector<64x128xf32>
    %c0_35 = arith.constant 0 : index
    %c1_36 = arith.constant 1 : index
    %c2_37 = arith.constant 2 : index
    %c0_38 = arith.constant 0 : index
    %41 = vector.load %arg1[%c0_35, %c1_36, %c2_37, %c0_38] : memref<1x10x10x16xf32, #tpu.memory_space<vmem>>, vector<1x8x8x16xf32>
    %42 = vector.shape_cast %41 : vector<1x8x8x16xf32> to vector<8x8x16xf32>
    %43 = vector.shape_cast %42 : vector<8x8x16xf32> to vector<64x16xf32>
    %44 = arith.truncf %43 : vector<64x16xf32> to vector<64x16xbf16>
    %c5 = arith.constant 5 : index
    %c0_39 = arith.constant 0 : index
    %c0_40 = arith.constant 0 : index
    %45 = vector.load %arg2[%c5, %c0_39, %c0_40] : memref<9x16x128xbf16, #tpu.memory_space<vmem>>, vector<1x16x128xbf16>
    %46 = vector.shape_cast %45 : vector<1x16x128xbf16> to vector<16x128xbf16>
    %cst_41 = arith.constant dense<0.000000e+00> : vector<64x128xf32>
    %47 = tpu.matmul %44, %46, %cst_41 {dimension_numbers = #tpu.dot_dimension_numbers<[1], [0], [0], [1], [0, 0, 1, 1], [], []>} : vector<64x16xbf16>, vector<16x128xbf16>, vector<64x128xf32> -> vector<64x128xf32>
    %48 = arith.addf %40, %47 : vector<64x128xf32>
    %c0_42 = arith.constant 0 : index
    %c2_43 = arith.constant 2 : index
    %c0_44 = arith.constant 0 : index
    %c0_45 = arith.constant 0 : index
    %49 = vector.load %arg1[%c0_42, %c2_43, %c0_44, %c0_45] : memref<1x10x10x16xf32, #tpu.memory_space<vmem>>, vector<1x8x8x16xf32>
    %50 = vector.shape_cast %49 : vector<1x8x8x16xf32> to vector<8x8x16xf32>
    %51 = vector.shape_cast %50 : vector<8x8x16xf32> to vector<64x16xf32>
    %52 = arith.truncf %51 : vector<64x16xf32> to vector<64x16xbf16>
    %c6 = arith.constant 6 : index
    %c0_46 = arith.constant 0 : index
    %c0_47 = arith.constant 0 : index
    %53 = vector.load %arg2[%c6, %c0_46, %c0_47] : memref<9x16x128xbf16, #tpu.memory_space<vmem>>, vector<1x16x128xbf16>
    %54 = vector.shape_cast %53 : vector<1x16x128xbf16> to vector<16x128xbf16>
    %cst_48 = arith.constant dense<0.000000e+00> : vector<64x128xf32>
    %55 = tpu.matmul %52, %54, %cst_48 {dimension_numbers = #tpu.dot_dimension_numbers<[1], [0], [0], [1], [0, 0, 1, 1], [], []>} : vector<64x16xbf16>, vector<16x128xbf16>, vector<64x128xf32> -> vector<64x128xf32>
    %56 = arith.addf %48, %55 : vector<64x128xf32>
    %c0_49 = arith.constant 0 : index
    %c2_50 = arith.constant 2 : index
    %c1_51 = arith.constant 1 : index
    %c0_52 = arith.constant 0 : index
    %57 = vector.load %arg1[%c0_49, %c2_50, %c1_51, %c0_52] : memref<1x10x10x16xf32, #tpu.memory_space<vmem>>, vector<1x8x8x16xf32>
    %58 = vector.shape_cast %57 : vector<1x8x8x16xf32> to vector<8x8x16xf32>
    %59 = vector.shape_cast %58 : vector<8x8x16xf32> to vector<64x16xf32>
    %60 = arith.truncf %59 : vector<64x16xf32> to vector<64x16xbf16>
    %c7 = arith.constant 7 : index
    %c0_53 = arith.constant 0 : index
    %c0_54 = arith.constant 0 : index
    %61 = vector.load %arg2[%c7, %c0_53, %c0_54] : memref<9x16x128xbf16, #tpu.memory_space<vmem>>, vector<1x16x128xbf16>
    %62 = vector.shape_cast %61 : vector<1x16x128xbf16> to vector<16x128xbf16>
    %cst_55 = arith.constant dense<0.000000e+00> : vector<64x128xf32>
    %63 = tpu.matmul %60, %62, %cst_55 {dimension_numbers = #tpu.dot_dimension_numbers<[1], [0], [0], [1], [0, 0, 1, 1], [], []>} : vector<64x16xbf16>, vector<16x128xbf16>, vector<64x128xf32> -> vector<64x128xf32>
    %64 = arith.addf %56, %63 : vector<64x128xf32>
    %c0_56 = arith.constant 0 : index
    %c2_57 = arith.constant 2 : index
    %c2_58 = arith.constant 2 : index
    %c0_59 = arith.constant 0 : index
    %65 = vector.load %arg1[%c0_56, %c2_57, %c2_58, %c0_59] : memref<1x10x10x16xf32, #tpu.memory_space<vmem>>, vector<1x8x8x16xf32>
    %66 = vector.shape_cast %65 : vector<1x8x8x16xf32> to vector<8x8x16xf32>
    %67 = vector.shape_cast %66 : vector<8x8x16xf32> to vector<64x16xf32>
    %68 = arith.truncf %67 : vector<64x16xf32> to vector<64x16xbf16>
    %c8 = arith.constant 8 : index
    %c0_60 = arith.constant 0 : index
    %c0_61 = arith.constant 0 : index
    %69 = vector.load %arg2[%c8, %c0_60, %c0_61] : memref<9x16x128xbf16, #tpu.memory_space<vmem>>, vector<1x16x128xbf16>
    %70 = vector.shape_cast %69 : vector<1x16x128xbf16> to vector<16x128xbf16>
    %cst_62 = arith.constant dense<0.000000e+00> : vector<64x128xf32>
    %71 = tpu.matmul %68, %70, %cst_62 {dimension_numbers = #tpu.dot_dimension_numbers<[1], [0], [0], [1], [0, 0, 1, 1], [], []>} : vector<64x16xbf16>, vector<16x128xbf16>, vector<64x128xf32> -> vector<64x128xf32>
    %72 = arith.addf %64, %71 : vector<64x128xf32>
    %c0_63 = arith.constant 0 : index
    %c0_64 = arith.constant 0 : index
    %73 = vector.load %arg3[%c0_63, %c0_64] : memref<1x128xf32, #tpu.memory_space<vmem>>, vector<1x128xf32>
    %74 = vector.broadcast %73 : vector<1x128xf32> to vector<64x128xf32>
    %75 = arith.addf %72, %74 : vector<64x128xf32>
    %cst_65 = arith.constant 0.000000e+00 : f32
    %76 = vector.broadcast %cst_65 : f32 to vector<64x128xf32>
    %77 = arith.maximumf %75, %76 : vector<64x128xf32>
    %cst_66 = arith.constant 0.000000e+00 : f32
    %78 = vector.broadcast %cst_66 : f32 to vector<10x10x128xf32>
    %c0_67 = arith.constant 0 : index
    %c0_68 = arith.constant 0 : index
    %c0_69 = arith.constant 0 : index
    %79 = vector.load %arg9[%c0_67, %c0_68, %c0_69] : memref<10x10x128xf32, #tpu.memory_space<vmem>>, vector<10x10x128xf32>
    tpu.vector_store %arg9[%c0_67, %c0_68, %c0_69], %78 {strides = array<i32>} : memref<10x10x128xf32, #tpu.memory_space<vmem>>, vector<10x10x128xf32>,
    %80 = vector.shape_cast %77 : vector<64x128xf32> to vector<8x8x128xf32>
    %c1_70 = arith.constant 1 : index
    %c1_71 = arith.constant 1 : index
    %c0_72 = arith.constant 0 : index
    %81 = vector.load %arg9[%c1_70, %c1_71, %c0_72] : memref<10x10x128xf32, #tpu.memory_space<vmem>>, vector<8x8x128xf32>
    tpu.vector_store %arg9[%c1_70, %c1_71, %c0_72], %80 {strides = array<i32>} : memref<10x10x128xf32, #tpu.memory_space<vmem>>, vector<8x8x128xf32>,
    %c0_73 = arith.constant 0 : index
    %c0_74 = arith.constant 0 : index
    %c0_75 = arith.constant 0 : index
    %82 = vector.load %arg9[%c0_73, %c0_74, %c0_75] : memref<10x10x128xf32, #tpu.memory_space<vmem>>, vector<8x8x128xf32>
    %83 = vector.shape_cast %82 : vector<8x8x128xf32> to vector<64x128xf32>
    %84 = arith.truncf %83 : vector<64x128xf32> to vector<64x128xbf16>
    %c0_76 = arith.constant 0 : index
    %c1_77 = arith.constant 1 : index
    %c0_78 = arith.constant 0 : index
    %85 = vector.load %arg9[%c0_76, %c1_77, %c0_78] : memref<10x10x128xf32, #tpu.memory_space<vmem>>, vector<8x8x128xf32>
    %86 = vector.shape_cast %85 : vector<8x8x128xf32> to vector<64x128xf32>
    %87 = arith.truncf %86 : vector<64x128xf32> to vector<64x128xbf16>
    %c0_79 = arith.constant 0 : index
    %c2_80 = arith.constant 2 : index
    %c0_81 = arith.constant 0 : index
    %88 = vector.load %arg9[%c0_79, %c2_80, %c0_81] : memref<10x10x128xf32, #tpu.memory_space<vmem>>, vector<8x8x128xf32>
    %89 = vector.shape_cast %88 : vector<8x8x128xf32> to vector<64x128xf32>
    %90 = arith.truncf %89 : vector<64x128xf32> to vector<64x128xbf16>
    %c1_82 = arith.constant 1 : index
    %c0_83 = arith.constant 0 : index
    %c0_84 = arith.constant 0 : index
    %91 = vector.load %arg9[%c1_82, %c0_83, %c0_84] : memref<10x10x128xf32, #tpu.memory_space<vmem>>, vector<8x8x128xf32>
    %92 = vector.shape_cast %91 : vector<8x8x128xf32> to vector<64x128xf32>
    %93 = arith.truncf %92 : vector<64x128xf32> to vector<64x128xbf16>
    %c1_85 = arith.constant 1 : index
    %c1_86 = arith.constant 1 : index
    %c0_87 = arith.constant 0 : index
    %94 = vector.load %arg9[%c1_85, %c1_86, %c0_87] : memref<10x10x128xf32, #tpu.memory_space<vmem>>, vector<8x8x128xf32>
    %95 = vector.shape_cast %94 : vector<8x8x128xf32> to vector<64x128xf32>
    %96 = arith.truncf %95 : vector<64x128xf32> to vector<64x128xbf16>
    %c1_88 = arith.constant 1 : index
    %c2_89 = arith.constant 2 : index
    %c0_90 = arith.constant 0 : index
    %97 = vector.load %arg9[%c1_88, %c2_89, %c0_90] : memref<10x10x128xf32, #tpu.memory_space<vmem>>, vector<8x8x128xf32>
    %98 = vector.shape_cast %97 : vector<8x8x128xf32> to vector<64x128xf32>
    %99 = arith.truncf %98 : vector<64x128xf32> to vector<64x128xbf16>
    %c2_91 = arith.constant 2 : index
    %c0_92 = arith.constant 0 : index
    %c0_93 = arith.constant 0 : index
    %100 = vector.load %arg9[%c2_91, %c0_92, %c0_93] : memref<10x10x128xf32, #tpu.memory_space<vmem>>, vector<8x8x128xf32>
    %101 = vector.shape_cast %100 : vector<8x8x128xf32> to vector<64x128xf32>
    %102 = arith.truncf %101 : vector<64x128xf32> to vector<64x128xbf16>
    %c2_94 = arith.constant 2 : index
    %c1_95 = arith.constant 1 : index
    %c0_96 = arith.constant 0 : index
    %103 = vector.load %arg9[%c2_94, %c1_95, %c0_96] : memref<10x10x128xf32, #tpu.memory_space<vmem>>, vector<8x8x128xf32>
    %104 = vector.shape_cast %103 : vector<8x8x128xf32> to vector<64x128xf32>
    %105 = arith.truncf %104 : vector<64x128xf32> to vector<64x128xbf16>
    %c2_97 = arith.constant 2 : index
    %c2_98 = arith.constant 2 : index
    %c0_99 = arith.constant 0 : index
    %106 = vector.load %arg9[%c2_97, %c2_98, %c0_99] : memref<10x10x128xf32, #tpu.memory_space<vmem>>, vector<8x8x128xf32>
    %107 = vector.shape_cast %106 : vector<8x8x128xf32> to vector<64x128xf32>
    %108 = arith.truncf %107 : vector<64x128xf32> to vector<64x128xbf16>
    %109 = tpu.concatenate %84, %87, %90, %93, %96, %99, %102, %105, %108 in 1 : vector<64x128xbf16>, vector<64x128xbf16>, vector<64x128xbf16>, vector<64x128xbf16>, vector<64x128xbf16>, vector<64x128xbf16>, vector<64x128xbf16>, vector<64x128xbf16>, vector<64x128xbf16> -> vector<64x1152xbf16>
    %c0_100 = arith.constant 0 : index
    %c0_101 = arith.constant 0 : index
    %110 = vector.load %arg4[%c0_100, %c0_101] : memref<1152x512xbf16, #tpu.memory_space<vmem>>, vector<1152x512xbf16>
    %cst_102 = arith.constant dense<0.000000e+00> : vector<64x512xf32>
    %111 = tpu.matmul %109, %110, %cst_102 {dimension_numbers = #tpu.dot_dimension_numbers<[1], [0], [0], [1], [0, 0, 1, 1], [], []>} : vector<64x1152xbf16>, vector<1152x512xbf16>, vector<64x512xf32> -> vector<64x512xf32>
    %c0_103 = arith.constant 0 : index
    %c0_104 = arith.constant 0 : index
    %112 = vector.load %arg5[%c0_103, %c0_104] : memref<1x512xf32, #tpu.memory_space<vmem>>, vector<1x512xf32>
    %113 = vector.broadcast %112 : vector<1x512xf32> to vector<64x512xf32>
    %114 = arith.addf %111, %113 : vector<64x512xf32>
    %cst_105 = arith.constant 0.000000e+00 : f32
    %115 = vector.broadcast %cst_105 : f32 to vector<64x512xf32>
    %116 = arith.maximumf %114, %115 : vector<64x512xf32>
    %cst_106 = arith.constant 0.000000e+00 : f32
    %117 = vector.broadcast %cst_106 : f32 to vector<10x10x512xf32>
    %c0_107 = arith.constant 0 : index
    %c0_108 = arith.constant 0 : index
    %c0_109 = arith.constant 0 : index
    %118 = vector.load %arg10[%c0_107, %c0_108, %c0_109] : memref<10x10x512xf32, #tpu.memory_space<vmem>>, vector<10x10x512xf32>
    tpu.vector_store %arg10[%c0_107, %c0_108, %c0_109], %117 {strides = array<i32>} : memref<10x10x512xf32, #tpu.memory_space<vmem>>, vector<10x10x512xf32>,
    %119 = vector.shape_cast %116 : vector<64x512xf32> to vector<8x8x512xf32>
    %c1_110 = arith.constant 1 : index
    %c1_111 = arith.constant 1 : index
    %c0_112 = arith.constant 0 : index
    %120 = vector.load %arg10[%c1_110, %c1_111, %c0_112] : memref<10x10x512xf32, #tpu.memory_space<vmem>>, vector<8x8x512xf32>
    tpu.vector_store %arg10[%c1_110, %c1_111, %c0_112], %119 {strides = array<i32>} : memref<10x10x512xf32, #tpu.memory_space<vmem>>, vector<8x8x512xf32>,
    %c0_113 = arith.constant 0 : index
    %c0_114 = arith.constant 0 : index
    %c0_115 = arith.constant 0 : index
    %121 = vector.load %arg10[%c0_113, %c0_114, %c0_115] : memref<10x10x512xf32, #tpu.memory_space<vmem>>, vector<8x8x512xf32>
    %122 = vector.shape_cast %121 : vector<8x8x512xf32> to vector<64x512xf32>
    %123 = arith.truncf %122 : vector<64x512xf32> to vector<64x512xbf16>
    %c0_116 = arith.constant 0 : index
    %c1_117 = arith.constant 1 : index
    %c0_118 = arith.constant 0 : index
    %124 = vector.load %arg10[%c0_116, %c1_117, %c0_118] : memref<10x10x512xf32, #tpu.memory_space<vmem>>, vector<8x8x512xf32>
    %125 = vector.shape_cast %124 : vector<8x8x512xf32> to vector<64x512xf32>
    %126 = arith.truncf %125 : vector<64x512xf32> to vector<64x512xbf16>
    %c0_119 = arith.constant 0 : index
    %c2_120 = arith.constant 2 : index
    %c0_121 = arith.constant 0 : index
    %127 = vector.load %arg10[%c0_119, %c2_120, %c0_121] : memref<10x10x512xf32, #tpu.memory_space<vmem>>, vector<8x8x512xf32>
    %128 = vector.shape_cast %127 : vector<8x8x512xf32> to vector<64x512xf32>
    %129 = arith.truncf %128 : vector<64x512xf32> to vector<64x512xbf16>
    %c1_122 = arith.constant 1 : index
    %c0_123 = arith.constant 0 : index
    %c0_124 = arith.constant 0 : index
    %130 = vector.load %arg10[%c1_122, %c0_123, %c0_124] : memref<10x10x512xf32, #tpu.memory_space<vmem>>, vector<8x8x512xf32>
    %131 = vector.shape_cast %130 : vector<8x8x512xf32> to vector<64x512xf32>
    %132 = arith.truncf %131 : vector<64x512xf32> to vector<64x512xbf16>
    %c1_125 = arith.constant 1 : index
    %c1_126 = arith.constant 1 : index
    %c0_127 = arith.constant 0 : index
    %133 = vector.load %arg10[%c1_125, %c1_126, %c0_127] : memref<10x10x512xf32, #tpu.memory_space<vmem>>, vector<8x8x512xf32>
    %134 = vector.shape_cast %133 : vector<8x8x512xf32> to vector<64x512xf32>
    %135 = arith.truncf %134 : vector<64x512xf32> to vector<64x512xbf16>
    %c1_128 = arith.constant 1 : index
    %c2_129 = arith.constant 2 : index
    %c0_130 = arith.constant 0 : index
    %136 = vector.load %arg10[%c1_128, %c2_129, %c0_130] : memref<10x10x512xf32, #tpu.memory_space<vmem>>, vector<8x8x512xf32>
    %137 = vector.shape_cast %136 : vector<8x8x512xf32> to vector<64x512xf32>
    %138 = arith.truncf %137 : vector<64x512xf32> to vector<64x512xbf16>
    %c2_131 = arith.constant 2 : index
    %c0_132 = arith.constant 0 : index
    %c0_133 = arith.constant 0 : index
    %139 = vector.load %arg10[%c2_131, %c0_132, %c0_133] : memref<10x10x512xf32, #tpu.memory_space<vmem>>, vector<8x8x512xf32>
    %140 = vector.shape_cast %139 : vector<8x8x512xf32> to vector<64x512xf32>
    %141 = arith.truncf %140 : vector<64x512xf32> to vector<64x512xbf16>
    %c2_134 = arith.constant 2 : index
    %c1_135 = arith.constant 1 : index
    %c0_136 = arith.constant 0 : index
    %142 = vector.load %arg10[%c2_134, %c1_135, %c0_136] : memref<10x10x512xf32, #tpu.memory_space<vmem>>, vector<8x8x512xf32>
    %143 = vector.shape_cast %142 : vector<8x8x512xf32> to vector<64x512xf32>
    %144 = arith.truncf %143 : vector<64x512xf32> to vector<64x512xbf16>
    %c2_137 = arith.constant 2 : index
    %c2_138 = arith.constant 2 : index
    %c0_139 = arith.constant 0 : index
    %145 = vector.load %arg10[%c2_137, %c2_138, %c0_139] : memref<10x10x512xf32, #tpu.memory_space<vmem>>, vector<8x8x512xf32>
    %146 = vector.shape_cast %145 : vector<8x8x512xf32> to vector<64x512xf32>
    %147 = arith.truncf %146 : vector<64x512xf32> to vector<64x512xbf16>
    %148 = tpu.concatenate %123, %126, %129, %132, %135, %138, %141, %144, %147 in 1 : vector<64x512xbf16>, vector<64x512xbf16>, vector<64x512xbf16>, vector<64x512xbf16>, vector<64x512xbf16>, vector<64x512xbf16>, vector<64x512xbf16>, vector<64x512xbf16>, vector<64x512xbf16> -> vector<64x4608xbf16>
    %c0_140 = arith.constant 0 : index
    %c0_141 = arith.constant 0 : index
    %149 = vector.load %arg6[%c0_140, %c0_141] : memref<4608x256xbf16, #tpu.memory_space<vmem>>, vector<4608x256xbf16>
    %cst_142 = arith.constant dense<0.000000e+00> : vector<64x256xf32>
    %150 = tpu.matmul %148, %149, %cst_142 {dimension_numbers = #tpu.dot_dimension_numbers<[1], [0], [0], [1], [0, 0, 1, 1], [], []>} : vector<64x4608xbf16>, vector<4608x256xbf16>, vector<64x256xf32> -> vector<64x256xf32>
    %c0_143 = arith.constant 0 : index
    %c0_144 = arith.constant 0 : index
    %151 = vector.load %arg7[%c0_143, %c0_144] : memref<1x256xf32, #tpu.memory_space<vmem>>, vector<1x256xf32>
    %152 = vector.broadcast %151 : vector<1x256xf32> to vector<64x256xf32>
    %153 = arith.addf %150, %152 : vector<64x256xf32>
    %cst_145 = arith.constant 0.000000e+00 : f32
    %154 = vector.broadcast %cst_145 : f32 to vector<64x256xf32>
    %155 = arith.maximumf %153, %154 : vector<64x256xf32>
    %c0_146 = arith.constant 0 : index
    %c0_147 = arith.constant 0 : index
    %c0_148 = arith.constant 0 : index
    %156 = vector.load %arg8[%c0_146, %c0_147, %c0_148] : memref<1x64x256xf32, #tpu.memory_space<vmem>>, vector<1x64x256xf32>
    %157 = vector.shape_cast %156 : vector<1x64x256xf32> to vector<64x256xf32>
    %158 = vector.shape_cast %155 : vector<64x256xf32> to vector<1x64x256xf32>
    tpu.vector_store %arg8[%c0_146, %c0_147, %c0_148], %158 {strides = array<i32>} : memref<1x64x256xf32, #tpu.memory_space<vmem>>, vector<1x64x256xf32>,
    return
  }
  func.func @transform_0(%arg0: i32) -> (i32, i32, i32, i32) {
    %c0_i32 = arith.constant 0 : i32
    %c0_i32_0 = arith.constant 0 : i32
    %c0_i32_1 = arith.constant 0 : i32
    %c0_i32_2 = arith.constant 0 : i32
    return %arg0, %c0_i32, %c0_i32_0, %c0_i32_1 : i32, i32, i32, i32
  }
  func.func @transform_1(%arg0: i32) -> (i32, i32, i32) {
    %c0_i32 = arith.constant 0 : i32
    %c0_i32_0 = arith.constant 0 : i32
    %c0_i32_1 = arith.constant 0 : i32
    %c0_i32_2 = arith.constant 0 : i32
    return %c0_i32, %c0_i32_0, %c0_i32_1 : i32, i32, i32
  }
  func.func @transform_2(%arg0: i32) -> (i32, i32) {
    %c0_i32 = arith.constant 0 : i32
    %c0_i32_0 = arith.constant 0 : i32
    %c0_i32_1 = arith.constant 0 : i32
    return %c0_i32, %c0_i32_0 : i32, i32
  }
  func.func @transform_3(%arg0: i32) -> (i32, i32) {
    %c0_i32 = arith.constant 0 : i32
    %c0_i32_0 = arith.constant 0 : i32
    %c0_i32_1 = arith.constant 0 : i32
    return %c0_i32, %c0_i32_0 : i32, i32
  }
  func.func @transform_4(%arg0: i32) -> (i32, i32) {
    %c0_i32 = arith.constant 0 : i32
    %c0_i32_0 = arith.constant 0 : i32
    %c0_i32_1 = arith.constant 0 : i32
    return %c0_i32, %c0_i32_0 : i32, i32
  }
  func.func @transform_5(%arg0: i32) -> (i32, i32) {
    %c0_i32 = arith.constant 0 : i32
    %c0_i32_0 = arith.constant 0 : i32
    %c0_i32_1 = arith.constant 0 : i32
    return %c0_i32, %c0_i32_0 : i32, i32
  }
  func.func @transform_6(%arg0: i32) -> (i32, i32) {
    %c0_i32 = arith.constant 0 : i32
    %c0_i32_0 = arith.constant 0 : i32
    %c0_i32_1 = arith.constant 0 : i32
    return %c0_i32, %c0_i32_0 : i32, i32
  }
  func.func @transform_7(%arg0: i32) -> (i32, i32, i32) {
    %c0_i32 = arith.constant 0 : i32
    %c0_i32_0 = arith.constant 0 : i32
    %c0_i32_1 = arith.constant 0 : i32
    return %arg0, %c0_i32, %c0_i32_0 : i32, i32, i32
  }
}

</mosaic_0001>

<llo_original>
// kernel: hyper_dec_forward_pallas.1
$region0: #{hyper_dec_forward_pallas.1}
  #allocation0 [shape = 'u32[]', space=smem, size = 0x4, offset = 0x4, fixed_abs, tag = 'smem constant byte address 0x4 - core index']
  #allocation1 [shape = 'u32[144,128]{1,0:T(1,128)}', space=vmem, size = 0x12000, scoped, tag = 'internal scratch']
  #allocation2 [shape = 'f32[10,10,128]{2,1,0:T(8,128)}', space=vmem, size = 0x14000, scoped, tag = 'scratch operand']
  #allocation3 [shape = 'f32[10,10,512]{2,1,0:T(8,128)}', space=vmem, size = 0x50000, scoped, tag = 'scratch operand']
  %s0 = inlined_call_operand.vmem [shape: f32[2,10,10,16], index: 0, kind: input, shape index: {}]
  %s1 = inlined_call_operand.hbm [shape: bf16[9,16,128], index: 1, kind: input, shape index: {}]
  %s2 = inlined_call_operand.hbm [shape: f32[1,128], index: 2, kind: input, shape index: {}]
  %s3 = inlined_call_operand.hbm [shape: bf16[1152,512], index: 3, kind: input, shape index: {}]
  %s4 = inlined_call_operand.hbm [shape: f32[1,512], index: 4, kind: input, shape index: {}]
  %s5 = inlined_call_operand.hbm [shape: bf16[4608,256], index: 5, kind: input, shape index: {}]
  %s6 = inlined_call_operand.hbm [shape: f32[1,256], index: 6, kind: input, shape index: {}]
  %s7 = inlined_call_operand.vmem [shape: f32[2,64,256], index: 7, kind: output, shape index: {}]
  %s8 = sld [smem:[#allocation0]]
  $region85: #{hyper_dec_forward_pallas.1} parent=0
    _
  %s10 = ssub.s32 1, %s8
  %s11 = scalar_select 0, %s10, %s8
  $region1: #{hyper_dec_forward_pallas.1} parent=0
    #allocation4 [shape = 'u8[36864]{0}', space=vmem, size = 0x9000, scoped, tag = 'input window, operand 1, single buffered']
    #allocation5 [shape = 's32[2]{0}', space=sflag, size = 0x8, scoped, tag = 'scoped memory for hyper_dec_forward_pallas.1']
    #allocation6 [shape = 'u8[512]{0}', space=vmem, size = 0x400, scoped, tag = 'input window, operand 2, single buffered']
    #allocation7 [shape = 's32[1]{0}', space=sflag, size = 0x4, scoped, tag = 'scoped memory for hyper_dec_forward_pallas.1']
    #allocation8 [shape = 'u8[1179648]{0}', space=vmem, size = 0x120000, scoped, tag = 'input window, operand 3, single buffered']
    #allocation9 [shape = 'u8[2048]{0}', space=vmem, size = 0x800, scoped, tag = 'input window, operand 4, single buffered']
    #allocation10 [shape = 's32[1]{0}', space=sflag, size = 0x4, scoped, tag = 'scoped memory for hyper_dec_forward_pallas.1']
    #allocation11 [shape = 'u8[2359296]{0}', space=vmem, size = 0x240000, scoped, tag = 'input window, operand 5, single buffered']
    #allocation12 [shape = 'u8[1024]{0}', space=vmem, size = 0x400, scoped, tag = 'input window, operand 6, single buffered']
    #allocation13 [shape = 's32[1]{0}', space=sflag, size = 0x4, scoped, tag = 'scoped memory for hyper_dec_forward_pallas.1']
    %12 = vsyncpa [#allocation5], 0
    %13 = vsyncpa [#allocation7], 0
    %14 = vsyncpa [#allocation10], 0
    %15 = vsyncpa [#allocation13], 0
    loop: start=0, step=1, limit=4
    $region2: #{hyper_dec_forward_pallas.1} parent=1 // loop_pre_header
      _
    $region3: #{hyper_dec_forward_pallas.1} parent=1 // loop_header
      %s17 = sphi 0, %s21
      %p18 = scmp.ge.s32.totalorder %s17, 4
      %s27 = sphi 0, %s29
      %s30 = sphi 0, %s27
      %s31 = sphi 0, %s30
      %s47 = sphi 0, %s31
      %s51 = sphi 0, %s51
      %s53 = sphi 0, %s51
      %s54 = sphi 0, %s53
      %s68 = sphi 0, %s54
      %s72 = sphi 0, %s72
      %s74 = sphi 0, %s72
      %s75 = sphi 0, %s74
      %s89 = sphi 0, %s75
      %s93 = sphi 0, %s93
      %s95 = sphi 0, %s93
      %s96 = sphi 0, %s95
      %s110 = sphi 0, %s96
      %s114 = sphi 0, %s114
      %s116 = sphi 0, %s114
      %s117 = sphi 0, %s116
      %s131 = sphi 0, %s117
      %s135 = sphi 0, %s135
      %s137 = sphi 0, %s135
      %s138 = sphi 0, %s137
      %s152 = sphi 0, %s138
      %s156 = sphi 0, %s156
      %s158 = sphi 0, %s156
      %s159 = sphi 0, %s158
      %s173 = sphi 0, %s159
      %s179 = sphi 0, %s181
      %s182 = sphi 0, %s179
      %s183 = sphi 0, %s182
      %s199 = sphi 0, %s183
    $region4: #{hyper_dec_forward_pallas.1} parent=1 // loop_header_branch
      %20 = sbr.rel (%p18) target = $region8
    $region5: #{hyper_dec_forward_pallas.1} parent=1 // loop_body
      %s22 = ssub.s32 %s17, 1
      %s23 = ssub.s32 %s17, 2
      %s24 = sadd.s32 %s17, 1
      %s25 = ssub.s32 %s17, %s24
      %p26 = scmp.eq.s32.totalorder %s25, 0
      %s28 = sadd.s32 %s27, 1
      %s29 = scalar_select %p26, %s27, %s28
      %p32 = pneg %p26
      %p33 = scmp.eq.s32.totalorder %s17, 1
      %p34 = por %p32, %p33
      %p35 = scmp.ne.s32.totalorder %s27, %s30
      %p36 = scmp.eq.s32.totalorder %s17, 0
      %p37 = por %p35, %p36
      %p38 = scmp.ne.s32.totalorder %s27, %s30
      %p39 = scmp.eq.s32.totalorder %s22, 1
      %p40 = por %p38, %p39
      %p41 = scmp.ne.s32.totalorder %s30, %s31
      %p42 = scmp.eq.s32.totalorder %s22, 0
      %p43 = por %p41, %p42
      %p44 = scmp.ne.s32.totalorder %s30, %s31
      %p45 = scmp.eq.s32.totalorder %s23, 1
      %p46 = por %p44, %p45
      %p48 = scmp.ne.s32.totalorder %s31, %s47
      %p49 = scmp.eq.s32.totalorder %s23, 0
      %p50 = por %p48, %p49
      %s52 = sadd.s32 %s51, 1
      %p55 = scmp.eq.s32.totalorder %s17, 1
      %p56 = scmp.ne.s32.totalorder %s51, %s53
      %p57 = scmp.eq.s32.totalorder %s17, 0
      %p58 = por %p56, %p57
      %p59 = scmp.ne.s32.totalorder %s51, %s53
      %p60 = scmp.eq.s32.totalorder %s22, 1
      %p61 = por %p59, %p60
      %p62 = scmp.ne.s32.totalorder %s53, %s54
      %p63 = scmp.eq.s32.totalorder %s22, 0
      %p64 = por %p62, %p63
      %p65 = scmp.ne.s32.totalorder %s53, %s54
      %p66 = scmp.eq.s32.totalorder %s23, 1
      %p67 = por %p65, %p66
      %p69 = scmp.ne.s32.totalorder %s54, %s68
      %p70 = scmp.eq.s32.totalorder %s23, 0
      %p71 = por %p69, %p70
      %s73 = sadd.s32 %s72, 1
      %p76 = scmp.eq.s32.totalorder %s17, 1
      %p77 = scmp.ne.s32.totalorder %s72, %s74
      %p78 = scmp.eq.s32.totalorder %s17, 0
      %p79 = por %p77, %p78
      %p80 = scmp.ne.s32.totalorder %s72, %s74
      %p81 = scmp.eq.s32.totalorder %s22, 1
      %p82 = por %p80, %p81
      %p83 = scmp.ne.s32.totalorder %s74, %s75
      %p84 = scmp.eq.s32.totalorder %s22, 0
      %p85 = por %p83, %p84
      %p86 = scmp.ne.s32.totalorder %s74, %s75
      %p87 = scmp.eq.s32.totalorder %s23, 1
      %p88 = por %p86, %p87
      %p90 = scmp.ne.s32.totalorder %s75, %s89
      %p91 = scmp.eq.s32.totalorder %s23, 0
      %p92 = por %p90, %p91
      %s94 = sadd.s32 %s93, 1
      %p97 = scmp.eq.s32.totalorder %s17, 1
      %p98 = scmp.ne.s32.totalorder %s93, %s95
      %p99 = scmp.eq.s32.totalorder %s17, 0
      %p100 = por %p98, %p99
      %p101 = scmp.ne.s32.totalorder %s93, %s95
      %p102 = scmp.eq.s32.totalorder %s22, 1
      %p103 = por %p101, %p102
      %p104 = scmp.ne.s32.totalorder %s95, %s96
      %p105 = scmp.eq.s32.totalorder %s22, 0
      %p106 = por %p104, %p105
      %p107 = scmp.ne.s32.totalorder %s95, %s96
      %p108 = scmp.eq.s32.totalorder %s23, 1
      %p109 = por %p107, %p108
      %p111 = scmp.ne.s32.totalorder %s96, %s110
      %p112 = scmp.eq.s32.totalorder %s23, 0
      %p113 = por %p111, %p112
      %s115 = sadd.s32 %s114, 1
      %p118 = scmp.eq.s32.totalorder %s17, 1
      %p119 = scmp.ne.s32.totalorder %s114, %s116
      %p120 = scmp.eq.s32.totalorder %s17, 0
      %p121 = por %p119, %p120
      %p122 = scmp.ne.s32.totalorder %s114, %s116
      %p123 = scmp.eq.s32.totalorder %s22, 1
      %p124 = por %p122, %p123
      %p125 = scmp.ne.s32.totalorder %s116, %s117
      %p126 = scmp.eq.s32.totalorder %s22, 0
      %p127 = por %p125, %p126
      %p128 = scmp.ne.s32.totalorder %s116, %s117
      %p129 = scmp.eq.s32.totalorder %s23, 1
      %p130 = por %p128, %p129
      %p132 = scmp.ne.s32.totalorder %s117, %s131
      %p133 = scmp.eq.s32.totalorder %s23, 0
      %p134 = por %p132, %p133
      %s136 = sadd.s32 %s135, 1
      %p139 = scmp.eq.s32.totalorder %s17, 1
      %p140 = scmp.ne.s32.totalorder %s135, %s137
      %p141 = scmp.eq.s32.totalorder %s17, 0
      %p142 = por %p140, %p141
      %p143 = scmp.ne.s32.totalorder %s135, %s137
      %p144 = scmp.eq.s32.totalorder %s22, 1
      %p145 = por %p143, %p144
      %p146 = scmp.ne.s32.totalorder %s137, %s138
      %p147 = scmp.eq.s32.totalorder %s22, 0
      %p148 = por %p146, %p147
      %p149 = scmp.ne.s32.totalorder %s137, %s138
      %p150 = scmp.eq.s32.totalorder %s23, 1
      %p151 = por %p149, %p150
      %p153 = scmp.ne.s32.totalorder %s138, %s152
      %p154 = scmp.eq.s32.totalorder %s23, 0
      %p155 = por %p153, %p154
      %s157 = sadd.s32 %s156, 1
      %p160 = scmp.eq.s32.totalorder %s17, 1
      %p161 = scmp.ne.s32.totalorder %s156, %s158
      %p162 = scmp.eq.s32.totalorder %s17, 0
      %p163 = por %p161, %p162
      %p164 = scmp.ne.s32.totalorder %s156, %s158
      %p165 = scmp.eq.s32.totalorder %s22, 1
      %p166 = por %p164, %p165
      %p167 = scmp.ne.s32.totalorder %s158, %s159
      %p168 = scmp.eq.s32.totalorder %s22, 0
      %p169 = por %p167, %p168
      %p170 = scmp.ne.s32.totalorder %s158, %s159
      %p171 = scmp.eq.s32.totalorder %s23, 1
      %p172 = por %p170, %p171
      %p174 = scmp.ne.s32.totalorder %s159, %s173
      %p175 = scmp.eq.s32.totalorder %s23, 0
      %p176 = por %p174, %p175
      %s177 = ssub.s32 %s17, %s24
      %p178 = scmp.eq.s32.totalorder %s177, 0
      %s180 = sadd.s32 %s179, 1
      %s181 = scalar_select %p178, %s179, %s180
      %p184 = pneg %p178
      %p185 = scmp.eq.s32.totalorder %s17, 1
      %p186 = por %p184, %p185
      %p187 = scmp.ne.s32.totalorder %s179, %s182
      %p188 = scmp.eq.s32.totalorder %s17, 0
      %p189 = por %p187, %p188
      %p190 = scmp.ne.s32.totalorder %s179, %s182
      %p191 = scmp.eq.s32.totalorder %s22, 1
      %p192 = por %p190, %p191
      %p193 = scmp.ne.s32.totalorder %s182, %s183
      %p194 = scmp.eq.s32.totalorder %s22, 0
      %p195 = por %p193, %p194
      %p196 = scmp.ne.s32.totalorder %s182, %s183
      %p197 = scmp.eq.s32.totalorder %s23, 1
      %p198 = por %p196, %p197
      %p200 = scmp.ne.s32.totalorder %s183, %s199
      %p201 = scmp.eq.s32.totalorder %s23, 0
      %p202 = por %p200, %p201
      %p203 = scmp.le.s32.totalorder 1, %s17
      %p204 = scmp.lt.s32.totalorder %s17, 3
      %p205 = pnand %p203, %p204
      %p206 = pneg %p205
      // Predicated region
      $region9: #{hyper_dec_forward_pallas.1} parent=5 // pred_check
        _
      $region10: #{hyper_dec_forward_pallas.1} parent=5 // pred_check_branch
        %208 = sbr.rel (%p205) target = $region12
      $region11: #{hyper_dec_forward_pallas.1} parent=5 // pred_region
        %s209 = ssub.s32 %s17, 1
        // Predicated region
        $region13: #{hyper_dec_forward_pallas.1} parent=11 // pred_check
          %p210 = pneg %p64
        $region14: #{hyper_dec_forward_pallas.1} parent=11 // pred_check_branch
          %212 = sbr.rel (%p210) target = $region16
        $region15: #{hyper_dec_forward_pallas.1} parent=11 // pred_region
          %s214 = ssub.s32 1152, 1152
          %215 = vsyncadd [#allocation5], %s214
          %s216 = sshll.u32 [#allocation4], 4
          %s217 = int_to_ptr.vmem [resolvable:$true] %s216
          %222 = dma.hbm_to_vmem [thread:$0]  %s1, 1152, %s217, [#allocation5], 64, 64, 4
        $region16: #{hyper_dec_forward_pallas.1} parent=11 // pred_fallthru
          _
        // Predicated region
        $region17: #{hyper_dec_forward_pallas.1} parent=11 // pred_check
          %p223 = pneg %p85
        $region18: #{hyper_dec_forward_pallas.1} parent=11 // pred_check_branch
          %225 = sbr.rel (%p223) target = $region20
        $region19: #{hyper_dec_forward_pallas.1} parent=11 // pred_region
          %s227 = ssub.s32 16, 16
          %228 = vsyncadd [#allocation7], %s227
          %s230 = sshll.u32 [#allocation6], 4
          %s231 = int_to_ptr.vmem [resolvable:$true] %s230
          %233 = dma.hbm_to_vmem [thread:$0]  %s2, 16, %s231, [#allocation7]
        $region20: #{hyper_dec_forward_pallas.1} parent=11 // pred_fallthru
          _
        // Predicated region
        $region21: #{hyper_dec_forward_pallas.1} parent=11 // pred_check
          %p234 = pneg %p106
        $region22: #{hyper_dec_forward_pallas.1} parent=11 // pred_check_branch
          %236 = sbr.rel (%p234) target = $region24
        $region23: #{hyper_dec_forward_pallas.1} parent=11 // pred_region
          %s238 = ssub.s32 36864, 36864
          %239 = vsyncadd [#allocation7], %s238
          %s240 = sshll.u32 [#allocation8], 4
          %s241 = int_to_ptr.vmem [resolvable:$true] %s240
          %246 = dma.hbm_to_vmem [thread:$0]  %s3, 36864, %s241, [#allocation7], 256, 256, 16
        $region24: #{hyper_dec_forward_pallas.1} parent=11 // pred_fallthru
          _
        // Predicated region
        $region25: #{hyper_dec_forward_pallas.1} parent=11 // pred_check
          %p247 = pneg %p127
        $region26: #{hyper_dec_forward_pallas.1} parent=11 // pred_check_branch
          %249 = sbr.rel (%p247) target = $region28
        $region27: #{hyper_dec_forward_pallas.1} parent=11 // pred_region
          %s251 = ssub.s32 64, 64
          %252 = vsyncadd [#allocation10], %s251
          %s254 = sshll.u32 [#allocation9], 4
          %s255 = int_to_ptr.vmem [resolvable:$true] %s254
          %257 = dma.hbm_to_vmem [thread:$0]  %s4, 64, %s255, [#allocation10]
        $region28: #{hyper_dec_forward_pallas.1} parent=11 // pred_fallthru
          _
        // Predicated region
        $region29: #{hyper_dec_forward_pallas.1} parent=11 // pred_check
          %p258 = pneg %p148
        $region30: #{hyper_dec_forward_pallas.1} parent=11 // pred_check_branch
          %260 = sbr.rel (%p258) target = $region32
        $region31: #{hyper_dec_forward_pallas.1} parent=11 // pred_region
          %s262 = ssub.s32 73728, 73728
          %263 = vsyncadd [#allocation10], %s262
          %s264 = sshll.u32 [#allocation11], 4
          %s265 = int_to_ptr.vmem [resolvable:$true] %s264
          %270 = dma.hbm_to_vmem [thread:$0]  %s5, 73728, %s265, [#allocation10], 128, 128, 8
        $region32: #{hyper_dec_forward_pallas.1} parent=11 // pred_fallthru
          _
        // Predicated region
        $region33: #{hyper_dec_forward_pallas.1} parent=11 // pred_check
          %p271 = pneg %p169
        $region34: #{hyper_dec_forward_pallas.1} parent=11 // pred_check_branch
          %273 = sbr.rel (%p271) target = $region36
        $region35: #{hyper_dec_forward_pallas.1} parent=11 // pred_region
          %s275 = ssub.s32 32, 32
          %276 = vsyncadd [#allocation13], %s275
          %s278 = sshll.u32 [#allocation12], 4
          %s279 = int_to_ptr.vmem [resolvable:$true] %s278
          %281 = dma.hbm_to_vmem [thread:$0]  %s6, 32, %s279, [#allocation13]
        $region36: #{hyper_dec_forward_pallas.1} parent=11 // pred_fallthru
          _
      $region12: #{hyper_dec_forward_pallas.1} parent=5 // pred_fallthru
        _
      %p282 = scmp.lt.s32.totalorder %s17, 2
      // Predicated region
      $region37: #{hyper_dec_forward_pallas.1} parent=5 // pred_check
        %p283 = pneg %p282
      $region38: #{hyper_dec_forward_pallas.1} parent=5 // pred_check_branch
        %285 = sbr.rel (%p283) target = $region40
      $region39: #{hyper_dec_forward_pallas.1} parent=5 // pred_region
        // Predicated region
        $region41: #{hyper_dec_forward_pallas.1} parent=39 // pred_check
          %p286 = pneg %p37
        $region42: #{hyper_dec_forward_pallas.1} parent=39 // pred_check_branch
          %288 = sbr.rel (%p286) target = $region44
        $region43: #{hyper_dec_forward_pallas.1} parent=39 // pred_region
          %p289 = scmp.lt.s32.totalorder %s17, 1
          %s290 = scalar_select %p289, %s17, 1
          %s291 = smul.addr %s290, 20
          %s292 = smul.addr %s291, 8
          %s293 = scalar_lea.vmem %s0, %s292
        $region44: #{hyper_dec_forward_pallas.1} parent=39 // pred_fallthru
          _
      $region40: #{hyper_dec_forward_pallas.1} parent=5 // pred_fallthru
        _
      %p294 = scmp.le.s32.totalorder 1, %s17
      %p295 = scmp.lt.s32.totalorder %s17, 3
      %p296 = pnand %p294, %p295
      %p297 = pneg %p296
      // Predicated region
      $region45: #{hyper_dec_forward_pallas.1} parent=5 // pred_check
        _
      $region46: #{hyper_dec_forward_pallas.1} parent=5 // pred_check_branch
        %299 = sbr.rel (%p296) target = $region48
      $region47: #{hyper_dec_forward_pallas.1} parent=5 // pred_region
        %s300 = ssub.s32 %s17, 1
        // Predicated region
        $region49: #{hyper_dec_forward_pallas.1} parent=47 // pred_check
          %p301 = pneg %p64
        $region50: #{hyper_dec_forward_pallas.1} parent=47 // pred_check_branch
          %303 = sbr.rel (%p301) target = $region52
        $region51: #{hyper_dec_forward_pallas.1} parent=47 // pred_region
          %304 = dma.done [#allocation5], 1152
        $region52: #{hyper_dec_forward_pallas.1} parent=47 // pred_fallthru
          _
        // Predicated region
        $region53: #{hyper_dec_forward_pallas.1} parent=47 // pred_check
          %p305 = pneg %p85
        $region54: #{hyper_dec_forward_pallas.1} parent=47 // pred_check_branch
          %307 = sbr.rel (%p305) target = $region56
        $region55: #{hyper_dec_forward_pallas.1} parent=47 // pred_region
          %308 = dma.done [#allocation7], 16
        $region56: #{hyper_dec_forward_pallas.1} parent=47 // pred_fallthru
          _
        // Predicated region
        $region57: #{hyper_dec_forward_pallas.1} parent=47 // pred_check
          %p309 = pneg %p106
        $region58: #{hyper_dec_forward_pallas.1} parent=47 // pred_check_branch
          %311 = sbr.rel (%p309) target = $region60
        $region59: #{hyper_dec_forward_pallas.1} parent=47 // pred_region
          %312 = dma.done [#allocation7], 36864
        $region60: #{hyper_dec_forward_pallas.1} parent=47 // pred_fallthru
          _
        // Predicated region
        $region61: #{hyper_dec_forward_pallas.1} parent=47 // pred_check
          %p313 = pneg %p127
        $region62: #{hyper_dec_forward_pallas.1} parent=47 // pred_check_branch
          %315 = sbr.rel (%p313) target = $region64
        $region63: #{hyper_dec_forward_pallas.1} parent=47 // pred_region
          %316 = dma.done [#allocation10], 64
        $region64: #{hyper_dec_forward_pallas.1} parent=47 // pred_fallthru
          _
        // Predicated region
        $region65: #{hyper_dec_forward_pallas.1} parent=47 // pred_check
          %p317 = pneg %p148
        $region66: #{hyper_dec_forward_pallas.1} parent=47 // pred_check_branch
          %319 = sbr.rel (%p317) target = $region68
        $region67: #{hyper_dec_forward_pallas.1} parent=47 // pred_region
          %320 = dma.done [#allocation10], 73728
        $region68: #{hyper_dec_forward_pallas.1} parent=47 // pred_fallthru
          _
        // Predicated region
        $region69: #{hyper_dec_forward_pallas.1} parent=47 // pred_check
          %p321 = pneg %p169
        $region70: #{hyper_dec_forward_pallas.1} parent=47 // pred_check_branch
          %323 = sbr.rel (%p321) target = $region72
        $region71: #{hyper_dec_forward_pallas.1} parent=47 // pred_region
          %324 = dma.done [#allocation13], 32
        $region72: #{hyper_dec_forward_pallas.1} parent=47 // pred_fallthru
          _
        %p325 = scmp.lt.s32.totalorder %s22, 1
        %s326 = scalar_select %p325, %s22, 1
        %s327 = smul.addr %s326, 20
        %s328 = smul.addr %s327, 8
        %s329 = scalar_lea.vmem %s0, %s328
        %p330 = pneg %p43
        %p331 = pneg %p40
        %p332 = pneg %p64
        %p333 = pneg %p61
        %p334 = pneg %p85
        %p335 = pneg %p82
        %p336 = pneg %p106
        %p337 = pneg %p103
        %p338 = pneg %p127
        %p339 = pneg %p124
        %p340 = pneg %p148
        %p341 = pneg %p145
        %p342 = pneg %p169
        %p343 = pneg %p166
        %p344 = pneg %p195
        %p345 = pneg %p192
        %p346 = scmp.lt.s32.totalorder %s22, 1
        %s347 = scalar_select %p346, %s22, 1
        %s348 = smul.addr %s347, 16
        %s349 = smul.addr %s348, 8
        %s350 = scalar_lea.vmem %s7, %s349
        %p351 = scmp.lt.s32.totalorder %s22, 1
        %s352 = scalar_select %p351, %s22, 1
        %s353 = smul.addr %s352, 20
        %s354 = smul.addr %s353, 8
        %s355 = scalar_lea.vmem %s0, %s354
        %p356 = scmp.lt.s32.totalorder %s22, 1
        %s357 = scalar_select %p356, %s22, 1
        %s358 = smul.addr %s357, 16
        %s359 = smul.addr %s358, 8
        %s360 = scalar_lea.vmem %s7, %s359
        %v362 = vld [vmem:[%s355] sm:$0xff]
        %v363 = vld [vmem:[%s355 + $0x10] sm:$0xff]
        %v364 = vld [vmem:[%s355 + $0x20] sm:$0xff]
        %v365 = vld [vmem:[%s355 + $0x30] sm:$0xff]
        %v366 = vld [vmem:[%s355 + $0x40] sm:$0xff]
        %v367 = vld [vmem:[%s355 + $0x50] sm:$0xff]
        %v368 = vld [vmem:[%s355 + $0x60] sm:$0xff]
        %v369 = vld [vmem:[%s355 + $0x70] sm:$0xff]
        %v370 = vpack.c.bf16 %v363, %v362
        %v371 = vpack.c.bf16 %v365, %v364
        %v372 = vpack.c.bf16 %v367, %v366
        %v373 = vpack.c.bf16 %v369, %v368
        %v374 = vld [vmem:[#allocation4] sm:$0xf]
        %v375 = vld [vmem:[#allocation4 + $0x4] sm:$0xf]
        %v376 = vld [vmem:[%s355 + $0x1] sm:$0xff]
        %v377 = vld [vmem:[%s355 + $0x11] sm:$0xff]
        %v378 = vld [vmem:[%s355 + $0x21] sm:$0xff]
        %v379 = vld [vmem:[%s355 + $0x31] sm:$0xff]
        %v380 = vld [vmem:[%s355 + $0x41] sm:$0xff]
        %v381 = vld [vmem:[%s355 + $0x51] sm:$0xff]
        %v382 = vld [vmem:[%s355 + $0x61] sm:$0xff]
        %v383 = vld [vmem:[%s355 + $0x71] sm:$0xff]
        %v384 = vpack.c.bf16 %v377, %v376
        %v385 = vpack.c.bf16 %v379, %v378
        %v386 = vpack.c.bf16 %v381, %v380
        %v387 = vpack.c.bf16 %v383, %v382
        %s388 = scalar_lea.vmem [#allocation4], 8
        %v389 = vld [vmem:[%s388] sm:$0xf]
        %v390 = vld [vmem:[%s388 + $0x4] sm:$0xf]
        %v393 = vunpack.c.l.b16 %v389
        %v394 = vunpack.c.l.b16 %v390
        %v395 = vpack.c.b16 %v394, %v393
        %vm397 = vcmask 130048
        %v399 = vsel %vm397, %v384, 0
        %v402 = vsel %vm397, %v385, 0
        %v405 = vsel %vm397, %v386, 0
        %v408 = vsel %vm397, %v387, 0
        %410 = vmatprep.subr.bf16.mxu0 0
        %411 = vmatpush1.bf16.msra.mxu0 %v395
        %412 = vmatprep.subr.bf16.mxu0 0
        %413 = vmatpush1.bf16.msra.mxu0 0
        %414 = vmatprep.subr.bf16.mxu0 0
        %415 = vmatpush1.bf16.msra.mxu0 0
        %416 = vmatprep.subr.bf16.mxu0 0
        %417 = vmatpush1.bf16.msra.mxu0 0
        %418 = vmatprep.subr.bf16.mxu0 0
        %419 = vmatpush1.bf16.msra.mxu0 0
        %420 = vmatprep.subr.bf16.mxu0 0
        %421 = vmatpush1.bf16.msra.mxu0 0
        %422 = vmatprep.subr.bf16.mxu0 0
        %423 = vmatpush1.bf16.msra.mxu0 0
        %424 = vmatprep.subr.bf16.mxu0 0
        %425 = vmatpush1.bf16.msra.mxu0 0
        %426 = vmatprep.subr.bf16.mxu0 0
        %427 = vmatpush1.bf16.msra.mxu0 0
        %428 = vmatprep.subr.bf16.mxu0 0
        %429 = vmatpush1.bf16.msra.mxu0 0
        %430 = vmatprep.subr.bf16.mxu0 0
        %431 = vmatpush1.bf16.msra.mxu0 0
        %432 = vmatprep.subr.bf16.mxu0 0
        %433 = vmatpush1.bf16.msra.mxu0 0
        %434 = vmatprep.subr.bf16.mxu0 0
        %435 = vmatpush1.bf16.msra.mxu0 0
        %436 = vmatprep.subr.bf16.mxu0 0
        %437 = vmatpush1.bf16.msra.mxu0 0
        %438 = vmatprep.subr.bf16.mxu0 0
        %439 = vmatpush1.bf16.msra.mxu0 0
        %440 = vmatprep.subr.bf16.mxu0 0
        %441 = vmatpush1.bf16.msra.mxu0 0
        %442 = vmatprep.mubr.bf16.mxu0 0
        %443 = vmatmul.mubr.bf16.gmra.mrb[0].mxu0 %v399
        %v444 = vpop.f32.mrb[0].mxu0
        %v445 = vadd.f32 0.0, %v444
        %v446 = vpop.f32.mrb[0].mxu0
        %v447 = vpop.f32.mrb[0].mxu0
        %v448 = vadd.f32 0.0, %v447
        %v449 = vpop.f32.mrb[0].mxu0
        %450 = vmatprep.mubr.bf16.mxu0 0
        %451 = vmatmul.mubr.bf16.gmra.mrb[0].mxu0 %v402
        %v452 = vpop.f32.mrb[0].mxu0
        %v453 = vadd.f32 0.0, %v452
        %v454 = vpop.f32.mrb[0].mxu0
        %v455 = vpop.f32.mrb[0].mxu0
        %v456 = vadd.f32 0.0, %v455
        %v457 = vpop.f32.mrb[0].mxu0
        %458 = vmatprep.mubr.bf16.mxu0 0
        %459 = vmatmul.mubr.bf16.gmra.mrb[0].mxu0 %v405
        %v460 = vpop.f32.mrb[0].mxu0
        %v461 = vadd.f32 0.0, %v460
        %v462 = vpop.f32.mrb[0].mxu0
        %v463 = vpop.f32.mrb[0].mxu0
        %v464 = vadd.f32 0.0, %v463
        %v465 = vpop.f32.mrb[0].mxu0
        %466 = vmatprep.mubr.bf16.mxu0 0
        %467 = vmatmul.mubr.bf16.gmra.mrb[0].mxu0 %v408
        %v468 = vpop.f32.mrb[0].mxu0
        %v469 = vadd.f32 0.0, %v468
        %v470 = vpop.f32.mrb[0].mxu0
        %v471 = vpop.f32.mrb[0].mxu0
        %v472 = vadd.f32 0.0, %v471
        %v473 = vpop.f32.mrb[0].mxu0
        %474 = vdwg.mxu0
        %v477 = vunpack.c.l.b16 %v374
        %v478 = vunpack.c.l.b16 %v375
        %v479 = vpack.c.b16 %v478, %v477
        %v482 = vsel %vm397, %v370, 0
        %v485 = vsel %vm397, %v371, 0
        %v488 = vsel %vm397, %v372, 0
        %v491 = vsel %vm397, %v373, 0
        %493 = vmatprep.subr.bf16.mxu0 0
        %494 = vmatpush1.bf16.msra.mxu0 %v479
        %495 = vmatprep.subr.bf16.mxu0 0
        %496 = vmatpush1.bf16.msra.mxu0 0
        %497 = vmatprep.subr.bf16.mxu0 0
        %498 = vmatpush1.bf16.msra.mxu0 0
        %499 = vmatprep.subr.bf16.mxu0 0
        %500 = vmatpush1.bf16.msra.mxu0 0
        %501 = vmatprep.subr.bf16.mxu0 0
        %502 = vmatpush1.bf16.msra.mxu0 0
        %503 = vmatprep.subr.bf16.mxu0 0
        %504 = vmatpush1.bf16.msra.mxu0 0
        %505 = vmatprep.subr.bf16.mxu0 0
        %506 = vmatpush1.bf16.msra.mxu0 0
        %507 = vmatprep.subr.bf16.mxu0 0
        %508 = vmatpush1.bf16.msra.mxu0 0
        %509 = vmatprep.subr.bf16.mxu0 0
        %510 = vmatpush1.bf16.msra.mxu0 0
        %511 = vmatprep.subr.bf16.mxu0 0
        %512 = vmatpush1.bf16.msra.mxu0 0
        %513 = vmatprep.subr.bf16.mxu0 0
        %514 = vmatpush1.bf16.msra.mxu0 0
        %515 = vmatprep.subr.bf16.mxu0 0
        %516 = vmatpush1.bf16.msra.mxu0 0
        %517 = vmatprep.subr.bf16.mxu0 0
        %518 = vmatpush1.bf16.msra.mxu0 0
        %519 = vmatprep.subr.bf16.mxu0 0
        %520 = vmatpush1.bf16.msra.mxu0 0
        %521 = vmatprep.subr.bf16.mxu0 0
        %522 = vmatpush1.bf16.msra.mxu0 0
        %523 = vmatprep.subr.bf16.mxu0 0
        %524 = vmatpush1.bf16.msra.mxu0 0
        %525 = vmatprep.mubr.bf16.mxu0 0
        %526 = vmatmul.mubr.bf16.gmra.mrb[0].mxu0 %v482
        %v527 = vpop.f32.mrb[0].mxu0
        %v528 = vadd.f32 %v445, %v527
        %v529 = vpop.f32.mrb[0].mxu0
        %v530 = vpop.f32.mrb[0].mxu0
        %v531 = vadd.f32 %v448, %v530
        %v532 = vpop.f32.mrb[0].mxu0
        %533 = vmatprep.mubr.bf16.mxu0 0
        %534 = vmatmul.mubr.bf16.gmra.mrb[0].mxu0 %v485
        %v535 = vpop.f32.mrb[0].mxu0
        %v536 = vadd.f32 %v453, %v535
        %v537 = vpop.f32.mrb[0].mxu0
        %v538 = vpop.f32.mrb[0].mxu0
        %v539 = vadd.f32 %v456, %v538
        %v540 = vpop.f32.mrb[0].mxu0
        %541 = vmatprep.mubr.bf16.mxu0 0
        %542 = vmatmul.mubr.bf16.gmra.mrb[0].mxu0 %v488
        %v543 = vpop.f32.mrb[0].mxu0
        %v544 = vadd.f32 %v461, %v543
        %v545 = vpop.f32.mrb[0].mxu0
        %v546 = vpop.f32.mrb[0].mxu0
        %v547 = vadd.f32 %v464, %v546
        %v548 = vpop.f32.mrb[0].mxu0
        %549 = vmatprep.mubr.bf16.mxu0 0
        %550 = vmatmul.mubr.bf16.gmra.mrb[0].mxu0 %v491
        %v551 = vpop.f32.mrb[0].mxu0
        %v552 = vadd.f32 %v469, %v551
        %v553 = vpop.f32.mrb[0].mxu0
        %v554 = vpop.f32.mrb[0].mxu0
        %v555 = vadd.f32 %v472, %v554
        %v556 = vpop.f32.mrb[0].mxu0
        %557 = vdwg.mxu0
        %v558 = vld [vmem:[%s355 + $0x2] sm:$0xff]
        %v559 = vld [vmem:[%s355 + $0x12] sm:$0xff]
        %v560 = vld [vmem:[%s355 + $0x22] sm:$0xff]
        %v561 = vld [vmem:[%s355 + $0x32] sm:$0xff]
        %v562 = vld [vmem:[%s355 + $0x42] sm:$0xff]
        %v563 = vld [vmem:[%s355 + $0x52] sm:$0xff]
        %v564 = vld [vmem:[%s355 + $0x62] sm:$0xff]
        %v565 = vld [vmem:[%s355 + $0x72] sm:$0xff]
        %v566 = vpack.c.bf16 %v559, %v558
        %v567 = vpack.c.bf16 %v561, %v560
        %v568 = vpack.c.bf16 %v563, %v562
        %v569 = vpack.c.bf16 %v565, %v564
        %s570 = scalar_lea.vmem [#allocation4], 16
        %v571 = vld [vmem:[%s570] sm:$0xf]
        %v572 = vld [vmem:[%s570 + $0x4] sm:$0xf]
        %v575 = vunpack.c.l.b16 %v571
        %v576 = vunpack.c.l.b16 %v572
        %v577 = vpack.c.b16 %v576, %v575
        %v580 = vsel %vm397, %v566, 0
        %v583 = vsel %vm397, %v567, 0
        %v586 = vsel %vm397, %v568, 0
        %v589 = vsel %vm397, %v569, 0
        %591 = vmatprep.subr.bf16.mxu0 0
        %592 = vmatpush1.bf16.msra.mxu0 %v577
        %593 = vmatprep.subr.bf16.mxu0 0
        %594 = vmatpush1.bf16.msra.mxu0 0
        %595 = vmatprep.subr.bf16.mxu0 0
        %596 = vmatpush1.bf16.msra.mxu0 0
        %597 = vmatprep.subr.bf16.mxu0 0
        %598 = vmatpush1.bf16.msra.mxu0 0
        %599 = vmatprep.subr.bf16.mxu0 0
        %600 = vmatpush1.bf16.msra.mxu0 0
        %601 = vmatprep.subr.bf16.mxu0 0
        %602 = vmatpush1.bf16.msra.mxu0 0
        %603 = vmatprep.subr.bf16.mxu0 0
        %604 = vmatpush1.bf16.msra.mxu0 0
        %605 = vmatprep.subr.bf16.mxu0 0
        %606 = vmatpush1.bf16.msra.mxu0 0
        %607 = vmatprep.subr.bf16.mxu0 0
        %608 = vmatpush1.bf16.msra.mxu0 0
        %609 = vmatprep.subr.bf16.mxu0 0
        %610 = vmatpush1.bf16.msra.mxu0 0
        %611 = vmatprep.subr.bf16.mxu0 0
        %612 = vmatpush1.bf16.msra.mxu0 0
        %613 = vmatprep.subr.bf16.mxu0 0
        %614 = vmatpush1.bf16.msra.mxu0 0
        %615 = vmatprep.subr.bf16.mxu0 0
        %616 = vmatpush1.bf16.msra.mxu0 0
        %617 = vmatprep.subr.bf16.mxu0 0
        %618 = vmatpush1.bf16.msra.mxu0 0
        %619 = vmatprep.subr.bf16.mxu0 0
        %620 = vmatpush1.bf16.msra.mxu0 0
        %621 = vmatprep.subr.bf16.mxu0 0
        %622 = vmatpush1.bf16.msra.mxu0 0
        %623 = vmatprep.mubr.bf16.mxu0 0
        %624 = vmatmul.mubr.bf16.gmra.mrb[0].mxu0 %v580
        %v625 = vpop.f32.mrb[0].mxu0
        %v626 = vadd.f32 0.0, %v625
        %v627 = vpop.f32.mrb[0].mxu0
        %v628 = vpop.f32.mrb[0].mxu0
        %v629 = vadd.f32 0.0, %v628
        %v630 = vpop.f32.mrb[0].mxu0
        %631 = vmatprep.mubr.bf16.mxu0 0
        %632 = vmatmul.mubr.bf16.gmra.mrb[0].mxu0 %v583
        %v633 = vpop.f32.mrb[0].mxu0
        %v634 = vadd.f32 0.0, %v633
        %v635 = vpop.f32.mrb[0].mxu0
        %v636 = vpop.f32.mrb[0].mxu0
        %v637 = vadd.f32 0.0, %v636
        %v638 = vpop.f32.mrb[0].mxu0
        %639 = vmatprep.mubr.bf16.mxu0 0
        %640 = vmatmul.mubr.bf16.gmra.mrb[0].mxu0 %v586
        %v641 = vpop.f32.mrb[0].mxu0
        %v642 = vadd.f32 0.0, %v641
        %v643 = vpop.f32.mrb[0].mxu0
        %v644 = vpop.f32.mrb[0].mxu0
        %v645 = vadd.f32 0.0, %v644
        %v646 = vpop.f32.mrb[0].mxu0
        %647 = vmatprep.mubr.bf16.mxu0 0
        %648 = vmatmul.mubr.bf16.gmra.mrb[0].mxu0 %v589
        %v649 = vpop.f32.mrb[0].mxu0
        %v650 = vadd.f32 0.0, %v649
        %v651 = vpop.f32.mrb[0].mxu0
        %v652 = vpop.f32.mrb[0].mxu0
        %v653 = vadd.f32 0.0, %v652
        %v654 = vpop.f32.mrb[0].mxu0
        %655 = vdwg.mxu0
        %v656 = vadd.f32 %v528, %v626
        %v657 = vadd.f32 %v531, %v629
        %v658 = vadd.f32 %v536, %v634
        %v659 = vadd.f32 %v539, %v637
        %v660 = vadd.f32 %v544, %v642
        %v661 = vadd.f32 %v547, %v645
        %v662 = vadd.f32 %v552, %v650
        %v663 = vadd.f32 %v555, %v653
        %s664 = scalar_lea.vmem %s355, 16
        %v665 = vld [vmem:[%s664] sm:$0xff]
        %v666 = vld [vmem:[%s664 + $0x10] sm:$0xff]
        %v667 = vld [vmem:[%s664 + $0x20] sm:$0xff]
        %v668 = vld [vmem:[%s664 + $0x30] sm:$0xff]
        %v669 = vld [vmem:[%s664 + $0x40] sm:$0xff]
        %v670 = vld [vmem:[%s664 + $0x50] sm:$0xff]
        %v671 = vld [vmem:[%s664 + $0x60] sm:$0xff]
        %v672 = vld [vmem:[%s664 + $0x70] sm:$0xff]
        %v673 = vpack.c.bf16 %v666, %v665
        %v674 = vpack.c.bf16 %v668, %v667
        %v675 = vpack.c.bf16 %v670, %v669
        %v676 = vpack.c.bf16 %v672, %v671
        %s677 = scalar_lea.vmem [#allocation4], 24
        %v678 = vld [vmem:[%s677] sm:$0xf]
        %v679 = vld [vmem:[%s677 + $0x4] sm:$0xf]
        %v682 = vunpack.c.l.b16 %v678
        %v683 = vunpack.c.l.b16 %v679
        %v684 = vpack.c.b16 %v683, %v682
        %v687 = vsel %vm397, %v673, 0
        %v690 = vsel %vm397, %v674, 0
        %v693 = vsel %vm397, %v675, 0
        %v696 = vsel %vm397, %v676, 0
        %698 = vmatprep.subr.bf16.mxu0 0
        %699 = vmatpush1.bf16.msra.mxu0 %v684
        %700 = vmatprep.subr.bf16.mxu0 0
        %701 = vmatpush1.bf16.msra.mxu0 0
        %702 = vmatprep.subr.bf16.mxu0 0
        %703 = vmatpush1.bf16.msra.mxu0 0
        %704 = vmatprep.subr.bf16.mxu0 0
        %705 = vmatpush1.bf16.msra.mxu0 0
        %706 = vmatprep.subr.bf16.mxu0 0
        %707 = vmatpush1.bf16.msra.mxu0 0
        %708 = vmatprep.subr.bf16.mxu0 0
        %709 = vmatpush1.bf16.msra.mxu0 0
        %710 = vmatprep.subr.bf16.mxu0 0
        %711 = vmatpush1.bf16.msra.mxu0 0
        %712 = vmatprep.subr.bf16.mxu0 0
        %713 = vmatpush1.bf16.msra.mxu0 0
        %714 = vmatprep.subr.bf16.mxu0 0
        %715 = vmatpush1.bf16.msra.mxu0 0
        %716 = vmatprep.subr.bf16.mxu0 0
        %717 = vmatpush1.bf16.msra.mxu0 0
        %718 = vmatprep.subr.bf16.mxu0 0
        %719 = vmatpush1.bf16.msra.mxu0 0
        %720 = vmatprep.subr.bf16.mxu0 0
        %721 = vmatpush1.bf16.msra.mxu0 0
        %722 = vmatprep.subr.bf16.mxu0 0
        %723 = vmatpush1.bf16.msra.mxu0 0
        %724 = vmatprep.subr.bf16.mxu0 0
        %725 = vmatpush1.bf16.msra.mxu0 0
        %726 = vmatprep.subr.bf16.mxu0 0
        %727 = vmatpush1.bf16.msra.mxu0 0
        %728 = vmatprep.subr.bf16.mxu0 0
        %729 = vmatpush1.bf16.msra.mxu0 0
        %730 = vmatprep.mubr.bf16.mxu0 0
        %731 = vmatmul.mubr.bf16.gmra.mrb[0].mxu0 %v687
        %v732 = vpop.f32.mrb[0].mxu0
        %v733 = vadd.f32 0.0, %v732
        %v734 = vpop.f32.mrb[0].mxu0
        %v735 = vpop.f32.mrb[0].mxu0
        %v736 = vadd.f32 0.0, %v735
        %v737 = vpop.f32.mrb[0].mxu0
        %738 = vmatprep.mubr.bf16.mxu0 0
        %739 = vmatmul.mubr.bf16.gmra.mrb[0].mxu0 %v690
        %v740 = vpop.f32.mrb[0].mxu0
        %v741 = vadd.f32 0.0, %v740
        %v742 = vpop.f32.mrb[0].mxu0
        %v743 = vpop.f32.mrb[0].mxu0
        %v744 = vadd.f32 0.0, %v743
        %v745 = vpop.f32.mrb[0].mxu0
        %746 = vmatprep.mubr.bf16.mxu0 0
        %747 = vmatmul.mubr.bf16.gmra.mrb[0].mxu0 %v693
        %v748 = vpop.f32.mrb[0].mxu0
        %v749 = vadd.f32 0.0, %v748
        %v750 = vpop.f32.mrb[0].mxu0
        %v751 = vpop.f32.mrb[0].mxu0
        %v752 = vadd.f32 0.0, %v751
        %v753 = vpop.f32.mrb[0].mxu0
        %754 = vmatprep.mubr.bf16.mxu0 0
        %755 = vmatmul.mubr.bf16.gmra.mrb[0].mxu0 %v696
        %v756 = vpop.f32.mrb[0].mxu0
        %v757 = vadd.f32 0.0, %v756
        %v758 = vpop.f32.mrb[0].mxu0
        %v759 = vpop.f32.mrb[0].mxu0
        %v760 = vadd.f32 0.0, %v759
        %v761 = vpop.f32.mrb[0].mxu0
        %762 = vdwg.mxu0
        %v763 = vadd.f32 %v656, %v733
        %v764 = vadd.f32 %v657, %v736
        %v765 = vadd.f32 %v658, %v741
        %v766 = vadd.f32 %v659, %v744
        %v767 = vadd.f32 %v660, %v749
        %v768 = vadd.f32 %v661, %v752
        %v769 = vadd.f32 %v662, %v757
        %v770 = vadd.f32 %v663, %v760
        %v771 = vld [vmem:[%s664 + $0x1] sm:$0xff]
        %v772 = vld [vmem:[%s664 + $0x11] sm:$0xff]
        %v773 = vld [vmem:[%s664 + $0x21] sm:$0xff]
        %v774 = vld [vmem:[%s664 + $0x31] sm:$0xff]
        %v775 = vld [vmem:[%s664 + $0x41] sm:$0xff]
        %v776 = vld [vmem:[%s664 + $0x51] sm:$0xff]
        %v777 = vld [vmem:[%s664 + $0x61] sm:$0xff]
        %v778 = vld [vmem:[%s664 + $0x71] sm:$0xff]
        %v779 = vpack.c.bf16 %v772, %v771
        %v780 = vpack.c.bf16 %v774, %v773
        %v781 = vpack.c.bf16 %v776, %v775
        %v782 = vpack.c.bf16 %v778, %v777
        %s783 = scalar_lea.vmem [#allocation4], 32
        %v784 = vld [vmem:[%s783] sm:$0xf]
        %v785 = vld [vmem:[%s783 + $0x4] sm:$0xf]
        %v788 = vunpack.c.l.b16 %v784
        %v789 = vunpack.c.l.b16 %v785
        %v790 = vpack.c.b16 %v789, %v788
        %v793 = vsel %vm397, %v779, 0
        %v796 = vsel %vm397, %v780, 0
        %v799 = vsel %vm397, %v781, 0
        %v802 = vsel %vm397, %v782, 0
        %804 = vmatprep.subr.bf16.mxu0 0
        %805 = vmatpush1.bf16.msra.mxu0 %v790
        %806 = vmatprep.subr.bf16.mxu0 0
        %807 = vmatpush1.bf16.msra.mxu0 0
        %808 = vmatprep.subr.bf16.mxu0 0
        %809 = vmatpush1.bf16.msra.mxu0 0
        %810 = vmatprep.subr.bf16.mxu0 0
        %811 = vmatpush1.bf16.msra.mxu0 0
        %812 = vmatprep.subr.bf16.mxu0 0
        %813 = vmatpush1.bf16.msra.mxu0 0
        %814 = vmatprep.subr.bf16.mxu0 0
        %815 = vmatpush1.bf16.msra.mxu0 0
        %816 = vmatprep.subr.bf16.mxu0 0
        %817 = vmatpush1.bf16.msra.mxu0 0
        %818 = vmatprep.subr.bf16.mxu0 0
        %819 = vmatpush1.bf16.msra.mxu0 0
        %820 = vmatprep.subr.bf16.mxu0 0
        %821 = vmatpush1.bf16.msra.mxu0 0
        %822 = vmatprep.subr.bf16.mxu0 0
        %823 = vmatpush1.bf16.msra.mxu0 0
        %824 = vmatprep.subr.bf16.mxu0 0
        %825 = vmatpush1.bf16.msra.mxu0 0
        %826 = vmatprep.subr.bf16.mxu0 0
        %827 = vmatpush1.bf16.msra.mxu0 0
        %828 = vmatprep.subr.bf16.mxu0 0
        %829 = vmatpush1.bf16.msra.mxu0 0
        %830 = vmatprep.subr.bf16.mxu0 0
        %831 = vmatpush1.bf16.msra.mxu0 0
        %832 = vmatprep.subr.bf16.mxu0 0
        %833 = vmatpush1.bf16.msra.mxu0 0
        %834 = vmatprep.subr.bf16.mxu0 0
        %835 = vmatpush1.bf16.msra.mxu0 0
        %836 = vmatprep.mubr.bf16.mxu0 0
        %837 = vmatmul.mubr.bf16.gmra.mrb[0].mxu0 %v793
        %v838 = vpop.f32.mrb[0].mxu0
        %v839 = vadd.f32 0.0, %v838
        %v840 = vpop.f32.mrb[0].mxu0
        %v841 = vpop.f32.mrb[0].mxu0
        %v842 = vadd.f32 0.0, %v841
        %v843 = vpop.f32.mrb[0].mxu0
        %844 = vmatprep.mubr.bf16.mxu0 0
        %845 = vmatmul.mubr.bf16.gmra.mrb[0].mxu0 %v796
        %v846 = vpop.f32.mrb[0].mxu0
        %v847 = vadd.f32 0.0, %v846
        %v848 = vpop.f32.mrb[0].mxu0
        %v849 = vpop.f32.mrb[0].mxu0
        %v850 = vadd.f32 0.0, %v849
        %v851 = vpop.f32.mrb[0].mxu0
        %852 = vmatprep.mubr.bf16.mxu0 0
        %853 = vmatmul.mubr.bf16.gmra.mrb[0].mxu0 %v799
        %v854 = vpop.f32.mrb[0].mxu0
        %v855 = vadd.f32 0.0, %v854
        %v856 = vpop.f32.mrb[0].mxu0
        %v857 = vpop.f32.mrb[0].mxu0
        %v858 = vadd.f32 0.0, %v857
        %v859 = vpop.f32.mrb[0].mxu0
        %860 = vmatprep.mubr.bf16.mxu0 0
        %861 = vmatmul.mubr.bf16.gmra.mrb[0].mxu0 %v802
        %v862 = vpop.f32.mrb[0].mxu0
        %v863 = vadd.f32 0.0, %v862
        %v864 = vpop.f32.mrb[0].mxu0
        %v865 = vpop.f32.mrb[0].mxu0
        %v866 = vadd.f32 0.0, %v865
        %v867 = vpop.f32.mrb[0].mxu0
        %868 = vdwg.mxu0
        %v869 = vadd.f32 %v763, %v839
        %v870 = vadd.f32 %v764, %v842
        %v871 = vadd.f32 %v765, %v847
        %v872 = vadd.f32 %v766, %v850
        %v873 = vadd.f32 %v767, %v855
        %v874 = vadd.f32 %v768, %v858
        %v875 = vadd.f32 %v769, %v863
        %v876 = vadd.f32 %v770, %v866
        %v877 = vld [vmem:[%s664 + $0x2] sm:$0xff]
        %v878 = vld [vmem:[%s664 + $0x12] sm:$0xff]
        %v879 = vld [vmem:[%s664 + $0x22] sm:$0xff]
        %v880 = vld [vmem:[%s664 + $0x32] sm:$0xff]
        %v881 = vld [vmem:[%s664 + $0x42] sm:$0xff]
        %v882 = vld [vmem:[%s664 + $0x52] sm:$0xff]
        %v883 = vld [vmem:[%s664 + $0x62] sm:$0xff]
        %v884 = vld [vmem:[%s664 + $0x72] sm:$0xff]
        %v885 = vpack.c.bf16 %v878, %v877
        %v886 = vpack.c.bf16 %v880, %v879
        %v887 = vpack.c.bf16 %v882, %v881
        %v888 = vpack.c.bf16 %v884, %v883
        %s889 = scalar_lea.vmem [#allocation4], 40
        %v890 = vld [vmem:[%s889] sm:$0xf]
        %v891 = vld [vmem:[%s889 + $0x4] sm:$0xf]
        %v894 = vunpack.c.l.b16 %v890
        %v895 = vunpack.c.l.b16 %v891
        %v896 = vpack.c.b16 %v895, %v894
        %v899 = vsel %vm397, %v885, 0
        %v902 = vsel %vm397, %v886, 0
        %v905 = vsel %vm397, %v887, 0
        %v908 = vsel %vm397, %v888, 0
        %910 = vmatprep.subr.bf16.mxu0 0
        %911 = vmatpush1.bf16.msra.mxu0 %v896
        %912 = vmatprep.subr.bf16.mxu0 0
        %913 = vmatpush1.bf16.msra.mxu0 0
        %914 = vmatprep.subr.bf16.mxu0 0
        %915 = vmatpush1.bf16.msra.mxu0 0
        %916 = vmatprep.subr.bf16.mxu0 0
        %917 = vmatpush1.bf16.msra.mxu0 0
        %918 = vmatprep.subr.bf16.mxu0 0
        %919 = vmatpush1.bf16.msra.mxu0 0
        %920 = vmatprep.subr.bf16.mxu0 0
        %921 = vmatpush1.bf16.msra.mxu0 0
        %922 = vmatprep.subr.bf16.mxu0 0
        %923 = vmatpush1.bf16.msra.mxu0 0
        %924 = vmatprep.subr.bf16.mxu0 0
        %925 = vmatpush1.bf16.msra.mxu0 0
        %926 = vmatprep.subr.bf16.mxu0 0
        %927 = vmatpush1.bf16.msra.mxu0 0
        %928 = vmatprep.subr.bf16.mxu0 0
        %929 = vmatpush1.bf16.msra.mxu0 0
        %930 = vmatprep.subr.bf16.mxu0 0
        %931 = vmatpush1.bf16.msra.mxu0 0
        %932 = vmatprep.subr.bf16.mxu0 0
        %933 = vmatpush1.bf16.msra.mxu0 0
        %934 = vmatprep.subr.bf16.mxu0 0
        %935 = vmatpush1.bf16.msra.mxu0 0
        %936 = vmatprep.subr.bf16.mxu0 0
        %937 = vmatpush1.bf16.msra.mxu0 0
        %938 = vmatprep.subr.bf16.mxu0 0
        %939 = vmatpush1.bf16.msra.mxu0 0
        %940 = vmatprep.subr.bf16.mxu0 0
        %941 = vmatpush1.bf16.msra.mxu0 0
        %942 = vmatprep.mubr.bf16.mxu0 0
        %943 = vmatmul.mubr.bf16.gmra.mrb[0].mxu0 %v899
        %v944 = vpop.f32.mrb[0].mxu0
        %v945 = vadd.f32 0.0, %v944
        %v946 = vpop.f32.mrb[0].mxu0
        %v947 = vpop.f32.mrb[0].mxu0
        %v948 = vadd.f32 0.0, %v947
        %v949 = vpop.f32.mrb[0].mxu0
        %950 = vmatprep.mubr.bf16.mxu0 0
        %951 = vmatmul.mubr.bf16.gmra.mrb[0].mxu0 %v902
        %v952 = vpop.f32.mrb[0].mxu0
        %v953 = vadd.f32 0.0, %v952
        %v954 = vpop.f32.mrb[0].mxu0
        %v955 = vpop.f32.mrb[0].mxu0
        %v956 = vadd.f32 0.0, %v955
        %v957 = vpop.f32.mrb[0].mxu0
        %958 = vmatprep.mubr.bf16.mxu0 0
        %959 = vmatmul.mubr.bf16.gmra.mrb[0].mxu0 %v905
        %v960 = vpop.f32.mrb[0].mxu0
        %v961 = vadd.f32 0.0, %v960
        %v962 = vpop.f32.mrb[0].mxu0
        %v963 = vpop.f32.mrb[0].mxu0
        %v964 = vadd.f32 0.0, %v963
        %v965 = vpop.f32.mrb[0].mxu0
        %966 = vmatprep.mubr.bf16.mxu0 0
        %967 = vmatmul.mubr.bf16.gmra.mrb[0].mxu0 %v908
        %v968 = vpop.f32.mrb[0].mxu0
        %v969 = vadd.f32 0.0, %v968
        %v970 = vpop.f32.mrb[0].mxu0
        %v971 = vpop.f32.mrb[0].mxu0
        %v972 = vadd.f32 0.0, %v971
        %v973 = vpop.f32.mrb[0].mxu0
        %974 = vdwg.mxu0
        %v975 = vadd.f32 %v869, %v945
        %v976 = vadd.f32 %v870, %v948
        %v977 = vadd.f32 %v871, %v953
        %v978 = vadd.f32 %v872, %v956
        %v979 = vadd.f32 %v873, %v961
        %v980 = vadd.f32 %v874, %v964
        %v981 = vadd.f32 %v875, %v969
        %v982 = vadd.f32 %v876, %v972
        %s983 = scalar_lea.vmem %s355, 32
        %v984 = vld [vmem:[%s983] sm:$0xff]
        %v985 = vld [vmem:[%s983 + $0x10] sm:$0xff]
        %v986 = vld [vmem:[%s983 + $0x20] sm:$0xff]
        %v987 = vld [vmem:[%s983 + $0x30] sm:$0xff]
        %v988 = vld [vmem:[%s983 + $0x40] sm:$0xff]
        %v989 = vld [vmem:[%s983 + $0x50] sm:$0xff]
        %v990 = vld [vmem:[%s983 + $0x60] sm:$0xff]
        %v991 = vld [vmem:[%s983 + $0x70] sm:$0xff]
        %v992 = vpack.c.bf16 %v985, %v984
        %v993 = vpack.c.bf16 %v987, %v986
        %v994 = vpack.c.bf16 %v989, %v988
        %v995 = vpack.c.bf16 %v991, %v990
        %s996 = scalar_lea.vmem [#allocation4], 48
        %v997 = vld [vmem:[%s996] sm:$0xf]
        %v998 = vld [vmem:[%s996 + $0x4] sm:$0xf]
        %v1001 = vunpack.c.l.b16 %v997
        %v1002 = vunpack.c.l.b16 %v998
        %v1003 = vpack.c.b16 %v1002, %v1001
        %v1006 = vsel %vm397, %v992, 0
        %v1009 = vsel %vm397, %v993, 0
        %v1012 = vsel %vm397, %v994, 0
        %v1015 = vsel %vm397, %v995, 0
        %1017 = vmatprep.subr.bf16.mxu0 0
        %1018 = vmatpush1.bf16.msra.mxu0 %v1003
        %1019 = vmatprep.subr.bf16.mxu0 0
        %1020 = vmatpush1.bf16.msra.mxu0 0
        %1021 = vmatprep.subr.bf16.mxu0 0
        %1022 = vmatpush1.bf16.msra.mxu0 0
        %1023 = vmatprep.subr.bf16.mxu0 0
        %1024 = vmatpush1.bf16.msra.mxu0 0
        %1025 = vmatprep.subr.bf16.mxu0 0
        %1026 = vmatpush1.bf16.msra.mxu0 0
        %1027 = vmatprep.subr.bf16.mxu0 0
        %1028 = vmatpush1.bf16.msra.mxu0 0
        %1029 = vmatprep.subr.bf16.mxu0 0
        %1030 = vmatpush1.bf16.msra.mxu0 0
        %1031 = vmatprep.subr.bf16.mxu0 0
        %1032 = vmatpush1.bf16.msra.mxu0 0
        %1033 = vmatprep.subr.bf16.mxu0 0
        %1034 = vmatpush1.bf16.msra.mxu0 0
        %1035 = vmatprep.subr.bf16.mxu0 0
        %1036 = vmatpush1.bf16.msra.mxu0 0
        %1037 = vmatprep.subr.bf16.mxu0 0
        %1038 = vmatpush1.bf16.msra.mxu0 0
        %1039 = vmatprep.subr.bf16.mxu0 0
        %1040 = vmatpush1.bf16.msra.mxu0 0
        %1041 = vmatprep.subr.bf16.mxu0 0
        %1042 = vmatpush1.bf16.msra.mxu0 0
        %1043 = vmatprep.subr.bf16.mxu0 0
        %1044 = vmatpush1.bf16.msra.mxu0 0
        %1045 = vmatprep.subr.bf16.mxu0 0
        %1046 = vmatpush1.bf16.msra.mxu0 0
        %1047 = vmatprep.subr.bf16.mxu0 0
        %1048 = vmatpush1.bf16.msra.mxu0 0
        %1049 = vmatprep.mubr.bf16.mxu0 0
        %1050 = vmatmul.mubr.bf16.gmra.mrb[0].mxu0 %v1006
        %v1051 = vpop.f32.mrb[0].mxu0
        %v1052 = vadd.f32 0.0, %v1051
        %v1053 = vpop.f32.mrb[0].mxu0
        %v1054 = vpop.f32.mrb[0].mxu0
        %v1055 = vadd.f32 0.0, %v1054
        %v1056 = vpop.f32.mrb[0].mxu0
        %1057 = vmatprep.mubr.bf16.mxu0 0
        %1058 = vmatmul.mubr.bf16.gmra.mrb[0].mxu0 %v1009
        %v1059 = vpop.f32.mrb[0].mxu0
        %v1060 = vadd.f32 0.0, %v1059
        %v1061 = vpop.f32.mrb[0].mxu0
        %v1062 = vpop.f32.mrb[0].mxu0
        %v1063 = vadd.f32 0.0, %v1062
        %v1064 = vpop.f32.mrb[0].mxu0
        %1065 = vmatprep.mubr.bf16.mxu0 0
        %1066 = vmatmul.mubr.bf16.gmra.mrb[0].mxu0 %v1012
        %v1067 = vpop.f32.mrb[0].mxu0
        %v1068 = vadd.f32 0.0, %v1067
        %v1069 = vpop.f32.mrb[0].mxu0
        %v1070 = vpop.f32.mrb[0].mxu0
        %v1071 = vadd.f32 0.0, %v1070
        %v1072 = vpop.f32.mrb[0].mxu0
        %1073 = vmatprep.mubr.bf16.mxu0 0
        %1074 = vmatmul.mubr.bf16.gmra.mrb[0].mxu0 %v1015
        %v1075 = vpop.f32.mrb[0].mxu0
        %v1076 = vadd.f32 0.0, %v1075
        %v1077 = vpop.f32.mrb[0].mxu0
        %v1078 = vpop.f32.mrb[0].mxu0
        %v1079 = vadd.f32 0.0, %v1078
        %v1080 = vpop.f32.mrb[0].mxu0
        %1081 = vdwg.mxu0
        %v1082 = vadd.f32 %v975, %v1052
        %v1083 = vadd.f32 %v976, %v1055
        %v1084 = vadd.f32 %v977, %v1060
        %v1085 = vadd.f32 %v978, %v1063
        %v1086 = vadd.f32 %v979, %v1068
        %v1087 = vadd.f32 %v980, %v1071
        %v1088 = vadd.f32 %v981, %v1076
        %v1089 = vadd.f32 %v982, %v1079
        %v1090 = vld [vmem:[%s983 + $0x1] sm:$0xff]
        %v1091 = vld [vmem:[%s983 + $0x11] sm:$0xff]
        %v1092 = vld [vmem:[%s983 + $0x21] sm:$0xff]
        %v1093 = vld [vmem:[%s983 + $0x31] sm:$0xff]
        %v1094 = vld [vmem:[%s983 + $0x41] sm:$0xff]
        %v1095 = vld [vmem:[%s983 + $0x51] sm:$0xff]
        %v1096 = vld [vmem:[%s983 + $0x61] sm:$0xff]
        %v1097 = vld [vmem:[%s983 + $0x71] sm:$0xff]
        %v1098 = vpack.c.bf16 %v1091, %v1090
        %v1099 = vpack.c.bf16 %v1093, %v1092
        %v1100 = vpack.c.bf16 %v1095, %v1094
        %v1101 = vpack.c.bf16 %v1097, %v1096
        %s1102 = scalar_lea.vmem [#allocation4], 56
        %v1103 = vld [vmem:[%s1102] sm:$0xf]
        %v1104 = vld [vmem:[%s1102 + $0x4] sm:$0xf]
        %v1107 = vunpack.c.l.b16 %v1103
        %v1108 = vunpack.c.l.b16 %v1104
        %v1109 = vpack.c.b16 %v1108, %v1107
        %v1112 = vsel %vm397, %v1098, 0
        %v1115 = vsel %vm397, %v1099, 0
        %v1118 = vsel %vm397, %v1100, 0
        %v1121 = vsel %vm397, %v1101, 0
        %1123 = vmatprep.subr.bf16.mxu0 0
        %1124 = vmatpush1.bf16.msra.mxu0 %v1109
        %1125 = vmatprep.subr.bf16.mxu0 0
        %1126 = vmatpush1.bf16.msra.mxu0 0
        %1127 = vmatprep.subr.bf16.mxu0 0
        %1128 = vmatpush1.bf16.msra.mxu0 0
        %1129 = vmatprep.subr.bf16.mxu0 0
        %1130 = vmatpush1.bf16.msra.mxu0 0
        %1131 = vmatprep.subr.bf16.mxu0 0
        %1132 = vmatpush1.bf16.msra.mxu0 0
        %1133 = vmatprep.subr.bf16.mxu0 0
        %1134 = vmatpush1.bf16.msra.mxu0 0
        %1135 = vmatprep.subr.bf16.mxu0 0
        %1136 = vmatpush1.bf16.msra.mxu0 0
        %1137 = vmatprep.subr.bf16.mxu0 0
        %1138 = vmatpush1.bf16.msra.mxu0 0
        %1139 = vmatprep.subr.bf16.mxu0 0
        %1140 = vmatpush1.bf16.msra.mxu0 0
        %1141 = vmatprep.subr.bf16.mxu0 0
        %1142 = vmatpush1.bf16.msra.mxu0 0
        %1143 = vmatprep.subr.bf16.mxu0 0
        %1144 = vmatpush1.bf16.msra.mxu0 0
        %1145 = vmatprep.subr.bf16.mxu0 0
        %1146 = vmatpush1.bf16.msra.mxu0 0
        %1147 = vmatprep.subr.bf16.mxu0 0
        %1148 = vmatpush1.bf16.msra.mxu0 0
        %1149 = vmatprep.subr.bf16.mxu0 0
        %1150 = vmatpush1.bf16.msra.mxu0 0
        %1151 = vmatprep.subr.bf16.mxu0 0
        %1152 = vmatpush1.bf16.msra.mxu0 0
        %1153 = vmatprep.subr.bf16.mxu0 0
        %1154 = vmatpush1.bf16.msra.mxu0 0
        %1155 = vmatprep.mubr.bf16.mxu0 0
        %1156 = vmatmul.mubr.bf16.gmra.mrb[0].mxu0 %v1112
        %v1157 = vpop.f32.mrb[0].mxu0
        %v1158 = vadd.f32 0.0, %v1157
        %v1159 = vpop.f32.mrb[0].mxu0
        %v1160 = vpop.f32.mrb[0].mxu0
        %v1161 = vadd.f32 0.0, %v1160
        %v1162 = vpop.f32.mrb[0].mxu0
        %1163 = vmatprep.mubr.bf16.mxu0 0
        %1164 = vmatmul.mubr.bf16.gmra.mrb[0].mxu0 %v1115
        %v1165 = vpop.f32.mrb[0].mxu0
        %v1166 = vadd.f32 0.0, %v1165
        %v1167 = vpop.f32.mrb[0].mxu0
        %v1168 = vpop.f32.mrb[0].mxu0
        %v1169 = vadd.f32 0.0, %v1168
        %v1170 = vpop.f32.mrb[0].mxu0
        %1171 = vmatprep.mubr.bf16.mxu0 0
        %1172 = vmatmul.mubr.bf16.gmra.mrb[0].mxu0 %v1118
        %v1173 = vpop.f32.mrb[0].mxu0
        %v1174 = vadd.f32 0.0, %v1173
        %v1175 = vpop.f32.mrb[0].mxu0
        %v1176 = vpop.f32.mrb[0].mxu0
        %v1177 = vadd.f32 0.0, %v1176
        %v1178 = vpop.f32.mrb[0].mxu0
        %1179 = vmatprep.mubr.bf16.mxu0 0
        %1180 = vmatmul.mubr.bf16.gmra.mrb[0].mxu0 %v1121
        %v1181 = vpop.f32.mrb[0].mxu0
        %v1182 = vadd.f32 0.0, %v1181
        %v1183 = vpop.f32.mrb[0].mxu0
        %v1184 = vpop.f32.mrb[0].mxu0
        %v1185 = vadd.f32 0.0, %v1184
        %v1186 = vpop.f32.mrb[0].mxu0
        %1187 = vdwg.mxu0
        %v1188 = vadd.f32 %v1082, %v1158
        %v1189 = vadd.f32 %v1083, %v1161
        %v1190 = vadd.f32 %v1084, %v1166
        %v1191 = vadd.f32 %v1085, %v1169
        %v1192 = vadd.f32 %v1086, %v1174
        %v1193 = vadd.f32 %v1087, %v1177
        %v1194 = vadd.f32 %v1088, %v1182
        %v1195 = vadd.f32 %v1089, %v1185
        %v1196 = vld [vmem:[%s983 + $0x2] sm:$0xff]
        %v1197 = vld [vmem:[%s983 + $0x12] sm:$0xff]
        %v1198 = vld [vmem:[%s983 + $0x22] sm:$0xff]
        %v1199 = vld [vmem:[%s983 + $0x32] sm:$0xff]
        %v1200 = vld [vmem:[%s983 + $0x42] sm:$0xff]
        %v1201 = vld [vmem:[%s983 + $0x52] sm:$0xff]
        %v1202 = vld [vmem:[%s983 + $0x62] sm:$0xff]
        %v1203 = vld [vmem:[%s983 + $0x72] sm:$0xff]
        %v1204 = vpack.c.bf16 %v1197, %v1196
        %v1205 = vpack.c.bf16 %v1199, %v1198
        %v1206 = vpack.c.bf16 %v1201, %v1200
        %v1207 = vpack.c.bf16 %v1203, %v1202
        %s1208 = scalar_lea.vmem [#allocation4], 64
        %v1209 = vld [vmem:[%s1208] sm:$0xf]
        %v1210 = vld [vmem:[%s1208 + $0x4] sm:$0xf]
        %v1213 = vunpack.c.l.b16 %v1209
        %v1214 = vunpack.c.l.b16 %v1210
        %v1215 = vpack.c.b16 %v1214, %v1213
        %v1218 = vsel %vm397, %v1204, 0
        %v1221 = vsel %vm397, %v1205, 0
        %v1224 = vsel %vm397, %v1206, 0
        %v1227 = vsel %vm397, %v1207, 0
        %1229 = vmatprep.subr.bf16.mxu0 0
        %1230 = vmatpush1.bf16.msra.mxu0 %v1215
        %1231 = vmatprep.subr.bf16.mxu0 0
        %1232 = vmatpush1.bf16.msra.mxu0 0
        %1233 = vmatprep.subr.bf16.mxu0 0
        %1234 = vmatpush1.bf16.msra.mxu0 0
        %1235 = vmatprep.subr.bf16.mxu0 0
        %1236 = vmatpush1.bf16.msra.mxu0 0
        %1237 = vmatprep.subr.bf16.mxu0 0
        %1238 = vmatpush1.bf16.msra.mxu0 0
        %1239 = vmatprep.subr.bf16.mxu0 0
        %1240 = vmatpush1.bf16.msra.mxu0 0
        %1241 = vmatprep.subr.bf16.mxu0 0
        %1242 = vmatpush1.bf16.msra.mxu0 0
        %1243 = vmatprep.subr.bf16.mxu0 0
        %1244 = vmatpush1.bf16.msra.mxu0 0
        %1245 = vmatprep.subr.bf16.mxu0 0
        %1246 = vmatpush1.bf16.msra.mxu0 0
        %1247 = vmatprep.subr.bf16.mxu0 0
        %1248 = vmatpush1.bf16.msra.mxu0 0
        %1249 = vmatprep.subr.bf16.mxu0 0
        %1250 = vmatpush1.bf16.msra.mxu0 0
        %1251 = vmatprep.subr.bf16.mxu0 0
        %1252 = vmatpush1.bf16.msra.mxu0 0
        %1253 = vmatprep.subr.bf16.mxu0 0
        %1254 = vmatpush1.bf16.msra.mxu0 0
        %1255 = vmatprep.subr.bf16.mxu0 0
        %1256 = vmatpush1.bf16.msra.mxu0 0
        %1257 = vmatprep.subr.bf16.mxu0 0
        %1258 = vmatpush1.bf16.msra.mxu0 0
        %1259 = vmatprep.subr.bf16.mxu0 0
        %1260 = vmatpush1.bf16.msra.mxu0 0
        %1261 = vmatprep.mubr.bf16.mxu0 0
        %1262 = vmatmul.mubr.bf16.gmra.mrb[0].mxu0 %v1218
        %v1263 = vpop.f32.mrb[0].mxu0
        %v1264 = vadd.f32 0.0, %v1263
        %v1265 = vpop.f32.mrb[0].mxu0
        %v1266 = vpop.f32.mrb[0].mxu0
        %v1267 = vadd.f32 0.0, %v1266
        %v1268 = vpop.f32.mrb[0].mxu0
        %1269 = vmatprep.mubr.bf16.mxu0 0
        %1270 = vmatmul.mubr.bf16.gmra.mrb[0].mxu0 %v1221
        %v1271 = vpop.f32.mrb[0].mxu0
        %v1272 = vadd.f32 0.0, %v1271
        %v1273 = vpop.f32.mrb[0].mxu0
        %v1274 = vpop.f32.mrb[0].mxu0
        %v1275 = vadd.f32 0.0, %v1274
        %v1276 = vpop.f32.mrb[0].mxu0
        %1277 = vmatprep.mubr.bf16.mxu0 0
        %1278 = vmatmul.mubr.bf16.gmra.mrb[0].mxu0 %v1224
        %v1279 = vpop.f32.mrb[0].mxu0
        %v1280 = vadd.f32 0.0, %v1279
        %v1281 = vpop.f32.mrb[0].mxu0
        %v1282 = vpop.f32.mrb[0].mxu0
        %v1283 = vadd.f32 0.0, %v1282
        %v1284 = vpop.f32.mrb[0].mxu0
        %1285 = vmatprep.mubr.bf16.mxu0 0
        %1286 = vmatmul.mubr.bf16.gmra.mrb[0].mxu0 %v1227
        %v1287 = vpop.f32.mrb[0].mxu0
        %v1288 = vadd.f32 0.0, %v1287
        %v1289 = vpop.f32.mrb[0].mxu0
        %v1290 = vpop.f32.mrb[0].mxu0
        %v1291 = vadd.f32 0.0, %v1290
        %v1292 = vpop.f32.mrb[0].mxu0
        %1293 = vdwg.mxu0
        %v1294 = vadd.f32 %v1188, %v1264
        %v1295 = vadd.f32 %v1189, %v1267
        %v1296 = vadd.f32 %v1190, %v1272
        %v1297 = vadd.f32 %v1191, %v1275
        %v1298 = vadd.f32 %v1192, %v1280
        %v1299 = vadd.f32 %v1193, %v1283
        %v1300 = vadd.f32 %v1194, %v1288
        %v1301 = vadd.f32 %v1195, %v1291
        %v1302 = vld [vmem:[#allocation6] sm:$0x1]
        %v1304 = vlaneseq
        %v1305 = vshrl.u32 %v1304, 7
        %v1306 = vsub.s32 0, %v1305
        %v1307 = vrot.slane %v1302, %v1306
        %v1309 = vadd.f32 %v1294, %v1307
        %v1310 = vadd.f32 %v1295, %v1307
        %v1311 = vadd.f32 %v1296, %v1307
        %v1312 = vadd.f32 %v1297, %v1307
        %v1313 = vadd.f32 %v1298, %v1307
        %v1314 = vadd.f32 %v1299, %v1307
        %v1315 = vadd.f32 %v1300, %v1307
        %v1316 = vadd.f32 %v1301, %v1307
        %v1317 = vmax.f32 %v1309, 0.0
        %v1318 = vmax.f32 %v1310, 0.0
        %v1319 = vmax.f32 %v1311, 0.0
        %v1320 = vmax.f32 %v1312, 0.0
        %v1321 = vmax.f32 %v1313, 0.0
        %v1322 = vmax.f32 %v1314, 0.0
        %v1323 = vmax.f32 %v1315, 0.0
        %v1324 = vmax.f32 %v1316, 0.0
        %1325 = vst [vmem:[#allocation2] sm:$0xff] 0.0
        %1326 = vst [vmem:[#allocation2 + $0x8] sm:$0x3] 0.0
        %1327 = vst [vmem:[#allocation2 + $0x10] sm:$0xff] 0.0
        %1328 = vst [vmem:[#allocation2 + $0x18] sm:$0x3] 0.0
        %1329 = vst [vmem:[#allocation2 + $0x20] sm:$0xff] 0.0
        %1330 = vst [vmem:[#allocation2 + $0x28] sm:$0x3] 0.0
        %1331 = vst [vmem:[#allocation2 + $0x30] sm:$0xff] 0.0
        %1332 = vst [vmem:[#allocation2 + $0x38] sm:$0x3] 0.0
        %1333 = vst [vmem:[#allocation2 + $0x40] sm:$0xff] 0.0
        %1334 = vst [vmem:[#allocation2 + $0x48] sm:$0x3] 0.0
        %1335 = vst [vmem:[#allocation2 + $0x50] sm:$0xff] 0.0
        %1336 = vst [vmem:[#allocation2 + $0x58] sm:$0x3] 0.0
        %1337 = vst [vmem:[#allocation2 + $0x60] sm:$0xff] 0.0
        %1338 = vst [vmem:[#allocation2 + $0x68] sm:$0x3] 0.0
        %1339 = vst [vmem:[#allocation2 + $0x70] sm:$0xff] 0.0
        %1340 = vst [vmem:[#allocation2 + $0x78] sm:$0x3] 0.0
        %1341 = vst [vmem:[#allocation2 + $0x80] sm:$0xff] 0.0
        %1342 = vst [vmem:[#allocation2 + $0x88] sm:$0x3] 0.0
        %1343 = vst [vmem:[#allocation2 + $0x90] sm:$0xff] 0.0
        %1344 = vst [vmem:[#allocation2 + $0x98] sm:$0x3] 0.0
        %s1345 = scalar_lea.vmem [#allocation2], 16
        %1346 = vst [vmem:[%s1345 + $0x1] sm:$0xff] %v1317
        %1347 = vst [vmem:[%s1345 + $0x11] sm:$0xff] %v1318
        %1348 = vst [vmem:[%s1345 + $0x21] sm:$0xff] %v1319
        %1349 = vst [vmem:[%s1345 + $0x31] sm:$0xff] %v1320
        %1350 = vst [vmem:[%s1345 + $0x41] sm:$0xff] %v1321
        %1351 = vst [vmem:[%s1345 + $0x51] sm:$0xff] %v1322
        %1352 = vst [vmem:[%s1345 + $0x61] sm:$0xff] %v1323
        %1353 = vst [vmem:[%s1345 + $0x71] sm:$0xff] %v1324
        %v1354 = vld [vmem:[#allocation2] sm:$0xff]
        %v1355 = vld [vmem:[#allocation2 + $0x10] sm:$0xff]
        %v1356 = vld [vmem:[#allocation2 + $0x20] sm:$0xff]
        %v1357 = vld [vmem:[#allocation2 + $0x30] sm:$0xff]
        %v1358 = vld [vmem:[#allocation2 + $0x40] sm:$0xff]
        %v1359 = vld [vmem:[#allocation2 + $0x50] sm:$0xff]
        %v1360 = vld [vmem:[#allocation2 + $0x60] sm:$0xff]
        %v1361 = vld [vmem:[#allocation2 + $0x70] sm:$0xff]
        %v1362 = vpack.c.bf16 %v1355, %v1354
        %v1363 = vpack.c.bf16 %v1357, %v1356
        %v1364 = vpack.c.bf16 %v1359, %v1358
        %v1365 = vpack.c.bf16 %v1361, %v1360
        %v1366 = vld [vmem:[#allocation2 + $0x1] sm:$0xff]
        %v1367 = vld [vmem:[#allocation2 + $0x11] sm:$0xff]
        %v1368 = vld [vmem:[#allocation2 + $0x21] sm:$0xff]
        %v1369 = vld [vmem:[#allocation2 + $0x31] sm:$0xff]
        %v1370 = vld [vmem:[#allocation2 + $0x41] sm:$0xff]
        %v1371 = vld [vmem:[#allocation2 + $0x51] sm:$0xff]
        %v1372 = vld [vmem:[#allocation2 + $0x61] sm:$0xff]
        %v1373 = vld [vmem:[#allocation2 + $0x71] sm:$0xff]
        %v1374 = vpack.c.bf16 %v1367, %v1366
        %v1375 = vpack.c.bf16 %v1369, %v1368
        %v1376 = vpack.c.bf16 %v1371, %v1370
        %v1377 = vpack.c.bf16 %v1373, %v1372
        %v1378 = vld [vmem:[#allocation2 + $0x2] sm:$0xff]
        %v1379 = vld [vmem:[#allocation2 + $0x12] sm:$0xff]
        %v1380 = vld [vmem:[#allocation2 + $0x22] sm:$0xff]
        %v1381 = vld [vmem:[#allocation2 + $0x32] sm:$0xff]
        %v1382 = vld [vmem:[#allocation2 + $0x42] sm:$0xff]
        %v1383 = vld [vmem:[#allocation2 + $0x52] sm:$0xff]
        %v1384 = vld [vmem:[#allocation2 + $0x62] sm:$0xff]
        %v1385 = vld [vmem:[#allocation2 + $0x72] sm:$0xff]
        %v1386 = vpack.c.bf16 %v1379, %v1378
        %v1387 = vpack.c.bf16 %v1381, %v1380
        %v1388 = vpack.c.bf16 %v1383, %v1382
        %v1389 = vpack.c.bf16 %v1385, %v1384
        %v1390 = vld [vmem:[%s1345] sm:$0xff]
        %v1391 = vld [vmem:[%s1345 + $0x10] sm:$0xff]
        %v1392 = vld [vmem:[%s1345 + $0x20] sm:$0xff]
        %v1393 = vld [vmem:[%s1345 + $0x30] sm:$0xff]
        %v1394 = vld [vmem:[%s1345 + $0x40] sm:$0xff]
        %v1395 = vld [vmem:[%s1345 + $0x50] sm:$0xff]
        %v1396 = vld [vmem:[%s1345 + $0x60] sm:$0xff]
        %v1397 = vld [vmem:[%s1345 + $0x70] sm:$0xff]
        %v1398 = vpack.c.bf16 %v1391, %v1390
        %v1399 = vpack.c.bf16 %v1393, %v1392
        %v1400 = vpack.c.bf16 %v1395, %v1394
        %v1401 = vpack.c.bf16 %v1397, %v1396
        %v1402 = vld [vmem:[%s1345 + $0x1] sm:$0xff]
        %v1403 = vld [vmem:[%s1345 + $0x11] sm:$0xff]
        %v1404 = vld [vmem:[%s1345 + $0x21] sm:$0xff]
        %v1405 = vld [vmem:[%s1345 + $0x31] sm:$0xff]
        %v1406 = vld [vmem:[%s1345 + $0x41] sm:$0xff]
        %v1407 = vld [vmem:[%s1345 + $0x51] sm:$0xff]
        %v1408 = vld [vmem:[%s1345 + $0x61] sm:$0xff]
        %v1409 = vld [vmem:[%s1345 + $0x71] sm:$0xff]
        %v1410 = vpack.c.bf16 %v1403, %v1402
        %v1411 = vpack.c.bf16 %v1405, %v1404
        %v1412 = vpack.c.bf16 %v1407, %v1406
        %v1413 = vpack.c.bf16 %v1409, %v1408
        %v1414 = vld [vmem:[%s1345 + $0x2] sm:$0xff]
        %v1415 = vld [vmem:[%s1345 + $0x12] sm:$0xff]
        %v1416 = vld [vmem:[%s1345 + $0x22] sm:$0xff]
        %v1417 = vld [vmem:[%s1345 + $0x32] sm:$0xff]
        %v1418 = vld [vmem:[%s1345 + $0x42] sm:$0xff]
        %v1419 = vld [vmem:[%s1345 + $0x52] sm:$0xff]
        %v1420 = vld [vmem:[%s1345 + $0x62] sm:$0xff]
        %v1421 = vld [vmem:[%s1345 + $0x72] sm:$0xff]
        %v1422 = vpack.c.bf16 %v1415, %v1414
        %v1423 = vpack.c.bf16 %v1417, %v1416
        %v1424 = vpack.c.bf16 %v1419, %v1418
        %v1425 = vpack.c.bf16 %v1421, %v1420
        %s1426 = scalar_lea.vmem [#allocation2], 32
        %v1427 = vld [vmem:[%s1426] sm:$0xff]
        %v1428 = vld [vmem:[%s1426 + $0x10] sm:$0xff]
        %v1429 = vld [vmem:[%s1426 + $0x20] sm:$0xff]
        %v1430 = vld [vmem:[%s1426 + $0x30] sm:$0xff]
        %v1431 = vld [vmem:[%s1426 + $0x40] sm:$0xff]
        %v1432 = vld [vmem:[%s1426 + $0x50] sm:$0xff]
        %v1433 = vld [vmem:[%s1426 + $0x60] sm:$0xff]
        %v1434 = vld [vmem:[%s1426 + $0x70] sm:$0xff]
        %v1435 = vpack.c.bf16 %v1428, %v1427
        %v1436 = vpack.c.bf16 %v1430, %v1429
        %v1437 = vpack.c.bf16 %v1432, %v1431
        %v1438 = vpack.c.bf16 %v1434, %v1433
        %v1439 = vld [vmem:[%s1426 + $0x1] sm:$0xff]
        %v1440 = vld [vmem:[%s1426 + $0x11] sm:$0xff]
        %v1441 = vld [vmem:[%s1426 + $0x21] sm:$0xff]
        %v1442 = vld [vmem:[%s1426 + $0x31] sm:$0xff]
        %v1443 = vld [vmem:[%s1426 + $0x41] sm:$0xff]
        %v1444 = vld [vmem:[%s1426 + $0x51] sm:$0xff]
        %v1445 = vld [vmem:[%s1426 + $0x61] sm:$0xff]
        %v1446 = vld [vmem:[%s1426 + $0x71] sm:$0xff]
        %v1447 = vpack.c.bf16 %v1440, %v1439
        %v1448 = vpack.c.bf16 %v1442, %v1441
        %v1449 = vpack.c.bf16 %v1444, %v1443
        %v1450 = vpack.c.bf16 %v1446, %v1445
        %v1451 = vld [vmem:[%s1426 + $0x2] sm:$0xff]
        %v1452 = vld [vmem:[%s1426 + $0x12] sm:$0xff]
        %v1453 = vld [vmem:[%s1426 + $0x22] sm:$0xff]
        %v1454 = vld [vmem:[%s1426 + $0x32] sm:$0xff]
        %v1455 = vld [vmem:[%s1426 + $0x42] sm:$0xff]
        %v1456 = vld [vmem:[%s1426 + $0x52] sm:$0xff]
        %v1457 = vld [vmem:[%s1426 + $0x62] sm:$0xff]
        %v1458 = vld [vmem:[%s1426 + $0x72] sm:$0xff]
        %v1459 = vpack.c.bf16 %v1452, %v1451
        %v1460 = vpack.c.bf16 %v1454, %v1453
        %v1461 = vpack.c.bf16 %v1456, %v1455
        %v1462 = vpack.c.bf16 %v1458, %v1457
        %v1463 = vld [vmem:[#allocation8] sm:$0xff]
        %v1464 = vld [vmem:[#allocation8 + $0x8] sm:$0xff]
        %v1465 = vld [vmem:[#allocation8 + $0x10] sm:$0xff]
        %v1466 = vld [vmem:[#allocation8 + $0x18] sm:$0xff]
        %v1467 = vld [vmem:[#allocation8 + $0x20] sm:$0xff]
        %v1468 = vld [vmem:[#allocation8 + $0x28] sm:$0xff]
        %v1469 = vld [vmem:[#allocation8 + $0x30] sm:$0xff]
        %v1470 = vld [vmem:[#allocation8 + $0x38] sm:$0xff]
        %v1471 = vld [vmem:[#allocation8 + $0x40] sm:$0xff]
        %v1472 = vld [vmem:[#allocation8 + $0x48] sm:$0xff]
        %v1473 = vld [vmem:[#allocation8 + $0x50] sm:$0xff]
        %v1474 = vld [vmem:[#allocation8 + $0x58] sm:$0xff]
        %v1475 = vld [vmem:[#allocation8 + $0x60] sm:$0xff]
        %v1476 = vld [vmem:[#allocation8 + $0x68] sm:$0xff]
        %v1477 = vld [vmem:[#allocation8 + $0x70] sm:$0xff]
        %v1478 = vld [vmem:[#allocation8 + $0x78] sm:$0xff]
        %v1479 = vld [vmem:[#allocation8 + $0x80] sm:$0xff]
        %v1480 = vld [vmem:[#allocation8 + $0x88] sm:$0xff]
        %v1481 = vld [vmem:[#allocation8 + $0x90] sm:$0xff]
        %v1482 = vld [vmem:[#allocation8 + $0x98] sm:$0xff]
        %v1483 = vld [vmem:[#allocation8 + $0xa0] sm:$0xff]
        %v1484 = vld [vmem:[#allocation8 + $0xa8] sm:$0xff]
        %v1485 = vld [vmem:[#allocation8 + $0xb0] sm:$0xff]
        %v1486 = vld [vmem:[#allocation8 + $0xb8] sm:$0xff]
        %v1487 = vld [vmem:[#allocation8 + $0xc0] sm:$0xff]
        %v1488 = vld [vmem:[#allocation8 + $0xc8] sm:$0xff]
        %v1489 = vld [vmem:[#allocation8 + $0xd0] sm:$0xff]
        %v1490 = vld [vmem:[#allocation8 + $0xd8] sm:$0xff]
        %v1491 = vld [vmem:[#allocation8 + $0xe0] sm:$0xff]
        %v1492 = vld [vmem:[#allocation8 + $0xe8] sm:$0xff]
        %v1493 = vld [vmem:[#allocation8 + $0xf0] sm:$0xff]
        %v1494 = vld [vmem:[#allocation8 + $0xf8] sm:$0xff]
        %v1495 = vld [vmem:[#allocation8 + $0x100] sm:$0xff]
        %v1496 = vld [vmem:[#allocation8 + $0x108] sm:$0xff]
        %v1497 = vld [vmem:[#allocation8 + $0x110] sm:$0xff]
        %v1498 = vld [vmem:[#allocation8 + $0x118] sm:$0xff]
        %v1499 = vld [vmem:[#allocation8 + $0x120] sm:$0xff]
        %v1500 = vld [vmem:[#allocation8 + $0x128] sm:$0xff]
        %v1501 = vld [vmem:[#allocation8 + $0x130] sm:$0xff]
        %v1502 = vld [vmem:[#allocation8 + $0x138] sm:$0xff]
        %v1503 = vld [vmem:[#allocation8 + $0x140] sm:$0xff]
        %v1504 = vld [vmem:[#allocation8 + $0x148] sm:$0xff]
        %v1505 = vld [vmem:[#allocation8 + $0x150] sm:$0xff]
        %v1506 = vld [vmem:[#allocation8 + $0x158] sm:$0xff]
        %v1507 = vld [vmem:[#allocation8 + $0x160] sm:$0xff]
        %v1508 = vld [vmem:[#allocation8 + $0x168] sm:$0xff]
        %v1509 = vld [vmem:[#allocation8 + $0x170] sm:$0xff]
        %v1510 = vld [vmem:[#allocation8 + $0x178] sm:$0xff]
        %v1511 = vld [vmem:[#allocation8 + $0x180] sm:$0xff]
        %v1512 = vld [vmem:[#allocation8 + $0x188] sm:$0xff]
        %v1513 = vld [vmem:[#allocation8 + $0x190] sm:$0xff]
        %v1514 = vld [vmem:[#allocation8 + $0x198] sm:$0xff]
        %v1515 = vld [vmem:[#allocation8 + $0x1a0] sm:$0xff]
        %v1516 = vld [vmem:[#allocation8 + $0x1a8] sm:$0xff]
        %v1517 = vld [vmem:[#allocation8 + $0x1b0] sm:$0xff]
        %v1518 = vld [vmem:[#allocation8 + $0x1b8] sm:$0xff]
        %v1519 = vld [vmem:[#allocation8 + $0x1c0] sm:$0xff]
        %v1520 = vld [vmem:[#allocation8 + $0x1c8] sm:$0xff]
        %v1521 = vld [vmem:[#allocation8 + $0x1d0] sm:$0xff]
        %v1522 = vld [vmem:[#allocation8 + $0x1d8] sm:$0xff]
        %v1523 = vld [vmem:[#allocation8 + $0x1e0] sm:$0xff]
        %v1524 = vld [vmem:[#allocation8 + $0x1e8] sm:$0xff]
        %v1525 = vld [vmem:[#allocation8 + $0x1f0] sm:$0xff]
        %v1526 = vld [vmem:[#allocation8 + $0x1f8] sm:$0xff]
        %v1527 = vld [vmem:[#allocation8 + $0x200] sm:$0xff]
        %v1528 = vld [vmem:[#allocation8 + $0x208] sm:$0xff]
        %v1529 = vld [vmem:[#allocation8 + $0x210] sm:$0xff]
        %v1530 = vld [vmem:[#allocation8 + $0x218] sm:$0xff]
        %v1531 = vld [vmem:[#allocation8 + $0x220] sm:$0xff]
        %v1532 = vld [vmem:[#allocation8 + $0x228] sm:$0xff]
        %v1533 = vld [vmem:[#allocation8 + $0x230] sm:$0xff]
        %v1534 = vld [vmem:[#allocation8 + $0x238] sm:$0xff]
        %v1535 = vld [vmem:[#allocation8 + $0x240] sm:$0xff]
        %v1536 = vld [vmem:[#allocation8 + $0x248] sm:$0xff]
        %v1537 = vld [vmem:[#allocation8 + $0x250] sm:$0xff]
        %v1538 = vld [vmem:[#allocation8 + $0x258] sm:$0xff]
        %v1539 = vld [vmem:[#allocation8 + $0x260] sm:$0xff]
        %v1540 = vld [vmem:[#allocation8 + $0x268] sm:$0xff]
        %v1541 = vld [vmem:[#allocation8 + $0x270] sm:$0xff]
        %v1542 = vld [vmem:[#allocation8 + $0x278] sm:$0xff]
        %v1543 = vld [vmem:[#allocation8 + $0x280] sm:$0xff]
        %v1544 = vld [vmem:[#allocation8 + $0x288] sm:$0xff]
        %v1545 = vld [vmem:[#allocation8 + $0x290] sm:$0xff]
        %v1546 = vld [vmem:[#allocation8 + $0x298] sm:$0xff]
        %v1547 = vld [vmem:[#allocation8 + $0x2a0] sm:$0xff]
        %v1548 = vld [vmem:[#allocation8 + $0x2a8] sm:$0xff]
        %v1549 = vld [vmem:[#allocation8 + $0x2b0] sm:$0xff]
        %v1550 = vld [vmem:[#allocation8 + $0x2b8] sm:$0xff]
        %v1551 = vld [vmem:[#allocation8 + $0x2c0] sm:$0xff]
        %v1552 = vld [vmem:[#allocation8 + $0x2c8] sm:$0xff]
        %v1553 = vld [vmem:[#allocation8 + $0x2d0] sm:$0xff]
        %v1554 = vld [vmem:[#allocation8 + $0x2d8] sm:$0xff]
        %v1555 = vld [vmem:[#allocation8 + $0x2e0] sm:$0xff]
        %v1556 = vld [vmem:[#allocation8 + $0x2e8] sm:$0xff]
        %v1557 = vld [vmem:[#allocation8 + $0x2f0] sm:$0xff]
        %v1558 = vld [vmem:[#allocation8 + $0x2f8] sm:$0xff]
        %v1559 = vld [vmem:[#allocation8 + $0x300] sm:$0xff]
        %v1560 = vld [vmem:[#allocation8 + $0x308] sm:$0xff]
        %v1561 = vld [vmem:[#allocation8 + $0x310] sm:$0xff]
        %v1562 = vld [vmem:[#allocation8 + $0x318] sm:$0xff]
        %v1563 = vld [vmem:[#allocation8 + $0x320] sm:$0xff]
        %v1564 = vld [vmem:[#allocation8 + $0x328] sm:$0xff]
        %v1565 = vld [vmem:[#allocation8 + $0x330] sm:$0xff]
        %v1566 = vld [vmem:[#allocation8 + $0x338] sm:$0xff]
        %v1567 = vld [vmem:[#allocation8 + $0x340] sm:$0xff]
        %v1568 = vld [vmem:[#allocation8 + $0x348] sm:$0xff]
        %v1569 = vld [vmem:[#allocation8 + $0x350] sm:$0xff]
        %v1570 = vld [vmem:[#allocation8 + $0x358] sm:$0xff]
        %v1571 = vld [vmem:[#allocation8 + $0x360] sm:$0xff]
        %v1572 = vld [vmem:[#allocation8 + $0x368] sm:$0xff]
        %v1573 = vld [vmem:[#allocation8 + $0x370] sm:$0xff]
        %v1574 = vld [vmem:[#allocation8 + $0x378] sm:$0xff]
        %v1575 = vld [vmem:[#allocation8 + $0x380] sm:$0xff]
        %v1576 = vld [vmem:[#allocation8 + $0x388] sm:$0xff]
        %v1577 = vld [vmem:[#allocation8 + $0x390] sm:$0xff]
        %v1578 = vld [vmem:[#allocation8 + $0x398] sm:$0xff]
        %v1579 = vld [vmem:[#allocation8 + $0x3a0] sm:$0xff]
        %v1580 = vld [vmem:[#allocation8 + $0x3a8] sm:$0xff]
        %v1581 = vld [vmem:[#allocation8 + $0x3b0] sm:$0xff]
        %v1582 = vld [vmem:[#allocation8 + $0x3b8] sm:$0xff]
        %v1583 = vld [vmem:[#allocation8 + $0x3c0] sm:$0xff]
        %v1584 = vld [vmem:[#allocation8 + $0x3c8] sm:$0xff]
        %v1585 = vld [vmem:[#allocation8 + $0x3d0] sm:$0xff]
        %v1586 = vld [vmem:[#allocation8 + $0x3d8] sm:$0xff]
        %v1587 = vld [vmem:[#allocation8 + $0x3e0] sm:$0xff]
        %v1588 = vld [vmem:[#allocation8 + $0x3e8] sm:$0xff]
        %v1589 = vld [vmem:[#allocation8 + $0x3f0] sm:$0xff]
        %v1590 = vld [vmem:[#allocation8 + $0x3f8] sm:$0xff]
        %v1591 = vld [vmem:[#allocation8 + $0x400] sm:$0xff]
        %v1592 = vld [vmem:[#allocation8 + $0x408] sm:$0xff]
        %v1593 = vld [vmem:[#allocation8 + $0x410] sm:$0xff]
        %v1594 = vld [vmem:[#allocation8 + $0x418] sm:$0xff]
        %v1595 = vld [vmem:[#allocation8 + $0x420] sm:$0xff]
        %v1596 = vld [vmem:[#allocation8 + $0x428] sm:$0xff]
        %v1597 = vld [vmem:[#allocation8 + $0x430] sm:$0xff]
        %v1598 = vld [vmem:[#allocation8 + $0x438] sm:$0xff]
        %v1599 = vld [vmem:[#allocation8 + $0x440] sm:$0xff]
        %v1600 = vld [vmem:[#allocation8 + $0x448] sm:$0xff]
        %v1601 = vld [vmem:[#allocation8 + $0x450] sm:$0xff]
        %v1602 = vld [vmem:[#allocation8 + $0x458] sm:$0xff]
        %v1603 = vld [vmem:[#allocation8 + $0x460] sm:$0xff]
        %v1604 = vld [vmem:[#allocation8 + $0x468] sm:$0xff]
        %v1605 = vld [vmem:[#allocation8 + $0x470] sm:$0xff]
        %v1606 = vld [vmem:[#allocation8 + $0x478] sm:$0xff]
        %v1607 = vld [vmem:[#allocation8 + $0x480] sm:$0xff]
        %v1608 = vld [vmem:[#allocation8 + $0x488] sm:$0xff]
        %v1609 = vld [vmem:[#allocation8 + $0x490] sm:$0xff]
        %v1610 = vld [vmem:[#allocation8 + $0x498] sm:$0xff]
        %v1611 = vld [vmem:[#allocation8 + $0x4a0] sm:$0xff]
        %v1612 = vld [vmem:[#allocation8 + $0x4a8] sm:$0xff]
        %v1613 = vld [vmem:[#allocation8 + $0x4b0] sm:$0xff]
        %v1614 = vld [vmem:[#allocation8 + $0x4b8] sm:$0xff]
        %v1615 = vld [vmem:[#allocation8 + $0x4c0] sm:$0xff]
        %v1616 = vld [vmem:[#allocation8 + $0x4c8] sm:$0xff]
        %v1617 = vld [vmem:[#allocation8 + $0x4d0] sm:$0xff]
        %v1618 = vld [vmem:[#allocation8 + $0x4d8] sm:$0xff]
        %v1619 = vld [vmem:[#allocation8 + $0x4e0] sm:$0xff]
        %v1620 = vld [vmem:[#allocation8 + $0x4e8] sm:$0xff]
        %v1621 = vld [vmem:[#allocation8 + $0x4f0] sm:$0xff]
        %v1622 = vld [vmem:[#allocation8 + $0x4f8] sm:$0xff]
        %v1623 = vld [vmem:[#allocation8 + $0x500] sm:$0xff]
        %v1624 = vld [vmem:[#allocation8 + $0x508] sm:$0xff]
        %v1625 = vld [vmem:[#allocation8 + $0x510] sm:$0xff]
        %v1626 = vld [vmem:[#allocation8 + $0x518] sm:$0xff]
        %v1627 = vld [vmem:[#allocation8 + $0x520] sm:$0xff]
        %v1628 = vld [vmem:[#allocation8 + $0x528] sm:$0xff]
        %v1629 = vld [vmem:[#allocation8 + $0x530] sm:$0xff]
        %v1630 = vld [vmem:[#allocation8 + $0x538] sm:$0xff]
        %v1631 = vld [vmem:[#allocation8 + $0x540] sm:$0xff]
        %v1632 = vld [vmem:[#allocation8 + $0x548] sm:$0xff]
        %v1633 = vld [vmem:[#allocation8 + $0x550] sm:$0xff]
        %v1634 = vld [vmem:[#allocation8 + $0x558] sm:$0xff]
        %v1635 = vld [vmem:[#allocation8 + $0x560] sm:$0xff]
        %v1636 = vld [vmem:[#allocation8 + $0x568] sm:$0xff]
        %v1637 = vld [vmem:[#allocation8 + $0x570] sm:$0xff]
        %v1638 = vld [vmem:[#allocation8 + $0x578] sm:$0xff]
        %v1639 = vld [vmem:[#allocation8 + $0x580] sm:$0xff]
        %v1640 = vld [vmem:[#allocation8 + $0x588] sm:$0xff]
        %v1641 = vld [vmem:[#allocation8 + $0x590] sm:$0xff]
        %v1642 = vld [vmem:[#allocation8 + $0x598] sm:$0xff]
        %v1643 = vld [vmem:[#allocation8 + $0x5a0] sm:$0xff]
        %v1644 = vld [vmem:[#allocation8 + $0x5a8] sm:$0xff]
        %v1645 = vld [vmem:[#allocation8 + $0x5b0] sm:$0xff]
        %v1646 = vld [vmem:[#allocation8 + $0x5b8] sm:$0xff]
        %v1647 = vld [vmem:[#allocation8 + $0x5c0] sm:$0xff]
        %v1648 = vld [vmem:[#allocation8 + $0x5c8] sm:$0xff]
        %v1649 = vld [vmem:[#allocation8 + $0x5d0] sm:$0xff]
        %v1650 = vld [vmem:[#allocation8 + $0x5d8] sm:$0xff]
        %v1651 = vld [vmem:[#allocation8 + $0x5e0] sm:$0xff]
        %v1652 = vld [vmem:[#allocation8 + $0x5e8] sm:$0xff]
        %v1653 = vld [vmem:[#allocation8 + $0x5f0] sm:$0xff]
        %v1654 = vld [vmem:[#allocation8 + $0x5f8] sm:$0xff]
        %v1655 = vld [vmem:[#allocation8 + $0x600] sm:$0xff]
        %v1656 = vld [vmem:[#allocation8 + $0x608] sm:$0xff]
        %v1657 = vld [vmem:[#allocation8 + $0x610] sm:$0xff]
        %v1658 = vld [vmem:[#allocation8 + $0x618] sm:$0xff]
        %v1659 = vld [vmem:[#allocation8 + $0x620] sm:$0xff]
        %v1660 = vld [vmem:[#allocation8 + $0x628] sm:$0xff]
        %v1661 = vld [vmem:[#allocation8 + $0x630] sm:$0xff]
        %v1662 = vld [vmem:[#allocation8 + $0x638] sm:$0xff]
        %v1663 = vld [vmem:[#allocation8 + $0x640] sm:$0xff]
        %v1664 = vld [vmem:[#allocation8 + $0x648] sm:$0xff]
        %v1665 = vld [vmem:[#allocation8 + $0x650] sm:$0xff]
        %v1666 = vld [vmem:[#allocation8 + $0x658] sm:$0xff]
        %v1667 = vld [vmem:[#allocation8 + $0x660] sm:$0xff]
        %v1668 = vld [vmem:[#allocation8 + $0x668] sm:$0xff]
        %v1669 = vld [vmem:[#allocation8 + $0x670] sm:$0xff]
        %v1670 = vld [vmem:[#allocation8 + $0x678] sm:$0xff]
        %v1671 = vld [vmem:[#allocation8 + $0x680] sm:$0xff]
        %v1672 = vld [vmem:[#allocation8 + $0x688] sm:$0xff]
        %v1673 = vld [vmem:[#allocation8 + $0x690] sm:$0xff]
        %v1674 = vld [vmem:[#allocation8 + $0x698] sm:$0xff]
        %v1675 = vld [vmem:[#allocation8 + $0x6a0] sm:$0xff]
        %v1676 = vld [vmem:[#allocation8 + $0x6a8] sm:$0xff]
        %v1677 = vld [vmem:[#allocation8 + $0x6b0] sm:$0xff]
        %v1678 = vld [vmem:[#allocation8 + $0x6b8] sm:$0xff]
        %v1679 = vld [vmem:[#allocation8 + $0x6c0] sm:$0xff]
        %v1680 = vld [vmem:[#allocation8 + $0x6c8] sm:$0xff]
        %v1681 = vld [vmem:[#allocation8 + $0x6d0] sm:$0xff]
        %v1682 = vld [vmem:[#allocation8 + $0x6d8] sm:$0xff]
        %v1683 = vld [vmem:[#allocation8 + $0x6e0] sm:$0xff]
        %v1684 = vld [vmem:[#allocation8 + $0x6e8] sm:$0xff]
        %v1685 = vld [vmem:[#allocation8 + $0x6f0] sm:$0xff]
        %v1686 = vld [vmem:[#allocation8 + $0x6f8] sm:$0xff]
        %v1687 = vld [vmem:[#allocation8 + $0x700] sm:$0xff]
        %v1688 = vld [vmem:[#allocation8 + $0x708] sm:$0xff]
        %v1689 = vld [vmem:[#allocation8 + $0x710] sm:$0xff]
        %v1690 = vld [vmem:[#allocation8 + $0x718] sm:$0xff]
        %v1691 = vld [vmem:[#allocation8 + $0x720] sm:$0xff]
        %v1692 = vld [vmem:[#allocation8 + $0x728] sm:$0xff]
        %v1693 = vld [vmem:[#allocation8 + $0x730] sm:$0xff]
        %v1694 = vld [vmem:[#allocation8 + $0x738] sm:$0xff]
        %v1695 = vld [vmem:[#allocation8 + $0x740] sm:$0xff]
        %v1696 = vld [vmem:[#allocation8 + $0x748] sm:$0xff]
        %v1697 = vld [vmem:[#allocation8 + $0x750] sm:$0xff]
        %v1698 = vld [vmem:[#allocation8 + $0x758] sm:$0xff]
        %v1699 = vld [vmem:[#allocation8 + $0x760] sm:$0xff]
        %v1700 = vld [vmem:[#allocation8 + $0x768] sm:$0xff]
        %v1701 = vld [vmem:[#allocation8 + $0x770] sm:$0xff]
        %v1702 = vld [vmem:[#allocation8 + $0x778] sm:$0xff]
        %v1703 = vld [vmem:[#allocation8 + $0x780] sm:$0xff]
        %v1704 = vld [vmem:[#allocation8 + $0x788] sm:$0xff]
        %v1705 = vld [vmem:[#allocation8 + $0x790] sm:$0xff]
        %v1706 = vld [vmem:[#allocation8 + $0x798] sm:$0xff]
        %v1707 = vld [vmem:[#allocation8 + $0x7a0] sm:$0xff]
        %v1708 = vld [vmem:[#allocation8 + $0x7a8] sm:$0xff]
        %v1709 = vld [vmem:[#allocation8 + $0x7b0] sm:$0xff]
        %v1710 = vld [vmem:[#allocation8 + $0x7b8] sm:$0xff]
        %v1711 = vld [vmem:[#allocation8 + $0x7c0] sm:$0xff]
        %v1712 = vld [vmem:[#allocation8 + $0x7c8] sm:$0xff]
        %v1713 = vld [vmem:[#allocation8 + $0x7d0] sm:$0xff]
        %v1714 = vld [vmem:[#allocation8 + $0x7d8] sm:$0xff]
        %v1715 = vld [vmem:[#allocation8 + $0x7e0] sm:$0xff]
        %v1716 = vld [vmem:[#allocation8 + $0x7e8] sm:$0xff]
        %v1717 = vld [vmem:[#allocation8 + $0x7f0] sm:$0xff]
        %v1718 = vld [vmem:[#allocation8 + $0x7f8] sm:$0xff]
        %v1719 = vld [vmem:[#allocation8 + $0x800] sm:$0xff]
        %v1720 = vld [vmem:[#allocation8 + $0x808] sm:$0xff]
        %v1721 = vld [vmem:[#allocation8 + $0x810] sm:$0xff]
        %v1722 = vld [vmem:[#allocation8 + $0x818] sm:$0xff]
        %v1723 = vld [vmem:[#allocation8 + $0x820] sm:$0xff]
        %v1724 = vld [vmem:[#allocation8 + $0x828] sm:$0xff]
        %v1725 = vld [vmem:[#allocation8 + $0x830] sm:$0xff]
        %v1726 = vld [vmem:[#allocation8 + $0x838] sm:$0xff]
        %v1727 = vld [vmem:[#allocation8 + $0x840] sm:$0xff]
        %v1728 = vld [vmem:[#allocation8 + $0x848] sm:$0xff]
        %v1729 = vld [vmem:[#allocation8 + $0x850] sm:$0xff]
        %v1730 = vld [vmem:[#allocation8 + $0x858] sm:$0xff]
        %v1731 = vld [vmem:[#allocation8 + $0x860] sm:$0xff]
        %v1732 = vld [vmem:[#allocation8 + $0x868] sm:$0xff]
        %v1733 = vld [vmem:[#allocation8 + $0x870] sm:$0xff]
        %v1734 = vld [vmem:[#allocation8 + $0x878] sm:$0xff]
        %v1735 = vld [vmem:[#allocation8 + $0x880] sm:$0xff]
        %v1736 = vld [vmem:[#allocation8 + $0x888] sm:$0xff]
        %v1737 = vld [vmem:[#allocation8 + $0x890] sm:$0xff]
        %v1738 = vld [vmem:[#allocation8 + $0x898] sm:$0xff]
        %v1739 = vld [vmem:[#allocation8 + $0x8a0] sm:$0xff]
        %v1740 = vld [vmem:[#allocation8 + $0x8a8] sm:$0xff]
        %v1741 = vld [vmem:[#allocation8 + $0x8b0] sm:$0xff]
        %v1742 = vld [vmem:[#allocation8 + $0x8b8] sm:$0xff]
        %v1743 = vld [vmem:[#allocation8 + $0x8c0] sm:$0xff]
        %v1744 = vld [vmem:[#allocation8 + $0x8c8] sm:$0xff]
        %v1745 = vld [vmem:[#allocation8 + $0x8d0] sm:$0xff]
        %v1746 = vld [vmem:[#allocation8 + $0x8d8] sm:$0xff]
        %v1747 = vld [vmem:[#allocation8 + $0x8e0] sm:$0xff]
        %v1748 = vld [vmem:[#allocation8 + $0x8e8] sm:$0xff]
        %v1749 = vld [vmem:[#allocation8 + $0x8f0] sm:$0xff]
        %v1750 = vld [vmem:[#allocation8 + $0x8f8] sm:$0xff]
        %v1751 = vld [vmem:[#allocation9] sm:$0xf]
        %v1753 = vlaneseq
        %v1754 = vshrl.u32 %v1753, 7
        %v1755 = vsub.s32 0, %v1754
        %v1756 = vrot.slane %v1751, %v1755
        %v1757 = vlaneseq
        %v1758 = vshrl.u32 %v1757, 7
        %v1759 = vsub.s32 1, %v1758
        %v1760 = vrot.slane %v1751, %v1759
        %v1761 = vlaneseq
        %v1762 = vshrl.u32 %v1761, 7
        %v1763 = vsub.s32 2, %v1762
        %v1764 = vrot.slane %v1751, %v1763
        %v1765 = vlaneseq
        %v1766 = vshrl.u32 %v1765, 7
        %v1767 = vsub.s32 3, %v1766
        %v1768 = vrot.slane %v1751, %v1767
        %v2061 = vunpack.c.l.b16 %v1463
        %v2062 = vunpack.c.h.b16 %v1463
        %v2063 = vunpack.c.l.b16 %v1464
        %v2064 = vunpack.c.h.b16 %v1464
        %v2065 = vunpack.c.l.b16 %v1465
        %v2066 = vunpack.c.h.b16 %v1465
        %v2067 = vunpack.c.l.b16 %v1466
        %v2068 = vunpack.c.h.b16 %v1466
        %v2069 = vunpack.c.l.b16 %v1467
        %v2070 = vunpack.c.h.b16 %v1467
        %v2071 = vunpack.c.l.b16 %v1468
        %v2072 = vunpack.c.h.b16 %v1468
        %v2073 = vunpack.c.l.b16 %v1469
        %v2074 = vunpack.c.h.b16 %v1469
        %v2075 = vunpack.c.l.b16 %v1470
        %v2076 = vunpack.c.h.b16 %v1470
        %v2077 = vunpack.c.l.b16 %v1471
        %v2078 = vunpack.c.h.b16 %v1471
        %v2079 = vunpack.c.l.b16 %v1472
        %v2080 = vunpack.c.h.b16 %v1472
        %v2081 = vunpack.c.l.b16 %v1473
        %v2082 = vunpack.c.h.b16 %v1473
        %v2083 = vunpack.c.l.b16 %v1474
        %v2084 = vunpack.c.h.b16 %v1474
        %v2085 = vunpack.c.l.b16 %v1475
        %v2086 = vunpack.c.h.b16 %v1475
        %v2087 = vunpack.c.l.b16 %v1476
        %v2088 = vunpack.c.h.b16 %v1476
        %v2089 = vunpack.c.l.b16 %v1477
        %v2090 = vunpack.c.h.b16 %v1477
        %v2091 = vunpack.c.l.b16 %v1478
        %v2092 = vunpack.c.h.b16 %v1478
        %v2093 = vunpack.c.l.b16 %v1479
        %v2094 = vunpack.c.h.b16 %v1479
        %v2095 = vunpack.c.l.b16 %v1480
        %v2096 = vunpack.c.h.b16 %v1480
        %v2097 = vunpack.c.l.b16 %v1481
        %v2098 = vunpack.c.h.b16 %v1481
        %v2099 = vunpack.c.l.b16 %v1482
        %v2100 = vunpack.c.h.b16 %v1482
        %v2101 = vunpack.c.l.b16 %v1483
        %v2102 = vunpack.c.h.b16 %v1483
        %v2103 = vunpack.c.l.b16 %v1484
        %v2104 = vunpack.c.h.b16 %v1484
        %v2105 = vunpack.c.l.b16 %v1485
        %v2106 = vunpack.c.h.b16 %v1485
        %v2107 = vunpack.c.l.b16 %v1486
        %v2108 = vunpack.c.h.b16 %v1486
        %v2109 = vunpack.c.l.b16 %v1487
        %v2110 = vunpack.c.h.b16 %v1487
        %v2111 = vunpack.c.l.b16 %v1488
        %v2112 = vunpack.c.h.b16 %v1488
        %v2113 = vunpack.c.l.b16 %v1489
        %v2114 = vunpack.c.h.b16 %v1489
        %v2115 = vunpack.c.l.b16 %v1490
        %v2116 = vunpack.c.h.b16 %v1490
        %v2117 = vunpack.c.l.b16 %v1491
        %v2118 = vunpack.c.h.b16 %v1491
        %v2119 = vunpack.c.l.b16 %v1492
        %v2120 = vunpack.c.h.b16 %v1492
        %v2121 = vunpack.c.l.b16 %v1493
        %v2122 = vunpack.c.h.b16 %v1493
        %v2123 = vunpack.c.l.b16 %v1494
        %v2124 = vunpack.c.h.b16 %v1494
        %v2125 = vunpack.c.l.b16 %v1495
        %v2126 = vunpack.c.h.b16 %v1495
        %v2127 = vunpack.c.l.b16 %v1496
        %v2128 = vunpack.c.h.b16 %v1496
        %v2129 = vunpack.c.l.b16 %v1497
        %v2130 = vunpack.c.h.b16 %v1497
        %v2131 = vunpack.c.l.b16 %v1498
        %v2132 = vunpack.c.h.b16 %v1498
        %v2133 = vunpack.c.l.b16 %v1499
        %v2134 = vunpack.c.h.b16 %v1499
        %v2135 = vunpack.c.l.b16 %v1500
        %v2136 = vunpack.c.h.b16 %v1500
        %v2137 = vunpack.c.l.b16 %v1501
        %v2138 = vunpack.c.h.b16 %v1501
        %v2139 = vunpack.c.l.b16 %v1502
        %v2140 = vunpack.c.h.b16 %v1502
        %v2141 = vunpack.c.l.b16 %v1503
        %v2142 = vunpack.c.h.b16 %v1503
        %v2143 = vunpack.c.l.b16 %v1504
        %v2144 = vunpack.c.h.b16 %v1504
        %v2145 = vunpack.c.l.b16 %v1505
        %v2146 = vunpack.c.h.b16 %v1505
        %v2147 = vunpack.c.l.b16 %v1506
        %v2148 = vunpack.c.h.b16 %v1506
        %v2149 = vunpack.c.l.b16 %v1507
        %v2150 = vunpack.c.h.b16 %v1507
        %v2151 = vunpack.c.l.b16 %v1508
        %v2152 = vunpack.c.h.b16 %v1508
        %v2153 = vunpack.c.l.b16 %v1509
        %v2154 = vunpack.c.h.b16 %v1509
        %v2155 = vunpack.c.l.b16 %v1510
        %v2156 = vunpack.c.h.b16 %v1510
        %v2157 = vunpack.c.l.b16 %v1511
        %v2158 = vunpack.c.h.b16 %v1511
        %v2159 = vunpack.c.l.b16 %v1512
        %v2160 = vunpack.c.h.b16 %v1512
        %v2161 = vunpack.c.l.b16 %v1513
        %v2162 = vunpack.c.h.b16 %v1513
        %v2163 = vunpack.c.l.b16 %v1514
        %v2164 = vunpack.c.h.b16 %v1514
        %v2165 = vunpack.c.l.b16 %v1515
        %v2166 = vunpack.c.h.b16 %v1515
        %v2167 = vunpack.c.l.b16 %v1516
        %v2168 = vunpack.c.h.b16 %v1516
        %v2169 = vunpack.c.l.b16 %v1517
        %v2170 = vunpack.c.h.b16 %v1517
        %v2171 = vunpack.c.l.b16 %v1518
        %v2172 = vunpack.c.h.b16 %v1518
        %v2173 = vunpack.c.l.b16 %v1519
        %v2174 = vunpack.c.h.b16 %v1519
        %v2175 = vunpack.c.l.b16 %v1520
        %v2176 = vunpack.c.h.b16 %v1520
        %v2177 = vunpack.c.l.b16 %v1521
        %v2178 = vunpack.c.h.b16 %v1521
        %v2179 = vunpack.c.l.b16 %v1522
        %v2180 = vunpack.c.h.b16 %v1522
        %v2181 = vunpack.c.l.b16 %v1523
        %v2182 = vunpack.c.h.b16 %v1523
        %v2183 = vunpack.c.l.b16 %v1524
        %v2184 = vunpack.c.h.b16 %v1524
        %v2185 = vunpack.c.l.b16 %v1525
        %v2186 = vunpack.c.h.b16 %v1525
        %v2187 = vunpack.c.l.b16 %v1526
        %v2188 = vunpack.c.h.b16 %v1526
        %v2189 = vunpack.c.l.b16 %v1527
        %v2190 = vunpack.c.h.b16 %v1527
        %v2191 = vunpack.c.l.b16 %v1528
        %v2192 = vunpack.c.h.b16 %v1528
        %v2193 = vunpack.c.l.b16 %v1529
        %v2194 = vunpack.c.h.b16 %v1529
        %v2195 = vunpack.c.l.b16 %v1530
        %v2196 = vunpack.c.h.b16 %v1530
        %v2197 = vunpack.c.l.b16 %v1531
        %v2198 = vunpack.c.h.b16 %v1531
        %v2199 = vunpack.c.l.b16 %v1532
        %v2200 = vunpack.c.h.b16 %v1532
        %v2201 = vunpack.c.l.b16 %v1533
        %v2202 = vunpack.c.h.b16 %v1533
        %v2203 = vunpack.c.l.b16 %v1534
        %v2204 = vunpack.c.h.b16 %v1534
        %v2205 = vunpack.c.l.b16 %v1535
        %v2206 = vunpack.c.h.b16 %v1535
        %v2207 = vunpack.c.l.b16 %v1536
        %v2208 = vunpack.c.h.b16 %v1536
        %v2209 = vunpack.c.l.b16 %v1537
        %v2210 = vunpack.c.h.b16 %v1537
        %v2211 = vunpack.c.l.b16 %v1538
        %v2212 = vunpack.c.h.b16 %v1538
        %v2213 = vunpack.c.l.b16 %v1539
        %v2214 = vunpack.c.h.b16 %v1539
        %v2215 = vunpack.c.l.b16 %v1540
        %v2216 = vunpack.c.h.b16 %v1540
        %v2217 = vunpack.c.l.b16 %v1541
        %v2218 = vunpack.c.h.b16 %v1541
        %v2219 = vunpack.c.l.b16 %v1542
        %v2220 = vunpack.c.h.b16 %v1542
        %v2221 = vunpack.c.l.b16 %v1543
        %v2222 = vunpack.c.h.b16 %v1543
        %v2223 = vunpack.c.l.b16 %v1544
        %v2224 = vunpack.c.h.b16 %v1544
        %v2225 = vunpack.c.l.b16 %v1545
        %v2226 = vunpack.c.h.b16 %v1545
        %v2227 = vunpack.c.l.b16 %v1546
        %v2228 = vunpack.c.h.b16 %v1546
        %v2229 = vunpack.c.l.b16 %v1547
        %v2230 = vunpack.c.h.b16 %v1547
        %v2231 = vunpack.c.l.b16 %v1548
        %v2232 = vunpack.c.h.b16 %v1548
        %v2233 = vunpack.c.l.b16 %v1549
        %v2234 = vunpack.c.h.b16 %v1549
        %v2235 = vunpack.c.l.b16 %v1550
        %v2236 = vunpack.c.h.b16 %v1550
        %v2237 = vunpack.c.l.b16 %v1551
        %v2238 = vunpack.c.h.b16 %v1551
        %v2239 = vunpack.c.l.b16 %v1552
        %v2240 = vunpack.c.h.b16 %v1552
        %v2241 = vunpack.c.l.b16 %v1553
        %v2242 = vunpack.c.h.b16 %v1553
        %v2243 = vunpack.c.l.b16 %v1554
        %v2244 = vunpack.c.h.b16 %v1554
        %v2245 = vunpack.c.l.b16 %v1555
        %v2246 = vunpack.c.h.b16 %v1555
        %v2247 = vunpack.c.l.b16 %v1556
        %v2248 = vunpack.c.h.b16 %v1556
        %v2249 = vunpack.c.l.b16 %v1557
        %v2250 = vunpack.c.h.b16 %v1557
        %v2251 = vunpack.c.l.b16 %v1558
        %v2252 = vunpack.c.h.b16 %v1558
        %v2253 = vunpack.c.l.b16 %v1559
        %v2254 = vunpack.c.h.b16 %v1559
        %v2255 = vunpack.c.l.b16 %v1560
        %v2256 = vunpack.c.h.b16 %v1560
        %v2257 = vunpack.c.l.b16 %v1561
        %v2258 = vunpack.c.h.b16 %v1561
        %v2259 = vunpack.c.l.b16 %v1562
        %v2260 = vunpack.c.h.b16 %v1562
        %v2261 = vunpack.c.l.b16 %v1563
        %v2262 = vunpack.c.h.b16 %v1563
        %v2263 = vunpack.c.l.b16 %v1564
        %v2264 = vunpack.c.h.b16 %v1564
        %v2265 = vunpack.c.l.b16 %v1565
        %v2266 = vunpack.c.h.b16 %v1565
        %v2267 = vunpack.c.l.b16 %v1566
        %v2268 = vunpack.c.h.b16 %v1566
        %v2269 = vunpack.c.l.b16 %v1567
        %v2270 = vunpack.c.h.b16 %v1567
        %v2271 = vunpack.c.l.b16 %v1568
        %v2272 = vunpack.c.h.b16 %v1568
        %v2273 = vunpack.c.l.b16 %v1569
        %v2274 = vunpack.c.h.b16 %v1569
        %v2275 = vunpack.c.l.b16 %v1570
        %v2276 = vunpack.c.h.b16 %v1570
        %v2277 = vunpack.c.l.b16 %v1571
        %v2278 = vunpack.c.h.b16 %v1571
        %v2279 = vunpack.c.l.b16 %v1572
        %v2280 = vunpack.c.h.b16 %v1572
        %v2281 = vunpack.c.l.b16 %v1573
        %v2282 = vunpack.c.h.b16 %v1573
        %v2283 = vunpack.c.l.b16 %v1574
        %v2284 = vunpack.c.h.b16 %v1574
        %v2285 = vunpack.c.l.b16 %v1575
        %v2286 = vunpack.c.h.b16 %v1575
        %v2287 = vunpack.c.l.b16 %v1576
        %v2288 = vunpack.c.h.b16 %v1576
        %v2289 = vunpack.c.l.b16 %v1577
        %v2290 = vunpack.c.h.b16 %v1577
        %v2291 = vunpack.c.l.b16 %v1578
        %v2292 = vunpack.c.h.b16 %v1578
        %v2293 = vunpack.c.l.b16 %v1579
        %v2294 = vunpack.c.h.b16 %v1579
        %v2295 = vunpack.c.l.b16 %v1580
        %v2296 = vunpack.c.h.b16 %v1580
        %v2297 = vunpack.c.l.b16 %v1581
        %v2298 = vunpack.c.h.b16 %v1581
        %v2299 = vunpack.c.l.b16 %v1582
        %v2300 = vunpack.c.h.b16 %v1582
        %v2301 = vunpack.c.l.b16 %v1583
        %v2302 = vunpack.c.h.b16 %v1583
        %v2303 = vunpack.c.l.b16 %v1584
        %v2304 = vunpack.c.h.b16 %v1584
        %v2305 = vunpack.c.l.b16 %v1585
        %v2306 = vunpack.c.h.b16 %v1585
        %v2307 = vunpack.c.l.b16 %v1586
        %v2308 = vunpack.c.h.b16 %v1586
        %v2309 = vunpack.c.l.b16 %v1587
        %v2310 = vunpack.c.h.b16 %v1587
        %v2311 = vunpack.c.l.b16 %v1588
        %v2312 = vunpack.c.h.b16 %v1588
        %v2313 = vunpack.c.l.b16 %v1589
        %v2314 = vunpack.c.h.b16 %v1589
        %v2315 = vunpack.c.l.b16 %v1590
        %v2316 = vunpack.c.h.b16 %v1590
        %v2317 = vunpack.c.l.b16 %v1591
        %v2318 = vunpack.c.h.b16 %v1591
        %v2319 = vunpack.c.l.b16 %v1592
        %v2320 = vunpack.c.h.b16 %v1592
        %v2321 = vunpack.c.l.b16 %v1593
        %v2322 = vunpack.c.h.b16 %v1593
        %v2323 = vunpack.c.l.b16 %v1594
        %v2324 = vunpack.c.h.b16 %v1594
        %v2325 = vunpack.c.l.b16 %v1595
        %v2326 = vunpack.c.h.b16 %v1595
        %v2327 = vunpack.c.l.b16 %v1596
        %v2328 = vunpack.c.h.b16 %v1596
        %v2329 = vunpack.c.l.b16 %v1597
        %v2330 = vunpack.c.h.b16 %v1597
        %v2331 = vunpack.c.l.b16 %v1598
        %v2332 = vunpack.c.h.b16 %v1598
        %v2333 = vunpack.c.l.b16 %v1599
        %v2334 = vunpack.c.h.b16 %v1599
        %v2335 = vunpack.c.l.b16 %v1600
        %v2336 = vunpack.c.h.b16 %v1600
        %v2337 = vunpack.c.l.b16 %v1601
        %v2338 = vunpack.c.h.b16 %v1601
        %v2339 = vunpack.c.l.b16 %v1602
        %v2340 = vunpack.c.h.b16 %v1602
        %v2341 = vunpack.c.l.b16 %v1603
        %v2342 = vunpack.c.h.b16 %v1603
        %v2343 = vunpack.c.l.b16 %v1604
        %v2344 = vunpack.c.h.b16 %v1604
        %v2345 = vunpack.c.l.b16 %v1605
        %v2346 = vunpack.c.h.b16 %v1605
        %v2347 = vunpack.c.l.b16 %v1606
        %v2348 = vunpack.c.h.b16 %v1606
        %v2349 = vunpack.c.l.b16 %v1607
        %v2350 = vunpack.c.h.b16 %v1607
        %v2351 = vunpack.c.l.b16 %v1608
        %v2352 = vunpack.c.h.b16 %v1608
        %v2353 = vunpack.c.l.b16 %v1609
        %v2354 = vunpack.c.h.b16 %v1609
        %v2355 = vunpack.c.l.b16 %v1610
        %v2356 = vunpack.c.h.b16 %v1610
        %v2357 = vunpack.c.l.b16 %v1611
        %v2358 = vunpack.c.h.b16 %v1611
        %v2359 = vunpack.c.l.b16 %v1612
        %v2360 = vunpack.c.h.b16 %v1612
        %v2361 = vunpack.c.l.b16 %v1613
        %v2362 = vunpack.c.h.b16 %v1613
        %v2363 = vunpack.c.l.b16 %v1614
        %v2364 = vunpack.c.h.b16 %v1614
        %v2365 = vunpack.c.l.b16 %v1615
        %v2366 = vunpack.c.h.b16 %v1615
        %v2367 = vunpack.c.l.b16 %v1616
        %v2368 = vunpack.c.h.b16 %v1616
        %v2369 = vunpack.c.l.b16 %v1617
        %v2370 = vunpack.c.h.b16 %v1617
        %v2371 = vunpack.c.l.b16 %v1618
        %v2372 = vunpack.c.h.b16 %v1618
        %v2373 = vunpack.c.l.b16 %v1619
        %v2374 = vunpack.c.h.b16 %v1619
        %v2375 = vunpack.c.l.b16 %v1620
        %v2376 = vunpack.c.h.b16 %v1620
        %v2377 = vunpack.c.l.b16 %v1621
        %v2378 = vunpack.c.h.b16 %v1621
        %v2379 = vunpack.c.l.b16 %v1622
        %v2380 = vunpack.c.h.b16 %v1622
        %v2381 = vunpack.c.l.b16 %v1623
        %v2382 = vunpack.c.h.b16 %v1623
        %v2383 = vunpack.c.l.b16 %v1624
        %v2384 = vunpack.c.h.b16 %v1624
        %v2385 = vunpack.c.l.b16 %v1625
        %v2386 = vunpack.c.h.b16 %v1625
        %v2387 = vunpack.c.l.b16 %v1626
        %v2388 = vunpack.c.h.b16 %v1626
        %v2389 = vunpack.c.l.b16 %v1627
        %v2390 = vunpack.c.h.b16 %v1627
        %v2391 = vunpack.c.l.b16 %v1628
        %v2392 = vunpack.c.h.b16 %v1628
        %v2393 = vunpack.c.l.b16 %v1629
        %v2394 = vunpack.c.h.b16 %v1629
        %v2395 = vunpack.c.l.b16 %v1630
        %v2396 = vunpack.c.h.b16 %v1630
        %v2397 = vunpack.c.l.b16 %v1631
        %v2398 = vunpack.c.h.b16 %v1631
        %v2399 = vunpack.c.l.b16 %v1632
        %v2400 = vunpack.c.h.b16 %v1632
        %v2401 = vunpack.c.l.b16 %v1633
        %v2402 = vunpack.c.h.b16 %v1633
        %v2403 = vunpack.c.l.b16 %v1634
        %v2404 = vunpack.c.h.b16 %v1634
        %v2405 = vunpack.c.l.b16 %v1635
        %v2406 = vunpack.c.h.b16 %v1635
        %v2407 = vunpack.c.l.b16 %v1636
        %v2408 = vunpack.c.h.b16 %v1636
        %v2409 = vunpack.c.l.b16 %v1637
        %v2410 = vunpack.c.h.b16 %v1637
        %v2411 = vunpack.c.l.b16 %v1638
        %v2412 = vunpack.c.h.b16 %v1638
        %v2413 = vunpack.c.l.b16 %v1639
        %v2414 = vunpack.c.h.b16 %v1639
        %v2415 = vunpack.c.l.b16 %v1640
        %v2416 = vunpack.c.h.b16 %v1640
        %v2417 = vunpack.c.l.b16 %v1641
        %v2418 = vunpack.c.h.b16 %v1641
        %v2419 = vunpack.c.l.b16 %v1642
        %v2420 = vunpack.c.h.b16 %v1642
        %v2421 = vunpack.c.l.b16 %v1643
        %v2422 = vunpack.c.h.b16 %v1643
        %v2423 = vunpack.c.l.b16 %v1644
        %v2424 = vunpack.c.h.b16 %v1644
        %v2425 = vunpack.c.l.b16 %v1645
        %v2426 = vunpack.c.h.b16 %v1645
        %v2427 = vunpack.c.l.b16 %v1646
        %v2428 = vunpack.c.h.b16 %v1646
        %v2429 = vunpack.c.l.b16 %v1647
        %v2430 = vunpack.c.h.b16 %v1647
        %v2431 = vunpack.c.l.b16 %v1648
        %v2432 = vunpack.c.h.b16 %v1648
        %v2433 = vunpack.c.l.b16 %v1649
        %v2434 = vunpack.c.h.b16 %v1649
        %v2435 = vunpack.c.l.b16 %v1650
        %v2436 = vunpack.c.h.b16 %v1650
        %v2437 = vunpack.c.l.b16 %v1651
        %v2438 = vunpack.c.h.b16 %v1651
        %v2439 = vunpack.c.l.b16 %v1652
        %v2440 = vunpack.c.h.b16 %v1652
        %v2441 = vunpack.c.l.b16 %v1653
        %v2442 = vunpack.c.h.b16 %v1653
        %v2443 = vunpack.c.l.b16 %v1654
        %v2444 = vunpack.c.h.b16 %v1654
        %v2445 = vunpack.c.l.b16 %v1655
        %v2446 = vunpack.c.h.b16 %v1655
        %v2447 = vunpack.c.l.b16 %v1656
        %v2448 = vunpack.c.h.b16 %v1656
        %v2449 = vunpack.c.l.b16 %v1657
        %v2450 = vunpack.c.h.b16 %v1657
        %v2451 = vunpack.c.l.b16 %v1658
        %v2452 = vunpack.c.h.b16 %v1658
        %v2453 = vunpack.c.l.b16 %v1659
        %v2454 = vunpack.c.h.b16 %v1659
        %v2455 = vunpack.c.l.b16 %v1660
        %v2456 = vunpack.c.h.b16 %v1660
        %v2457 = vunpack.c.l.b16 %v1661
        %v2458 = vunpack.c.h.b16 %v1661
        %v2459 = vunpack.c.l.b16 %v1662
        %v2460 = vunpack.c.h.b16 %v1662
        %v2461 = vunpack.c.l.b16 %v1663
        %v2462 = vunpack.c.h.b16 %v1663
        %v2463 = vunpack.c.l.b16 %v1664
        %v2464 = vunpack.c.h.b16 %v1664
        %v2465 = vunpack.c.l.b16 %v1665
        %v2466 = vunpack.c.h.b16 %v1665
        %v2467 = vunpack.c.l.b16 %v1666
        %v2468 = vunpack.c.h.b16 %v1666
        %v2469 = vunpack.c.l.b16 %v1667
        %v2470 = vunpack.c.h.b16 %v1667
        %v2471 = vunpack.c.l.b16 %v1668
        %v2472 = vunpack.c.h.b16 %v1668
        %v2473 = vunpack.c.l.b16 %v1669
        %v2474 = vunpack.c.h.b16 %v1669
        %v2475 = vunpack.c.l.b16 %v1670
        %v2476 = vunpack.c.h.b16 %v1670
        %v2477 = vunpack.c.l.b16 %v1671
        %v2478 = vunpack.c.h.b16 %v1671
        %v2479 = vunpack.c.l.b16 %v1672
        %v2480 = vunpack.c.h.b16 %v1672
        %v2481 = vunpack.c.l.b16 %v1673
        %v2482 = vunpack.c.h.b16 %v1673
        %v2483 = vunpack.c.l.b16 %v1674
        %v2484 = vunpack.c.h.b16 %v1674
        %v2485 = vunpack.c.l.b16 %v1675
        %v2486 = vunpack.c.h.b16 %v1675
        %v2487 = vunpack.c.l.b16 %v1676
        %v2488 = vunpack.c.h.b16 %v1676
        %v2489 = vunpack.c.l.b16 %v1677
        %v2490 = vunpack.c.h.b16 %v1677
        %v2491 = vunpack.c.l.b16 %v1678
        %v2492 = vunpack.c.h.b16 %v1678
        %v2493 = vunpack.c.l.b16 %v1679
        %v2494 = vunpack.c.h.b16 %v1679
        %v2495 = vunpack.c.l.b16 %v1680
        %v2496 = vunpack.c.h.b16 %v1680
        %v2497 = vunpack.c.l.b16 %v1681
        %v2498 = vunpack.c.h.b16 %v1681
        %v2499 = vunpack.c.l.b16 %v1682
        %v2500 = vunpack.c.h.b16 %v1682
        %v2501 = vunpack.c.l.b16 %v1683
        %v2502 = vunpack.c.h.b16 %v1683
        %v2503 = vunpack.c.l.b16 %v1684
        %v2504 = vunpack.c.h.b16 %v1684
        %v2505 = vunpack.c.l.b16 %v1685
        %v2506 = vunpack.c.h.b16 %v1685
        %v2507 = vunpack.c.l.b16 %v1686
        %v2508 = vunpack.c.h.b16 %v1686
        %v2509 = vunpack.c.l.b16 %v1687
        %v2510 = vunpack.c.h.b16 %v1687
        %v2511 = vunpack.c.l.b16 %v1688
        %v2512 = vunpack.c.h.b16 %v1688
        %v2513 = vunpack.c.l.b16 %v1689
        %v2514 = vunpack.c.h.b16 %v1689
        %v2515 = vunpack.c.l.b16 %v1690
        %v2516 = vunpack.c.h.b16 %v1690
        %v2517 = vunpack.c.l.b16 %v1691
        %v2518 = vunpack.c.h.b16 %v1691
        %v2519 = vunpack.c.l.b16 %v1692
        %v2520 = vunpack.c.h.b16 %v1692
        %v2521 = vunpack.c.l.b16 %v1693
        %v2522 = vunpack.c.h.b16 %v1693
        %v2523 = vunpack.c.l.b16 %v1694
        %v2524 = vunpack.c.h.b16 %v1694
        %v2525 = vunpack.c.l.b16 %v1695
        %v2526 = vunpack.c.h.b16 %v1695
        %v2527 = vunpack.c.l.b16 %v1696
        %v2528 = vunpack.c.h.b16 %v1696
        %v2529 = vunpack.c.l.b16 %v1697
        %v2530 = vunpack.c.h.b16 %v1697
        %v2531 = vunpack.c.l.b16 %v1698
        %v2532 = vunpack.c.h.b16 %v1698
        %v2533 = vunpack.c.l.b16 %v1699
        %v2534 = vunpack.c.h.b16 %v1699
        %v2535 = vunpack.c.l.b16 %v1700
        %v2536 = vunpack.c.h.b16 %v1700
        %v2537 = vunpack.c.l.b16 %v1701
        %v2538 = vunpack.c.h.b16 %v1701
        %v2539 = vunpack.c.l.b16 %v1702
        %v2540 = vunpack.c.h.b16 %v1702
        %v2541 = vunpack.c.l.b16 %v1703
        %v2542 = vunpack.c.h.b16 %v1703
        %v2543 = vunpack.c.l.b16 %v1704
        %v2544 = vunpack.c.h.b16 %v1704
        %v2545 = vunpack.c.l.b16 %v1705
        %v2546 = vunpack.c.h.b16 %v1705
        %v2547 = vunpack.c.l.b16 %v1706
        %v2548 = vunpack.c.h.b16 %v1706
        %v2549 = vunpack.c.l.b16 %v1707
        %v2550 = vunpack.c.h.b16 %v1707
        %v2551 = vunpack.c.l.b16 %v1708
        %v2552 = vunpack.c.h.b16 %v1708
        %v2553 = vunpack.c.l.b16 %v1709
        %v2554 = vunpack.c.h.b16 %v1709
        %v2555 = vunpack.c.l.b16 %v1710
        %v2556 = vunpack.c.h.b16 %v1710
        %v2557 = vunpack.c.l.b16 %v1711
        %v2558 = vunpack.c.h.b16 %v1711
        %v2559 = vunpack.c.l.b16 %v1712
        %v2560 = vunpack.c.h.b16 %v1712
        %v2561 = vunpack.c.l.b16 %v1713
        %v2562 = vunpack.c.h.b16 %v1713
        %v2563 = vunpack.c.l.b16 %v1714
        %v2564 = vunpack.c.h.b16 %v1714
        %v2565 = vunpack.c.l.b16 %v1715
        %v2566 = vunpack.c.h.b16 %v1715
        %v2567 = vunpack.c.l.b16 %v1716
        %v2568 = vunpack.c.h.b16 %v1716
        %v2569 = vunpack.c.l.b16 %v1717
        %v2570 = vunpack.c.h.b16 %v1717
        %v2571 = vunpack.c.l.b16 %v1718
        %v2572 = vunpack.c.h.b16 %v1718
        %v2573 = vunpack.c.l.b16 %v1719
        %v2574 = vunpack.c.h.b16 %v1719
        %v2575 = vunpack.c.l.b16 %v1720
        %v2576 = vunpack.c.h.b16 %v1720
        %v2577 = vunpack.c.l.b16 %v1721
        %v2578 = vunpack.c.h.b16 %v1721
        %v2579 = vunpack.c.l.b16 %v1722
        %v2580 = vunpack.c.h.b16 %v1722
        %v2581 = vunpack.c.l.b16 %v1723
        %v2582 = vunpack.c.h.b16 %v1723
        %v2583 = vunpack.c.l.b16 %v1724
        %v2584 = vunpack.c.h.b16 %v1724
        %v2585 = vunpack.c.l.b16 %v1725
        %v2586 = vunpack.c.h.b16 %v1725
        %v2587 = vunpack.c.l.b16 %v1726
        %v2588 = vunpack.c.h.b16 %v1726
        %v2589 = vunpack.c.l.b16 %v1727
        %v2590 = vunpack.c.h.b16 %v1727
        %v2591 = vunpack.c.l.b16 %v1728
        %v2592 = vunpack.c.h.b16 %v1728
        %v2593 = vunpack.c.l.b16 %v1729
        %v2594 = vunpack.c.h.b16 %v1729
        %v2595 = vunpack.c.l.b16 %v1730
        %v2596 = vunpack.c.h.b16 %v1730
        %v2597 = vunpack.c.l.b16 %v1731
        %v2598 = vunpack.c.h.b16 %v1731
        %v2599 = vunpack.c.l.b16 %v1732
        %v2600 = vunpack.c.h.b16 %v1732
        %v2601 = vunpack.c.l.b16 %v1733
        %v2602 = vunpack.c.h.b16 %v1733
        %v2603 = vunpack.c.l.b16 %v1734
        %v2604 = vunpack.c.h.b16 %v1734
        %v2605 = vunpack.c.l.b16 %v1735
        %v2606 = vunpack.c.h.b16 %v1735
        %v2607 = vunpack.c.l.b16 %v1736
        %v2608 = vunpack.c.h.b16 %v1736
        %v2609 = vunpack.c.l.b16 %v1737
        %v2610 = vunpack.c.h.b16 %v1737
        %v2611 = vunpack.c.l.b16 %v1738
        %v2612 = vunpack.c.h.b16 %v1738
        %v2613 = vunpack.c.l.b16 %v1739
        %v2614 = vunpack.c.h.b16 %v1739
        %v2615 = vunpack.c.l.b16 %v1740
        %v2616 = vunpack.c.h.b16 %v1740
        %v2617 = vunpack.c.l.b16 %v1741
        %v2618 = vunpack.c.h.b16 %v1741
        %v2619 = vunpack.c.l.b16 %v1742
        %v2620 = vunpack.c.h.b16 %v1742
        %v2621 = vunpack.c.l.b16 %v1743
        %v2622 = vunpack.c.h.b16 %v1743
        %v2623 = vunpack.c.l.b16 %v1744
        %v2624 = vunpack.c.h.b16 %v1744
        %v2625 = vunpack.c.l.b16 %v1745
        %v2626 = vunpack.c.h.b16 %v1745
        %v2627 = vunpack.c.l.b16 %v1746
        %v2628 = vunpack.c.h.b16 %v1746
        %v2629 = vunpack.c.l.b16 %v1747
        %v2630 = vunpack.c.h.b16 %v1747
        %v2631 = vunpack.c.l.b16 %v1748
        %v2632 = vunpack.c.h.b16 %v1748
        %v2633 = vunpack.c.l.b16 %v1749
        %v2634 = vunpack.c.h.b16 %v1749
        %v2635 = vunpack.c.l.b16 %v1750
        %v2636 = vunpack.c.h.b16 %v1750
        %v2637 = vpack.c.b16 %v2065, %v2061
        %v2638 = vpack.c.b16 %v2066, %v2062
        %v2639 = vpack.c.b16 %v2067, %v2063
        %v2640 = vpack.c.b16 %v2068, %v2064
        %v2641 = vpack.c.b16 %v2073, %v2069
        %v2642 = vpack.c.b16 %v2074, %v2070
        %v2643 = vpack.c.b16 %v2075, %v2071
        %v2644 = vpack.c.b16 %v2076, %v2072
        %v2645 = vpack.c.b16 %v2081, %v2077
        %v2646 = vpack.c.b16 %v2082, %v2078
        %v2647 = vpack.c.b16 %v2083, %v2079
        %v2648 = vpack.c.b16 %v2084, %v2080
        %v2649 = vpack.c.b16 %v2089, %v2085
        %v2650 = vpack.c.b16 %v2090, %v2086
        %v2651 = vpack.c.b16 %v2091, %v2087
        %v2652 = vpack.c.b16 %v2092, %v2088
        %v2653 = vpack.c.b16 %v2097, %v2093
        %v2654 = vpack.c.b16 %v2098, %v2094
        %v2655 = vpack.c.b16 %v2099, %v2095
        %v2656 = vpack.c.b16 %v2100, %v2096
        %v2657 = vpack.c.b16 %v2105, %v2101
        %v2658 = vpack.c.b16 %v2106, %v2102
        %v2659 = vpack.c.b16 %v2107, %v2103
        %v2660 = vpack.c.b16 %v2108, %v2104
        %v2661 = vpack.c.b16 %v2113, %v2109
        %v2662 = vpack.c.b16 %v2114, %v2110
        %v2663 = vpack.c.b16 %v2115, %v2111
        %v2664 = vpack.c.b16 %v2116, %v2112
        %v2665 = vpack.c.b16 %v2121, %v2117
        %v2666 = vpack.c.b16 %v2122, %v2118
        %v2667 = vpack.c.b16 %v2123, %v2119
        %v2668 = vpack.c.b16 %v2124, %v2120
        %v2669 = vpack.c.b16 %v2129, %v2125
        %v2670 = vpack.c.b16 %v2130, %v2126
        %v2671 = vpack.c.b16 %v2131, %v2127
        %v2672 = vpack.c.b16 %v2132, %v2128
        %v2673 = vpack.c.b16 %v2137, %v2133
        %v2674 = vpack.c.b16 %v2138, %v2134
        %v2675 = vpack.c.b16 %v2139, %v2135
        %v2676 = vpack.c.b16 %v2140, %v2136
        %v2677 = vpack.c.b16 %v2145, %v2141
        %v2678 = vpack.c.b16 %v2146, %v2142
        %v2679 = vpack.c.b16 %v2147, %v2143
        %v2680 = vpack.c.b16 %v2148, %v2144
        %v2681 = vpack.c.b16 %v2153, %v2149
        %v2682 = vpack.c.b16 %v2154, %v2150
        %v2683 = vpack.c.b16 %v2155, %v2151
        %v2684 = vpack.c.b16 %v2156, %v2152
        %v2685 = vpack.c.b16 %v2161, %v2157
        %v2686 = vpack.c.b16 %v2162, %v2158
        %v2687 = vpack.c.b16 %v2163, %v2159
        %v2688 = vpack.c.b16 %v2164, %v2160
        %v2689 = vpack.c.b16 %v2169, %v2165
        %v2690 = vpack.c.b16 %v2170, %v2166
        %v2691 = vpack.c.b16 %v2171, %v2167
        %v2692 = vpack.c.b16 %v2172, %v2168
        %v2693 = vpack.c.b16 %v2177, %v2173
        %v2694 = vpack.c.b16 %v2178, %v2174
        %v2695 = vpack.c.b16 %v2179, %v2175
        %v2696 = vpack.c.b16 %v2180, %v2176
        %v2697 = vpack.c.b16 %v2185, %v2181
        %v2698 = vpack.c.b16 %v2186, %v2182
        %v2699 = vpack.c.b16 %v2187, %v2183
        %v2700 = vpack.c.b16 %v2188, %v2184
        %v2701 = vpack.c.b16 %v2193, %v2189
        %v2702 = vpack.c.b16 %v2194, %v2190
        %v2703 = vpack.c.b16 %v2195, %v2191
        %v2704 = vpack.c.b16 %v2196, %v2192
        %v2705 = vpack.c.b16 %v2201, %v2197
        %v2706 = vpack.c.b16 %v2202, %v2198
        %v2707 = vpack.c.b16 %v2203, %v2199
        %v2708 = vpack.c.b16 %v2204, %v2200
        %v2709 = vpack.c.b16 %v2209, %v2205
        %v2710 = vpack.c.b16 %v2210, %v2206
        %v2711 = vpack.c.b16 %v2211, %v2207
        %v2712 = vpack.c.b16 %v2212, %v2208
        %v2713 = vpack.c.b16 %v2217, %v2213
        %v2714 = vpack.c.b16 %v2218, %v2214
        %v2715 = vpack.c.b16 %v2219, %v2215
        %v2716 = vpack.c.b16 %v2220, %v2216
        %v2717 = vpack.c.b16 %v2225, %v2221
        %v2718 = vpack.c.b16 %v2226, %v2222
        %v2719 = vpack.c.b16 %v2227, %v2223
        %v2720 = vpack.c.b16 %v2228, %v2224
        %v2721 = vpack.c.b16 %v2233, %v2229
        %v2722 = vpack.c.b16 %v2234, %v2230
        %v2723 = vpack.c.b16 %v2235, %v2231
        %v2724 = vpack.c.b16 %v2236, %v2232
        %v2725 = vpack.c.b16 %v2241, %v2237
        %v2726 = vpack.c.b16 %v2242, %v2238
        %v2727 = vpack.c.b16 %v2243, %v2239
        %v2728 = vpack.c.b16 %v2244, %v2240
        %v2729 = vpack.c.b16 %v2249, %v2245
        %v2730 = vpack.c.b16 %v2250, %v2246
        %v2731 = vpack.c.b16 %v2251, %v2247
        %v2732 = vpack.c.b16 %v2252, %v2248
        %v2733 = vpack.c.b16 %v2257, %v2253
        %v2734 = vpack.c.b16 %v2258, %v2254
        %v2735 = vpack.c.b16 %v2259, %v2255
        %v2736 = vpack.c.b16 %v2260, %v2256
        %v2737 = vpack.c.b16 %v2265, %v2261
        %v2738 = vpack.c.b16 %v2266, %v2262
        %v2739 = vpack.c.b16 %v2267, %v2263
        %v2740 = vpack.c.b16 %v2268, %v2264
        %v2741 = vpack.c.b16 %v2273, %v2269
        %v2742 = vpack.c.b16 %v2274, %v2270
        %v2743 = vpack.c.b16 %v2275, %v2271
        %v2744 = vpack.c.b16 %v2276, %v2272
        %v2745 = vpack.c.b16 %v2281, %v2277
        %v2746 = vpack.c.b16 %v2282, %v2278
        %v2747 = vpack.c.b16 %v2283, %v2279
        %v2748 = vpack.c.b16 %v2284, %v2280
        %v2749 = vpack.c.b16 %v2289, %v2285
        %v2750 = vpack.c.b16 %v2290, %v2286
        %v2751 = vpack.c.b16 %v2291, %v2287
        %v2752 = vpack.c.b16 %v2292, %v2288
        %v2753 = vpack.c.b16 %v2297, %v2293
        %v2754 = vpack.c.b16 %v2298, %v2294
        %v2755 = vpack.c.b16 %v2299, %v2295
        %v2756 = vpack.c.b16 %v2300, %v2296
        %v2757 = vpack.c.b16 %v2305, %v2301
        %v2758 = vpack.c.b16 %v2306, %v2302
        %v2759 = vpack.c.b16 %v2307, %v2303
        %v2760 = vpack.c.b16 %v2308, %v2304
        %v2761 = vpack.c.b16 %v2313, %v2309
        %v2762 = vpack.c.b16 %v2314, %v2310
        %v2763 = vpack.c.b16 %v2315, %v2311
        %v2764 = vpack.c.b16 %v2316, %v2312
        %v2765 = vpack.c.b16 %v2321, %v2317
        %v2766 = vpack.c.b16 %v2322, %v2318
        %v2767 = vpack.c.b16 %v2323, %v2319
        %v2768 = vpack.c.b16 %v2324, %v2320
        %v2769 = vpack.c.b16 %v2329, %v2325
        %v2770 = vpack.c.b16 %v2330, %v2326
        %v2771 = vpack.c.b16 %v2331, %v2327
        %v2772 = vpack.c.b16 %v2332, %v2328
        %v2773 = vpack.c.b16 %v2337, %v2333
        %v2774 = vpack.c.b16 %v2338, %v2334
        %v2775 = vpack.c.b16 %v2339, %v2335
        %v2776 = vpack.c.b16 %v2340, %v2336
        %v2777 = vpack.c.b16 %v2345, %v2341
        %v2778 = vpack.c.b16 %v2346, %v2342
        %v2779 = vpack.c.b16 %v2347, %v2343
        %v2780 = vpack.c.b16 %v2348, %v2344
        %v2781 = vpack.c.b16 %v2353, %v2349
        %v2782 = vpack.c.b16 %v2354, %v2350
        %v2783 = vpack.c.b16 %v2355, %v2351
        %v2784 = vpack.c.b16 %v2356, %v2352
        %v2785 = vpack.c.b16 %v2361, %v2357
        %v2786 = vpack.c.b16 %v2362, %v2358
        %v2787 = vpack.c.b16 %v2363, %v2359
        %v2788 = vpack.c.b16 %v2364, %v2360
        %v2789 = vpack.c.b16 %v2369, %v2365
        %v2790 = vpack.c.b16 %v2370, %v2366
        %v2791 = vpack.c.b16 %v2371, %v2367
        %v2792 = vpack.c.b16 %v2372, %v2368
        %v2793 = vpack.c.b16 %v2377, %v2373
        %v2794 = vpack.c.b16 %v2378, %v2374
        %v2795 = vpack.c.b16 %v2379, %v2375
        %v2796 = vpack.c.b16 %v2380, %v2376
        %v2797 = vpack.c.b16 %v2385, %v2381
        %v2798 = vpack.c.b16 %v2386, %v2382
        %v2799 = vpack.c.b16 %v2387, %v2383
        %v2800 = vpack.c.b16 %v2388, %v2384
        %v2801 = vpack.c.b16 %v2393, %v2389
        %v2802 = vpack.c.b16 %v2394, %v2390
        %v2803 = vpack.c.b16 %v2395, %v2391
        %v2804 = vpack.c.b16 %v2396, %v2392
        %v2805 = vpack.c.b16 %v2401, %v2397
        %v2806 = vpack.c.b16 %v2402, %v2398
        %v2807 = vpack.c.b16 %v2403, %v2399
        %v2808 = vpack.c.b16 %v2404, %v2400
        %v2809 = vpack.c.b16 %v2409, %v2405
        %v2810 = vpack.c.b16 %v2410, %v2406
        %v2811 = vpack.c.b16 %v2411, %v2407
        %v2812 = vpack.c.b16 %v2412, %v2408
        %v2813 = vpack.c.b16 %v2417, %v2413
        %v2814 = vpack.c.b16 %v2418, %v2414
        %v2815 = vpack.c.b16 %v2419, %v2415
        %v2816 = vpack.c.b16 %v2420, %v2416
        %v2817 = vpack.c.b16 %v2425, %v2421
        %v2818 = vpack.c.b16 %v2426, %v2422
        %v2819 = vpack.c.b16 %v2427, %v2423
        %v2820 = vpack.c.b16 %v2428, %v2424
        %v2821 = vpack.c.b16 %v2433, %v2429
        %v2822 = vpack.c.b16 %v2434, %v2430
        %v2823 = vpack.c.b16 %v2435, %v2431
        %v2824 = vpack.c.b16 %v2436, %v2432
        %v2825 = vpack.c.b16 %v2441, %v2437
        %v2826 = vpack.c.b16 %v2442, %v2438
        %v2827 = vpack.c.b16 %v2443, %v2439
        %v2828 = vpack.c.b16 %v2444, %v2440
        %v2829 = vpack.c.b16 %v2449, %v2445
        %v2830 = vpack.c.b16 %v2450, %v2446
        %v2831 = vpack.c.b16 %v2451, %v2447
        %v2832 = vpack.c.b16 %v2452, %v2448
        %v2833 = vpack.c.b16 %v2457, %v2453
        %v2834 = vpack.c.b16 %v2458, %v2454
        %v2835 = vpack.c.b16 %v2459, %v2455
        %v2836 = vpack.c.b16 %v2460, %v2456
        %v2837 = vpack.c.b16 %v2465, %v2461
        %v2838 = vpack.c.b16 %v2466, %v2462
        %v2839 = vpack.c.b16 %v2467, %v2463
        %v2840 = vpack.c.b16 %v2468, %v2464
        %v2841 = vpack.c.b16 %v2473, %v2469
        %v2842 = vpack.c.b16 %v2474, %v2470
        %v2843 = vpack.c.b16 %v2475, %v2471
        %v2844 = vpack.c.b16 %v2476, %v2472
        %v2845 = vpack.c.b16 %v2481, %v2477
        %v2846 = vpack.c.b16 %v2482, %v2478
        %v2847 = vpack.c.b16 %v2483, %v2479
        %v2848 = vpack.c.b16 %v2484, %v2480
        %v2849 = vpack.c.b16 %v2489, %v2485
        %v2850 = vpack.c.b16 %v2490, %v2486
        %v2851 = vpack.c.b16 %v2491, %v2487
        %v2852 = vpack.c.b16 %v2492, %v2488
        %v2853 = vpack.c.b16 %v2497, %v2493
        %v2854 = vpack.c.b16 %v2498, %v2494
        %v2855 = vpack.c.b16 %v2499, %v2495
        %v2856 = vpack.c.b16 %v2500, %v2496
        %v2857 = vpack.c.b16 %v2505, %v2501
        %v2858 = vpack.c.b16 %v2506, %v2502
        %v2859 = vpack.c.b16 %v2507, %v2503
        %v2860 = vpack.c.b16 %v2508, %v2504
        %v2861 = vpack.c.b16 %v2513, %v2509
        %v2862 = vpack.c.b16 %v2514, %v2510
        %v2863 = vpack.c.b16 %v2515, %v2511
        %v2864 = vpack.c.b16 %v2516, %v2512
        %v2865 = vpack.c.b16 %v2521, %v2517
        %v2866 = vpack.c.b16 %v2522, %v2518
        %v2867 = vpack.c.b16 %v2523, %v2519
        %v2868 = vpack.c.b16 %v2524, %v2520
        %v2869 = vpack.c.b16 %v2529, %v2525
        %v2870 = vpack.c.b16 %v2530, %v2526
        %v2871 = vpack.c.b16 %v2531, %v2527
        %v2872 = vpack.c.b16 %v2532, %v2528
        %v2873 = vpack.c.b16 %v2537, %v2533
        %v2874 = vpack.c.b16 %v2538, %v2534
        %v2875 = vpack.c.b16 %v2539, %v2535
        %v2876 = vpack.c.b16 %v2540, %v2536
        %v2877 = vpack.c.b16 %v2545, %v2541
        %v2878 = vpack.c.b16 %v2546, %v2542
        %v2879 = vpack.c.b16 %v2547, %v2543
        %v2880 = vpack.c.b16 %v2548, %v2544
        %v2881 = vpack.c.b16 %v2553, %v2549
        %v2882 = vpack.c.b16 %v2554, %v2550
        %v2883 = vpack.c.b16 %v2555, %v2551
        %v2884 = vpack.c.b16 %v2556, %v2552
        %v2885 = vpack.c.b16 %v2561, %v2557
        %v2886 = vpack.c.b16 %v2562, %v2558
        %v2887 = vpack.c.b16 %v2563, %v2559
        %v2888 = vpack.c.b16 %v2564, %v2560
        %v2889 = vpack.c.b16 %v2569, %v2565
        %v2890 = vpack.c.b16 %v2570, %v2566
        %v2891 = vpack.c.b16 %v2571, %v2567
        %v2892 = vpack.c.b16 %v2572, %v2568
        %v2893 = vpack.c.b16 %v2577, %v2573
        %v2894 = vpack.c.b16 %v2578, %v2574
        %v2895 = vpack.c.b16 %v2579, %v2575
        %v2896 = vpack.c.b16 %v2580, %v2576
        %v2897 = vpack.c.b16 %v2585, %v2581
        %v2898 = vpack.c.b16 %v2586, %v2582
        %v2899 = vpack.c.b16 %v2587, %v2583
        %v2900 = vpack.c.b16 %v2588, %v2584
        %v2901 = vpack.c.b16 %v2593, %v2589
        %v2902 = vpack.c.b16 %v2594, %v2590
        %v2903 = vpack.c.b16 %v2595, %v2591
        %v2904 = vpack.c.b16 %v2596, %v2592
        %v2905 = vpack.c.b16 %v2601, %v2597
        %v2906 = vpack.c.b16 %v2602, %v2598
        %v2907 = vpack.c.b16 %v2603, %v2599
        %v2908 = vpack.c.b16 %v2604, %v2600
        %v2909 = vpack.c.b16 %v2609, %v2605
        %v2910 = vpack.c.b16 %v2610, %v2606
        %v2911 = vpack.c.b16 %v2611, %v2607
        %v2912 = vpack.c.b16 %v2612, %v2608
        %v2913 = vpack.c.b16 %v2617, %v2613
        %v2914 = vpack.c.b16 %v2618, %v2614
        %v2915 = vpack.c.b16 %v2619, %v2615
        %v2916 = vpack.c.b16 %v2620, %v2616
        %v2917 = vpack.c.b16 %v2625, %v2621
        %v2918 = vpack.c.b16 %v2626, %v2622
        %v2919 = vpack.c.b16 %v2627, %v2623
        %v2920 = vpack.c.b16 %v2628, %v2624
        %v2921 = vpack.c.b16 %v2633, %v2629
        %v2922 = vpack.c.b16 %v2634, %v2630
        %v2923 = vpack.c.b16 %v2635, %v2631
        %v2924 = vpack.c.b16 %v2636, %v2632
        %3213 = vmatprep.subr.bf16.mxu0 %v2638
        %3214 = vmatpush1.bf16.msra.mxu0 %v2637
        %3215 = vmatprep.subr.bf16.mxu0 %v2642
        %3216 = vmatpush1.bf16.msra.mxu0 %v2641
        %3217 = vmatprep.subr.bf16.mxu0 %v2646
        %3218 = vmatpush1.bf16.msra.mxu0 %v2645
        %3219 = vmatprep.subr.bf16.mxu0 %v2650
        %3220 = vmatpush1.bf16.msra.mxu0 %v2649
        %3221 = vmatprep.subr.bf16.mxu0 %v2654
        %3222 = vmatpush1.bf16.msra.mxu0 %v2653
        %3223 = vmatprep.subr.bf16.mxu0 %v2658
        %3224 = vmatpush1.bf16.msra.mxu0 %v2657
        %3225 = vmatprep.subr.bf16.mxu0 %v2662
        %3226 = vmatpush1.bf16.msra.mxu0 %v2661
        %3227 = vmatprep.subr.bf16.mxu0 %v2666
        %3228 = vmatpush1.bf16.msra.mxu0 %v2665
        %3229 = vmatprep.subr.bf16.mxu0 %v2670
        %3230 = vmatpush1.bf16.msra.mxu0 %v2669
        %3231 = vmatprep.subr.bf16.mxu0 %v2674
        %3232 = vmatpush1.bf16.msra.mxu0 %v2673
        %3233 = vmatprep.subr.bf16.mxu0 %v2678
        %3234 = vmatpush1.bf16.msra.mxu0 %v2677
        %3235 = vmatprep.subr.bf16.mxu0 %v2682
        %3236 = vmatpush1.bf16.msra.mxu0 %v2681
        %3237 = vmatprep.subr.bf16.mxu0 %v2686
        %3238 = vmatpush1.bf16.msra.mxu0 %v2685
        %3239 = vmatprep.subr.bf16.mxu0 %v2690
        %3240 = vmatpush1.bf16.msra.mxu0 %v2689
        %3241 = vmatprep.subr.bf16.mxu0 %v2694
        %3242 = vmatpush1.bf16.msra.mxu0 %v2693
        %3243 = vmatprep.subr.bf16.mxu0 %v2698
        %3244 = vmatpush1.bf16.msra.mxu0 %v2697
        %3245 = vmatprep.mubr.bf16.mxu0 %v1374
        %3246 = vmatmul.mubr.bf16.gmra.mrb[0].mxu0 %v1362
        %v3247 = vpop.f32.mrb[0].mxu0
        %v3248 = vadd.f32 %v1756, %v3247
        %v3249 = vpop.f32.mrb[0].mxu0
        %v3250 = vadd.f32 %v1760, %v3249
        %v3251 = vpop.f32.mrb[0].mxu0
        %v3252 = vadd.f32 %v1756, %v3251
        %v3253 = vpop.f32.mrb[0].mxu0
        %v3254 = vadd.f32 %v1760, %v3253
        %3255 = vmatprep.mubr.bf16.mxu0 %v1375
        %3256 = vmatmul.mubr.bf16.gmra.mrb[0].mxu0 %v1363
        %v3257 = vpop.f32.mrb[0].mxu0
        %v3258 = vadd.f32 %v1756, %v3257
        %v3259 = vpop.f32.mrb[0].mxu0
        %v3260 = vadd.f32 %v1760, %v3259
        %v3261 = vpop.f32.mrb[0].mxu0
        %v3262 = vadd.f32 %v1756, %v3261
        %v3263 = vpop.f32.mrb[0].mxu0
        %v3264 = vadd.f32 %v1760, %v3263
        %3265 = vmatprep.mubr.bf16.mxu0 %v1376
        %3266 = vmatmul.mubr.bf16.gmra.mrb[0].mxu0 %v1364
        %v3267 = vpop.f32.mrb[0].mxu0
        %v3268 = vadd.f32 %v1756, %v3267
        %v3269 = vpop.f32.mrb[0].mxu0
        %v3270 = vadd.f32 %v1760, %v3269
        %v3271 = vpop.f32.mrb[0].mxu0
        %v3272 = vadd.f32 %v1756, %v3271
        %v3273 = vpop.f32.mrb[0].mxu0
        %v3274 = vadd.f32 %v1760, %v3273
        %3275 = vmatprep.mubr.bf16.mxu0 %v1377
        %3276 = vmatmul.mubr.bf16.gmra.mrb[0].mxu0 %v1365
        %v3277 = vpop.f32.mrb[0].mxu0
        %v3278 = vadd.f32 %v1756, %v3277
        %v3279 = vpop.f32.mrb[0].mxu0
        %v3280 = vadd.f32 %v1760, %v3279
        %v3281 = vpop.f32.mrb[0].mxu0
        %v3282 = vadd.f32 %v1756, %v3281
        %v3283 = vpop.f32.mrb[0].mxu0
        %v3284 = vadd.f32 %v1760, %v3283
        %3285 = vdwg.mxu0
        %3286 = vmatprep.subr.bf16.mxu0 %v2702
        %3287 = vmatpush1.bf16.msra.mxu0 %v2701
        %3288 = vmatprep.subr.bf16.mxu0 %v2706
        %3289 = vmatpush1.bf16.msra.mxu0 %v2705
        %3290 = vmatprep.subr.bf16.mxu0 %v2710
        %3291 = vmatpush1.bf16.msra.mxu0 %v2709
        %3292 = vmatprep.subr.bf16.mxu0 %v2714
        %3293 = vmatpush1.bf16.msra.mxu0 %v2713
        %3294 = vmatprep.subr.bf16.mxu0 %v2718
        %3295 = vmatpush1.bf16.msra.mxu0 %v2717
        %3296 = vmatprep.subr.bf16.mxu0 %v2722
        %3297 = vmatpush1.bf16.msra.mxu0 %v2721
        %3298 = vmatprep.subr.bf16.mxu0 %v2726
        %3299 = vmatpush1.bf16.msra.mxu0 %v2725
        %3300 = vmatprep.subr.bf16.mxu0 %v2730
        %3301 = vmatpush1.bf16.msra.mxu0 %v2729
        %3302 = vmatprep.subr.bf16.mxu0 %v2734
        %3303 = vmatpush1.bf16.msra.mxu0 %v2733
        %3304 = vmatprep.subr.bf16.mxu0 %v2738
        %3305 = vmatpush1.bf16.msra.mxu0 %v2737
        %3306 = vmatprep.subr.bf16.mxu0 %v2742
        %3307 = vmatpush1.bf16.msra.mxu0 %v2741
        %3308 = vmatprep.subr.bf16.mxu0 %v2746
        %3309 = vmatpush1.bf16.msra.mxu0 %v2745
        %3310 = vmatprep.subr.bf16.mxu0 %v2750
        %3311 = vmatpush1.bf16.msra.mxu0 %v2749
        %3312 = vmatprep.subr.bf16.mxu0 %v2754
        %3313 = vmatpush1.bf16.msra.mxu0 %v2753
        %3314 = vmatprep.subr.bf16.mxu0 %v2758
        %3315 = vmatpush1.bf16.msra.mxu0 %v2757
        %3316 = vmatprep.subr.bf16.mxu0 %v2762
        %3317 = vmatpush1.bf16.msra.mxu0 %v2761
        %3318 = vmatprep.mubr.bf16.mxu0 %v1398
        %3319 = vmatmul.mubr.bf16.gmra.mrb[0].mxu0 %v1386
        %v3320 = vpop.f32.mrb[0].mxu0
        %v3321 = vadd.f32 %v3248, %v3320
        %v3322 = vpop.f32.mrb[0].mxu0
        %v3323 = vadd.f32 %v3250, %v3322
        %v3324 = vpop.f32.mrb[0].mxu0
        %v3325 = vadd.f32 %v3252, %v3324
        %v3326 = vpop.f32.mrb[0].mxu0
        %v3327 = vadd.f32 %v3254, %v3326
        %3328 = vmatprep.mubr.bf16.mxu0 %v1399
        %3329 = vmatmul.mubr.bf16.gmra.mrb[0].mxu0 %v1387
        %v3330 = vpop.f32.mrb[0].mxu0
        %v3331 = vadd.f32 %v3258, %v3330
        %v3332 = vpop.f32.mrb[0].mxu0
        %v3333 = vadd.f32 %v3260, %v3332
        %v3334 = vpop.f32.mrb[0].mxu0
        %v3335 = vadd.f32 %v3262, %v3334
        %v3336 = vpop.f32.mrb[0].mxu0
        %v3337 = vadd.f32 %v3264, %v3336
        %3338 = vmatprep.mubr.bf16.mxu0 %v1400
        %3339 = vmatmul.mubr.bf16.gmra.mrb[0].mxu0 %v1388
        %v3340 = vpop.f32.mrb[0].mxu0
        %v3341 = vadd.f32 %v3268, %v3340
        %v3342 = vpop.f32.mrb[0].mxu0
        %v3343 = vadd.f32 %v3270, %v3342
        %v3344 = vpop.f32.mrb[0].mxu0
        %v3345 = vadd.f32 %v3272, %v3344
        %v3346 = vpop.f32.mrb[0].mxu0
        %v3347 = vadd.f32 %v3274, %v3346
        %3348 = vmatprep.mubr.bf16.mxu0 %v1401
        %3349 = vmatmul.mubr.bf16.gmra.mrb[0].mxu0 %v1389
        %v3350 = vpop.f32.mrb[0].mxu0
        %v3351 = vadd.f32 %v3278, %v3350
        %v3352 = vpop.f32.mrb[0].mxu0
        %v3353 = vadd.f32 %v3280, %v3352
        %v3354 = vpop.f32.mrb[0].mxu0
        %v3355 = vadd.f32 %v3282, %v3354
        %v3356 = vpop.f32.mrb[0].mxu0
        %v3357 = vadd.f32 %v3284, %v3356
        %3358 = vdwg.mxu0
        %3359 = vmatprep.subr.bf16.mxu0 %v2766
        %3360 = vmatpush1.bf16.msra.mxu0 %v2765
        %3361 = vmatprep.subr.bf16.mxu0 %v2770
        %3362 = vmatpush1.bf16.msra.mxu0 %v2769
        %3363 = vmatprep.subr.bf16.mxu0 %v2774
        %3364 = vmatpush1.bf16.msra.mxu0 %v2773
        %3365 = vmatprep.subr.bf16.mxu0 %v2778
        %3366 = vmatpush1.bf16.msra.mxu0 %v2777
        %3367 = vmatprep.subr.bf16.mxu0 %v2782
        %3368 = vmatpush1.bf16.msra.mxu0 %v2781
        %3369 = vmatprep.subr.bf16.mxu0 %v2786
        %3370 = vmatpush1.bf16.msra.mxu0 %v2785
        %3371 = vmatprep.subr.bf16.mxu0 %v2790
        %3372 = vmatpush1.bf16.msra.mxu0 %v2789
        %3373 = vmatprep.subr.bf16.mxu0 %v2794
        %3374 = vmatpush1.bf16.msra.mxu0 %v2793
        %3375 = vmatprep.subr.bf16.mxu0 %v2798
        %3376 = vmatpush1.bf16.msra.mxu0 %v2797
        %3377 = vmatprep.subr.bf16.mxu0 %v2802
        %3378 = vmatpush1.bf16.msra.mxu0 %v2801
        %3379 = vmatprep.subr.bf16.mxu0 %v2806
        %3380 = vmatpush1.bf16.msra.mxu0 %v2805
        %3381 = vmatprep.subr.bf16.mxu0 %v2810
        %3382 = vmatpush1.bf16.msra.mxu0 %v2809
        %3383 = vmatprep.subr.bf16.mxu0 %v2814
        %3384 = vmatpush1.bf16.msra.mxu0 %v2813
        %3385 = vmatprep.subr.bf16.mxu0 %v2818
        %3386 = vmatpush1.bf16.msra.mxu0 %v2817
        %3387 = vmatprep.subr.bf16.mxu0 %v2822
        %3388 = vmatpush1.bf16.msra.mxu0 %v2821
        %3389 = vmatprep.subr.bf16.mxu0 %v2826
        %3390 = vmatpush1.bf16.msra.mxu0 %v2825
        %3391 = vmatprep.mubr.bf16.mxu0 %v1422
        %3392 = vmatmul.mubr.bf16.gmra.mrb[0].mxu0 %v1410
        %v3393 = vpop.f32.mrb[0].mxu0
        %v3394 = vadd.f32 %v3321, %v3393
        %v3395 = vpop.f32.mrb[0].mxu0
        %v3396 = vadd.f32 %v3323, %v3395
        %v3397 = vpop.f32.mrb[0].mxu0
        %v3398 = vadd.f32 %v3325, %v3397
        %v3399 = vpop.f32.mrb[0].mxu0
        %v3400 = vadd.f32 %v3327, %v3399
        %3401 = vmatprep.mubr.bf16.mxu0 %v1423
        %3402 = vmatmul.mubr.bf16.gmra.mrb[0].mxu0 %v1411
        %v3403 = vpop.f32.mrb[0].mxu0
        %v3404 = vadd.f32 %v3331, %v3403
        %v3405 = vpop.f32.mrb[0].mxu0
        %v3406 = vadd.f32 %v3333, %v3405
        %v3407 = vpop.f32.mrb[0].mxu0
        %v3408 = vadd.f32 %v3335, %v3407
        %v3409 = vpop.f32.mrb[0].mxu0
        %v3410 = vadd.f32 %v3337, %v3409
        %3411 = vmatprep.mubr.bf16.mxu0 %v1424
        %3412 = vmatmul.mubr.bf16.gmra.mrb[0].mxu0 %v1412
        %v3413 = vpop.f32.mrb[0].mxu0
        %v3414 = vadd.f32 %v3341, %v3413
        %v3415 = vpop.f32.mrb[0].mxu0
        %v3416 = vadd.f32 %v3343, %v3415
        %v3417 = vpop.f32.mrb[0].mxu0
        %v3418 = vadd.f32 %v3345, %v3417
        %v3419 = vpop.f32.mrb[0].mxu0
        %v3420 = vadd.f32 %v3347, %v3419
        %3421 = vmatprep.mubr.bf16.mxu0 %v1425
        %3422 = vmatmul.mubr.bf16.gmra.mrb[0].mxu0 %v1413
        %v3423 = vpop.f32.mrb[0].mxu0
        %v3424 = vadd.f32 %v3351, %v3423
        %v3425 = vpop.f32.mrb[0].mxu0
        %v3426 = vadd.f32 %v3353, %v3425
        %v3427 = vpop.f32.mrb[0].mxu0
        %v3428 = vadd.f32 %v3355, %v3427
        %v3429 = vpop.f32.mrb[0].mxu0
        %v3430 = vadd.f32 %v3357, %v3429
        %3431 = vdwg.mxu0
        %3432 = vmatprep.subr.bf16.mxu0 %v2830
        %3433 = vmatpush1.bf16.msra.mxu0 %v2829
        %3434 = vmatprep.subr.bf16.mxu0 %v2834
        %3435 = vmatpush1.bf16.msra.mxu0 %v2833
        %3436 = vmatprep.subr.bf16.mxu0 %v2838
        %3437 = vmatpush1.bf16.msra.mxu0 %v2837
        %3438 = vmatprep.subr.bf16.mxu0 %v2842
        %3439 = vmatpush1.bf16.msra.mxu0 %v2841
        %3440 = vmatprep.subr.bf16.mxu0 %v2846
        %3441 = vmatpush1.bf16.msra.mxu0 %v2845
        %3442 = vmatprep.subr.bf16.mxu0 %v2850
        %3443 = vmatpush1.bf16.msra.mxu0 %v2849
        %3444 = vmatprep.subr.bf16.mxu0 %v2854
        %3445 = vmatpush1.bf16.msra.mxu0 %v2853
        %3446 = vmatprep.subr.bf16.mxu0 %v2858
        %3447 = vmatpush1.bf16.msra.mxu0 %v2857
        %3448 = vmatprep.subr.bf16.mxu0 %v2862
        %3449 = vmatpush1.bf16.msra.mxu0 %v2861
        %3450 = vmatprep.subr.bf16.mxu0 %v2866
        %3451 = vmatpush1.bf16.msra.mxu0 %v2865
        %3452 = vmatprep.subr.bf16.mxu0 %v2870
        %3453 = vmatpush1.bf16.msra.mxu0 %v2869
        %3454 = vmatprep.subr.bf16.mxu0 %v2874
        %3455 = vmatpush1.bf16.msra.mxu0 %v2873
        %3456 = vmatprep.subr.bf16.mxu0 %v2878
        %3457 = vmatpush1.bf16.msra.mxu0 %v2877
        %3458 = vmatprep.subr.bf16.mxu0 %v2882
        %3459 = vmatpush1.bf16.msra.mxu0 %v2881
        %3460 = vmatprep.subr.bf16.mxu0 %v2886
        %3461 = vmatpush1.bf16.msra.mxu0 %v2885
        %3462 = vmatprep.subr.bf16.mxu0 %v2890
        %3463 = vmatpush1.bf16.msra.mxu0 %v2889
        %3464 = vmatprep.mubr.bf16.mxu0 %v1447
        %3465 = vmatmul.mubr.bf16.gmra.mrb[0].mxu0 %v1435
        %v3466 = vpop.f32.mrb[0].mxu0
        %v3467 = vadd.f32 %v3394, %v3466
        %v3468 = vpop.f32.mrb[0].mxu0
        %v3469 = vadd.f32 %v3396, %v3468
        %v3470 = vpop.f32.mrb[0].mxu0
        %v3471 = vadd.f32 %v3398, %v3470
        %v3472 = vpop.f32.mrb[0].mxu0
        %v3473 = vadd.f32 %v3400, %v3472
        %3474 = vmatprep.mubr.bf16.mxu0 %v1448
        %3475 = vmatmul.mubr.bf16.gmra.mrb[0].mxu0 %v1436
        %v3476 = vpop.f32.mrb[0].mxu0
        %v3477 = vadd.f32 %v3404, %v3476
        %v3478 = vpop.f32.mrb[0].mxu0
        %v3479 = vadd.f32 %v3406, %v3478
        %v3480 = vpop.f32.mrb[0].mxu0
        %v3481 = vadd.f32 %v3408, %v3480
        %v3482 = vpop.f32.mrb[0].mxu0
        %v3483 = vadd.f32 %v3410, %v3482
        %3484 = vmatprep.mubr.bf16.mxu0 %v1449
        %3485 = vmatmul.mubr.bf16.gmra.mrb[0].mxu0 %v1437
        %v3486 = vpop.f32.mrb[0].mxu0
        %v3487 = vadd.f32 %v3414, %v3486
        %v3488 = vpop.f32.mrb[0].mxu0
        %v3489 = vadd.f32 %v3416, %v3488
        %v3490 = vpop.f32.mrb[0].mxu0
        %v3491 = vadd.f32 %v3418, %v3490
        %v3492 = vpop.f32.mrb[0].mxu0
        %v3493 = vadd.f32 %v3420, %v3492
        %3494 = vmatprep.mubr.bf16.mxu0 %v1450
        %3495 = vmatmul.mubr.bf16.gmra.mrb[0].mxu0 %v1438
        %v3496 = vpop.f32.mrb[0].mxu0
        %v3497 = vadd.f32 %v3424, %v3496
        %v3498 = vpop.f32.mrb[0].mxu0
        %v3499 = vadd.f32 %v3426, %v3498
        %v3500 = vpop.f32.mrb[0].mxu0
        %v3501 = vadd.f32 %v3428, %v3500
        %v3502 = vpop.f32.mrb[0].mxu0
        %v3503 = vadd.f32 %v3430, %v3502
        %3504 = vdwg.mxu0
        %3505 = vmatprep.subr.bf16.mxu0 %v2894
        %3506 = vmatpush1.bf16.msra.mxu0 %v2893
        %3507 = vmatprep.subr.bf16.mxu0 %v2898
        %3508 = vmatpush1.bf16.msra.mxu0 %v2897
        %3509 = vmatprep.subr.bf16.mxu0 %v2902
        %3510 = vmatpush1.bf16.msra.mxu0 %v2901
        %3511 = vmatprep.subr.bf16.mxu0 %v2906
        %3512 = vmatpush1.bf16.msra.mxu0 %v2905
        %3513 = vmatprep.subr.bf16.mxu0 %v2910
        %3514 = vmatpush1.bf16.msra.mxu0 %v2909
        %3515 = vmatprep.subr.bf16.mxu0 %v2914
        %3516 = vmatpush1.bf16.msra.mxu0 %v2913
        %3517 = vmatprep.subr.bf16.mxu0 %v2918
        %3518 = vmatpush1.bf16.msra.mxu0 %v2917
        %3519 = vmatprep.subr.bf16.mxu0 %v2922
        %3520 = vmatpush1.bf16.msra.mxu0 %v2921
        %3521 = vmatprep.subr.bf16.mxu0 0
        %3522 = vmatpush1.bf16.msra.mxu0 0
        %3523 = vmatprep.subr.bf16.mxu0 0
        %3524 = vmatpush1.bf16.msra.mxu0 0
        %3525 = vmatprep.subr.bf16.mxu0 0
        %3526 = vmatpush1.bf16.msra.mxu0 0
        %3527 = vmatprep.subr.bf16.mxu0 0
        %3528 = vmatpush1.bf16.msra.mxu0 0
        %3529 = vmatprep.subr.bf16.mxu0 0
        %3530 = vmatpush1.bf16.msra.mxu0 0
        %3531 = vmatprep.subr.bf16.mxu0 0
        %3532 = vmatpush1.bf16.msra.mxu0 0
        %3533 = vmatprep.subr.bf16.mxu0 0
        %3534 = vmatpush1.bf16.msra.mxu0 0
        %3535 = vmatprep.subr.bf16.mxu0 0
        %3536 = vmatpush1.bf16.msra.mxu0 0
        %3537 = vmatprep.mubr.bf16.mxu0 0
        %3538 = vmatmul.mubr.bf16.gmra.mrb[0].mxu0 %v1459
        %v3539 = vpop.f32.mrb[0].mxu0
        %v3540 = vadd.f32 %v3467, %v3539
        %v3541 = vpop.f32.mrb[0].mxu0
        %v3542 = vadd.f32 %v3469, %v3541
        %v3543 = vpop.f32.mrb[0].mxu0
        %v3544 = vadd.f32 %v3471, %v3543
        %v3545 = vpop.f32.mrb[0].mxu0
        %v3546 = vadd.f32 %v3473, %v3545
        %3547 = vmatprep.mubr.bf16.mxu0 0
        %3548 = vmatmul.mubr.bf16.gmra.mrb[0].mxu0 %v1460
        %v3549 = vpop.f32.mrb[0].mxu0
        %v3550 = vadd.f32 %v3477, %v3549
        %v3551 = vpop.f32.mrb[0].mxu0
        %v3552 = vadd.f32 %v3479, %v3551
        %v3553 = vpop.f32.mrb[0].mxu0
        %v3554 = vadd.f32 %v3481, %v3553
        %v3555 = vpop.f32.mrb[0].mxu0
        %v3556 = vadd.f32 %v3483, %v3555
        %3557 = vmatprep.mubr.bf16.mxu0 0
        %3558 = vmatmul.mubr.bf16.gmra.mrb[0].mxu0 %v1461
        %v3559 = vpop.f32.mrb[0].mxu0
        %v3560 = vadd.f32 %v3487, %v3559
        %v3561 = vpop.f32.mrb[0].mxu0
        %v3562 = vadd.f32 %v3489, %v3561
        %v3563 = vpop.f32.mrb[0].mxu0
        %v3564 = vadd.f32 %v3491, %v3563
        %v3565 = vpop.f32.mrb[0].mxu0
        %v3566 = vadd.f32 %v3493, %v3565
        %3567 = vmatprep.mubr.bf16.mxu0 0
        %3568 = vmatmul.mubr.bf16.gmra.mrb[0].mxu0 %v1462
        %v3569 = vpop.f32.mrb[0].mxu0
        %v3570 = vadd.f32 %v3497, %v3569
        %v3571 = vpop.f32.mrb[0].mxu0
        %v3572 = vadd.f32 %v3499, %v3571
        %v3573 = vpop.f32.mrb[0].mxu0
        %v3574 = vadd.f32 %v3501, %v3573
        %v3575 = vpop.f32.mrb[0].mxu0
        %v3576 = vadd.f32 %v3503, %v3575
        %3577 = vdwg.mxu0
        %3578 = vmatprep.subr.bf16.mxu0 %v2640
        %3579 = vmatpush1.bf16.msra.mxu0 %v2639
        %3580 = vmatprep.subr.bf16.mxu0 %v2644
        %3581 = vmatpush1.bf16.msra.mxu0 %v2643
        %3582 = vmatprep.subr.bf16.mxu0 %v2648
        %3583 = vmatpush1.bf16.msra.mxu0 %v2647
        %3584 = vmatprep.subr.bf16.mxu0 %v2652
        %3585 = vmatpush1.bf16.msra.mxu0 %v2651
        %3586 = vmatprep.subr.bf16.mxu0 %v2656
        %3587 = vmatpush1.bf16.msra.mxu0 %v2655
        %3588 = vmatprep.subr.bf16.mxu0 %v2660
        %3589 = vmatpush1.bf16.msra.mxu0 %v2659
        %3590 = vmatprep.subr.bf16.mxu0 %v2664
        %3591 = vmatpush1.bf16.msra.mxu0 %v2663
        %3592 = vmatprep.subr.bf16.mxu0 %v2668
        %3593 = vmatpush1.bf16.msra.mxu0 %v2667
        %3594 = vmatprep.subr.bf16.mxu0 %v2672
        %3595 = vmatpush1.bf16.msra.mxu0 %v2671
        %3596 = vmatprep.subr.bf16.mxu0 %v2676
        %3597 = vmatpush1.bf16.msra.mxu0 %v2675
        %3598 = vmatprep.subr.bf16.mxu0 %v2680
        %3599 = vmatpush1.bf16.msra.mxu0 %v2679
        %3600 = vmatprep.subr.bf16.mxu0 %v2684
        %3601 = vmatpush1.bf16.msra.mxu0 %v2683
        %3602 = vmatprep.subr.bf16.mxu0 %v2688
        %3603 = vmatpush1.bf16.msra.mxu0 %v2687
        %3604 = vmatprep.subr.bf16.mxu0 %v2692
        %3605 = vmatpush1.bf16.msra.mxu0 %v2691
        %3606 = vmatprep.subr.bf16.mxu0 %v2696
        %3607 = vmatpush1.bf16.msra.mxu0 %v2695
        %3608 = vmatprep.subr.bf16.mxu0 %v2700
        %3609 = vmatpush1.bf16.msra.mxu0 %v2699
        %3610 = vmatprep.mubr.bf16.mxu0 %v1374
        %3611 = vmatmul.mubr.bf16.gmra.mrb[0].mxu0 %v1362
        %v3612 = vpop.f32.mrb[0].mxu0
        %v3613 = vadd.f32 %v1764, %v3612
        %v3614 = vpop.f32.mrb[0].mxu0
        %v3615 = vadd.f32 %v1768, %v3614
        %v3616 = vpop.f32.mrb[0].mxu0
        %v3617 = vadd.f32 %v1764, %v3616
        %v3618 = vpop.f32.mrb[0].mxu0
        %v3619 = vadd.f32 %v1768, %v3618
        %3620 = vmatprep.mubr.bf16.mxu0 %v1375
        %3621 = vmatmul.mubr.bf16.gmra.mrb[0].mxu0 %v1363
        %v3622 = vpop.f32.mrb[0].mxu0
        %v3623 = vadd.f32 %v1764, %v3622
        %v3624 = vpop.f32.mrb[0].mxu0
        %v3625 = vadd.f32 %v1768, %v3624
        %v3626 = vpop.f32.mrb[0].mxu0
        %v3627 = vadd.f32 %v1764, %v3626
        %v3628 = vpop.f32.mrb[0].mxu0
        %v3629 = vadd.f32 %v1768, %v3628
        %3630 = vmatprep.mubr.bf16.mxu0 %v1376
        %3631 = vmatmul.mubr.bf16.gmra.mrb[0].mxu0 %v1364
        %v3632 = vpop.f32.mrb[0].mxu0
        %v3633 = vadd.f32 %v1764, %v3632
        %v3634 = vpop.f32.mrb[0].mxu0
        %v3635 = vadd.f32 %v1768, %v3634
        %v3636 = vpop.f32.mrb[0].mxu0
        %v3637 = vadd.f32 %v1764, %v3636
        %v3638 = vpop.f32.mrb[0].mxu0
        %v3639 = vadd.f32 %v1768, %v3638
        %3640 = vmatprep.mubr.bf16.mxu0 %v1377
        %3641 = vmatmul.mubr.bf16.gmra.mrb[0].mxu0 %v1365
        %v3642 = vpop.f32.mrb[0].mxu0
        %v3643 = vadd.f32 %v1764, %v3642
        %v3644 = vpop.f32.mrb[0].mxu0
        %v3645 = vadd.f32 %v1768, %v3644
        %v3646 = vpop.f32.mrb[0].mxu0
        %v3647 = vadd.f32 %v1764, %v3646
        %v3648 = vpop.f32.mrb[0].mxu0
        %v3649 = vadd.f32 %v1768, %v3648
        %3650 = vdwg.mxu0
        %3651 = vmatprep.subr.bf16.mxu0 %v2704
        %3652 = vmatpush1.bf16.msra.mxu0 %v2703
        %3653 = vmatprep.subr.bf16.mxu0 %v2708
        %3654 = vmatpush1.bf16.msra.mxu0 %v2707
        %3655 = vmatprep.subr.bf16.mxu0 %v2712
        %3656 = vmatpush1.bf16.msra.mxu0 %v2711
        %3657 = vmatprep.subr.bf16.mxu0 %v2716
        %3658 = vmatpush1.bf16.msra.mxu0 %v2715
        %3659 = vmatprep.subr.bf16.mxu0 %v2720
        %3660 = vmatpush1.bf16.msra.mxu0 %v2719
        %3661 = vmatprep.subr.bf16.mxu0 %v2724
        %3662 = vmatpush1.bf16.msra.mxu0 %v2723
        %3663 = vmatprep.subr.bf16.mxu0 %v2728
        %3664 = vmatpush1.bf16.msra.mxu0 %v2727
        %3665 = vmatprep.subr.bf16.mxu0 %v2732
        %3666 = vmatpush1.bf16.msra.mxu0 %v2731
        %3667 = vmatprep.subr.bf16.mxu0 %v2736
        %3668 = vmatpush1.bf16.msra.mxu0 %v2735
        %3669 = vmatprep.subr.bf16.mxu0 %v2740
        %3670 = vmatpush1.bf16.msra.mxu0 %v2739
        %3671 = vmatprep.subr.bf16.mxu0 %v2744
        %3672 = vmatpush1.bf16.msra.mxu0 %v2743
        %3673 = vmatprep.subr.bf16.mxu0 %v2748
        %3674 = vmatpush1.bf16.msra.mxu0 %v2747
        %3675 = vmatprep.subr.bf16.mxu0 %v2752
        %3676 = vmatpush1.bf16.msra.mxu0 %v2751
        %3677 = vmatprep.subr.bf16.mxu0 %v2756
        %3678 = vmatpush1.bf16.msra.mxu0 %v2755
        %3679 = vmatprep.subr.bf16.mxu0 %v2760
        %3680 = vmatpush1.bf16.msra.mxu0 %v2759
        %3681 = vmatprep.subr.bf16.mxu0 %v2764
        %3682 = vmatpush1.bf16.msra.mxu0 %v2763
        %3683 = vmatprep.mubr.bf16.mxu0 %v1398
        %3684 = vmatmul.mubr.bf16.gmra.mrb[0].mxu0 %v1386
        %v3685 = vpop.f32.mrb[0].mxu0
        %v3686 = vadd.f32 %v3613, %v3685
        %v3687 = vpop.f32.mrb[0].mxu0
        %v3688 = vadd.f32 %v3615, %v3687
        %v3689 = vpop.f32.mrb[0].mxu0
        %v3690 = vadd.f32 %v3617, %v3689
        %v3691 = vpop.f32.mrb[0].mxu0
        %v3692 = vadd.f32 %v3619, %v3691
        %3693 = vmatprep.mubr.bf16.mxu0 %v1399
        %3694 = vmatmul.mubr.bf16.gmra.mrb[0].mxu0 %v1387
        %v3695 = vpop.f32.mrb[0].mxu0
        %v3696 = vadd.f32 %v3623, %v3695
        %v3697 = vpop.f32.mrb[0].mxu0
        %v3698 = vadd.f32 %v3625, %v3697
        %v3699 = vpop.f32.mrb[0].mxu0
        %v3700 = vadd.f32 %v3627, %v3699
        %v3701 = vpop.f32.mrb[0].mxu0
        %v3702 = vadd.f32 %v3629, %v3701
        %3703 = vmatprep.mubr.bf16.mxu0 %v1400
        %3704 = vmatmul.mubr.bf16.gmra.mrb[0].mxu0 %v1388
        %v3705 = vpop.f32.mrb[0].mxu0
        %v3706 = vadd.f32 %v3633, %v3705
        %v3707 = vpop.f32.mrb[0].mxu0
        %v3708 = vadd.f32 %v3635, %v3707
        %v3709 = vpop.f32.mrb[0].mxu0
        %v3710 = vadd.f32 %v3637, %v3709
        %v3711 = vpop.f32.mrb[0].mxu0
        %v3712 = vadd.f32 %v3639, %v3711
        %3713 = vmatprep.mubr.bf16.mxu0 %v1401
        %3714 = vmatmul.mubr.bf16.gmra.mrb[0].mxu0 %v1389
        %v3715 = vpop.f32.mrb[0].mxu0
        %v3716 = vadd.f32 %v3643, %v3715
        %v3717 = vpop.f32.mrb[0].mxu0
        %v3718 = vadd.f32 %v3645, %v3717
        %v3719 = vpop.f32.mrb[0].mxu0
        %v3720 = vadd.f32 %v3647, %v3719
        %v3721 = vpop.f32.mrb[0].mxu0
        %v3722 = vadd.f32 %v3649, %v3721
        %3723 = vdwg.mxu0
        %3724 = vmatprep.subr.bf16.mxu0 %v2768
        %3725 = vmatpush1.bf16.msra.mxu0 %v2767
        %3726 = vmatprep.subr.bf16.mxu0 %v2772
        %3727 = vmatpush1.bf16.msra.mxu0 %v2771
        %3728 = vmatprep.subr.bf16.mxu0 %v2776
        %3729 = vmatpush1.bf16.msra.mxu0 %v2775
        %3730 = vmatprep.subr.bf16.mxu0 %v2780
        %3731 = vmatpush1.bf16.msra.mxu0 %v2779
        %3732 = vmatprep.subr.bf16.mxu0 %v2784
        %3733 = vmatpush1.bf16.msra.mxu0 %v2783
        %3734 = vmatprep.subr.bf16.mxu0 %v2788
        %3735 = vmatpush1.bf16.msra.mxu0 %v2787
        %3736 = vmatprep.subr.bf16.mxu0 %v2792
        %3737 = vmatpush1.bf16.msra.mxu0 %v2791
        %3738 = vmatprep.subr.bf16.mxu0 %v2796
        %3739 = vmatpush1.bf16.msra.mxu0 %v2795
        %3740 = vmatprep.subr.bf16.mxu0 %v2800
        %3741 = vmatpush1.bf16.msra.mxu0 %v2799
        %3742 = vmatprep.subr.bf16.mxu0 %v2804
        %3743 = vmatpush1.bf16.msra.mxu0 %v2803
        %3744 = vmatprep.subr.bf16.mxu0 %v2808
        %3745 = vmatpush1.bf16.msra.mxu0 %v2807
        %3746 = vmatprep.subr.bf16.mxu0 %v2812
        %3747 = vmatpush1.bf16.msra.mxu0 %v2811
        %3748 = vmatprep.subr.bf16.mxu0 %v2816
        %3749 = vmatpush1.bf16.msra.mxu0 %v2815
        %3750 = vmatprep.subr.bf16.mxu0 %v2820
        %3751 = vmatpush1.bf16.msra.mxu0 %v2819
        %3752 = vmatprep.subr.bf16.mxu0 %v2824
        %3753 = vmatpush1.bf16.msra.mxu0 %v2823
        %3754 = vmatprep.subr.bf16.mxu0 %v2828
        %3755 = vmatpush1.bf16.msra.mxu0 %v2827
        %3756 = vmatprep.mubr.bf16.mxu0 %v1422
        %3757 = vmatmul.mubr.bf16.gmra.mrb[0].mxu0 %v1410
        %v3758 = vpop.f32.mrb[0].mxu0
        %v3759 = vadd.f32 %v3686, %v3758
        %v3760 = vpop.f32.mrb[0].mxu0
        %v3761 = vadd.f32 %v3688, %v3760
        %v3762 = vpop.f32.mrb[0].mxu0
        %v3763 = vadd.f32 %v3690, %v3762
        %v3764 = vpop.f32.mrb[0].mxu0
        %v3765 = vadd.f32 %v3692, %v3764
        %3766 = vmatprep.mubr.bf16.mxu0 %v1423
        %3767 = vmatmul.mubr.bf16.gmra.mrb[0].mxu0 %v1411
        %v3768 = vpop.f32.mrb[0].mxu0
        %v3769 = vadd.f32 %v3696, %v3768
        %v3770 = vpop.f32.mrb[0].mxu0
        %v3771 = vadd.f32 %v3698, %v3770
        %v3772 = vpop.f32.mrb[0].mxu0
        %v3773 = vadd.f32 %v3700, %v3772
        %v3774 = vpop.f32.mrb[0].mxu0
        %v3775 = vadd.f32 %v3702, %v3774
        %3776 = vmatprep.mubr.bf16.mxu0 %v1424
        %3777 = vmatmul.mubr.bf16.gmra.mrb[0].mxu0 %v1412
        %v3778 = vpop.f32.mrb[0].mxu0
        %v3779 = vadd.f32 %v3706, %v3778
        %v3780 = vpop.f32.mrb[0].mxu0
        %v3781 = vadd.f32 %v3708, %v3780
        %v3782 = vpop.f32.mrb[0].mxu0
        %v3783 = vadd.f32 %v3710, %v3782
        %v3784 = vpop.f32.mrb[0].mxu0
        %v3785 = vadd.f32 %v3712, %v3784
        %3786 = vmatprep.mubr.bf16.mxu0 %v1425
        %3787 = vmatmul.mubr.bf16.gmra.mrb[0].mxu0 %v1413
        %v3788 = vpop.f32.mrb[0].mxu0
        %v3789 = vadd.f32 %v3716, %v3788
        %v3790 = vpop.f32.mrb[0].mxu0
        %v3791 = vadd.f32 %v3718, %v3790
        %v3792 = vpop.f32.mrb[0].mxu0
        %v3793 = vadd.f32 %v3720, %v3792
        %v3794 = vpop.f32.mrb[0].mxu0
        %v3795 = vadd.f32 %v3722, %v3794
        %3796 = vdwg.mxu0
        %3797 = vmatprep.subr.bf16.mxu0 %v2832
        %3798 = vmatpush1.bf16.msra.mxu0 %v2831
        %3799 = vmatprep.subr.bf16.mxu0 %v2836
        %3800 = vmatpush1.bf16.msra.mxu0 %v2835
        %3801 = vmatprep.subr.bf16.mxu0 %v2840
        %3802 = vmatpush1.bf16.msra.mxu0 %v2839
        %3803 = vmatprep.subr.bf16.mxu0 %v2844
        %3804 = vmatpush1.bf16.msra.mxu0 %v2843
        %3805 = vmatprep.subr.bf16.mxu0 %v2848
        %3806 = vmatpush1.bf16.msra.mxu0 %v2847
        %3807 = vmatprep.subr.bf16.mxu0 %v2852
        %3808 = vmatpush1.bf16.msra.mxu0 %v2851
        %3809 = vmatprep.subr.bf16.mxu0 %v2856
        %3810 = vmatpush1.bf16.msra.mxu0 %v2855
        %3811 = vmatprep.subr.bf16.mxu0 %v2860
        %3812 = vmatpush1.bf16.msra.mxu0 %v2859
        %3813 = vmatprep.subr.bf16.mxu0 %v2864
        %3814 = vmatpush1.bf16.msra.mxu0 %v2863
        %3815 = vmatprep.subr.bf16.mxu0 %v2868
        %3816 = vmatpush1.bf16.msra.mxu0 %v2867
        %3817 = vmatprep.subr.bf16.mxu0 %v2872
        %3818 = vmatpush1.bf16.msra.mxu0 %v2871
        %3819 = vmatprep.subr.bf16.mxu0 %v2876
        %3820 = vmatpush1.bf16.msra.mxu0 %v2875
        %3821 = vmatprep.subr.bf16.mxu0 %v2880
        %3822 = vmatpush1.bf16.msra.mxu0 %v2879
        %3823 = vmatprep.subr.bf16.mxu0 %v2884
        %3824 = vmatpush1.bf16.msra.mxu0 %v2883
        %3825 = vmatprep.subr.bf16.mxu0 %v2888
        %3826 = vmatpush1.bf16.msra.mxu0 %v2887
        %3827 = vmatprep.subr.bf16.mxu0 %v2892
        %3828 = vmatpush1.bf16.msra.mxu0 %v2891
        %3829 = vmatprep.mubr.bf16.mxu0 %v1447
        %3830 = vmatmul.mubr.bf16.gmra.mrb[0].mxu0 %v1435
        %v3831 = vpop.f32.mrb[0].mxu0
        %v3832 = vadd.f32 %v3759, %v3831
        %v3833 = vpop.f32.mrb[0].mxu0
        %v3834 = vadd.f32 %v3761, %v3833
        %v3835 = vpop.f32.mrb[0].mxu0
        %v3836 = vadd.f32 %v3763, %v3835
        %v3837 = vpop.f32.mrb[0].mxu0
        %v3838 = vadd.f32 %v3765, %v3837
        %3839 = vmatprep.mubr.bf16.mxu0 %v1448
        %3840 = vmatmul.mubr.bf16.gmra.mrb[0].mxu0 %v1436
        %v3841 = vpop.f32.mrb[0].mxu0
        %v3842 = vadd.f32 %v3769, %v3841
        %v3843 = vpop.f32.mrb[0].mxu0
        %v3844 = vadd.f32 %v3771, %v3843
        %v3845 = vpop.f32.mrb[0].mxu0
        %v3846 = vadd.f32 %v3773, %v3845
        %v3847 = vpop.f32.mrb[0].mxu0
        %v3848 = vadd.f32 %v3775, %v3847
        %3849 = vmatprep.mubr.bf16.mxu0 %v1449
        %3850 = vmatmul.mubr.bf16.gmra.mrb[0].mxu0 %v1437
        %v3851 = vpop.f32.mrb[0].mxu0
        %v3852 = vadd.f32 %v3779, %v3851
        %v3853 = vpop.f32.mrb[0].mxu0
        %v3854 = vadd.f32 %v3781, %v3853
        %v3855 = vpop.f32.mrb[0].mxu0
        %v3856 = vadd.f32 %v3783, %v3855
        %v3857 = vpop.f32.mrb[0].mxu0
        %v3858 = vadd.f32 %v3785, %v3857
        %3859 = vmatprep.mubr.bf16.mxu0 %v1450
        %3860 = vmatmul.mubr.bf16.gmra.mrb[0].mxu0 %v1438
        %v3861 = vpop.f32.mrb[0].mxu0
        %v3862 = vadd.f32 %v3789, %v3861
        %v3863 = vpop.f32.mrb[0].mxu0
        %v3864 = vadd.f32 %v3791, %v3863
        %v3865 = vpop.f32.mrb[0].mxu0
        %v3866 = vadd.f32 %v3793, %v3865
        %v3867 = vpop.f32.mrb[0].mxu0
        %v3868 = vadd.f32 %v3795, %v3867
        %3869 = vdwg.mxu0
        %3870 = vmatprep.subr.bf16.mxu0 %v2896
        %3871 = vmatpush1.bf16.msra.mxu0 %v2895
        %3872 = vmatprep.subr.bf16.mxu0 %v2900
        %3873 = vmatpush1.bf16.msra.mxu0 %v2899
        %3874 = vmatprep.subr.bf16.mxu0 %v2904
        %3875 = vmatpush1.bf16.msra.mxu0 %v2903
        %3876 = vmatprep.subr.bf16.mxu0 %v2908
        %3877 = vmatpush1.bf16.msra.mxu0 %v2907
        %3878 = vmatprep.subr.bf16.mxu0 %v2912
        %3879 = vmatpush1.bf16.msra.mxu0 %v2911
        %3880 = vmatprep.subr.bf16.mxu0 %v2916
        %3881 = vmatpush1.bf16.msra.mxu0 %v2915
        %3882 = vmatprep.subr.bf16.mxu0 %v2920
        %3883 = vmatpush1.bf16.msra.mxu0 %v2919
        %3884 = vmatprep.subr.bf16.mxu0 %v2924
        %3885 = vmatpush1.bf16.msra.mxu0 %v2923
        %3886 = vmatprep.subr.bf16.mxu0 0
        %3887 = vmatpush1.bf16.msra.mxu0 0
        %3888 = vmatprep.subr.bf16.mxu0 0
        %3889 = vmatpush1.bf16.msra.mxu0 0
        %3890 = vmatprep.subr.bf16.mxu0 0
        %3891 = vmatpush1.bf16.msra.mxu0 0
        %3892 = vmatprep.subr.bf16.mxu0 0
        %3893 = vmatpush1.bf16.msra.mxu0 0
        %3894 = vmatprep.subr.bf16.mxu0 0
        %3895 = vmatpush1.bf16.msra.mxu0 0
        %3896 = vmatprep.subr.bf16.mxu0 0
        %3897 = vmatpush1.bf16.msra.mxu0 0
        %3898 = vmatprep.subr.bf16.mxu0 0
        %3899 = vmatpush1.bf16.msra.mxu0 0
        %3900 = vmatprep.subr.bf16.mxu0 0
        %3901 = vmatpush1.bf16.msra.mxu0 0
        %3902 = vmatprep.mubr.bf16.mxu0 0
        %3903 = vmatmul.mubr.bf16.gmra.mrb[0].mxu0 %v1459
        %v3904 = vpop.f32.mrb[0].mxu0
        %v3905 = vadd.f32 %v3832, %v3904
        %v3906 = vpop.f32.mrb[0].mxu0
        %v3907 = vadd.f32 %v3834, %v3906
        %v3908 = vpop.f32.mrb[0].mxu0
        %v3909 = vadd.f32 %v3836, %v3908
        %v3910 = vpop.f32.mrb[0].mxu0
        %v3911 = vadd.f32 %v3838, %v3910
        %3912 = vmatprep.mubr.bf16.mxu0 0
        %3913 = vmatmul.mubr.bf16.gmra.mrb[0].mxu0 %v1460
        %v3914 = vpop.f32.mrb[0].mxu0
        %v3915 = vadd.f32 %v3842, %v3914
        %v3916 = vpop.f32.mrb[0].mxu0
        %v3917 = vadd.f32 %v3844, %v3916
        %v3918 = vpop.f32.mrb[0].mxu0
        %v3919 = vadd.f32 %v3846, %v3918
        %v3920 = vpop.f32.mrb[0].mxu0
        %v3921 = vadd.f32 %v3848, %v3920
        %3922 = vmatprep.mubr.bf16.mxu0 0
        %3923 = vmatmul.mubr.bf16.gmra.mrb[0].mxu0 %v1461
        %v3924 = vpop.f32.mrb[0].mxu0
        %v3925 = vadd.f32 %v3852, %v3924
        %v3926 = vpop.f32.mrb[0].mxu0
        %v3927 = vadd.f32 %v3854, %v3926
        %v3928 = vpop.f32.mrb[0].mxu0
        %v3929 = vadd.f32 %v3856, %v3928
        %v3930 = vpop.f32.mrb[0].mxu0
        %v3931 = vadd.f32 %v3858, %v3930
        %3932 = vmatprep.mubr.bf16.mxu0 0
        %3933 = vmatmul.mubr.bf16.gmra.mrb[0].mxu0 %v1462
        %v3934 = vpop.f32.mrb[0].mxu0
        %v3935 = vadd.f32 %v3862, %v3934
        %v3936 = vpop.f32.mrb[0].mxu0
        %v3937 = vadd.f32 %v3864, %v3936
        %v3938 = vpop.f32.mrb[0].mxu0
        %v3939 = vadd.f32 %v3866, %v3938
        %v3940 = vpop.f32.mrb[0].mxu0
        %v3941 = vadd.f32 %v3868, %v3940
        %3942 = vdwg.mxu0
        %v3943 = vmax.f32 %v3540, 0.0
        %v3944 = vmax.f32 %v3542, 0.0
        %v3945 = vmax.f32 %v3905, 0.0
        %v3946 = vmax.f32 %v3907, 0.0
        %v3947 = vmax.f32 %v3544, 0.0
        %v3948 = vmax.f32 %v3546, 0.0
        %v3949 = vmax.f32 %v3909, 0.0
        %v3950 = vmax.f32 %v3911, 0.0
        %v3951 = vmax.f32 %v3550, 0.0
        %v3952 = vmax.f32 %v3552, 0.0
        %v3953 = vmax.f32 %v3915, 0.0
        %v3954 = vmax.f32 %v3917, 0.0
        %v3955 = vmax.f32 %v3554, 0.0
        %v3956 = vmax.f32 %v3556, 0.0
        %v3957 = vmax.f32 %v3919, 0.0
        %v3958 = vmax.f32 %v3921, 0.0
        %v3959 = vmax.f32 %v3560, 0.0
        %v3960 = vmax.f32 %v3562, 0.0
        %v3961 = vmax.f32 %v3925, 0.0
        %v3962 = vmax.f32 %v3927, 0.0
        %v3963 = vmax.f32 %v3564, 0.0
        %v3964 = vmax.f32 %v3566, 0.0
        %v3965 = vmax.f32 %v3929, 0.0
        %v3966 = vmax.f32 %v3931, 0.0
        %v3967 = vmax.f32 %v3570, 0.0
        %v3968 = vmax.f32 %v3572, 0.0
        %v3969 = vmax.f32 %v3935, 0.0
        %v3970 = vmax.f32 %v3937, 0.0
        %v3971 = vmax.f32 %v3574, 0.0
        %v3972 = vmax.f32 %v3576, 0.0
        %v3973 = vmax.f32 %v3939, 0.0
        %v3974 = vmax.f32 %v3941, 0.0
        %3975 = vst [vmem:[#allocation3] sm:$0xff] 0.0
        %3976 = vst [vmem:[#allocation3 + $0x8] sm:$0xff] 0.0
        %3977 = vst [vmem:[#allocation3 + $0x10] sm:$0xff] 0.0
        %3978 = vst [vmem:[#allocation3 + $0x18] sm:$0xff] 0.0
        %3979 = vst [vmem:[#allocation3 + $0x20] sm:$0x3] 0.0
        %3980 = vst [vmem:[#allocation3 + $0x28] sm:$0x3] 0.0
        %3981 = vst [vmem:[#allocation3 + $0x30] sm:$0x3] 0.0
        %3982 = vst [vmem:[#allocation3 + $0x38] sm:$0x3] 0.0
        %3983 = vst [vmem:[#allocation3 + $0x40] sm:$0xff] 0.0
        %3984 = vst [vmem:[#allocation3 + $0x48] sm:$0xff] 0.0
        %3985 = vst [vmem:[#allocation3 + $0x50] sm:$0xff] 0.0
        %3986 = vst [vmem:[#allocation3 + $0x58] sm:$0xff] 0.0
        %3987 = vst [vmem:[#allocation3 + $0x60] sm:$0x3] 0.0
        %3988 = vst [vmem:[#allocation3 + $0x68] sm:$0x3] 0.0
        %3989 = vst [vmem:[#allocation3 + $0x70] sm:$0x3] 0.0
        %3990 = vst [vmem:[#allocation3 + $0x78] sm:$0x3] 0.0
        %3991 = vst [vmem:[#allocation3 + $0x80] sm:$0xff] 0.0
        %3992 = vst [vmem:[#allocation3 + $0x88] sm:$0xff] 0.0
        %3993 = vst [vmem:[#allocation3 + $0x90] sm:$0xff] 0.0
        %3994 = vst [vmem:[#allocation3 + $0x98] sm:$0xff] 0.0
        %3995 = vst [vmem:[#allocation3 + $0xa0] sm:$0x3] 0.0
        %3996 = vst [vmem:[#allocation3 + $0xa8] sm:$0x3] 0.0
        %3997 = vst [vmem:[#allocation3 + $0xb0] sm:$0x3] 0.0
        %3998 = vst [vmem:[#allocation3 + $0xb8] sm:$0x3] 0.0
        %3999 = vst [vmem:[#allocation3 + $0xc0] sm:$0xff] 0.0
        %4000 = vst [vmem:[#allocation3 + $0xc8] sm:$0xff] 0.0
        %4001 = vst [vmem:[#allocation3 + $0xd0] sm:$0xff] 0.0
        %4002 = vst [vmem:[#allocation3 + $0xd8] sm:$0xff] 0.0
        %4003 = vst [vmem:[#allocation3 + $0xe0] sm:$0x3] 0.0
        %4004 = vst [vmem:[#allocation3 + $0xe8] sm:$0x3] 0.0
        %4005 = vst [vmem:[#allocation3 + $0xf0] sm:$0x3] 0.0
        %4006 = vst [vmem:[#allocation3 + $0xf8] sm:$0x3] 0.0
        %4007 = vst [vmem:[#allocation3 + $0x100] sm:$0xff] 0.0
        %4008 = vst [vmem:[#allocation3 + $0x108] sm:$0xff] 0.0
        %4009 = vst [vmem:[#allocation3 + $0x110] sm:$0xff] 0.0
        %4010 = vst [vmem:[#allocation3 + $0x118] sm:$0xff] 0.0
        %4011 = vst [vmem:[#allocation3 + $0x120] sm:$0x3] 0.0
        %4012 = vst [vmem:[#allocation3 + $0x128] sm:$0x3] 0.0
        %4013 = vst [vmem:[#allocation3 + $0x130] sm:$0x3] 0.0
        %4014 = vst [vmem:[#allocation3 + $0x138] sm:$0x3] 0.0
        %4015 = vst [vmem:[#allocation3 + $0x140] sm:$0xff] 0.0
        %4016 = vst [vmem:[#allocation3 + $0x148] sm:$0xff] 0.0
        %4017 = vst [vmem:[#allocation3 + $0x150] sm:$0xff] 0.0
        %4018 = vst [vmem:[#allocation3 + $0x158] sm:$0xff] 0.0
        %4019 = vst [vmem:[#allocation3 + $0x160] sm:$0x3] 0.0
        %4020 = vst [vmem:[#allocation3 + $0x168] sm:$0x3] 0.0
        %4021 = vst [vmem:[#allocation3 + $0x170] sm:$0x3] 0.0
        %4022 = vst [vmem:[#allocation3 + $0x178] sm:$0x3] 0.0
        %4023 = vst [vmem:[#allocation3 + $0x180] sm:$0xff] 0.0
        %4024 = vst [vmem:[#allocation3 + $0x188] sm:$0xff] 0.0
        %4025 = vst [vmem:[#allocation3 + $0x190] sm:$0xff] 0.0
        %4026 = vst [vmem:[#allocation3 + $0x198] sm:$0xff] 0.0
        %4027 = vst [vmem:[#allocation3 + $0x1a0] sm:$0x3] 0.0
        %4028 = vst [vmem:[#allocation3 + $0x1a8] sm:$0x3] 0.0
        %4029 = vst [vmem:[#allocation3 + $0x1b0] sm:$0x3] 0.0
        %4030 = vst [vmem:[#allocation3 + $0x1b8] sm:$0x3] 0.0
        %4031 = vst [vmem:[#allocation3 + $0x1c0] sm:$0xff] 0.0
        %4032 = vst [vmem:[#allocation3 + $0x1c8] sm:$0xff] 0.0
        %4033 = vst [vmem:[#allocation3 + $0x1d0] sm:$0xff] 0.0
        %4034 = vst [vmem:[#allocation3 + $0x1d8] sm:$0xff] 0.0
        %4035 = vst [vmem:[#allocation3 + $0x1e0] sm:$0x3] 0.0
        %4036 = vst [vmem:[#allocation3 + $0x1e8] sm:$0x3] 0.0
        %4037 = vst [vmem:[#allocation3 + $0x1f0] sm:$0x3] 0.0
        %4038 = vst [vmem:[#allocation3 + $0x1f8] sm:$0x3] 0.0
        %4039 = vst [vmem:[#allocation3 + $0x200] sm:$0xff] 0.0
        %4040 = vst [vmem:[#allocation3 + $0x208] sm:$0xff] 0.0
        %4041 = vst [vmem:[#allocation3 + $0x210] sm:$0xff] 0.0
        %4042 = vst [vmem:[#allocation3 + $0x218] sm:$0xff] 0.0
        %4043 = vst [vmem:[#allocation3 + $0x220] sm:$0x3] 0.0
        %4044 = vst [vmem:[#allocation3 + $0x228] sm:$0x3] 0.0
        %4045 = vst [vmem:[#allocation3 + $0x230] sm:$0x3] 0.0
        %4046 = vst [vmem:[#allocation3 + $0x238] sm:$0x3] 0.0
        %4047 = vst [vmem:[#allocation3 + $0x240] sm:$0xff] 0.0
        %4048 = vst [vmem:[#allocation3 + $0x248] sm:$0xff] 0.0
        %4049 = vst [vmem:[#allocation3 + $0x250] sm:$0xff] 0.0
        %4050 = vst [vmem:[#allocation3 + $0x258] sm:$0xff] 0.0
        %4051 = vst [vmem:[#allocation3 + $0x260] sm:$0x3] 0.0
        %4052 = vst [vmem:[#allocation3 + $0x268] sm:$0x3] 0.0
        %4053 = vst [vmem:[#allocation3 + $0x270] sm:$0x3] 0.0
        %4054 = vst [vmem:[#allocation3 + $0x278] sm:$0x3] 0.0
        %v4087 = vrot.slane %v3943, 7
        %v4088 = vrot.slane %v3944, 7
        %v4089 = vrot.slane %v3945, 7
        %v4090 = vrot.slane %v3946, 7
        %v4091 = vrot.slane %v3947, 7
        %v4092 = vrot.slane %v3948, 7
        %v4093 = vrot.slane %v3949, 7
        %v4094 = vrot.slane %v3950, 7
        %v4095 = vrot.slane %v3951, 7
        %v4096 = vrot.slane %v3952, 7
        %v4097 = vrot.slane %v3953, 7
        %v4098 = vrot.slane %v3954, 7
        %v4099 = vrot.slane %v3955, 7
        %v4100 = vrot.slane %v3956, 7
        %v4101 = vrot.slane %v3957, 7
        %v4102 = vrot.slane %v3958, 7
        %v4103 = vrot.slane %v3959, 7
        %v4104 = vrot.slane %v3960, 7
        %v4105 = vrot.slane %v3961, 7
        %v4106 = vrot.slane %v3962, 7
        %v4107 = vrot.slane %v3963, 7
        %v4108 = vrot.slane %v3964, 7
        %v4109 = vrot.slane %v3965, 7
        %v4110 = vrot.slane %v3966, 7
        %v4111 = vrot.slane %v3967, 7
        %v4112 = vrot.slane %v3968, 7
        %v4113 = vrot.slane %v3969, 7
        %v4114 = vrot.slane %v3970, 7
        %v4115 = vrot.slane %v3971, 7
        %v4116 = vrot.slane %v3972, 7
        %v4117 = vrot.slane %v3973, 7
        %v4118 = vrot.slane %v3974, 7
        %s4151 = scalar_lea.vmem [#allocation3], 64
        %4152 = vst [vmem:[%s4151] sm:$0xfe] %v4087
        %4153 = vst [vmem:[%s4151 + $0x8] sm:$0xfe] %v4088
        %4154 = vst [vmem:[%s4151 + $0x10] sm:$0xfe] %v4089
        %4155 = vst [vmem:[%s4151 + $0x18] sm:$0xfe] %v4090
        %4156 = vst [vmem:[%s4151 + $0x20] sm:$0x1] %v4087
        %4157 = vst [vmem:[%s4151 + $0x28] sm:$0x1] %v4088
        %4158 = vst [vmem:[%s4151 + $0x30] sm:$0x1] %v4089
        %4159 = vst [vmem:[%s4151 + $0x38] sm:$0x1] %v4090
        %4160 = vst [vmem:[%s4151 + $0x40] sm:$0xfe] %v4091
        %4161 = vst [vmem:[%s4151 + $0x48] sm:$0xfe] %v4092
        %4162 = vst [vmem:[%s4151 + $0x50] sm:$0xfe] %v4093
        %4163 = vst [vmem:[%s4151 + $0x58] sm:$0xfe] %v4094
        %4164 = vst [vmem:[%s4151 + $0x60] sm:$0x1] %v4091
        %4165 = vst [vmem:[%s4151 + $0x68] sm:$0x1] %v4092
        %4166 = vst [vmem:[%s4151 + $0x70] sm:$0x1] %v4093
        %4167 = vst [vmem:[%s4151 + $0x78] sm:$0x1] %v4094
        %4168 = vst [vmem:[%s4151 + $0x80] sm:$0xfe] %v4095
        %4169 = vst [vmem:[%s4151 + $0x88] sm:$0xfe] %v4096
        %4170 = vst [vmem:[%s4151 + $0x90] sm:$0xfe] %v4097
        %4171 = vst [vmem:[%s4151 + $0x98] sm:$0xfe] %v4098
        %4172 = vst [vmem:[%s4151 + $0xa0] sm:$0x1] %v4095
        %4173 = vst [vmem:[%s4151 + $0xa8] sm:$0x1] %v4096
        %4174 = vst [vmem:[%s4151 + $0xb0] sm:$0x1] %v4097
        %4175 = vst [vmem:[%s4151 + $0xb8] sm:$0x1] %v4098
        %4176 = vst [vmem:[%s4151 + $0xc0] sm:$0xfe] %v4099
        %4177 = vst [vmem:[%s4151 + $0xc8] sm:$0xfe] %v4100
        %4178 = vst [vmem:[%s4151 + $0xd0] sm:$0xfe] %v4101
        %4179 = vst [vmem:[%s4151 + $0xd8] sm:$0xfe] %v4102
        %4180 = vst [vmem:[%s4151 + $0xe0] sm:$0x1] %v4099
        %4181 = vst [vmem:[%s4151 + $0xe8] sm:$0x1] %v4100
        %4182 = vst [vmem:[%s4151 + $0xf0] sm:$0x1] %v4101
        %4183 = vst [vmem:[%s4151 + $0xf8] sm:$0x1] %v4102
        %4184 = vst [vmem:[%s4151 + $0x100] sm:$0xfe] %v4103
        %4185 = vst [vmem:[%s4151 + $0x108] sm:$0xfe] %v4104
        %4186 = vst [vmem:[%s4151 + $0x110] sm:$0xfe] %v4105
        %4187 = vst [vmem:[%s4151 + $0x118] sm:$0xfe] %v4106
        %4188 = vst [vmem:[%s4151 + $0x120] sm:$0x1] %v4103
        %4189 = vst [vmem:[%s4151 + $0x128] sm:$0x1] %v4104
        %4190 = vst [vmem:[%s4151 + $0x130] sm:$0x1] %v4105
        %4191 = vst [vmem:[%s4151 + $0x138] sm:$0x1] %v4106
        %4192 = vst [vmem:[%s4151 + $0x140] sm:$0xfe] %v4107
        %4193 = vst [vmem:[%s4151 + $0x148] sm:$0xfe] %v4108
        %4194 = vst [vmem:[%s4151 + $0x150] sm:$0xfe] %v4109
        %4195 = vst [vmem:[%s4151 + $0x158] sm:$0xfe] %v4110
        %4196 = vst [vmem:[%s4151 + $0x160] sm:$0x1] %v4107
        %4197 = vst [vmem:[%s4151 + $0x168] sm:$0x1] %v4108
        %4198 = vst [vmem:[%s4151 + $0x170] sm:$0x1] %v4109
        %4199 = vst [vmem:[%s4151 + $0x178] sm:$0x1] %v4110
        %4200 = vst [vmem:[%s4151 + $0x180] sm:$0xfe] %v4111
        %4201 = vst [vmem:[%s4151 + $0x188] sm:$0xfe] %v4112
        %4202 = vst [vmem:[%s4151 + $0x190] sm:$0xfe] %v4113
        %4203 = vst [vmem:[%s4151 + $0x198] sm:$0xfe] %v4114
        %4204 = vst [vmem:[%s4151 + $0x1a0] sm:$0x1] %v4111
        %4205 = vst [vmem:[%s4151 + $0x1a8] sm:$0x1] %v4112
        %4206 = vst [vmem:[%s4151 + $0x1b0] sm:$0x1] %v4113
        %4207 = vst [vmem:[%s4151 + $0x1b8] sm:$0x1] %v4114
        %4208 = vst [vmem:[%s4151 + $0x1c0] sm:$0xfe] %v4115
        %4209 = vst [vmem:[%s4151 + $0x1c8] sm:$0xfe] %v4116
        %4210 = vst [vmem:[%s4151 + $0x1d0] sm:$0xfe] %v4117
        %4211 = vst [vmem:[%s4151 + $0x1d8] sm:$0xfe] %v4118
        %4212 = vst [vmem:[%s4151 + $0x1e0] sm:$0x1] %v4115
        %4213 = vst [vmem:[%s4151 + $0x1e8] sm:$0x1] %v4116
        %4214 = vst [vmem:[%s4151 + $0x1f0] sm:$0x1] %v4117
        %4215 = vst [vmem:[%s4151 + $0x1f8] sm:$0x1] %v4118
        %v4216 = vld [vmem:[#allocation3] sm:$0xff]
        %v4217 = vld [vmem:[#allocation3 + $0x8] sm:$0xff]
        %v4218 = vld [vmem:[#allocation3 + $0x10] sm:$0xff]
        %v4219 = vld [vmem:[#allocation3 + $0x18] sm:$0xff]
        %v4220 = vld [vmem:[#allocation3 + $0x40] sm:$0xff]
        %v4221 = vld [vmem:[#allocation3 + $0x48] sm:$0xff]
        %v4222 = vld [vmem:[#allocation3 + $0x50] sm:$0xff]
        %v4223 = vld [vmem:[#allocation3 + $0x58] sm:$0xff]
        %v4224 = vld [vmem:[#allocation3 + $0x80] sm:$0xff]
        %v4225 = vld [vmem:[#allocation3 + $0x88] sm:$0xff]
        %v4226 = vld [vmem:[#allocation3 + $0x90] sm:$0xff]
        %v4227 = vld [vmem:[#allocation3 + $0x98] sm:$0xff]
        %v4228 = vld [vmem:[#allocation3 + $0xc0] sm:$0xff]
        %v4229 = vld [vmem:[#allocation3 + $0xc8] sm:$0xff]
        %v4230 = vld [vmem:[#allocation3 + $0xd0] sm:$0xff]
        %v4231 = vld [vmem:[#allocation3 + $0xd8] sm:$0xff]
        %v4232 = vld [vmem:[#allocation3 + $0x100] sm:$0xff]
        %v4233 = vld [vmem:[#allocation3 + $0x108] sm:$0xff]
        %v4234 = vld [vmem:[#allocation3 + $0x110] sm:$0xff]
        %v4235 = vld [vmem:[#allocation3 + $0x118] sm:$0xff]
        %v4236 = vld [vmem:[#allocation3 + $0x140] sm:$0xff]
        %v4237 = vld [vmem:[#allocation3 + $0x148] sm:$0xff]
        %v4238 = vld [vmem:[#allocation3 + $0x150] sm:$0xff]
        %v4239 = vld [vmem:[#allocation3 + $0x158] sm:$0xff]
        %v4240 = vld [vmem:[#allocation3 + $0x180] sm:$0xff]
        %v4241 = vld [vmem:[#allocation3 + $0x188] sm:$0xff]
        %v4242 = vld [vmem:[#allocation3 + $0x190] sm:$0xff]
        %v4243 = vld [vmem:[#allocation3 + $0x198] sm:$0xff]
        %v4244 = vld [vmem:[#allocation3 + $0x1c0] sm:$0xff]
        %v4245 = vld [vmem:[#allocation3 + $0x1c8] sm:$0xff]
        %v4246 = vld [vmem:[#allocation3 + $0x1d0] sm:$0xff]
        %v4247 = vld [vmem:[#allocation3 + $0x1d8] sm:$0xff]
        %v4248 = vpack.c.bf16 %v4220, %v4216
        %v4249 = vpack.c.bf16 %v4221, %v4217
        %v4250 = vpack.c.bf16 %v4222, %v4218
        %v4251 = vpack.c.bf16 %v4223, %v4219
        %v4252 = vpack.c.bf16 %v4228, %v4224
        %v4253 = vpack.c.bf16 %v4229, %v4225
        %v4254 = vpack.c.bf16 %v4230, %v4226
        %v4255 = vpack.c.bf16 %v4231, %v4227
        %v4256 = vpack.c.bf16 %v4236, %v4232
        %v4257 = vpack.c.bf16 %v4237, %v4233
        %v4258 = vpack.c.bf16 %v4238, %v4234
        %v4259 = vpack.c.bf16 %v4239, %v4235
        %v4260 = vpack.c.bf16 %v4244, %v4240
        %v4261 = vpack.c.bf16 %v4245, %v4241
        %v4262 = vpack.c.bf16 %v4246, %v4242
        %v4263 = vpack.c.bf16 %v4247, %v4243
        %v4264 = vld [vmem:[#allocation3] sm:$0xfe]
        %v4265 = vld [vmem:[#allocation3 + $0x8] sm:$0xfe]
        %v4266 = vld [vmem:[#allocation3 + $0x10] sm:$0xfe]
        %v4267 = vld [vmem:[#allocation3 + $0x18] sm:$0xfe]
        %v4268 = vld [vmem:[#allocation3 + $0x20] sm:$0x1]
        %v4269 = vld [vmem:[#allocation3 + $0x28] sm:$0x1]
        %v4270 = vld [vmem:[#allocation3 + $0x30] sm:$0x1]
        %v4271 = vld [vmem:[#allocation3 + $0x38] sm:$0x1]
        %v4272 = vld [vmem:[#allocation3 + $0x40] sm:$0xfe]
        %v4273 = vld [vmem:[#allocation3 + $0x48] sm:$0xfe]
        %v4274 = vld [vmem:[#allocation3 + $0x50] sm:$0xfe]
        %v4275 = vld [vmem:[#allocation3 + $0x58] sm:$0xfe]
        %v4276 = vld [vmem:[#allocation3 + $0x60] sm:$0x1]
        %v4277 = vld [vmem:[#allocation3 + $0x68] sm:$0x1]
        %v4278 = vld [vmem:[#allocation3 + $0x70] sm:$0x1]
        %v4279 = vld [vmem:[#allocation3 + $0x78] sm:$0x1]
        %v4280 = vld [vmem:[#allocation3 + $0x80] sm:$0xfe]
        %v4281 = vld [vmem:[#allocation3 + $0x88] sm:$0xfe]
        %v4282 = vld [vmem:[#allocation3 + $0x90] sm:$0xfe]
        %v4283 = vld [vmem:[#allocation3 + $0x98] sm:$0xfe]
        %v4284 = vld [vmem:[#allocation3 + $0xa0] sm:$0x1]
        %v4285 = vld [vmem:[#allocation3 + $0xa8] sm:$0x1]
        %v4286 = vld [vmem:[#allocation3 + $0xb0] sm:$0x1]
        %v4287 = vld [vmem:[#allocation3 + $0xb8] sm:$0x1]
        %v4288 = vld [vmem:[#allocation3 + $0xc0] sm:$0xfe]
        %v4289 = vld [vmem:[#allocation3 + $0xc8] sm:$0xfe]
        %v4290 = vld [vmem:[#allocation3 + $0xd0] sm:$0xfe]
        %v4291 = vld [vmem:[#allocation3 + $0xd8] sm:$0xfe]
        %v4292 = vld [vmem:[#allocation3 + $0xe0] sm:$0x1]
        %v4293 = vld [vmem:[#allocation3 + $0xe8] sm:$0x1]
        %v4294 = vld [vmem:[#allocation3 + $0xf0] sm:$0x1]
        %v4295 = vld [vmem:[#allocation3 + $0xf8] sm:$0x1]
        %v4296 = vld [vmem:[#allocation3 + $0x100] sm:$0xfe]
        %v4297 = vld [vmem:[#allocation3 + $0x108] sm:$0xfe]
        %v4298 = vld [vmem:[#allocation3 + $0x110] sm:$0xfe]
        %v4299 = vld [vmem:[#allocation3 + $0x118] sm:$0xfe]
        %v4300 = vld [vmem:[#allocation3 + $0x120] sm:$0x1]
        %v4301 = vld [vmem:[#allocation3 + $0x128] sm:$0x1]
        %v4302 = vld [vmem:[#allocation3 + $0x130] sm:$0x1]
        %v4303 = vld [vmem:[#allocation3 + $0x138] sm:$0x1]
        %v4304 = vld [vmem:[#allocation3 + $0x140] sm:$0xfe]
        %v4305 = vld [vmem:[#allocation3 + $0x148] sm:$0xfe]
        %v4306 = vld [vmem:[#allocation3 + $0x150] sm:$0xfe]
        %v4307 = vld [vmem:[#allocation3 + $0x158] sm:$0xfe]
        %v4308 = vld [vmem:[#allocation3 + $0x160] sm:$0x1]
        %v4309 = vld [vmem:[#allocation3 + $0x168] sm:$0x1]
        %v4310 = vld [vmem:[#allocation3 + $0x170] sm:$0x1]
        %v4311 = vld [vmem:[#allocation3 + $0x178] sm:$0x1]
        %v4312 = vld [vmem:[#allocation3 + $0x180] sm:$0xfe]
        %v4313 = vld [vmem:[#allocation3 + $0x188] sm:$0xfe]
        %v4314 = vld [vmem:[#allocation3 + $0x190] sm:$0xfe]
        %v4315 = vld [vmem:[#allocation3 + $0x198] sm:$0xfe]
        %v4316 = vld [vmem:[#allocation3 + $0x1a0] sm:$0x1]
        %v4317 = vld [vmem:[#allocation3 + $0x1a8] sm:$0x1]
        %v4318 = vld [vmem:[#allocation3 + $0x1b0] sm:$0x1]
        %v4319 = vld [vmem:[#allocation3 + $0x1b8] sm:$0x1]
        %v4320 = vld [vmem:[#allocation3 + $0x1c0] sm:$0xfe]
        %v4321 = vld [vmem:[#allocation3 + $0x1c8] sm:$0xfe]
        %v4322 = vld [vmem:[#allocation3 + $0x1d0] sm:$0xfe]
        %v4323 = vld [vmem:[#allocation3 + $0x1d8] sm:$0xfe]
        %v4324 = vld [vmem:[#allocation3 + $0x1e0] sm:$0x1]
        %v4325 = vld [vmem:[#allocation3 + $0x1e8] sm:$0x1]
        %v4326 = vld [vmem:[#allocation3 + $0x1f0] sm:$0x1]
        %v4327 = vld [vmem:[#allocation3 + $0x1f8] sm:$0x1]
        %vm4392 = vcmask 1046528
        %v4393 = vrot.slane %v4264, 1
        %v4394 = vrot.slane %v4268, 1
        %v4395 = vsel %vm4392, %v4393, %v4394
        %v4396 = vrot.slane %v4265, 1
        %v4397 = vrot.slane %v4269, 1
        %v4398 = vsel %vm4392, %v4396, %v4397
        %v4399 = vrot.slane %v4266, 1
        %v4400 = vrot.slane %v4270, 1
        %v4401 = vsel %vm4392, %v4399, %v4400
        %v4402 = vrot.slane %v4267, 1
        %v4403 = vrot.slane %v4271, 1
        %v4404 = vsel %vm4392, %v4402, %v4403
        %v4405 = vrot.slane %v4272, 1
        %v4406 = vrot.slane %v4276, 1
        %v4407 = vsel %vm4392, %v4405, %v4406
        %v4408 = vrot.slane %v4273, 1
        %v4409 = vrot.slane %v4277, 1
        %v4410 = vsel %vm4392, %v4408, %v4409
        %v4411 = vrot.slane %v4274, 1
        %v4412 = vrot.slane %v4278, 1
        %v4413 = vsel %vm4392, %v4411, %v4412
        %v4414 = vrot.slane %v4275, 1
        %v4415 = vrot.slane %v4279, 1
        %v4416 = vsel %vm4392, %v4414, %v4415
        %v4417 = vrot.slane %v4280, 1
        %v4418 = vrot.slane %v4284, 1
        %v4419 = vsel %vm4392, %v4417, %v4418
        %v4420 = vrot.slane %v4281, 1
        %v4421 = vrot.slane %v4285, 1
        %v4422 = vsel %vm4392, %v4420, %v4421
        %v4423 = vrot.slane %v4282, 1
        %v4424 = vrot.slane %v4286, 1
        %v4425 = vsel %vm4392, %v4423, %v4424
        %v4426 = vrot.slane %v4283, 1
        %v4427 = vrot.slane %v4287, 1
        %v4428 = vsel %vm4392, %v4426, %v4427
        %v4429 = vrot.slane %v4288, 1
        %v4430 = vrot.slane %v4292, 1
        %v4431 = vsel %vm4392, %v4429, %v4430
        %v4432 = vrot.slane %v4289, 1
        %v4433 = vrot.slane %v4293, 1
        %v4434 = vsel %vm4392, %v4432, %v4433
        %v4435 = vrot.slane %v4290, 1
        %v4436 = vrot.slane %v4294, 1
        %v4437 = vsel %vm4392, %v4435, %v4436
        %v4438 = vrot.slane %v4291, 1
        %v4439 = vrot.slane %v4295, 1
        %v4440 = vsel %vm4392, %v4438, %v4439
        %v4441 = vrot.slane %v4296, 1
        %v4442 = vrot.slane %v4300, 1
        %v4443 = vsel %vm4392, %v4441, %v4442
        %v4444 = vrot.slane %v4297, 1
        %v4445 = vrot.slane %v4301, 1
        %v4446 = vsel %vm4392, %v4444, %v4445
        %v4447 = vrot.slane %v4298, 1
        %v4448 = vrot.slane %v4302, 1
        %v4449 = vsel %vm4392, %v4447, %v4448
        %v4450 = vrot.slane %v4299, 1
        %v4451 = vrot.slane %v4303, 1
        %v4452 = vsel %vm4392, %v4450, %v4451
        %v4453 = vrot.slane %v4304, 1
        %v4454 = vrot.slane %v4308, 1
        %v4455 = vsel %vm4392, %v4453, %v4454
        %v4456 = vrot.slane %v4305, 1
        %v4457 = vrot.slane %v4309, 1
        %v4458 = vsel %vm4392, %v4456, %v4457
        %v4459 = vrot.slane %v4306, 1
        %v4460 = vrot.slane %v4310, 1
        %v4461 = vsel %vm4392, %v4459, %v4460
        %v4462 = vrot.slane %v4307, 1
        %v4463 = vrot.slane %v4311, 1
        %v4464 = vsel %vm4392, %v4462, %v4463
        %v4465 = vrot.slane %v4312, 1
        %v4466 = vrot.slane %v4316, 1
        %v4467 = vsel %vm4392, %v4465, %v4466
        %v4468 = vrot.slane %v4313, 1
        %v4469 = vrot.slane %v4317, 1
        %v4470 = vsel %vm4392, %v4468, %v4469
        %v4471 = vrot.slane %v4314, 1
        %v4472 = vrot.slane %v4318, 1
        %v4473 = vsel %vm4392, %v4471, %v4472
        %v4474 = vrot.slane %v4315, 1
        %v4475 = vrot.slane %v4319, 1
        %v4476 = vsel %vm4392, %v4474, %v4475
        %v4477 = vrot.slane %v4320, 1
        %v4478 = vrot.slane %v4324, 1
        %v4479 = vsel %vm4392, %v4477, %v4478
        %v4480 = vrot.slane %v4321, 1
        %v4481 = vrot.slane %v4325, 1
        %v4482 = vsel %vm4392, %v4480, %v4481
        %v4483 = vrot.slane %v4322, 1
        %v4484 = vrot.slane %v4326, 1
        %v4485 = vsel %vm4392, %v4483, %v4484
        %v4486 = vrot.slane %v4323, 1
        %v4487 = vrot.slane %v4327, 1
        %v4488 = vsel %vm4392, %v4486, %v4487
        %v4521 = vpack.c.bf16 %v4407, %v4395
        %v4522 = vpack.c.bf16 %v4410, %v4398
        %v4523 = vpack.c.bf16 %v4413, %v4401
        %v4524 = vpack.c.bf16 %v4416, %v4404
        %v4525 = vpack.c.bf16 %v4431, %v4419
        %v4526 = vpack.c.bf16 %v4434, %v4422
        %v4527 = vpack.c.bf16 %v4437, %v4425
        %v4528 = vpack.c.bf16 %v4440, %v4428
        %v4529 = vpack.c.bf16 %v4455, %v4443
        %v4530 = vpack.c.bf16 %v4458, %v4446
        %v4531 = vpack.c.bf16 %v4461, %v4449
        %v4532 = vpack.c.bf16 %v4464, %v4452
        %v4533 = vpack.c.bf16 %v4479, %v4467
        %v4534 = vpack.c.bf16 %v4482, %v4470
        %v4535 = vpack.c.bf16 %v4485, %v4473
        %v4536 = vpack.c.bf16 %v4488, %v4476
        %v4537 = vld [vmem:[#allocation3] sm:$0xfc]
        %v4538 = vld [vmem:[#allocation3 + $0x8] sm:$0xfc]
        %v4539 = vld [vmem:[#allocation3 + $0x10] sm:$0xfc]
        %v4540 = vld [vmem:[#allocation3 + $0x18] sm:$0xfc]
        %v4541 = vld [vmem:[#allocation3 + $0x20] sm:$0x3]
        %v4542 = vld [vmem:[#allocation3 + $0x28] sm:$0x3]
        %v4543 = vld [vmem:[#allocation3 + $0x30] sm:$0x3]
        %v4544 = vld [vmem:[#allocation3 + $0x38] sm:$0x3]
        %v4545 = vld [vmem:[#allocation3 + $0x40] sm:$0xfc]
        %v4546 = vld [vmem:[#allocation3 + $0x48] sm:$0xfc]
        %v4547 = vld [vmem:[#allocation3 + $0x50] sm:$0xfc]
        %v4548 = vld [vmem:[#allocation3 + $0x58] sm:$0xfc]
        %v4549 = vld [vmem:[#allocation3 + $0x60] sm:$0x3]
        %v4550 = vld [vmem:[#allocation3 + $0x68] sm:$0x3]
        %v4551 = vld [vmem:[#allocation3 + $0x70] sm:$0x3]
        %v4552 = vld [vmem:[#allocation3 + $0x78] sm:$0x3]
        %v4553 = vld [vmem:[#allocation3 + $0x80] sm:$0xfc]
        %v4554 = vld [vmem:[#allocation3 + $0x88] sm:$0xfc]
        %v4555 = vld [vmem:[#allocation3 + $0x90] sm:$0xfc]
        %v4556 = vld [vmem:[#allocation3 + $0x98] sm:$0xfc]
        %v4557 = vld [vmem:[#allocation3 + $0xa0] sm:$0x3]
        %v4558 = vld [vmem:[#allocation3 + $0xa8] sm:$0x3]
        %v4559 = vld [vmem:[#allocation3 + $0xb0] sm:$0x3]
        %v4560 = vld [vmem:[#allocation3 + $0xb8] sm:$0x3]
        %v4561 = vld [vmem:[#allocation3 + $0xc0] sm:$0xfc]
        %v4562 = vld [vmem:[#allocation3 + $0xc8] sm:$0xfc]
        %v4563 = vld [vmem:[#allocation3 + $0xd0] sm:$0xfc]
        %v4564 = vld [vmem:[#allocation3 + $0xd8] sm:$0xfc]
        %v4565 = vld [vmem:[#allocation3 + $0xe0] sm:$0x3]
        %v4566 = vld [vmem:[#allocation3 + $0xe8] sm:$0x3]
        %v4567 = vld [vmem:[#allocation3 + $0xf0] sm:$0x3]
        %v4568 = vld [vmem:[#allocation3 + $0xf8] sm:$0x3]
        %v4569 = vld [vmem:[#allocation3 + $0x100] sm:$0xfc]
        %v4570 = vld [vmem:[#allocation3 + $0x108] sm:$0xfc]
        %v4571 = vld [vmem:[#allocation3 + $0x110] sm:$0xfc]
        %v4572 = vld [vmem:[#allocation3 + $0x118] sm:$0xfc]
        %v4573 = vld [vmem:[#allocation3 + $0x120] sm:$0x3]
        %v4574 = vld [vmem:[#allocation3 + $0x128] sm:$0x3]
        %v4575 = vld [vmem:[#allocation3 + $0x130] sm:$0x3]
        %v4576 = vld [vmem:[#allocation3 + $0x138] sm:$0x3]
        %v4577 = vld [vmem:[#allocation3 + $0x140] sm:$0xfc]
        %v4578 = vld [vmem:[#allocation3 + $0x148] sm:$0xfc]
        %v4579 = vld [vmem:[#allocation3 + $0x150] sm:$0xfc]
        %v4580 = vld [vmem:[#allocation3 + $0x158] sm:$0xfc]
        %v4581 = vld [vmem:[#allocation3 + $0x160] sm:$0x3]
        %v4582 = vld [vmem:[#allocation3 + $0x168] sm:$0x3]
        %v4583 = vld [vmem:[#allocation3 + $0x170] sm:$0x3]
        %v4584 = vld [vmem:[#allocation3 + $0x178] sm:$0x3]
        %v4585 = vld [vmem:[#allocation3 + $0x180] sm:$0xfc]
        %v4586 = vld [vmem:[#allocation3 + $0x188] sm:$0xfc]
        %v4587 = vld [vmem:[#allocation3 + $0x190] sm:$0xfc]
        %v4588 = vld [vmem:[#allocation3 + $0x198] sm:$0xfc]
        %v4589 = vld [vmem:[#allocation3 + $0x1a0] sm:$0x3]
        %v4590 = vld [vmem:[#allocation3 + $0x1a8] sm:$0x3]
        %v4591 = vld [vmem:[#allocation3 + $0x1b0] sm:$0x3]
        %v4592 = vld [vmem:[#allocation3 + $0x1b8] sm:$0x3]
        %v4593 = vld [vmem:[#allocation3 + $0x1c0] sm:$0xfc]
        %v4594 = vld [vmem:[#allocation3 + $0x1c8] sm:$0xfc]
        %v4595 = vld [vmem:[#allocation3 + $0x1d0] sm:$0xfc]
        %v4596 = vld [vmem:[#allocation3 + $0x1d8] sm:$0xfc]
        %v4597 = vld [vmem:[#allocation3 + $0x1e0] sm:$0x3]
        %v4598 = vld [vmem:[#allocation3 + $0x1e8] sm:$0x3]
        %v4599 = vld [vmem:[#allocation3 + $0x1f0] sm:$0x3]
        %v4600 = vld [vmem:[#allocation3 + $0x1f8] sm:$0x3]
        %vm4665 = vcmask 1045504
        %v4666 = vrot.slane %v4537, 2
        %v4667 = vrot.slane %v4541, 2
        %v4668 = vsel %vm4665, %v4666, %v4667
        %v4669 = vrot.slane %v4538, 2
        %v4670 = vrot.slane %v4542, 2
        %v4671 = vsel %vm4665, %v4669, %v4670
        %v4672 = vrot.slane %v4539, 2
        %v4673 = vrot.slane %v4543, 2
        %v4674 = vsel %vm4665, %v4672, %v4673
        %v4675 = vrot.slane %v4540, 2
        %v4676 = vrot.slane %v4544, 2
        %v4677 = vsel %vm4665, %v4675, %v4676
        %v4678 = vrot.slane %v4545, 2
        %v4679 = vrot.slane %v4549, 2
        %v4680 = vsel %vm4665, %v4678, %v4679
        %v4681 = vrot.slane %v4546, 2
        %v4682 = vrot.slane %v4550, 2
        %v4683 = vsel %vm4665, %v4681, %v4682
        %v4684 = vrot.slane %v4547, 2
        %v4685 = vrot.slane %v4551, 2
        %v4686 = vsel %vm4665, %v4684, %v4685
        %v4687 = vrot.slane %v4548, 2
        %v4688 = vrot.slane %v4552, 2
        %v4689 = vsel %vm4665, %v4687, %v4688
        %v4690 = vrot.slane %v4553, 2
        %v4691 = vrot.slane %v4557, 2
        %v4692 = vsel %vm4665, %v4690, %v4691
        %v4693 = vrot.slane %v4554, 2
        %v4694 = vrot.slane %v4558, 2
        %v4695 = vsel %vm4665, %v4693, %v4694
        %v4696 = vrot.slane %v4555, 2
        %v4697 = vrot.slane %v4559, 2
        %v4698 = vsel %vm4665, %v4696, %v4697
        %v4699 = vrot.slane %v4556, 2
        %v4700 = vrot.slane %v4560, 2
        %v4701 = vsel %vm4665, %v4699, %v4700
        %v4702 = vrot.slane %v4561, 2
        %v4703 = vrot.slane %v4565, 2
        %v4704 = vsel %vm4665, %v4702, %v4703
        %v4705 = vrot.slane %v4562, 2
        %v4706 = vrot.slane %v4566, 2
        %v4707 = vsel %vm4665, %v4705, %v4706
        %v4708 = vrot.slane %v4563, 2
        %v4709 = vrot.slane %v4567, 2
        %v4710 = vsel %vm4665, %v4708, %v4709
        %v4711 = vrot.slane %v4564, 2
        %v4712 = vrot.slane %v4568, 2
        %v4713 = vsel %vm4665, %v4711, %v4712
        %v4714 = vrot.slane %v4569, 2
        %v4715 = vrot.slane %v4573, 2
        %v4716 = vsel %vm4665, %v4714, %v4715
        %v4717 = vrot.slane %v4570, 2
        %v4718 = vrot.slane %v4574, 2
        %v4719 = vsel %vm4665, %v4717, %v4718
        %v4720 = vrot.slane %v4571, 2
        %v4721 = vrot.slane %v4575, 2
        %v4722 = vsel %vm4665, %v4720, %v4721
        %v4723 = vrot.slane %v4572, 2
        %v4724 = vrot.slane %v4576, 2
        %v4725 = vsel %vm4665, %v4723, %v4724
        %v4726 = vrot.slane %v4577, 2
        %v4727 = vrot.slane %v4581, 2
        %v4728 = vsel %vm4665, %v4726, %v4727
        %v4729 = vrot.slane %v4578, 2
        %v4730 = vrot.slane %v4582, 2
        %v4731 = vsel %vm4665, %v4729, %v4730
        %v4732 = vrot.slane %v4579, 2
        %v4733 = vrot.slane %v4583, 2
        %v4734 = vsel %vm4665, %v4732, %v4733
        %v4735 = vrot.slane %v4580, 2
        %v4736 = vrot.slane %v4584, 2
        %v4737 = vsel %vm4665, %v4735, %v4736
        %v4738 = vrot.slane %v4585, 2
        %v4739 = vrot.slane %v4589, 2
        %v4740 = vsel %vm4665, %v4738, %v4739
        %v4741 = vrot.slane %v4586, 2
        %v4742 = vrot.slane %v4590, 2
        %v4743 = vsel %vm4665, %v4741, %v4742
        %v4744 = vrot.slane %v4587, 2
        %v4745 = vrot.slane %v4591, 2
        %v4746 = vsel %vm4665, %v4744, %v4745
        %v4747 = vrot.slane %v4588, 2
        %v4748 = vrot.slane %v4592, 2
        %v4749 = vsel %vm4665, %v4747, %v4748
        %v4750 = vrot.slane %v4593, 2
        %v4751 = vrot.slane %v4597, 2
        %v4752 = vsel %vm4665, %v4750, %v4751
        %v4753 = vrot.slane %v4594, 2
        %v4754 = vrot.slane %v4598, 2
        %v4755 = vsel %vm4665, %v4753, %v4754
        %v4756 = vrot.slane %v4595, 2
        %v4757 = vrot.slane %v4599, 2
        %v4758 = vsel %vm4665, %v4756, %v4757
        %v4759 = vrot.slane %v4596, 2
        %v4760 = vrot.slane %v4600, 2
        %v4761 = vsel %vm4665, %v4759, %v4760
        %v4794 = vpack.c.bf16 %v4680, %v4668
        %v4795 = vpack.c.bf16 %v4683, %v4671
        %v4796 = vpack.c.bf16 %v4686, %v4674
        %v4797 = vpack.c.bf16 %v4689, %v4677
        %v4798 = vpack.c.bf16 %v4704, %v4692
        %v4799 = vpack.c.bf16 %v4707, %v4695
        %v4800 = vpack.c.bf16 %v4710, %v4698
        %v4801 = vpack.c.bf16 %v4713, %v4701
        %v4802 = vpack.c.bf16 %v4728, %v4716
        %v4803 = vpack.c.bf16 %v4731, %v4719
        %v4804 = vpack.c.bf16 %v4734, %v4722
        %v4805 = vpack.c.bf16 %v4737, %v4725
        %v4806 = vpack.c.bf16 %v4752, %v4740
        %v4807 = vpack.c.bf16 %v4755, %v4743
        %v4808 = vpack.c.bf16 %v4758, %v4746
        %v4809 = vpack.c.bf16 %v4761, %v4749
        %v4810 = vld [vmem:[%s4151] sm:$0xff]
        %v4811 = vld [vmem:[%s4151 + $0x8] sm:$0xff]
        %v4812 = vld [vmem:[%s4151 + $0x10] sm:$0xff]
        %v4813 = vld [vmem:[%s4151 + $0x18] sm:$0xff]
        %v4814 = vld [vmem:[%s4151 + $0x40] sm:$0xff]
        %v4815 = vld [vmem:[%s4151 + $0x48] sm:$0xff]
        %v4816 = vld [vmem:[%s4151 + $0x50] sm:$0xff]
        %v4817 = vld [vmem:[%s4151 + $0x58] sm:$0xff]
        %v4818 = vld [vmem:[%s4151 + $0x80] sm:$0xff]
        %v4819 = vld [vmem:[%s4151 + $0x88] sm:$0xff]
        %v4820 = vld [vmem:[%s4151 + $0x90] sm:$0xff]
        %v4821 = vld [vmem:[%s4151 + $0x98] sm:$0xff]
        %v4822 = vld [vmem:[%s4151 + $0xc0] sm:$0xff]
        %v4823 = vld [vmem:[%s4151 + $0xc8] sm:$0xff]
        %v4824 = vld [vmem:[%s4151 + $0xd0] sm:$0xff]
        %v4825 = vld [vmem:[%s4151 + $0xd8] sm:$0xff]
        %v4826 = vld [vmem:[%s4151 + $0x100] sm:$0xff]
        %v4827 = vld [vmem:[%s4151 + $0x108] sm:$0xff]
        %v4828 = vld [vmem:[%s4151 + $0x110] sm:$0xff]
        %v4829 = vld [vmem:[%s4151 + $0x118] sm:$0xff]
        %v4830 = vld [vmem:[%s4151 + $0x140] sm:$0xff]
        %v4831 = vld [vmem:[%s4151 + $0x148] sm:$0xff]
        %v4832 = vld [vmem:[%s4151 + $0x150] sm:$0xff]
        %v4833 = vld [vmem:[%s4151 + $0x158] sm:$0xff]
        %v4834 = vld [vmem:[%s4151 + $0x180] sm:$0xff]
        %v4835 = vld [vmem:[%s4151 + $0x188] sm:$0xff]
        %v4836 = vld [vmem:[%s4151 + $0x190] sm:$0xff]
        %v4837 = vld [vmem:[%s4151 + $0x198] sm:$0xff]
        %v4838 = vld [vmem:[%s4151 + $0x1c0] sm:$0xff]
        %v4839 = vld [vmem:[%s4151 + $0x1c8] sm:$0xff]
        %v4840 = vld [vmem:[%s4151 + $0x1d0] sm:$0xff]
        %v4841 = vld [vmem:[%s4151 + $0x1d8] sm:$0xff]
        %v4842 = vpack.c.bf16 %v4814, %v4810
        %v4843 = vpack.c.bf16 %v4815, %v4811
        %v4844 = vpack.c.bf16 %v4816, %v4812
        %v4845 = vpack.c.bf16 %v4817, %v4813
        %v4846 = vpack.c.bf16 %v4822, %v4818
        %v4847 = vpack.c.bf16 %v4823, %v4819
        %v4848 = vpack.c.bf16 %v4824, %v4820
        %v4849 = vpack.c.bf16 %v4825, %v4821
        %v4850 = vpack.c.bf16 %v4830, %v4826
        %v4851 = vpack.c.bf16 %v4831, %v4827
        %v4852 = vpack.c.bf16 %v4832, %v4828
        %v4853 = vpack.c.bf16 %v4833, %v4829
        %v4854 = vpack.c.bf16 %v4838, %v4834
        %v4855 = vpack.c.bf16 %v4839, %v4835
        %v4856 = vpack.c.bf16 %v4840, %v4836
        %v4857 = vpack.c.bf16 %v4841, %v4837
        %v4858 = vld [vmem:[%s4151] sm:$0xfe]
        %v4859 = vld [vmem:[%s4151 + $0x8] sm:$0xfe]
        %v4860 = vld [vmem:[%s4151 + $0x10] sm:$0xfe]
        %v4861 = vld [vmem:[%s4151 + $0x18] sm:$0xfe]
        %v4862 = vld [vmem:[%s4151 + $0x20] sm:$0x1]
        %v4863 = vld [vmem:[%s4151 + $0x28] sm:$0x1]
        %v4864 = vld [vmem:[%s4151 + $0x30] sm:$0x1]
        %v4865 = vld [vmem:[%s4151 + $0x38] sm:$0x1]
        %v4866 = vld [vmem:[%s4151 + $0x40] sm:$0xfe]
        %v4867 = vld [vmem:[%s4151 + $0x48] sm:$0xfe]
        %v4868 = vld [vmem:[%s4151 + $0x50] sm:$0xfe]
        %v4869 = vld [vmem:[%s4151 + $0x58] sm:$0xfe]
        %v4870 = vld [vmem:[%s4151 + $0x60] sm:$0x1]
        %v4871 = vld [vmem:[%s4151 + $0x68] sm:$0x1]
        %v4872 = vld [vmem:[%s4151 + $0x70] sm:$0x1]
        %v4873 = vld [vmem:[%s4151 + $0x78] sm:$0x1]
        %v4874 = vld [vmem:[%s4151 + $0x80] sm:$0xfe]
        %v4875 = vld [vmem:[%s4151 + $0x88] sm:$0xfe]
        %v4876 = vld [vmem:[%s4151 + $0x90] sm:$0xfe]
        %v4877 = vld [vmem:[%s4151 + $0x98] sm:$0xfe]
        %v4878 = vld [vmem:[%s4151 + $0xa0] sm:$0x1]
        %v4879 = vld [vmem:[%s4151 + $0xa8] sm:$0x1]
        %v4880 = vld [vmem:[%s4151 + $0xb0] sm:$0x1]
        %v4881 = vld [vmem:[%s4151 + $0xb8] sm:$0x1]
        %v4882 = vld [vmem:[%s4151 + $0xc0] sm:$0xfe]
        %v4883 = vld [vmem:[%s4151 + $0xc8] sm:$0xfe]
        %v4884 = vld [vmem:[%s4151 + $0xd0] sm:$0xfe]
        %v4885 = vld [vmem:[%s4151 + $0xd8] sm:$0xfe]
        %v4886 = vld [vmem:[%s4151 + $0xe0] sm:$0x1]
        %v4887 = vld [vmem:[%s4151 + $0xe8] sm:$0x1]
        %v4888 = vld [vmem:[%s4151 + $0xf0] sm:$0x1]
        %v4889 = vld [vmem:[%s4151 + $0xf8] sm:$0x1]
        %v4890 = vld [vmem:[%s4151 + $0x100] sm:$0xfe]
        %v4891 = vld [vmem:[%s4151 + $0x108] sm:$0xfe]
        %v4892 = vld [vmem:[%s4151 + $0x110] sm:$0xfe]
        %v4893 = vld [vmem:[%s4151 + $0x118] sm:$0xfe]
        %v4894 = vld [vmem:[%s4151 + $0x120] sm:$0x1]
        %v4895 = vld [vmem:[%s4151 + $0x128] sm:$0x1]
        %v4896 = vld [vmem:[%s4151 + $0x130] sm:$0x1]
        %v4897 = vld [vmem:[%s4151 + $0x138] sm:$0x1]
        %v4898 = vld [vmem:[%s4151 + $0x140] sm:$0xfe]
        %v4899 = vld [vmem:[%s4151 + $0x148] sm:$0xfe]
        %v4900 = vld [vmem:[%s4151 + $0x150] sm:$0xfe]
        %v4901 = vld [vmem:[%s4151 + $0x158] sm:$0xfe]
        %v4902 = vld [vmem:[%s4151 + $0x160] sm:$0x1]
        %v4903 = vld [vmem:[%s4151 + $0x168] sm:$0x1]
        %v4904 = vld [vmem:[%s4151 + $0x170] sm:$0x1]
        %v4905 = vld [vmem:[%s4151 + $0x178] sm:$0x1]
        %v4906 = vld [vmem:[%s4151 + $0x180] sm:$0xfe]
        %v4907 = vld [vmem:[%s4151 + $0x188] sm:$0xfe]
        %v4908 = vld [vmem:[%s4151 + $0x190] sm:$0xfe]
        %v4909 = vld [vmem:[%s4151 + $0x198] sm:$0xfe]
        %v4910 = vld [vmem:[%s4151 + $0x1a0] sm:$0x1]
        %v4911 = vld [vmem:[%s4151 + $0x1a8] sm:$0x1]
        %v4912 = vld [vmem:[%s4151 + $0x1b0] sm:$0x1]
        %v4913 = vld [vmem:[%s4151 + $0x1b8] sm:$0x1]
        %v4914 = vld [vmem:[%s4151 + $0x1c0] sm:$0xfe]
        %v4915 = vld [vmem:[%s4151 + $0x1c8] sm:$0xfe]
        %v4916 = vld [vmem:[%s4151 + $0x1d0] sm:$0xfe]
        %v4917 = vld [vmem:[%s4151 + $0x1d8] sm:$0xfe]
        %v4918 = vld [vmem:[%s4151 + $0x1e0] sm:$0x1]
        %v4919 = vld [vmem:[%s4151 + $0x1e8] sm:$0x1]
        %v4920 = vld [vmem:[%s4151 + $0x1f0] sm:$0x1]
        %v4921 = vld [vmem:[%s4151 + $0x1f8] sm:$0x1]
        %v4986 = vrot.slane %v4858, 1
        %v4987 = vrot.slane %v4862, 1
        %v4988 = vsel %vm4392, %v4986, %v4987
        %v4989 = vrot.slane %v4859, 1
        %v4990 = vrot.slane %v4863, 1
        %v4991 = vsel %vm4392, %v4989, %v4990
        %v4992 = vrot.slane %v4860, 1
        %v4993 = vrot.slane %v4864, 1
        %v4994 = vsel %vm4392, %v4992, %v4993
        %v4995 = vrot.slane %v4861, 1
        %v4996 = vrot.slane %v4865, 1
        %v4997 = vsel %vm4392, %v4995, %v4996
        %v4998 = vrot.slane %v4866, 1
        %v4999 = vrot.slane %v4870, 1
        %v5000 = vsel %vm4392, %v4998, %v4999
        %v5001 = vrot.slane %v4867, 1
        %v5002 = vrot.slane %v4871, 1
        %v5003 = vsel %vm4392, %v5001, %v5002
        %v5004 = vrot.slane %v4868, 1
        %v5005 = vrot.slane %v4872, 1
        %v5006 = vsel %vm4392, %v5004, %v5005
        %v5007 = vrot.slane %v4869, 1
        %v5008 = vrot.slane %v4873, 1
        %v5009 = vsel %vm4392, %v5007, %v5008
        %v5010 = vrot.slane %v4874, 1
        %v5011 = vrot.slane %v4878, 1
        %v5012 = vsel %vm4392, %v5010, %v5011
        %v5013 = vrot.slane %v4875, 1
        %v5014 = vrot.slane %v4879, 1
        %v5015 = vsel %vm4392, %v5013, %v5014
        %v5016 = vrot.slane %v4876, 1
        %v5017 = vrot.slane %v4880, 1
        %v5018 = vsel %vm4392, %v5016, %v5017
        %v5019 = vrot.slane %v4877, 1
        %v5020 = vrot.slane %v4881, 1
        %v5021 = vsel %vm4392, %v5019, %v5020
        %v5022 = vrot.slane %v4882, 1
        %v5023 = vrot.slane %v4886, 1
        %v5024 = vsel %vm4392, %v5022, %v5023
        %v5025 = vrot.slane %v4883, 1
        %v5026 = vrot.slane %v4887, 1
        %v5027 = vsel %vm4392, %v5025, %v5026
        %v5028 = vrot.slane %v4884, 1
        %v5029 = vrot.slane %v4888, 1
        %v5030 = vsel %vm4392, %v5028, %v5029
        %v5031 = vrot.slane %v4885, 1
        %v5032 = vrot.slane %v4889, 1
        %v5033 = vsel %vm4392, %v5031, %v5032
        %v5034 = vrot.slane %v4890, 1
        %v5035 = vrot.slane %v4894, 1
        %v5036 = vsel %vm4392, %v5034, %v5035
        %v5037 = vrot.slane %v4891, 1
        %v5038 = vrot.slane %v4895, 1
        %v5039 = vsel %vm4392, %v5037, %v5038
        %v5040 = vrot.slane %v4892, 1
        %v5041 = vrot.slane %v4896, 1
        %v5042 = vsel %vm4392, %v5040, %v5041
        %v5043 = vrot.slane %v4893, 1
        %v5044 = vrot.slane %v4897, 1
        %v5045 = vsel %vm4392, %v5043, %v5044
        %v5046 = vrot.slane %v4898, 1
        %v5047 = vrot.slane %v4902, 1
        %v5048 = vsel %vm4392, %v5046, %v5047
        %v5049 = vrot.slane %v4899, 1
        %v5050 = vrot.slane %v4903, 1
        %v5051 = vsel %vm4392, %v5049, %v5050
        %v5052 = vrot.slane %v4900, 1
        %v5053 = vrot.slane %v4904, 1
        %v5054 = vsel %vm4392, %v5052, %v5053
        %v5055 = vrot.slane %v4901, 1
        %v5056 = vrot.slane %v4905, 1
        %v5057 = vsel %vm4392, %v5055, %v5056
        %v5058 = vrot.slane %v4906, 1
        %v5059 = vrot.slane %v4910, 1
        %v5060 = vsel %vm4392, %v5058, %v5059
        %v5061 = vrot.slane %v4907, 1
        %v5062 = vrot.slane %v4911, 1
        %v5063 = vsel %vm4392, %v5061, %v5062
        %v5064 = vrot.slane %v4908, 1
        %v5065 = vrot.slane %v4912, 1
        %v5066 = vsel %vm4392, %v5064, %v5065
        %v5067 = vrot.slane %v4909, 1
        %v5068 = vrot.slane %v4913, 1
        %v5069 = vsel %vm4392, %v5067, %v5068
        %v5070 = vrot.slane %v4914, 1
        %v5071 = vrot.slane %v4918, 1
        %v5072 = vsel %vm4392, %v5070, %v5071
        %v5073 = vrot.slane %v4915, 1
        %v5074 = vrot.slane %v4919, 1
        %v5075 = vsel %vm4392, %v5073, %v5074
        %v5076 = vrot.slane %v4916, 1
        %v5077 = vrot.slane %v4920, 1
        %v5078 = vsel %vm4392, %v5076, %v5077
        %v5079 = vrot.slane %v4917, 1
        %v5080 = vrot.slane %v4921, 1
        %v5081 = vsel %vm4392, %v5079, %v5080
        %v5114 = vpack.c.bf16 %v5000, %v4988
        %v5115 = vpack.c.bf16 %v5003, %v4991
        %v5116 = vpack.c.bf16 %v5006, %v4994
        %v5117 = vpack.c.bf16 %v5009, %v4997
        %v5118 = vpack.c.bf16 %v5024, %v5012
        %v5119 = vpack.c.bf16 %v5027, %v5015
        %v5120 = vpack.c.bf16 %v5030, %v5018
        %v5121 = vpack.c.bf16 %v5033, %v5021
        %v5122 = vpack.c.bf16 %v5048, %v5036
        %v5123 = vpack.c.bf16 %v5051, %v5039
        %v5124 = vpack.c.bf16 %v5054, %v5042
        %v5125 = vpack.c.bf16 %v5057, %v5045
        %v5126 = vpack.c.bf16 %v5072, %v5060
        %v5127 = vpack.c.bf16 %v5075, %v5063
        %v5128 = vpack.c.bf16 %v5078, %v5066
        %v5129 = vpack.c.bf16 %v5081, %v5069
        %v5130 = vld [vmem:[%s4151] sm:$0xfc]
        %v5131 = vld [vmem:[%s4151 + $0x8] sm:$0xfc]
        %v5132 = vld [vmem:[%s4151 + $0x10] sm:$0xfc]
        %v5133 = vld [vmem:[%s4151 + $0x18] sm:$0xfc]
        %v5134 = vld [vmem:[%s4151 + $0x20] sm:$0x3]
        %v5135 = vld [vmem:[%s4151 + $0x28] sm:$0x3]
        %v5136 = vld [vmem:[%s4151 + $0x30] sm:$0x3]
        %v5137 = vld [vmem:[%s4151 + $0x38] sm:$0x3]
        %v5138 = vld [vmem:[%s4151 + $0x40] sm:$0xfc]
        %v5139 = vld [vmem:[%s4151 + $0x48] sm:$0xfc]
        %v5140 = vld [vmem:[%s4151 + $0x50] sm:$0xfc]
        %v5141 = vld [vmem:[%s4151 + $0x58] sm:$0xfc]
        %v5142 = vld [vmem:[%s4151 + $0x60] sm:$0x3]
        %v5143 = vld [vmem:[%s4151 + $0x68] sm:$0x3]
        %v5144 = vld [vmem:[%s4151 + $0x70] sm:$0x3]
        %v5145 = vld [vmem:[%s4151 + $0x78] sm:$0x3]
        %v5146 = vld [vmem:[%s4151 + $0x80] sm:$0xfc]
        %v5147 = vld [vmem:[%s4151 + $0x88] sm:$0xfc]
        %v5148 = vld [vmem:[%s4151 + $0x90] sm:$0xfc]
        %v5149 = vld [vmem:[%s4151 + $0x98] sm:$0xfc]
        %v5150 = vld [vmem:[%s4151 + $0xa0] sm:$0x3]
        %v5151 = vld [vmem:[%s4151 + $0xa8] sm:$0x3]
        %v5152 = vld [vmem:[%s4151 + $0xb0] sm:$0x3]
        %v5153 = vld [vmem:[%s4151 + $0xb8] sm:$0x3]
        %v5154 = vld [vmem:[%s4151 + $0xc0] sm:$0xfc]
        %v5155 = vld [vmem:[%s4151 + $0xc8] sm:$0xfc]
        %v5156 = vld [vmem:[%s4151 + $0xd0] sm:$0xfc]
        %v5157 = vld [vmem:[%s4151 + $0xd8] sm:$0xfc]
        %v5158 = vld [vmem:[%s4151 + $0xe0] sm:$0x3]
        %v5159 = vld [vmem:[%s4151 + $0xe8] sm:$0x3]
        %v5160 = vld [vmem:[%s4151 + $0xf0] sm:$0x3]
        %v5161 = vld [vmem:[%s4151 + $0xf8] sm:$0x3]
        %v5162 = vld [vmem:[%s4151 + $0x100] sm:$0xfc]
        %v5163 = vld [vmem:[%s4151 + $0x108] sm:$0xfc]
        %v5164 = vld [vmem:[%s4151 + $0x110] sm:$0xfc]
        %v5165 = vld [vmem:[%s4151 + $0x118] sm:$0xfc]
        %v5166 = vld [vmem:[%s4151 + $0x120] sm:$0x3]
        %v5167 = vld [vmem:[%s4151 + $0x128] sm:$0x3]
        %v5168 = vld [vmem:[%s4151 + $0x130] sm:$0x3]
        %v5169 = vld [vmem:[%s4151 + $0x138] sm:$0x3]
        %v5170 = vld [vmem:[%s4151 + $0x140] sm:$0xfc]
        %v5171 = vld [vmem:[%s4151 + $0x148] sm:$0xfc]
        %v5172 = vld [vmem:[%s4151 + $0x150] sm:$0xfc]
        %v5173 = vld [vmem:[%s4151 + $0x158] sm:$0xfc]
        %v5174 = vld [vmem:[%s4151 + $0x160] sm:$0x3]
        %v5175 = vld [vmem:[%s4151 + $0x168] sm:$0x3]
        %v5176 = vld [vmem:[%s4151 + $0x170] sm:$0x3]
        %v5177 = vld [vmem:[%s4151 + $0x178] sm:$0x3]
        %v5178 = vld [vmem:[%s4151 + $0x180] sm:$0xfc]
        %v5179 = vld [vmem:[%s4151 + $0x188] sm:$0xfc]
        %v5180 = vld [vmem:[%s4151 + $0x190] sm:$0xfc]
        %v5181 = vld [vmem:[%s4151 + $0x198] sm:$0xfc]
        %v5182 = vld [vmem:[%s4151 + $0x1a0] sm:$0x3]
        %v5183 = vld [vmem:[%s4151 + $0x1a8] sm:$0x3]
        %v5184 = vld [vmem:[%s4151 + $0x1b0] sm:$0x3]
        %v5185 = vld [vmem:[%s4151 + $0x1b8] sm:$0x3]
        %v5186 = vld [vmem:[%s4151 + $0x1c0] sm:$0xfc]
        %v5187 = vld [vmem:[%s4151 + $0x1c8] sm:$0xfc]
        %v5188 = vld [vmem:[%s4151 + $0x1d0] sm:$0xfc]
        %v5189 = vld [vmem:[%s4151 + $0x1d8] sm:$0xfc]
        %v5190 = vld [vmem:[%s4151 + $0x1e0] sm:$0x3]
        %v5191 = vld [vmem:[%s4151 + $0x1e8] sm:$0x3]
        %v5192 = vld [vmem:[%s4151 + $0x1f0] sm:$0x3]
        %v5193 = vld [vmem:[%s4151 + $0x1f8] sm:$0x3]
        %v5258 = vrot.slane %v5130, 2
        %v5259 = vrot.slane %v5134, 2
        %v5260 = vsel %vm4665, %v5258, %v5259
        %v5261 = vrot.slane %v5131, 2
        %v5262 = vrot.slane %v5135, 2
        %v5263 = vsel %vm4665, %v5261, %v5262
        %v5264 = vrot.slane %v5132, 2
        %v5265 = vrot.slane %v5136, 2
        %v5266 = vsel %vm4665, %v5264, %v5265
        %v5267 = vrot.slane %v5133, 2
        %v5268 = vrot.slane %v5137, 2
        %v5269 = vsel %vm4665, %v5267, %v5268
        %v5270 = vrot.slane %v5138, 2
        %v5271 = vrot.slane %v5142, 2
        %v5272 = vsel %vm4665, %v5270, %v5271
        %v5273 = vrot.slane %v5139, 2
        %v5274 = vrot.slane %v5143, 2
        %v5275 = vsel %vm4665, %v5273, %v5274
        %v5276 = vrot.slane %v5140, 2
        %v5277 = vrot.slane %v5144, 2
        %v5278 = vsel %vm4665, %v5276, %v5277
        %v5279 = vrot.slane %v5141, 2
        %v5280 = vrot.slane %v5145, 2
        %v5281 = vsel %vm4665, %v5279, %v5280
        %v5282 = vrot.slane %v5146, 2
        %v5283 = vrot.slane %v5150, 2
        %v5284 = vsel %vm4665, %v5282, %v5283
        %v5285 = vrot.slane %v5147, 2
        %v5286 = vrot.slane %v5151, 2
        %v5287 = vsel %vm4665, %v5285, %v5286
        %v5288 = vrot.slane %v5148, 2
        %v5289 = vrot.slane %v5152, 2
        %v5290 = vsel %vm4665, %v5288, %v5289
        %v5291 = vrot.slane %v5149, 2
        %v5292 = vrot.slane %v5153, 2
        %v5293 = vsel %vm4665, %v5291, %v5292
        %v5294 = vrot.slane %v5154, 2
        %v5295 = vrot.slane %v5158, 2
        %v5296 = vsel %vm4665, %v5294, %v5295
        %v5297 = vrot.slane %v5155, 2
        %v5298 = vrot.slane %v5159, 2
        %v5299 = vsel %vm4665, %v5297, %v5298
        %v5300 = vrot.slane %v5156, 2
        %v5301 = vrot.slane %v5160, 2
        %v5302 = vsel %vm4665, %v5300, %v5301
        %v5303 = vrot.slane %v5157, 2
        %v5304 = vrot.slane %v5161, 2
        %v5305 = vsel %vm4665, %v5303, %v5304
        %v5306 = vrot.slane %v5162, 2
        %v5307 = vrot.slane %v5166, 2
        %v5308 = vsel %vm4665, %v5306, %v5307
        %v5309 = vrot.slane %v5163, 2
        %v5310 = vrot.slane %v5167, 2
        %v5311 = vsel %vm4665, %v5309, %v5310
        %v5312 = vrot.slane %v5164, 2
        %v5313 = vrot.slane %v5168, 2
        %v5314 = vsel %vm4665, %v5312, %v5313
        %v5315 = vrot.slane %v5165, 2
        %v5316 = vrot.slane %v5169, 2
        %v5317 = vsel %vm4665, %v5315, %v5316
        %v5318 = vrot.slane %v5170, 2
        %v5319 = vrot.slane %v5174, 2
        %v5320 = vsel %vm4665, %v5318, %v5319
        %v5321 = vrot.slane %v5171, 2
        %v5322 = vrot.slane %v5175, 2
        %v5323 = vsel %vm4665, %v5321, %v5322
        %v5324 = vrot.slane %v5172, 2
        %v5325 = vrot.slane %v5176, 2
        %v5326 = vsel %vm4665, %v5324, %v5325
        %v5327 = vrot.slane %v5173, 2
        %v5328 = vrot.slane %v5177, 2
        %v5329 = vsel %vm4665, %v5327, %v5328
        %v5330 = vrot.slane %v5178, 2
        %v5331 = vrot.slane %v5182, 2
        %v5332 = vsel %vm4665, %v5330, %v5331
        %v5333 = vrot.slane %v5179, 2
        %v5334 = vrot.slane %v5183, 2
        %v5335 = vsel %vm4665, %v5333, %v5334
        %v5336 = vrot.slane %v5180, 2
        %v5337 = vrot.slane %v5184, 2
        %v5338 = vsel %vm4665, %v5336, %v5337
        %v5339 = vrot.slane %v5181, 2
        %v5340 = vrot.slane %v5185, 2
        %v5341 = vsel %vm4665, %v5339, %v5340
        %v5342 = vrot.slane %v5186, 2
        %v5343 = vrot.slane %v5190, 2
        %v5344 = vsel %vm4665, %v5342, %v5343
        %v5345 = vrot.slane %v5187, 2
        %v5346 = vrot.slane %v5191, 2
        %v5347 = vsel %vm4665, %v5345, %v5346
        %v5348 = vrot.slane %v5188, 2
        %v5349 = vrot.slane %v5192, 2
        %v5350 = vsel %vm4665, %v5348, %v5349
        %v5351 = vrot.slane %v5189, 2
        %v5352 = vrot.slane %v5193, 2
        %v5353 = vsel %vm4665, %v5351, %v5352
        %v5386 = vpack.c.bf16 %v5272, %v5260
        %v5387 = vpack.c.bf16 %v5275, %v5263
        %v5388 = vpack.c.bf16 %v5278, %v5266
        %v5389 = vpack.c.bf16 %v5281, %v5269
        %v5390 = vpack.c.bf16 %v5296, %v5284
        %v5391 = vpack.c.bf16 %v5299, %v5287
        %v5392 = vpack.c.bf16 %v5302, %v5290
        %v5393 = vpack.c.bf16 %v5305, %v5293
        %v5394 = vpack.c.bf16 %v5320, %v5308
        %v5395 = vpack.c.bf16 %v5323, %v5311
        %v5396 = vpack.c.bf16 %v5326, %v5314
        %v5397 = vpack.c.bf16 %v5329, %v5317
        %v5398 = vpack.c.bf16 %v5344, %v5332
        %v5399 = vpack.c.bf16 %v5347, %v5335
        %v5400 = vpack.c.bf16 %v5350, %v5338
        %v5401 = vpack.c.bf16 %v5353, %v5341
        %s5402 = scalar_lea.vmem [#allocation3], 128
        %v5403 = vld [vmem:[%s5402] sm:$0xff]
        %v5404 = vld [vmem:[%s5402 + $0x8] sm:$0xff]
        %v5405 = vld [vmem:[%s5402 + $0x10] sm:$0xff]
        %v5406 = vld [vmem:[%s5402 + $0x18] sm:$0xff]
        %v5407 = vld [vmem:[%s5402 + $0x40] sm:$0xff]
        %v5408 = vld [vmem:[%s5402 + $0x48] sm:$0xff]
        %v5409 = vld [vmem:[%s5402 + $0x50] sm:$0xff]
        %v5410 = vld [vmem:[%s5402 + $0x58] sm:$0xff]
        %v5411 = vld [vmem:[%s5402 + $0x80] sm:$0xff]
        %v5412 = vld [vmem:[%s5402 + $0x88] sm:$0xff]
        %v5413 = vld [vmem:[%s5402 + $0x90] sm:$0xff]
        %v5414 = vld [vmem:[%s5402 + $0x98] sm:$0xff]
        %v5415 = vld [vmem:[%s5402 + $0xc0] sm:$0xff]
        %v5416 = vld [vmem:[%s5402 + $0xc8] sm:$0xff]
        %v5417 = vld [vmem:[%s5402 + $0xd0] sm:$0xff]
        %v5418 = vld [vmem:[%s5402 + $0xd8] sm:$0xff]
        %v5419 = vld [vmem:[%s5402 + $0x100] sm:$0xff]
        %v5420 = vld [vmem:[%s5402 + $0x108] sm:$0xff]
        %v5421 = vld [vmem:[%s5402 + $0x110] sm:$0xff]
        %v5422 = vld [vmem:[%s5402 + $0x118] sm:$0xff]
        %v5423 = vld [vmem:[%s5402 + $0x140] sm:$0xff]
        %v5424 = vld [vmem:[%s5402 + $0x148] sm:$0xff]
        %v5425 = vld [vmem:[%s5402 + $0x150] sm:$0xff]
        %v5426 = vld [vmem:[%s5402 + $0x158] sm:$0xff]
        %v5427 = vld [vmem:[%s5402 + $0x180] sm:$0xff]
        %v5428 = vld [vmem:[%s5402 + $0x188] sm:$0xff]
        %v5429 = vld [vmem:[%s5402 + $0x190] sm:$0xff]
        %v5430 = vld [vmem:[%s5402 + $0x198] sm:$0xff]
        %v5431 = vld [vmem:[%s5402 + $0x1c0] sm:$0xff]
        %v5432 = vld [vmem:[%s5402 + $0x1c8] sm:$0xff]
        %v5433 = vld [vmem:[%s5402 + $0x1d0] sm:$0xff]
        %v5434 = vld [vmem:[%s5402 + $0x1d8] sm:$0xff]
        %v5435 = vpack.c.bf16 %v5407, %v5403
        %v5436 = vpack.c.bf16 %v5408, %v5404
        %v5437 = vpack.c.bf16 %v5409, %v5405
        %v5438 = vpack.c.bf16 %v5410, %v5406
        %v5439 = vpack.c.bf16 %v5415, %v5411
        %v5440 = vpack.c.bf16 %v5416, %v5412
        %v5441 = vpack.c.bf16 %v5417, %v5413
        %v5442 = vpack.c.bf16 %v5418, %v5414
        %v5443 = vpack.c.bf16 %v5423, %v5419
        %v5444 = vpack.c.bf16 %v5424, %v5420
        %v5445 = vpack.c.bf16 %v5425, %v5421
        %v5446 = vpack.c.bf16 %v5426, %v5422
        %v5447 = vpack.c.bf16 %v5431, %v5427
        %v5448 = vpack.c.bf16 %v5432, %v5428
        %v5449 = vpack.c.bf16 %v5433, %v5429
        %v5450 = vpack.c.bf16 %v5434, %v5430
        %v5451 = vld [vmem:[%s5402] sm:$0xfe]
        %v5452 = vld [vmem:[%s5402 + $0x8] sm:$0xfe]
        %v5453 = vld [vmem:[%s5402 + $0x10] sm:$0xfe]
        %v5454 = vld [vmem:[%s5402 + $0x18] sm:$0xfe]
        %v5455 = vld [vmem:[%s5402 + $0x20] sm:$0x1]
        %v5456 = vld [vmem:[%s5402 + $0x28] sm:$0x1]
        %v5457 = vld [vmem:[%s5402 + $0x30] sm:$0x1]
        %v5458 = vld [vmem:[%s5402 + $0x38] sm:$0x1]
        %v5459 = vld [vmem:[%s5402 + $0x40] sm:$0xfe]
        %v5460 = vld [vmem:[%s5402 + $0x48] sm:$0xfe]
        %v5461 = vld [vmem:[%s5402 + $0x50] sm:$0xfe]
        %v5462 = vld [vmem:[%s5402 + $0x58] sm:$0xfe]
        %v5463 = vld [vmem:[%s5402 + $0x60] sm:$0x1]
        %v5464 = vld [vmem:[%s5402 + $0x68] sm:$0x1]
        %v5465 = vld [vmem:[%s5402 + $0x70] sm:$0x1]
        %v5466 = vld [vmem:[%s5402 + $0x78] sm:$0x1]
        %v5467 = vld [vmem:[%s5402 + $0x80] sm:$0xfe]
        %v5468 = vld [vmem:[%s5402 + $0x88] sm:$0xfe]
        %v5469 = vld [vmem:[%s5402 + $0x90] sm:$0xfe]
        %v5470 = vld [vmem:[%s5402 + $0x98] sm:$0xfe]
        %v5471 = vld [vmem:[%s5402 + $0xa0] sm:$0x1]
        %v5472 = vld [vmem:[%s5402 + $0xa8] sm:$0x1]
        %v5473 = vld [vmem:[%s5402 + $0xb0] sm:$0x1]
        %v5474 = vld [vmem:[%s5402 + $0xb8] sm:$0x1]
        %v5475 = vld [vmem:[%s5402 + $0xc0] sm:$0xfe]
        %v5476 = vld [vmem:[%s5402 + $0xc8] sm:$0xfe]
        %v5477 = vld [vmem:[%s5402 + $0xd0] sm:$0xfe]
        %v5478 = vld [vmem:[%s5402 + $0xd8] sm:$0xfe]
        %v5479 = vld [vmem:[%s5402 + $0xe0] sm:$0x1]
        %v5480 = vld [vmem:[%s5402 + $0xe8] sm:$0x1]
        %v5481 = vld [vmem:[%s5402 + $0xf0] sm:$0x1]
        %v5482 = vld [vmem:[%s5402 + $0xf8] sm:$0x1]
        %v5483 = vld [vmem:[%s5402 + $0x100] sm:$0xfe]
        %v5484 = vld [vmem:[%s5402 + $0x108] sm:$0xfe]
        %v5485 = vld [vmem:[%s5402 + $0x110] sm:$0xfe]
        %v5486 = vld [vmem:[%s5402 + $0x118] sm:$0xfe]
        %v5487 = vld [vmem:[%s5402 + $0x120] sm:$0x1]
        %v5488 = vld [vmem:[%s5402 + $0x128] sm:$0x1]
        %v5489 = vld [vmem:[%s5402 + $0x130] sm:$0x1]
        %v5490 = vld [vmem:[%s5402 + $0x138] sm:$0x1]
        %v5491 = vld [vmem:[%s5402 + $0x140] sm:$0xfe]
        %v5492 = vld [vmem:[%s5402 + $0x148] sm:$0xfe]
        %v5493 = vld [vmem:[%s5402 + $0x150] sm:$0xfe]
        %v5494 = vld [vmem:[%s5402 + $0x158] sm:$0xfe]
        %v5495 = vld [vmem:[%s5402 + $0x160] sm:$0x1]
        %v5496 = vld [vmem:[%s5402 + $0x168] sm:$0x1]
        %v5497 = vld [vmem:[%s5402 + $0x170] sm:$0x1]
        %v5498 = vld [vmem:[%s5402 + $0x178] sm:$0x1]
        %v5499 = vld [vmem:[%s5402 + $0x180] sm:$0xfe]
        %v5500 = vld [vmem:[%s5402 + $0x188] sm:$0xfe]
        %v5501 = vld [vmem:[%s5402 + $0x190] sm:$0xfe]
        %v5502 = vld [vmem:[%s5402 + $0x198] sm:$0xfe]
        %v5503 = vld [vmem:[%s5402 + $0x1a0] sm:$0x1]
        %v5504 = vld [vmem:[%s5402 + $0x1a8] sm:$0x1]
        %v5505 = vld [vmem:[%s5402 + $0x1b0] sm:$0x1]
        %v5506 = vld [vmem:[%s5402 + $0x1b8] sm:$0x1]
        %v5507 = vld [vmem:[%s5402 + $0x1c0] sm:$0xfe]
        %v5508 = vld [vmem:[%s5402 + $0x1c8] sm:$0xfe]
        %v5509 = vld [vmem:[%s5402 + $0x1d0] sm:$0xfe]
        %v5510 = vld [vmem:[%s5402 + $0x1d8] sm:$0xfe]
        %v5511 = vld [vmem:[%s5402 + $0x1e0] sm:$0x1]
        %v5512 = vld [vmem:[%s5402 + $0x1e8] sm:$0x1]
        %v5513 = vld [vmem:[%s5402 + $0x1f0] sm:$0x1]
        %v5514 = vld [vmem:[%s5402 + $0x1f8] sm:$0x1]
        %v5579 = vrot.slane %v5451, 1
        %v5580 = vrot.slane %v5455, 1
        %v5581 = vsel %vm4392, %v5579, %v5580
        %v5582 = vrot.slane %v5452, 1
        %v5583 = vrot.slane %v5456, 1
        %v5584 = vsel %vm4392, %v5582, %v5583
        %v5585 = vrot.slane %v5453, 1
        %v5586 = vrot.slane %v5457, 1
        %v5587 = vsel %vm4392, %v5585, %v5586
        %v5588 = vrot.slane %v5454, 1
        %v5589 = vrot.slane %v5458, 1
        %v5590 = vsel %vm4392, %v5588, %v5589
        %v5591 = vrot.slane %v5459, 1
        %v5592 = vrot.slane %v5463, 1
        %v5593 = vsel %vm4392, %v5591, %v5592
        %v5594 = vrot.slane %v5460, 1
        %v5595 = vrot.slane %v5464, 1
        %v5596 = vsel %vm4392, %v5594, %v5595
        %v5597 = vrot.slane %v5461, 1
        %v5598 = vrot.slane %v5465, 1
        %v5599 = vsel %vm4392, %v5597, %v5598
        %v5600 = vrot.slane %v5462, 1
        %v5601 = vrot.slane %v5466, 1
        %v5602 = vsel %vm4392, %v5600, %v5601
        %v5603 = vrot.slane %v5467, 1
        %v5604 = vrot.slane %v5471, 1
        %v5605 = vsel %vm4392, %v5603, %v5604
        %v5606 = vrot.slane %v5468, 1
        %v5607 = vrot.slane %v5472, 1
        %v5608 = vsel %vm4392, %v5606, %v5607
        %v5609 = vrot.slane %v5469, 1
        %v5610 = vrot.slane %v5473, 1
        %v5611 = vsel %vm4392, %v5609, %v5610
        %v5612 = vrot.slane %v5470, 1
        %v5613 = vrot.slane %v5474, 1
        %v5614 = vsel %vm4392, %v5612, %v5613
        %v5615 = vrot.slane %v5475, 1
        %v5616 = vrot.slane %v5479, 1
        %v5617 = vsel %vm4392, %v5615, %v5616
        %v5618 = vrot.slane %v5476, 1
        %v5619 = vrot.slane %v5480, 1
        %v5620 = vsel %vm4392, %v5618, %v5619
        %v5621 = vrot.slane %v5477, 1
        %v5622 = vrot.slane %v5481, 1
        %v5623 = vsel %vm4392, %v5621, %v5622
        %v5624 = vrot.slane %v5478, 1
        %v5625 = vrot.slane %v5482, 1
        %v5626 = vsel %vm4392, %v5624, %v5625
        %v5627 = vrot.slane %v5483, 1
        %v5628 = vrot.slane %v5487, 1
        %v5629 = vsel %vm4392, %v5627, %v5628
        %v5630 = vrot.slane %v5484, 1
        %v5631 = vrot.slane %v5488, 1
        %v5632 = vsel %vm4392, %v5630, %v5631
        %v5633 = vrot.slane %v5485, 1
        %v5634 = vrot.slane %v5489, 1
        %v5635 = vsel %vm4392, %v5633, %v5634
        %v5636 = vrot.slane %v5486, 1
        %v5637 = vrot.slane %v5490, 1
        %v5638 = vsel %vm4392, %v5636, %v5637
        %v5639 = vrot.slane %v5491, 1
        %v5640 = vrot.slane %v5495, 1
        %v5641 = vsel %vm4392, %v5639, %v5640
        %v5642 = vrot.slane %v5492, 1
        %v5643 = vrot.slane %v5496, 1
        %v5644 = vsel %vm4392, %v5642, %v5643
        %v5645 = vrot.slane %v5493, 1
        %v5646 = vrot.slane %v5497, 1
        %v5647 = vsel %vm4392, %v5645, %v5646
        %v5648 = vrot.slane %v5494, 1
        %v5649 = vrot.slane %v5498, 1
        %v5650 = vsel %vm4392, %v5648, %v5649
        %v5651 = vrot.slane %v5499, 1
        %v5652 = vrot.slane %v5503, 1
        %v5653 = vsel %vm4392, %v5651, %v5652
        %v5654 = vrot.slane %v5500, 1
        %v5655 = vrot.slane %v5504, 1
        %v5656 = vsel %vm4392, %v5654, %v5655
        %v5657 = vrot.slane %v5501, 1
        %v5658 = vrot.slane %v5505, 1
        %v5659 = vsel %vm4392, %v5657, %v5658
        %v5660 = vrot.slane %v5502, 1
        %v5661 = vrot.slane %v5506, 1
        %v5662 = vsel %vm4392, %v5660, %v5661
        %v5663 = vrot.slane %v5507, 1
        %v5664 = vrot.slane %v5511, 1
        %v5665 = vsel %vm4392, %v5663, %v5664
        %v5666 = vrot.slane %v5508, 1
        %v5667 = vrot.slane %v5512, 1
        %v5668 = vsel %vm4392, %v5666, %v5667
        %v5669 = vrot.slane %v5509, 1
        %v5670 = vrot.slane %v5513, 1
        %v5671 = vsel %vm4392, %v5669, %v5670
        %v5672 = vrot.slane %v5510, 1
        %v5673 = vrot.slane %v5514, 1
        %v5674 = vsel %vm4392, %v5672, %v5673
        %v5707 = vpack.c.bf16 %v5593, %v5581
        %v5708 = vpack.c.bf16 %v5596, %v5584
        %v5709 = vpack.c.bf16 %v5599, %v5587
        %v5710 = vpack.c.bf16 %v5602, %v5590
        %v5711 = vpack.c.bf16 %v5617, %v5605
        %v5712 = vpack.c.bf16 %v5620, %v5608
        %v5713 = vpack.c.bf16 %v5623, %v5611
        %v5714 = vpack.c.bf16 %v5626, %v5614
        %v5715 = vpack.c.bf16 %v5641, %v5629
        %v5716 = vpack.c.bf16 %v5644, %v5632
        %v5717 = vpack.c.bf16 %v5647, %v5635
        %v5718 = vpack.c.bf16 %v5650, %v5638
        %v5719 = vpack.c.bf16 %v5665, %v5653
        %v5720 = vpack.c.bf16 %v5668, %v5656
        %v5721 = vpack.c.bf16 %v5671, %v5659
        %v5722 = vpack.c.bf16 %v5674, %v5662
        %v5723 = vld [vmem:[%s5402] sm:$0xfc]
        %v5724 = vld [vmem:[%s5402 + $0x8] sm:$0xfc]
        %v5725 = vld [vmem:[%s5402 + $0x10] sm:$0xfc]
        %v5726 = vld [vmem:[%s5402 + $0x18] sm:$0xfc]
        %v5727 = vld [vmem:[%s5402 + $0x20] sm:$0x3]
        %v5728 = vld [vmem:[%s5402 + $0x28] sm:$0x3]
        %v5729 = vld [vmem:[%s5402 + $0x30] sm:$0x3]
        %v5730 = vld [vmem:[%s5402 + $0x38] sm:$0x3]
        %v5731 = vld [vmem:[%s5402 + $0x40] sm:$0xfc]
        %v5732 = vld [vmem:[%s5402 + $0x48] sm:$0xfc]
        %v5733 = vld [vmem:[%s5402 + $0x50] sm:$0xfc]
        %v5734 = vld [vmem:[%s5402 + $0x58] sm:$0xfc]
        %v5735 = vld [vmem:[%s5402 + $0x60] sm:$0x3]
        %v5736 = vld [vmem:[%s5402 + $0x68] sm:$0x3]
        %v5737 = vld [vmem:[%s5402 + $0x70] sm:$0x3]
        %v5738 = vld [vmem:[%s5402 + $0x78] sm:$0x3]
        %v5739 = vld [vmem:[%s5402 + $0x80] sm:$0xfc]
        %v5740 = vld [vmem:[%s5402 + $0x88] sm:$0xfc]
        %v5741 = vld [vmem:[%s5402 + $0x90] sm:$0xfc]
        %v5742 = vld [vmem:[%s5402 + $0x98] sm:$0xfc]
        %v5743 = vld [vmem:[%s5402 + $0xa0] sm:$0x3]
        %v5744 = vld [vmem:[%s5402 + $0xa8] sm:$0x3]
        %v5745 = vld [vmem:[%s5402 + $0xb0] sm:$0x3]
        %v5746 = vld [vmem:[%s5402 + $0xb8] sm:$0x3]
        %v5747 = vld [vmem:[%s5402 + $0xc0] sm:$0xfc]
        %v5748 = vld [vmem:[%s5402 + $0xc8] sm:$0xfc]
        %v5749 = vld [vmem:[%s5402 + $0xd0] sm:$0xfc]
        %v5750 = vld [vmem:[%s5402 + $0xd8] sm:$0xfc]
        %v5751 = vld [vmem:[%s5402 + $0xe0] sm:$0x3]
        %v5752 = vld [vmem:[%s5402 + $0xe8] sm:$0x3]
        %v5753 = vld [vmem:[%s5402 + $0xf0] sm:$0x3]
        %v5754 = vld [vmem:[%s5402 + $0xf8] sm:$0x3]
        %v5755 = vld [vmem:[%s5402 + $0x100] sm:$0xfc]
        %v5756 = vld [vmem:[%s5402 + $0x108] sm:$0xfc]
        %v5757 = vld [vmem:[%s5402 + $0x110] sm:$0xfc]
        %v5758 = vld [vmem:[%s5402 + $0x118] sm:$0xfc]
        %v5759 = vld [vmem:[%s5402 + $0x120] sm:$0x3]
        %v5760 = vld [vmem:[%s5402 + $0x128] sm:$0x3]
        %v5761 = vld [vmem:[%s5402 + $0x130] sm:$0x3]
        %v5762 = vld [vmem:[%s5402 + $0x138] sm:$0x3]
        %v5763 = vld [vmem:[%s5402 + $0x140] sm:$0xfc]
        %v5764 = vld [vmem:[%s5402 + $0x148] sm:$0xfc]
        %v5765 = vld [vmem:[%s5402 + $0x150] sm:$0xfc]
        %v5766 = vld [vmem:[%s5402 + $0x158] sm:$0xfc]
        %v5767 = vld [vmem:[%s5402 + $0x160] sm:$0x3]
        %v5768 = vld [vmem:[%s5402 + $0x168] sm:$0x3]
        %v5769 = vld [vmem:[%s5402 + $0x170] sm:$0x3]
        %v5770 = vld [vmem:[%s5402 + $0x178] sm:$0x3]
        %v5771 = vld [vmem:[%s5402 + $0x180] sm:$0xfc]
        %v5772 = vld [vmem:[%s5402 + $0x188] sm:$0xfc]
        %v5773 = vld [vmem:[%s5402 + $0x190] sm:$0xfc]
        %v5774 = vld [vmem:[%s5402 + $0x198] sm:$0xfc]
        %v5775 = vld [vmem:[%s5402 + $0x1a0] sm:$0x3]
        %v5776 = vld [vmem:[%s5402 + $0x1a8] sm:$0x3]
        %v5777 = vld [vmem:[%s5402 + $0x1b0] sm:$0x3]
        %v5778 = vld [vmem:[%s5402 + $0x1b8] sm:$0x3]
        %v5779 = vld [vmem:[%s5402 + $0x1c0] sm:$0xfc]
        %v5780 = vld [vmem:[%s5402 + $0x1c8] sm:$0xfc]
        %v5781 = vld [vmem:[%s5402 + $0x1d0] sm:$0xfc]
        %v5782 = vld [vmem:[%s5402 + $0x1d8] sm:$0xfc]
        %v5783 = vld [vmem:[%s5402 + $0x1e0] sm:$0x3]
        %v5784 = vld [vmem:[%s5402 + $0x1e8] sm:$0x3]
        %v5785 = vld [vmem:[%s5402 + $0x1f0] sm:$0x3]
        %v5786 = vld [vmem:[%s5402 + $0x1f8] sm:$0x3]
        %v5851 = vrot.slane %v5723, 2
        %v5852 = vrot.slane %v5727, 2
        %v5853 = vsel %vm4665, %v5851, %v5852
        %v5854 = vrot.slane %v5724, 2
        %v5855 = vrot.slane %v5728, 2
        %v5856 = vsel %vm4665, %v5854, %v5855
        %v5857 = vrot.slane %v5725, 2
        %v5858 = vrot.slane %v5729, 2
        %v5859 = vsel %vm4665, %v5857, %v5858
        %v5860 = vrot.slane %v5726, 2
        %v5861 = vrot.slane %v5730, 2
        %v5862 = vsel %vm4665, %v5860, %v5861
        %v5863 = vrot.slane %v5731, 2
        %v5864 = vrot.slane %v5735, 2
        %v5865 = vsel %vm4665, %v5863, %v5864
        %v5866 = vrot.slane %v5732, 2
        %v5867 = vrot.slane %v5736, 2
        %v5868 = vsel %vm4665, %v5866, %v5867
        %v5869 = vrot.slane %v5733, 2
        %v5870 = vrot.slane %v5737, 2
        %v5871 = vsel %vm4665, %v5869, %v5870
        %v5872 = vrot.slane %v5734, 2
        %v5873 = vrot.slane %v5738, 2
        %v5874 = vsel %vm4665, %v5872, %v5873
        %v5875 = vrot.slane %v5739, 2
        %v5876 = vrot.slane %v5743, 2
        %v5877 = vsel %vm4665, %v5875, %v5876
        %v5878 = vrot.slane %v5740, 2
        %v5879 = vrot.slane %v5744, 2
        %v5880 = vsel %vm4665, %v5878, %v5879
        %v5881 = vrot.slane %v5741, 2
        %v5882 = vrot.slane %v5745, 2
        %v5883 = vsel %vm4665, %v5881, %v5882
        %v5884 = vrot.slane %v5742, 2
        %v5885 = vrot.slane %v5746, 2
        %v5886 = vsel %vm4665, %v5884, %v5885
        %v5887 = vrot.slane %v5747, 2
        %v5888 = vrot.slane %v5751, 2
        %v5889 = vsel %vm4665, %v5887, %v5888
        %v5890 = vrot.slane %v5748, 2
        %v5891 = vrot.slane %v5752, 2
        %v5892 = vsel %vm4665, %v5890, %v5891
        %v5893 = vrot.slane %v5749, 2
        %v5894 = vrot.slane %v5753, 2
        %v5895 = vsel %vm4665, %v5893, %v5894
        %v5896 = vrot.slane %v5750, 2
        %v5897 = vrot.slane %v5754, 2
        %v5898 = vsel %vm4665, %v5896, %v5897
        %v5899 = vrot.slane %v5755, 2
        %v5900 = vrot.slane %v5759, 2
        %v5901 = vsel %vm4665, %v5899, %v5900
        %v5902 = vrot.slane %v5756, 2
        %v5903 = vrot.slane %v5760, 2
        %v5904 = vsel %vm4665, %v5902, %v5903
        %v5905 = vrot.slane %v5757, 2
        %v5906 = vrot.slane %v5761, 2
        %v5907 = vsel %vm4665, %v5905, %v5906
        %v5908 = vrot.slane %v5758, 2
        %v5909 = vrot.slane %v5762, 2
        %v5910 = vsel %vm4665, %v5908, %v5909
        %v5911 = vrot.slane %v5763, 2
        %v5912 = vrot.slane %v5767, 2
        %v5913 = vsel %vm4665, %v5911, %v5912
        %v5914 = vrot.slane %v5764, 2
        %v5915 = vrot.slane %v5768, 2
        %v5916 = vsel %vm4665, %v5914, %v5915
        %v5917 = vrot.slane %v5765, 2
        %v5918 = vrot.slane %v5769, 2
        %v5919 = vsel %vm4665, %v5917, %v5918
        %v5920 = vrot.slane %v5766, 2
        %v5921 = vrot.slane %v5770, 2
        %v5922 = vsel %vm4665, %v5920, %v5921
        %v5923 = vrot.slane %v5771, 2
        %v5924 = vrot.slane %v5775, 2
        %v5925 = vsel %vm4665, %v5923, %v5924
        %v5926 = vrot.slane %v5772, 2
        %v5927 = vrot.slane %v5776, 2
        %v5928 = vsel %vm4665, %v5926, %v5927
        %v5929 = vrot.slane %v5773, 2
        %v5930 = vrot.slane %v5777, 2
        %v5931 = vsel %vm4665, %v5929, %v5930
        %v5932 = vrot.slane %v5774, 2
        %v5933 = vrot.slane %v5778, 2
        %v5934 = vsel %vm4665, %v5932, %v5933
        %v5935 = vrot.slane %v5779, 2
        %v5936 = vrot.slane %v5783, 2
        %v5937 = vsel %vm4665, %v5935, %v5936
        %v5938 = vrot.slane %v5780, 2
        %v5939 = vrot.slane %v5784, 2
        %v5940 = vsel %vm4665, %v5938, %v5939
        %v5941 = vrot.slane %v5781, 2
        %v5942 = vrot.slane %v5785, 2
        %v5943 = vsel %vm4665, %v5941, %v5942
        %v5944 = vrot.slane %v5782, 2
        %v5945 = vrot.slane %v5786, 2
        %v5946 = vsel %vm4665, %v5944, %v5945
        %v5979 = vpack.c.bf16 %v5865, %v5853
        %v5980 = vpack.c.bf16 %v5868, %v5856
        %v5981 = vpack.c.bf16 %v5871, %v5859
        %v5982 = vpack.c.bf16 %v5874, %v5862
        %v5983 = vpack.c.bf16 %v5889, %v5877
        %v5984 = vpack.c.bf16 %v5892, %v5880
        %v5985 = vpack.c.bf16 %v5895, %v5883
        %v5986 = vpack.c.bf16 %v5898, %v5886
        %v5987 = vpack.c.bf16 %v5913, %v5901
        %v5988 = vpack.c.bf16 %v5916, %v5904
        %v5989 = vpack.c.bf16 %v5919, %v5907
        %v5990 = vpack.c.bf16 %v5922, %v5910
        %v5991 = vpack.c.bf16 %v5937, %v5925
        %v5992 = vpack.c.bf16 %v5940, %v5928
        %v5993 = vpack.c.bf16 %v5943, %v5931
        %v5994 = vpack.c.bf16 %v5946, %v5934
        %v5995 = vld [vmem:[#allocation11] sm:$0xff]
        %v5996 = vld [vmem:[#allocation11 + $0x8] sm:$0xff]
        %v5997 = vld [vmem:[#allocation11 + $0x10] sm:$0xff]
        %v5998 = vld [vmem:[#allocation11 + $0x18] sm:$0xff]
        %v5999 = vld [vmem:[#allocation11 + $0x20] sm:$0xff]
        %v6000 = vld [vmem:[#allocation11 + $0x28] sm:$0xff]
        %v6001 = vld [vmem:[#allocation11 + $0x30] sm:$0xff]
        %v6002 = vld [vmem:[#allocation11 + $0x38] sm:$0xff]
        %v6003 = vld [vmem:[#allocation11 + $0x40] sm:$0xff]
        %v6004 = vld [vmem:[#allocation11 + $0x48] sm:$0xff]
        %v6005 = vld [vmem:[#allocation11 + $0x50] sm:$0xff]
        %v6006 = vld [vmem:[#allocation11 + $0x58] sm:$0xff]
        %v6007 = vld [vmem:[#allocation11 + $0x60] sm:$0xff]
        %v6008 = vld [vmem:[#allocation11 + $0x68] sm:$0xff]
        %v6009 = vld [vmem:[#allocation11 + $0x70] sm:$0xff]
        %v6010 = vld [vmem:[#allocation11 + $0x78] sm:$0xff]
        %v6011 = vld [vmem:[#allocation11 + $0x80] sm:$0xff]
        %v6012 = vld [vmem:[#allocation11 + $0x88] sm:$0xff]
        %v6013 = vld [vmem:[#allocation11 + $0x90] sm:$0xff]
        %v6014 = vld [vmem:[#allocation11 + $0x98] sm:$0xff]
        %v6015 = vld [vmem:[#allocation11 + $0xa0] sm:$0xff]
        %v6016 = vld [vmem:[#allocation11 + $0xa8] sm:$0xff]
        %v6017 = vld [vmem:[#allocation11 + $0xb0] sm:$0xff]
        %v6018 = vld [vmem:[#allocation11 + $0xb8] sm:$0xff]
        %v6019 = vld [vmem:[#allocation11 + $0xc0] sm:$0xff]
        %v6020 = vld [vmem:[#allocation11 + $0xc8] sm:$0xff]
        %v6021 = vld [vmem:[#allocation11 + $0xd0] sm:$0xff]
        %v6022 = vld [vmem:[#allocation11 + $0xd8] sm:$0xff]
        %v6023 = vld [vmem:[#allocation11 + $0xe0] sm:$0xff]
        %v6024 = vld [vmem:[#allocation11 + $0xe8] sm:$0xff]
        %v6025 = vld [vmem:[#allocation11 + $0xf0] sm:$0xff]
        %v6026 = vld [vmem:[#allocation11 + $0xf8] sm:$0xff]
        %v6027 = vld [vmem:[#allocation11 + $0x100] sm:$0xff]
        %v6028 = vld [vmem:[#allocation11 + $0x108] sm:$0xff]
        %v6029 = vld [vmem:[#allocation11 + $0x110] sm:$0xff]
        %v6030 = vld [vmem:[#allocation11 + $0x118] sm:$0xff]
        %v6031 = vld [vmem:[#allocation11 + $0x120] sm:$0xff]
        %v6032 = vld [vmem:[#allocation11 + $0x128] sm:$0xff]
        %v6033 = vld [vmem:[#allocation11 + $0x130] sm:$0xff]
        %v6034 = vld [vmem:[#allocation11 + $0x138] sm:$0xff]
        %v6035 = vld [vmem:[#allocation11 + $0x140] sm:$0xff]
        %v6036 = vld [vmem:[#allocation11 + $0x148] sm:$0xff]
        %v6037 = vld [vmem:[#allocation11 + $0x150] sm:$0xff]
        %v6038 = vld [vmem:[#allocation11 + $0x158] sm:$0xff]
        %v6039 = vld [vmem:[#allocation11 + $0x160] sm:$0xff]
        %v6040 = vld [vmem:[#allocation11 + $0x168] sm:$0xff]
        %v6041 = vld [vmem:[#allocation11 + $0x170] sm:$0xff]
        %v6042 = vld [vmem:[#allocation11 + $0x178] sm:$0xff]
        %v6043 = vld [vmem:[#allocation11 + $0x180] sm:$0xff]
        %v6044 = vld [vmem:[#allocation11 + $0x188] sm:$0xff]
        %v6045 = vld [vmem:[#allocation11 + $0x190] sm:$0xff]
        %v6046 = vld [vmem:[#allocation11 + $0x198] sm:$0xff]
        %v6047 = vld [vmem:[#allocation11 + $0x1a0] sm:$0xff]
        %v6048 = vld [vmem:[#allocation11 + $0x1a8] sm:$0xff]
        %v6049 = vld [vmem:[#allocation11 + $0x1b0] sm:$0xff]
        %v6050 = vld [vmem:[#allocation11 + $0x1b8] sm:$0xff]
        %v6051 = vld [vmem:[#allocation11 + $0x1c0] sm:$0xff]
        %v6052 = vld [vmem:[#allocation11 + $0x1c8] sm:$0xff]
        %v6053 = vld [vmem:[#allocation11 + $0x1d0] sm:$0xff]
        %v6054 = vld [vmem:[#allocation11 + $0x1d8] sm:$0xff]
        %v6055 = vld [vmem:[#allocation11 + $0x1e0] sm:$0xff]
        %v6056 = vld [vmem:[#allocation11 + $0x1e8] sm:$0xff]
        %v6057 = vld [vmem:[#allocation11 + $0x1f0] sm:$0xff]
        %v6058 = vld [vmem:[#allocation11 + $0x1f8] sm:$0xff]
        %v6059 = vld [vmem:[#allocation11 + $0x200] sm:$0xff]
        %v6060 = vld [vmem:[#allocation11 + $0x208] sm:$0xff]
        %v6061 = vld [vmem:[#allocation11 + $0x210] sm:$0xff]
        %v6062 = vld [vmem:[#allocation11 + $0x218] sm:$0xff]
        %v6063 = vld [vmem:[#allocation11 + $0x220] sm:$0xff]
        %v6064 = vld [vmem:[#allocation11 + $0x228] sm:$0xff]
        %v6065 = vld [vmem:[#allocation11 + $0x230] sm:$0xff]
        %v6066 = vld [vmem:[#allocation11 + $0x238] sm:$0xff]
        %v6067 = vld [vmem:[#allocation11 + $0x240] sm:$0xff]
        %v6068 = vld [vmem:[#allocation11 + $0x248] sm:$0xff]
        %v6069 = vld [vmem:[#allocation11 + $0x250] sm:$0xff]
        %v6070 = vld [vmem:[#allocation11 + $0x258] sm:$0xff]
        %v6071 = vld [vmem:[#allocation11 + $0x260] sm:$0xff]
        %v6072 = vld [vmem:[#allocation11 + $0x268] sm:$0xff]
        %v6073 = vld [vmem:[#allocation11 + $0x270] sm:$0xff]
        %v6074 = vld [vmem:[#allocation11 + $0x278] sm:$0xff]
        %v6075 = vld [vmem:[#allocation11 + $0x280] sm:$0xff]
        %v6076 = vld [vmem:[#allocation11 + $0x288] sm:$0xff]
        %v6077 = vld [vmem:[#allocation11 + $0x290] sm:$0xff]
        %v6078 = vld [vmem:[#allocation11 + $0x298] sm:$0xff]
        %v6079 = vld [vmem:[#allocation11 + $0x2a0] sm:$0xff]
        %v6080 = vld [vmem:[#allocation11 + $0x2a8] sm:$0xff]
        %v6081 = vld [vmem:[#allocation11 + $0x2b0] sm:$0xff]
        %v6082 = vld [vmem:[#allocation11 + $0x2b8] sm:$0xff]
        %v6083 = vld [vmem:[#allocation11 + $0x2c0] sm:$0xff]
        %v6084 = vld [vmem:[#allocation11 + $0x2c8] sm:$0xff]
        %v6085 = vld [vmem:[#allocation11 + $0x2d0] sm:$0xff]
        %v6086 = vld [vmem:[#allocation11 + $0x2d8] sm:$0xff]
        %v6087 = vld [vmem:[#allocation11 + $0x2e0] sm:$0xff]
        %v6088 = vld [vmem:[#allocation11 + $0x2e8] sm:$0xff]
        %v6089 = vld [vmem:[#allocation11 + $0x2f0] sm:$0xff]
        %v6090 = vld [vmem:[#allocation11 + $0x2f8] sm:$0xff]
        %v6091 = vld [vmem:[#allocation11 + $0x300] sm:$0xff]
        %v6092 = vld [vmem:[#allocation11 + $0x308] sm:$0xff]
        %v6093 = vld [vmem:[#allocation11 + $0x310] sm:$0xff]
        %v6094 = vld [vmem:[#allocation11 + $0x318] sm:$0xff]
        %v6095 = vld [vmem:[#allocation11 + $0x320] sm:$0xff]
        %v6096 = vld [vmem:[#allocation11 + $0x328] sm:$0xff]
        %v6097 = vld [vmem:[#allocation11 + $0x330] sm:$0xff]
        %v6098 = vld [vmem:[#allocation11 + $0x338] sm:$0xff]
        %v6099 = vld [vmem:[#allocation11 + $0x340] sm:$0xff]
        %v6100 = vld [vmem:[#allocation11 + $0x348] sm:$0xff]
        %v6101 = vld [vmem:[#allocation11 + $0x350] sm:$0xff]
        %v6102 = vld [vmem:[#allocation11 + $0x358] sm:$0xff]
        %v6103 = vld [vmem:[#allocation11 + $0x360] sm:$0xff]
        %v6104 = vld [vmem:[#allocation11 + $0x368] sm:$0xff]
        %v6105 = vld [vmem:[#allocation11 + $0x370] sm:$0xff]
        %v6106 = vld [vmem:[#allocation11 + $0x378] sm:$0xff]
        %v6107 = vld [vmem:[#allocation11 + $0x380] sm:$0xff]
        %v6108 = vld [vmem:[#allocation11 + $0x388] sm:$0xff]
        %v6109 = vld [vmem:[#allocation11 + $0x390] sm:$0xff]
        %v6110 = vld [vmem:[#allocation11 + $0x398] sm:$0xff]
        %v6111 = vld [vmem:[#allocation11 + $0x3a0] sm:$0xff]
        %v6112 = vld [vmem:[#allocation11 + $0x3a8] sm:$0xff]
        %v6113 = vld [vmem:[#allocation11 + $0x3b0] sm:$0xff]
        %v6114 = vld [vmem:[#allocation11 + $0x3b8] sm:$0xff]
        %v6115 = vld [vmem:[#allocation11 + $0x3c0] sm:$0xff]
        %v6116 = vld [vmem:[#allocation11 + $0x3c8] sm:$0xff]
        %v6117 = vld [vmem:[#allocation11 + $0x3d0] sm:$0xff]
        %v6118 = vld [vmem:[#allocation11 + $0x3d8] sm:$0xff]
        %v6119 = vld [vmem:[#allocation11 + $0x3e0] sm:$0xff]
        %v6120 = vld [vmem:[#allocation11 + $0x3e8] sm:$0xff]
        %v6121 = vld [vmem:[#allocation11 + $0x3f0] sm:$0xff]
        %v6122 = vld [vmem:[#allocation11 + $0x3f8] sm:$0xff]
        %v6123 = vld [vmem:[#allocation11 + $0x400] sm:$0xff]
        %v6124 = vld [vmem:[#allocation11 + $0x408] sm:$0xff]
        %v6125 = vld [vmem:[#allocation11 + $0x410] sm:$0xff]
        %v6126 = vld [vmem:[#allocation11 + $0x418] sm:$0xff]
        %v6127 = vld [vmem:[#allocation11 + $0x420] sm:$0xff]
        %v6128 = vld [vmem:[#allocation11 + $0x428] sm:$0xff]
        %v6129 = vld [vmem:[#allocation11 + $0x430] sm:$0xff]
        %v6130 = vld [vmem:[#allocation11 + $0x438] sm:$0xff]
        %v6131 = vld [vmem:[#allocation11 + $0x440] sm:$0xff]
        %v6132 = vld [vmem:[#allocation11 + $0x448] sm:$0xff]
        %v6133 = vld [vmem:[#allocation11 + $0x450] sm:$0xff]
        %v6134 = vld [vmem:[#allocation11 + $0x458] sm:$0xff]
        %v6135 = vld [vmem:[#allocation11 + $0x460] sm:$0xff]
        %v6136 = vld [vmem:[#allocation11 + $0x468] sm:$0xff]
        %v6137 = vld [vmem:[#allocation11 + $0x470] sm:$0xff]
        %v6138 = vld [vmem:[#allocation11 + $0x478] sm:$0xff]
        %v6139 = vld [vmem:[#allocation11 + $0x480] sm:$0xff]
        %v6140 = vld [vmem:[#allocation11 + $0x488] sm:$0xff]
        %v6141 = vld [vmem:[#allocation11 + $0x490] sm:$0xff]
        %v6142 = vld [vmem:[#allocation11 + $0x498] sm:$0xff]
        %v6143 = vld [vmem:[#allocation11 + $0x4a0] sm:$0xff]
        %v6144 = vld [vmem:[#allocation11 + $0x4a8] sm:$0xff]
        %v6145 = vld [vmem:[#allocation11 + $0x4b0] sm:$0xff]
        %v6146 = vld [vmem:[#allocation11 + $0x4b8] sm:$0xff]
        %v6147 = vld [vmem:[#allocation11 + $0x4c0] sm:$0xff]
        %v6148 = vld [vmem:[#allocation11 + $0x4c8] sm:$0xff]
        %v6149 = vld [vmem:[#allocation11 + $0x4d0] sm:$0xff]
        %v6150 = vld [vmem:[#allocation11 + $0x4d8] sm:$0xff]
        %v6151 = vld [vmem:[#allocation11 + $0x4e0] sm:$0xff]
        %v6152 = vld [vmem:[#allocation11 + $0x4e8] sm:$0xff]
        %v6153 = vld [vmem:[#allocation11 + $0x4f0] sm:$0xff]
        %v6154 = vld [vmem:[#allocation11 + $0x4f8] sm:$0xff]
        %v6155 = vld [vmem:[#allocation11 + $0x500] sm:$0xff]
        %v6156 = vld [vmem:[#allocation11 + $0x508] sm:$0xff]
        %v6157 = vld [vmem:[#allocation11 + $0x510] sm:$0xff]
        %v6158 = vld [vmem:[#allocation11 + $0x518] sm:$0xff]
        %v6159 = vld [vmem:[#allocation11 + $0x520] sm:$0xff]
        %v6160 = vld [vmem:[#allocation11 + $0x528] sm:$0xff]
        %v6161 = vld [vmem:[#allocation11 + $0x530] sm:$0xff]
        %v6162 = vld [vmem:[#allocation11 + $0x538] sm:$0xff]
        %v6163 = vld [vmem:[#allocation11 + $0x540] sm:$0xff]
        %v6164 = vld [vmem:[#allocation11 + $0x548] sm:$0xff]
        %v6165 = vld [vmem:[#allocation11 + $0x550] sm:$0xff]
        %v6166 = vld [vmem:[#allocation11 + $0x558] sm:$0xff]
        %v6167 = vld [vmem:[#allocation11 + $0x560] sm:$0xff]
        %v6168 = vld [vmem:[#allocation11 + $0x568] sm:$0xff]
        %v6169 = vld [vmem:[#allocation11 + $0x570] sm:$0xff]
        %v6170 = vld [vmem:[#allocation11 + $0x578] sm:$0xff]
        %v6171 = vld [vmem:[#allocation11 + $0x580] sm:$0xff]
        %v6172 = vld [vmem:[#allocation11 + $0x588] sm:$0xff]
        %v6173 = vld [vmem:[#allocation11 + $0x590] sm:$0xff]
        %v6174 = vld [vmem:[#allocation11 + $0x598] sm:$0xff]
        %v6175 = vld [vmem:[#allocation11 + $0x5a0] sm:$0xff]
        %v6176 = vld [vmem:[#allocation11 + $0x5a8] sm:$0xff]
        %v6177 = vld [vmem:[#allocation11 + $0x5b0] sm:$0xff]
        %v6178 = vld [vmem:[#allocation11 + $0x5b8] sm:$0xff]
        %v6179 = vld [vmem:[#allocation11 + $0x5c0] sm:$0xff]
        %v6180 = vld [vmem:[#allocation11 + $0x5c8] sm:$0xff]
        %v6181 = vld [vmem:[#allocation11 + $0x5d0] sm:$0xff]
        %v6182 = vld [vmem:[#allocation11 + $0x5d8] sm:$0xff]
        %v6183 = vld [vmem:[#allocation11 + $0x5e0] sm:$0xff]
        %v6184 = vld [vmem:[#allocation11 + $0x5e8] sm:$0xff]
        %v6185 = vld [vmem:[#allocation11 + $0x5f0] sm:$0xff]
        %v6186 = vld [vmem:[#allocation11 + $0x5f8] sm:$0xff]
        %v6187 = vld [vmem:[#allocation11 + $0x600] sm:$0xff]
        %v6188 = vld [vmem:[#allocation11 + $0x608] sm:$0xff]
        %v6189 = vld [vmem:[#allocation11 + $0x610] sm:$0xff]
        %v6190 = vld [vmem:[#allocation11 + $0x618] sm:$0xff]
        %v6191 = vld [vmem:[#allocation11 + $0x620] sm:$0xff]
        %v6192 = vld [vmem:[#allocation11 + $0x628] sm:$0xff]
        %v6193 = vld [vmem:[#allocation11 + $0x630] sm:$0xff]
        %v6194 = vld [vmem:[#allocation11 + $0x638] sm:$0xff]
        %v6195 = vld [vmem:[#allocation11 + $0x640] sm:$0xff]
        %v6196 = vld [vmem:[#allocation11 + $0x648] sm:$0xff]
        %v6197 = vld [vmem:[#allocation11 + $0x650] sm:$0xff]
        %v6198 = vld [vmem:[#allocation11 + $0x658] sm:$0xff]
        %v6199 = vld [vmem:[#allocation11 + $0x660] sm:$0xff]
        %v6200 = vld [vmem:[#allocation11 + $0x668] sm:$0xff]
        %v6201 = vld [vmem:[#allocation11 + $0x670] sm:$0xff]
        %v6202 = vld [vmem:[#allocation11 + $0x678] sm:$0xff]
        %v6203 = vld [vmem:[#allocation11 + $0x680] sm:$0xff]
        %v6204 = vld [vmem:[#allocation11 + $0x688] sm:$0xff]
        %v6205 = vld [vmem:[#allocation11 + $0x690] sm:$0xff]
        %v6206 = vld [vmem:[#allocation11 + $0x698] sm:$0xff]
        %v6207 = vld [vmem:[#allocation11 + $0x6a0] sm:$0xff]
        %v6208 = vld [vmem:[#allocation11 + $0x6a8] sm:$0xff]
        %v6209 = vld [vmem:[#allocation11 + $0x6b0] sm:$0xff]
        %v6210 = vld [vmem:[#allocation11 + $0x6b8] sm:$0xff]
        %v6211 = vld [vmem:[#allocation11 + $0x6c0] sm:$0xff]
        %v6212 = vld [vmem:[#allocation11 + $0x6c8] sm:$0xff]
        %v6213 = vld [vmem:[#allocation11 + $0x6d0] sm:$0xff]
        %v6214 = vld [vmem:[#allocation11 + $0x6d8] sm:$0xff]
        %v6215 = vld [vmem:[#allocation11 + $0x6e0] sm:$0xff]
        %v6216 = vld [vmem:[#allocation11 + $0x6e8] sm:$0xff]
        %v6217 = vld [vmem:[#allocation11 + $0x6f0] sm:$0xff]
        %v6218 = vld [vmem:[#allocation11 + $0x6f8] sm:$0xff]
        %v6219 = vld [vmem:[#allocation11 + $0x700] sm:$0xff]
        %v6220 = vld [vmem:[#allocation11 + $0x708] sm:$0xff]
        %v6221 = vld [vmem:[#allocation11 + $0x710] sm:$0xff]
        %v6222 = vld [vmem:[#allocation11 + $0x718] sm:$0xff]
        %v6223 = vld [vmem:[#allocation11 + $0x720] sm:$0xff]
        %v6224 = vld [vmem:[#allocation11 + $0x728] sm:$0xff]
        %v6225 = vld [vmem:[#allocation11 + $0x730] sm:$0xff]
        %v6226 = vld [vmem:[#allocation11 + $0x738] sm:$0xff]
        %v6227 = vld [vmem:[#allocation11 + $0x740] sm:$0xff]
        %v6228 = vld [vmem:[#allocation11 + $0x748] sm:$0xff]
        %v6229 = vld [vmem:[#allocation11 + $0x750] sm:$0xff]
        %v6230 = vld [vmem:[#allocation11 + $0x758] sm:$0xff]
        %v6231 = vld [vmem:[#allocation11 + $0x760] sm:$0xff]
        %v6232 = vld [vmem:[#allocation11 + $0x768] sm:$0xff]
        %v6233 = vld [vmem:[#allocation11 + $0x770] sm:$0xff]
        %v6234 = vld [vmem:[#allocation11 + $0x778] sm:$0xff]
        %v6235 = vld [vmem:[#allocation11 + $0x780] sm:$0xff]
        %v6236 = vld [vmem:[#allocation11 + $0x788] sm:$0xff]
        %v6237 = vld [vmem:[#allocation11 + $0x790] sm:$0xff]
        %v6238 = vld [vmem:[#allocation11 + $0x798] sm:$0xff]
        %v6239 = vld [vmem:[#allocation11 + $0x7a0] sm:$0xff]
        %v6240 = vld [vmem:[#allocation11 + $0x7a8] sm:$0xff]
        %v6241 = vld [vmem:[#allocation11 + $0x7b0] sm:$0xff]
        %v6242 = vld [vmem:[#allocation11 + $0x7b8] sm:$0xff]
        %v6243 = vld [vmem:[#allocation11 + $0x7c0] sm:$0xff]
        %v6244 = vld [vmem:[#allocation11 + $0x7c8] sm:$0xff]
        %v6245 = vld [vmem:[#allocation11 + $0x7d0] sm:$0xff]
        %v6246 = vld [vmem:[#allocation11 + $0x7d8] sm:$0xff]
        %v6247 = vld [vmem:[#allocation11 + $0x7e0] sm:$0xff]
        %v6248 = vld [vmem:[#allocation11 + $0x7e8] sm:$0xff]
        %v6249 = vld [vmem:[#allocation11 + $0x7f0] sm:$0xff]
        %v6250 = vld [vmem:[#allocation11 + $0x7f8] sm:$0xff]
        %v6251 = vld [vmem:[#allocation11 + $0x800] sm:$0xff]
        %v6252 = vld [vmem:[#allocation11 + $0x808] sm:$0xff]
        %v6253 = vld [vmem:[#allocation11 + $0x810] sm:$0xff]
        %v6254 = vld [vmem:[#allocation11 + $0x818] sm:$0xff]
        %v6255 = vld [vmem:[#allocation11 + $0x820] sm:$0xff]
        %v6256 = vld [vmem:[#allocation11 + $0x828] sm:$0xff]
        %v6257 = vld [vmem:[#allocation11 + $0x830] sm:$0xff]
        %v6258 = vld [vmem:[#allocation11 + $0x838] sm:$0xff]
        %v6259 = vld [vmem:[#allocation11 + $0x840] sm:$0xff]
        %v6260 = vld [vmem:[#allocation11 + $0x848] sm:$0xff]
        %v6261 = vld [vmem:[#allocation11 + $0x850] sm:$0xff]
        %v6262 = vld [vmem:[#allocation11 + $0x858] sm:$0xff]
        %v6263 = vld [vmem:[#allocation11 + $0x860] sm:$0xff]
        %v6264 = vld [vmem:[#allocation11 + $0x868] sm:$0xff]
        %v6265 = vld [vmem:[#allocation11 + $0x870] sm:$0xff]
        %v6266 = vld [vmem:[#allocation11 + $0x878] sm:$0xff]
        %v6267 = vld [vmem:[#allocation11 + $0x880] sm:$0xff]
        %v6268 = vld [vmem:[#allocation11 + $0x888] sm:$0xff]
        %v6269 = vld [vmem:[#allocation11 + $0x890] sm:$0xff]
        %v6270 = vld [vmem:[#allocation11 + $0x898] sm:$0xff]
        %v6271 = vld [vmem:[#allocation11 + $0x8a0] sm:$0xff]
        %v6272 = vld [vmem:[#allocation11 + $0x8a8] sm:$0xff]
        %v6273 = vld [vmem:[#allocation11 + $0x8b0] sm:$0xff]
        %v6274 = vld [vmem:[#allocation11 + $0x8b8] sm:$0xff]
        %v6275 = vld [vmem:[#allocation11 + $0x8c0] sm:$0xff]
        %v6276 = vld [vmem:[#allocation11 + $0x8c8] sm:$0xff]
        %v6277 = vld [vmem:[#allocation11 + $0x8d0] sm:$0xff]
        %v6278 = vld [vmem:[#allocation11 + $0x8d8] sm:$0xff]
        %v6279 = vld [vmem:[#allocation11 + $0x8e0] sm:$0xff]
        %v6280 = vld [vmem:[#allocation11 + $0x8e8] sm:$0xff]
        %v6281 = vld [vmem:[#allocation11 + $0x8f0] sm:$0xff]
        %v6282 = vld [vmem:[#allocation11 + $0x8f8] sm:$0xff]
        %v6283 = vld [vmem:[#allocation11 + $0x900] sm:$0xff]
        %v6284 = vld [vmem:[#allocation11 + $0x908] sm:$0xff]
        %v6285 = vld [vmem:[#allocation11 + $0x910] sm:$0xff]
        %v6286 = vld [vmem:[#allocation11 + $0x918] sm:$0xff]
        %v6287 = vld [vmem:[#allocation11 + $0x920] sm:$0xff]
        %v6288 = vld [vmem:[#allocation11 + $0x928] sm:$0xff]
        %v6289 = vld [vmem:[#allocation11 + $0x930] sm:$0xff]
        %v6290 = vld [vmem:[#allocation11 + $0x938] sm:$0xff]
        %v6291 = vld [vmem:[#allocation11 + $0x940] sm:$0xff]
        %v6292 = vld [vmem:[#allocation11 + $0x948] sm:$0xff]
        %v6293 = vld [vmem:[#allocation11 + $0x950] sm:$0xff]
        %v6294 = vld [vmem:[#allocation11 + $0x958] sm:$0xff]
        %v6295 = vld [vmem:[#allocation11 + $0x960] sm:$0xff]
        %v6296 = vld [vmem:[#allocation11 + $0x968] sm:$0xff]
        %v6297 = vld [vmem:[#allocation11 + $0x970] sm:$0xff]
        %v6298 = vld [vmem:[#allocation11 + $0x978] sm:$0xff]
        %v6299 = vld [vmem:[#allocation11 + $0x980] sm:$0xff]
        %v6300 = vld [vmem:[#allocation11 + $0x988] sm:$0xff]
        %v6301 = vld [vmem:[#allocation11 + $0x990] sm:$0xff]
        %v6302 = vld [vmem:[#allocation11 + $0x998] sm:$0xff]
        %v6303 = vld [vmem:[#allocation11 + $0x9a0] sm:$0xff]
        %v6304 = vld [vmem:[#allocation11 + $0x9a8] sm:$0xff]
        %v6305 = vld [vmem:[#allocation11 + $0x9b0] sm:$0xff]
        %v6306 = vld [vmem:[#allocation11 + $0x9b8] sm:$0xff]
        %v6307 = vld [vmem:[#allocation11 + $0x9c0] sm:$0xff]
        %v6308 = vld [vmem:[#allocation11 + $0x9c8] sm:$0xff]
        %v6309 = vld [vmem:[#allocation11 + $0x9d0] sm:$0xff]
        %v6310 = vld [vmem:[#allocation11 + $0x9d8] sm:$0xff]
        %v6311 = vld [vmem:[#allocation11 + $0x9e0] sm:$0xff]
        %v6312 = vld [vmem:[#allocation11 + $0x9e8] sm:$0xff]
        %v6313 = vld [vmem:[#allocation11 + $0x9f0] sm:$0xff]
        %v6314 = vld [vmem:[#allocation11 + $0x9f8] sm:$0xff]
        %v6315 = vld [vmem:[#allocation11 + $0xa00] sm:$0xff]
        %v6316 = vld [vmem:[#allocation11 + $0xa08] sm:$0xff]
        %v6317 = vld [vmem:[#allocation11 + $0xa10] sm:$0xff]
        %v6318 = vld [vmem:[#allocation11 + $0xa18] sm:$0xff]
        %v6319 = vld [vmem:[#allocation11 + $0xa20] sm:$0xff]
        %v6320 = vld [vmem:[#allocation11 + $0xa28] sm:$0xff]
        %v6321 = vld [vmem:[#allocation11 + $0xa30] sm:$0xff]
        %v6322 = vld [vmem:[#allocation11 + $0xa38] sm:$0xff]
        %v6323 = vld [vmem:[#allocation11 + $0xa40] sm:$0xff]
        %v6324 = vld [vmem:[#allocation11 + $0xa48] sm:$0xff]
        %v6325 = vld [vmem:[#allocation11 + $0xa50] sm:$0xff]
        %v6326 = vld [vmem:[#allocation11 + $0xa58] sm:$0xff]
        %v6327 = vld [vmem:[#allocation11 + $0xa60] sm:$0xff]
        %v6328 = vld [vmem:[#allocation11 + $0xa68] sm:$0xff]
        %v6329 = vld [vmem:[#allocation11 + $0xa70] sm:$0xff]
        %v6330 = vld [vmem:[#allocation11 + $0xa78] sm:$0xff]
        %v6331 = vld [vmem:[#allocation11 + $0xa80] sm:$0xff]
        %v6332 = vld [vmem:[#allocation11 + $0xa88] sm:$0xff]
        %v6333 = vld [vmem:[#allocation11 + $0xa90] sm:$0xff]
        %v6334 = vld [vmem:[#allocation11 + $0xa98] sm:$0xff]
        %v6335 = vld [vmem:[#allocation11 + $0xaa0] sm:$0xff]
        %v6336 = vld [vmem:[#allocation11 + $0xaa8] sm:$0xff]
        %v6337 = vld [vmem:[#allocation11 + $0xab0] sm:$0xff]
        %v6338 = vld [vmem:[#allocation11 + $0xab8] sm:$0xff]
        %v6339 = vld [vmem:[#allocation11 + $0xac0] sm:$0xff]
        %v6340 = vld [vmem:[#allocation11 + $0xac8] sm:$0xff]
        %v6341 = vld [vmem:[#allocation11 + $0xad0] sm:$0xff]
        %v6342 = vld [vmem:[#allocation11 + $0xad8] sm:$0xff]
        %v6343 = vld [vmem:[#allocation11 + $0xae0] sm:$0xff]
        %v6344 = vld [vmem:[#allocation11 + $0xae8] sm:$0xff]
        %v6345 = vld [vmem:[#allocation11 + $0xaf0] sm:$0xff]
        %v6346 = vld [vmem:[#allocation11 + $0xaf8] sm:$0xff]
        %v6347 = vld [vmem:[#allocation11 + $0xb00] sm:$0xff]
        %v6348 = vld [vmem:[#allocation11 + $0xb08] sm:$0xff]
        %v6349 = vld [vmem:[#allocation11 + $0xb10] sm:$0xff]
        %v6350 = vld [vmem:[#allocation11 + $0xb18] sm:$0xff]
        %v6351 = vld [vmem:[#allocation11 + $0xb20] sm:$0xff]
        %v6352 = vld [vmem:[#allocation11 + $0xb28] sm:$0xff]
        %v6353 = vld [vmem:[#allocation11 + $0xb30] sm:$0xff]
        %v6354 = vld [vmem:[#allocation11 + $0xb38] sm:$0xff]
        %v6355 = vld [vmem:[#allocation11 + $0xb40] sm:$0xff]
        %v6356 = vld [vmem:[#allocation11 + $0xb48] sm:$0xff]
        %v6357 = vld [vmem:[#allocation11 + $0xb50] sm:$0xff]
        %v6358 = vld [vmem:[#allocation11 + $0xb58] sm:$0xff]
        %v6359 = vld [vmem:[#allocation11 + $0xb60] sm:$0xff]
        %v6360 = vld [vmem:[#allocation11 + $0xb68] sm:$0xff]
        %v6361 = vld [vmem:[#allocation11 + $0xb70] sm:$0xff]
        %v6362 = vld [vmem:[#allocation11 + $0xb78] sm:$0xff]
        %v6363 = vld [vmem:[#allocation11 + $0xb80] sm:$0xff]
        %v6364 = vld [vmem:[#allocation11 + $0xb88] sm:$0xff]
        %v6365 = vld [vmem:[#allocation11 + $0xb90] sm:$0xff]
        %v6366 = vld [vmem:[#allocation11 + $0xb98] sm:$0xff]
        %v6367 = vld [vmem:[#allocation11 + $0xba0] sm:$0xff]
        %v6368 = vld [vmem:[#allocation11 + $0xba8] sm:$0xff]
        %v6369 = vld [vmem:[#allocation11 + $0xbb0] sm:$0xff]
        %v6370 = vld [vmem:[#allocation11 + $0xbb8] sm:$0xff]
        %v6371 = vld [vmem:[#allocation11 + $0xbc0] sm:$0xff]
        %v6372 = vld [vmem:[#allocation11 + $0xbc8] sm:$0xff]
        %v6373 = vld [vmem:[#allocation11 + $0xbd0] sm:$0xff]
        %v6374 = vld [vmem:[#allocation11 + $0xbd8] sm:$0xff]
        %v6375 = vld [vmem:[#allocation11 + $0xbe0] sm:$0xff]
        %v6376 = vld [vmem:[#allocation11 + $0xbe8] sm:$0xff]
        %v6377 = vld [vmem:[#allocation11 + $0xbf0] sm:$0xff]
        %v6378 = vld [vmem:[#allocation11 + $0xbf8] sm:$0xff]
        %v6379 = vld [vmem:[#allocation11 + $0xc00] sm:$0xff]
        %v6380 = vld [vmem:[#allocation11 + $0xc08] sm:$0xff]
        %v6381 = vld [vmem:[#allocation11 + $0xc10] sm:$0xff]
        %v6382 = vld [vmem:[#allocation11 + $0xc18] sm:$0xff]
        %v6383 = vld [vmem:[#allocation11 + $0xc20] sm:$0xff]
        %v6384 = vld [vmem:[#allocation11 + $0xc28] sm:$0xff]
        %v6385 = vld [vmem:[#allocation11 + $0xc30] sm:$0xff]
        %v6386 = vld [vmem:[#allocation11 + $0xc38] sm:$0xff]
        %v6387 = vld [vmem:[#allocation11 + $0xc40] sm:$0xff]
        %v6388 = vld [vmem:[#allocation11 + $0xc48] sm:$0xff]
        %v6389 = vld [vmem:[#allocation11 + $0xc50] sm:$0xff]
        %v6390 = vld [vmem:[#allocation11 + $0xc58] sm:$0xff]
        %v6391 = vld [vmem:[#allocation11 + $0xc60] sm:$0xff]
        %v6392 = vld [vmem:[#allocation11 + $0xc68] sm:$0xff]
        %v6393 = vld [vmem:[#allocation11 + $0xc70] sm:$0xff]
        %v6394 = vld [vmem:[#allocation11 + $0xc78] sm:$0xff]
        %v6395 = vld [vmem:[#allocation11 + $0xc80] sm:$0xff]
        %v6396 = vld [vmem:[#allocation11 + $0xc88] sm:$0xff]
        %v6397 = vld [vmem:[#allocation11 + $0xc90] sm:$0xff]
        %v6398 = vld [vmem:[#allocation11 + $0xc98] sm:$0xff]
        %v6399 = vld [vmem:[#allocation11 + $0xca0] sm:$0xff]
        %v6400 = vld [vmem:[#allocation11 + $0xca8] sm:$0xff]
        %v6401 = vld [vmem:[#allocation11 + $0xcb0] sm:$0xff]
        %v6402 = vld [vmem:[#allocation11 + $0xcb8] sm:$0xff]
        %v6403 = vld [vmem:[#allocation11 + $0xcc0] sm:$0xff]
        %v6404 = vld [vmem:[#allocation11 + $0xcc8] sm:$0xff]
        %v6405 = vld [vmem:[#allocation11 + $0xcd0] sm:$0xff]
        %v6406 = vld [vmem:[#allocation11 + $0xcd8] sm:$0xff]
        %v6407 = vld [vmem:[#allocation11 + $0xce0] sm:$0xff]
        %v6408 = vld [vmem:[#allocation11 + $0xce8] sm:$0xff]
        %v6409 = vld [vmem:[#allocation11 + $0xcf0] sm:$0xff]
        %v6410 = vld [vmem:[#allocation11 + $0xcf8] sm:$0xff]
        %v6411 = vld [vmem:[#allocation11 + $0xd00] sm:$0xff]
        %v6412 = vld [vmem:[#allocation11 + $0xd08] sm:$0xff]
        %v6413 = vld [vmem:[#allocation11 + $0xd10] sm:$0xff]
        %v6414 = vld [vmem:[#allocation11 + $0xd18] sm:$0xff]
        %v6415 = vld [vmem:[#allocation11 + $0xd20] sm:$0xff]
        %v6416 = vld [vmem:[#allocation11 + $0xd28] sm:$0xff]
        %v6417 = vld [vmem:[#allocation11 + $0xd30] sm:$0xff]
        %v6418 = vld [vmem:[#allocation11 + $0xd38] sm:$0xff]
        %v6419 = vld [vmem:[#allocation11 + $0xd40] sm:$0xff]
        %v6420 = vld [vmem:[#allocation11 + $0xd48] sm:$0xff]
        %v6421 = vld [vmem:[#allocation11 + $0xd50] sm:$0xff]
        %v6422 = vld [vmem:[#allocation11 + $0xd58] sm:$0xff]
        %v6423 = vld [vmem:[#allocation11 + $0xd60] sm:$0xff]
        %v6424 = vld [vmem:[#allocation11 + $0xd68] sm:$0xff]
        %v6425 = vld [vmem:[#allocation11 + $0xd70] sm:$0xff]
        %v6426 = vld [vmem:[#allocation11 + $0xd78] sm:$0xff]
        %v6427 = vld [vmem:[#allocation11 + $0xd80] sm:$0xff]
        %v6428 = vld [vmem:[#allocation11 + $0xd88] sm:$0xff]
        %v6429 = vld [vmem:[#allocation11 + $0xd90] sm:$0xff]
        %v6430 = vld [vmem:[#allocation11 + $0xd98] sm:$0xff]
        %v6431 = vld [vmem:[#allocation11 + $0xda0] sm:$0xff]
        %v6432 = vld [vmem:[#allocation11 + $0xda8] sm:$0xff]
        %v6433 = vld [vmem:[#allocation11 + $0xdb0] sm:$0xff]
        %v6434 = vld [vmem:[#allocation11 + $0xdb8] sm:$0xff]
        %v6435 = vld [vmem:[#allocation11 + $0xdc0] sm:$0xff]
        %v6436 = vld [vmem:[#allocation11 + $0xdc8] sm:$0xff]
        %v6437 = vld [vmem:[#allocation11 + $0xdd0] sm:$0xff]
        %v6438 = vld [vmem:[#allocation11 + $0xdd8] sm:$0xff]
        %v6439 = vld [vmem:[#allocation11 + $0xde0] sm:$0xff]
        %v6440 = vld [vmem:[#allocation11 + $0xde8] sm:$0xff]
        %v6441 = vld [vmem:[#allocation11 + $0xdf0] sm:$0xff]
        %v6442 = vld [vmem:[#allocation11 + $0xdf8] sm:$0xff]
        %v6443 = vld [vmem:[#allocation11 + $0xe00] sm:$0xff]
        %v6444 = vld [vmem:[#allocation11 + $0xe08] sm:$0xff]
        %v6445 = vld [vmem:[#allocation11 + $0xe10] sm:$0xff]
        %v6446 = vld [vmem:[#allocation11 + $0xe18] sm:$0xff]
        %v6447 = vld [vmem:[#allocation11 + $0xe20] sm:$0xff]
        %v6448 = vld [vmem:[#allocation11 + $0xe28] sm:$0xff]
        %v6449 = vld [vmem:[#allocation11 + $0xe30] sm:$0xff]
        %v6450 = vld [vmem:[#allocation11 + $0xe38] sm:$0xff]
        %v6451 = vld [vmem:[#allocation11 + $0xe40] sm:$0xff]
        %v6452 = vld [vmem:[#allocation11 + $0xe48] sm:$0xff]
        %v6453 = vld [vmem:[#allocation11 + $0xe50] sm:$0xff]
        %v6454 = vld [vmem:[#allocation11 + $0xe58] sm:$0xff]
        %v6455 = vld [vmem:[#allocation11 + $0xe60] sm:$0xff]
        %v6456 = vld [vmem:[#allocation11 + $0xe68] sm:$0xff]
        %v6457 = vld [vmem:[#allocation11 + $0xe70] sm:$0xff]
        %v6458 = vld [vmem:[#allocation11 + $0xe78] sm:$0xff]
        %v6459 = vld [vmem:[#allocation11 + $0xe80] sm:$0xff]
        %v6460 = vld [vmem:[#allocation11 + $0xe88] sm:$0xff]
        %v6461 = vld [vmem:[#allocation11 + $0xe90] sm:$0xff]
        %v6462 = vld [vmem:[#allocation11 + $0xe98] sm:$0xff]
        %v6463 = vld [vmem:[#allocation11 + $0xea0] sm:$0xff]
        %v6464 = vld [vmem:[#allocation11 + $0xea8] sm:$0xff]
        %v6465 = vld [vmem:[#allocation11 + $0xeb0] sm:$0xff]
        %v6466 = vld [vmem:[#allocation11 + $0xeb8] sm:$0xff]
        %v6467 = vld [vmem:[#allocation11 + $0xec0] sm:$0xff]
        %v6468 = vld [vmem:[#allocation11 + $0xec8] sm:$0xff]
        %v6469 = vld [vmem:[#allocation11 + $0xed0] sm:$0xff]
        %v6470 = vld [vmem:[#allocation11 + $0xed8] sm:$0xff]
        %v6471 = vld [vmem:[#allocation11 + $0xee0] sm:$0xff]
        %v6472 = vld [vmem:[#allocation11 + $0xee8] sm:$0xff]
        %v6473 = vld [vmem:[#allocation11 + $0xef0] sm:$0xff]
        %v6474 = vld [vmem:[#allocation11 + $0xef8] sm:$0xff]
        %v6475 = vld [vmem:[#allocation11 + $0xf00] sm:$0xff]
        %v6476 = vld [vmem:[#allocation11 + $0xf08] sm:$0xff]
        %v6477 = vld [vmem:[#allocation11 + $0xf10] sm:$0xff]
        %v6478 = vld [vmem:[#allocation11 + $0xf18] sm:$0xff]
        %v6479 = vld [vmem:[#allocation11 + $0xf20] sm:$0xff]
        %v6480 = vld [vmem:[#allocation11 + $0xf28] sm:$0xff]
        %v6481 = vld [vmem:[#allocation11 + $0xf30] sm:$0xff]
        %v6482 = vld [vmem:[#allocation11 + $0xf38] sm:$0xff]
        %v6483 = vld [vmem:[#allocation11 + $0xf40] sm:$0xff]
        %v6484 = vld [vmem:[#allocation11 + $0xf48] sm:$0xff]
        %v6485 = vld [vmem:[#allocation11 + $0xf50] sm:$0xff]
        %v6486 = vld [vmem:[#allocation11 + $0xf58] sm:$0xff]
        %v6487 = vld [vmem:[#allocation11 + $0xf60] sm:$0xff]
        %v6488 = vld [vmem:[#allocation11 + $0xf68] sm:$0xff]
        %v6489 = vld [vmem:[#allocation11 + $0xf70] sm:$0xff]
        %v6490 = vld [vmem:[#allocation11 + $0xf78] sm:$0xff]
        %v6491 = vld [vmem:[#allocation11 + $0xf80] sm:$0xff]
        %v6492 = vld [vmem:[#allocation11 + $0xf88] sm:$0xff]
        %v6493 = vld [vmem:[#allocation11 + $0xf90] sm:$0xff]
        %v6494 = vld [vmem:[#allocation11 + $0xf98] sm:$0xff]
        %v6495 = vld [vmem:[#allocation11 + $0xfa0] sm:$0xff]
        %v6496 = vld [vmem:[#allocation11 + $0xfa8] sm:$0xff]
        %v6497 = vld [vmem:[#allocation11 + $0xfb0] sm:$0xff]
        %v6498 = vld [vmem:[#allocation11 + $0xfb8] sm:$0xff]
        %v6499 = vld [vmem:[#allocation11 + $0xfc0] sm:$0xff]
        %v6500 = vld [vmem:[#allocation11 + $0xfc8] sm:$0xff]
        %v6501 = vld [vmem:[#allocation11 + $0xfd0] sm:$0xff]
        %v6502 = vld [vmem:[#allocation11 + $0xfd8] sm:$0xff]
        %v6503 = vld [vmem:[#allocation11 + $0xfe0] sm:$0xff]
        %v6504 = vld [vmem:[#allocation11 + $0xfe8] sm:$0xff]
        %v6505 = vld [vmem:[#allocation11 + $0xff0] sm:$0xff]
        %v6506 = vld [vmem:[#allocation11 + $0xff8] sm:$0xff]
        %v6507 = vld [vmem:[#allocation11 + $0x1000] sm:$0xff]
        %v6508 = vld [vmem:[#allocation11 + $0x1008] sm:$0xff]
        %v6509 = vld [vmem:[#allocation11 + $0x1010] sm:$0xff]
        %v6510 = vld [vmem:[#allocation11 + $0x1018] sm:$0xff]
        %v6511 = vld [vmem:[#allocation11 + $0x1020] sm:$0xff]
        %v6512 = vld [vmem:[#allocation11 + $0x1028] sm:$0xff]
        %v6513 = vld [vmem:[#allocation11 + $0x1030] sm:$0xff]
        %v6514 = vld [vmem:[#allocation11 + $0x1038] sm:$0xff]
        %v6515 = vld [vmem:[#allocation11 + $0x1040] sm:$0xff]
        %v6516 = vld [vmem:[#allocation11 + $0x1048] sm:$0xff]
        %v6517 = vld [vmem:[#allocation11 + $0x1050] sm:$0xff]
        %v6518 = vld [vmem:[#allocation11 + $0x1058] sm:$0xff]
        %v6519 = vld [vmem:[#allocation11 + $0x1060] sm:$0xff]
        %v6520 = vld [vmem:[#allocation11 + $0x1068] sm:$0xff]
        %v6521 = vld [vmem:[#allocation11 + $0x1070] sm:$0xff]
        %v6522 = vld [vmem:[#allocation11 + $0x1078] sm:$0xff]
        %v6523 = vld [vmem:[#allocation11 + $0x1080] sm:$0xff]
        %v6524 = vld [vmem:[#allocation11 + $0x1088] sm:$0xff]
        %v6525 = vld [vmem:[#allocation11 + $0x1090] sm:$0xff]
        %v6526 = vld [vmem:[#allocation11 + $0x1098] sm:$0xff]
        %v6527 = vld [vmem:[#allocation11 + $0x10a0] sm:$0xff]
        %v6528 = vld [vmem:[#allocation11 + $0x10a8] sm:$0xff]
        %v6529 = vld [vmem:[#allocation11 + $0x10b0] sm:$0xff]
        %v6530 = vld [vmem:[#allocation11 + $0x10b8] sm:$0xff]
        %v6531 = vld [vmem:[#allocation11 + $0x10c0] sm:$0xff]
        %v6532 = vld [vmem:[#allocation11 + $0x10c8] sm:$0xff]
        %v6533 = vld [vmem:[#allocation11 + $0x10d0] sm:$0xff]
        %v6534 = vld [vmem:[#allocation11 + $0x10d8] sm:$0xff]
        %v6535 = vld [vmem:[#allocation11 + $0x10e0] sm:$0xff]
        %v6536 = vld [vmem:[#allocation11 + $0x10e8] sm:$0xff]
        %v6537 = vld [vmem:[#allocation11 + $0x10f0] sm:$0xff]
        %v6538 = vld [vmem:[#allocation11 + $0x10f8] sm:$0xff]
        %v6539 = vld [vmem:[#allocation11 + $0x1100] sm:$0xff]
        %v6540 = vld [vmem:[#allocation11 + $0x1108] sm:$0xff]
        %v6541 = vld [vmem:[#allocation11 + $0x1110] sm:$0xff]
        %v6542 = vld [vmem:[#allocation11 + $0x1118] sm:$0xff]
        %v6543 = vld [vmem:[#allocation11 + $0x1120] sm:$0xff]
        %v6544 = vld [vmem:[#allocation11 + $0x1128] sm:$0xff]
        %v6545 = vld [vmem:[#allocation11 + $0x1130] sm:$0xff]
        %v6546 = vld [vmem:[#allocation11 + $0x1138] sm:$0xff]
        %v6547 = vld [vmem:[#allocation11 + $0x1140] sm:$0xff]
        %v6548 = vld [vmem:[#allocation11 + $0x1148] sm:$0xff]
        %v6549 = vld [vmem:[#allocation11 + $0x1150] sm:$0xff]
        %v6550 = vld [vmem:[#allocation11 + $0x1158] sm:$0xff]
        %v6551 = vld [vmem:[#allocation11 + $0x1160] sm:$0xff]
        %v6552 = vld [vmem:[#allocation11 + $0x1168] sm:$0xff]
        %v6553 = vld [vmem:[#allocation11 + $0x1170] sm:$0xff]
        %v6554 = vld [vmem:[#allocation11 + $0x1178] sm:$0xff]
        %v6555 = vld [vmem:[#allocation11 + $0x1180] sm:$0xff]
        %v6556 = vld [vmem:[#allocation11 + $0x1188] sm:$0xff]
        %v6557 = vld [vmem:[#allocation11 + $0x1190] sm:$0xff]
        %v6558 = vld [vmem:[#allocation11 + $0x1198] sm:$0xff]
        %v6559 = vld [vmem:[#allocation11 + $0x11a0] sm:$0xff]
        %v6560 = vld [vmem:[#allocation11 + $0x11a8] sm:$0xff]
        %v6561 = vld [vmem:[#allocation11 + $0x11b0] sm:$0xff]
        %v6562 = vld [vmem:[#allocation11 + $0x11b8] sm:$0xff]
        %v6563 = vld [vmem:[#allocation11 + $0x11c0] sm:$0xff]
        %v6564 = vld [vmem:[#allocation11 + $0x11c8] sm:$0xff]
        %v6565 = vld [vmem:[#allocation11 + $0x11d0] sm:$0xff]
        %v6566 = vld [vmem:[#allocation11 + $0x11d8] sm:$0xff]
        %v6567 = vld [vmem:[#allocation11 + $0x11e0] sm:$0xff]
        %v6568 = vld [vmem:[#allocation11 + $0x11e8] sm:$0xff]
        %v6569 = vld [vmem:[#allocation11 + $0x11f0] sm:$0xff]
        %v6570 = vld [vmem:[#allocation11 + $0x11f8] sm:$0xff]
        %v6571 = vld [vmem:[#allocation12] sm:$0x3]
        %v6573 = vlaneseq
        %v6574 = vshrl.u32 %v6573, 7
        %v6575 = vsub.s32 0, %v6574
        %v6576 = vrot.slane %v6571, %v6575
        %v6577 = vlaneseq
        %v6578 = vshrl.u32 %v6577, 7
        %v6579 = vsub.s32 1, %v6578
        %v6580 = vrot.slane %v6571, %v6579
        %v7159 = vunpack.c.l.b16 %v5995
        %v7160 = vunpack.c.h.b16 %v5995
        %v7161 = vunpack.c.l.b16 %v5996
        %v7162 = vunpack.c.h.b16 %v5996
        %v7163 = vunpack.c.l.b16 %v5997
        %v7164 = vunpack.c.h.b16 %v5997
        %v7165 = vunpack.c.l.b16 %v5998
        %v7166 = vunpack.c.h.b16 %v5998
        %v7167 = vunpack.c.l.b16 %v5999
        %v7168 = vunpack.c.h.b16 %v5999
        %v7169 = vunpack.c.l.b16 %v6000
        %v7170 = vunpack.c.h.b16 %v6000
        %v7171 = vunpack.c.l.b16 %v6001
        %v7172 = vunpack.c.h.b16 %v6001
        %v7173 = vunpack.c.l.b16 %v6002
        %v7174 = vunpack.c.h.b16 %v6002
        %v7175 = vunpack.c.l.b16 %v6003
        %v7176 = vunpack.c.h.b16 %v6003
        %v7177 = vunpack.c.l.b16 %v6004
        %v7178 = vunpack.c.h.b16 %v6004
        %v7179 = vunpack.c.l.b16 %v6005
        %v7180 = vunpack.c.h.b16 %v6005
        %v7181 = vunpack.c.l.b16 %v6006
        %v7182 = vunpack.c.h.b16 %v6006
        %v7183 = vunpack.c.l.b16 %v6007
        %v7184 = vunpack.c.h.b16 %v6007
        %v7185 = vunpack.c.l.b16 %v6008
        %v7186 = vunpack.c.h.b16 %v6008
        %v7187 = vunpack.c.l.b16 %v6009
        %v7188 = vunpack.c.h.b16 %v6009
        %v7189 = vunpack.c.l.b16 %v6010
        %v7190 = vunpack.c.h.b16 %v6010
        %v7191 = vunpack.c.l.b16 %v6011
        %v7192 = vunpack.c.h.b16 %v6011
        %v7193 = vunpack.c.l.b16 %v6012
        %v7194 = vunpack.c.h.b16 %v6012
        %v7195 = vunpack.c.l.b16 %v6013
        %v7196 = vunpack.c.h.b16 %v6013
        %v7197 = vunpack.c.l.b16 %v6014
        %v7198 = vunpack.c.h.b16 %v6014
        %v7199 = vunpack.c.l.b16 %v6015
        %v7200 = vunpack.c.h.b16 %v6015
        %v7201 = vunpack.c.l.b16 %v6016
        %v7202 = vunpack.c.h.b16 %v6016
        %v7203 = vunpack.c.l.b16 %v6017
        %v7204 = vunpack.c.h.b16 %v6017
        %v7205 = vunpack.c.l.b16 %v6018
        %v7206 = vunpack.c.h.b16 %v6018
        %v7207 = vunpack.c.l.b16 %v6019
        %v7208 = vunpack.c.h.b16 %v6019
        %v7209 = vunpack.c.l.b16 %v6020
        %v7210 = vunpack.c.h.b16 %v6020
        %v7211 = vunpack.c.l.b16 %v6021
        %v7212 = vunpack.c.h.b16 %v6021
        %v7213 = vunpack.c.l.b16 %v6022
        %v7214 = vunpack.c.h.b16 %v6022
        %v7215 = vunpack.c.l.b16 %v6023
        %v7216 = vunpack.c.h.b16 %v6023
        %v7217 = vunpack.c.l.b16 %v6024
        %v7218 = vunpack.c.h.b16 %v6024
        %v7219 = vunpack.c.l.b16 %v6025
        %v7220 = vunpack.c.h.b16 %v6025
        %v7221 = vunpack.c.l.b16 %v6026
        %v7222 = vunpack.c.h.b16 %v6026
        %v7223 = vunpack.c.l.b16 %v6027
        %v7224 = vunpack.c.h.b16 %v6027
        %v7225 = vunpack.c.l.b16 %v6028
        %v7226 = vunpack.c.h.b16 %v6028
        %v7227 = vunpack.c.l.b16 %v6029
        %v7228 = vunpack.c.h.b16 %v6029
        %v7229 = vunpack.c.l.b16 %v6030
        %v7230 = vunpack.c.h.b16 %v6030
        %v7231 = vunpack.c.l.b16 %v6031
        %v7232 = vunpack.c.h.b16 %v6031
        %v7233 = vunpack.c.l.b16 %v6032
        %v7234 = vunpack.c.h.b16 %v6032
        %v7235 = vunpack.c.l.b16 %v6033
        %v7236 = vunpack.c.h.b16 %v6033
        %v7237 = vunpack.c.l.b16 %v6034
        %v7238 = vunpack.c.h.b16 %v6034
        %v7239 = vunpack.c.l.b16 %v6035
        %v7240 = vunpack.c.h.b16 %v6035
        %v7241 = vunpack.c.l.b16 %v6036
        %v7242 = vunpack.c.h.b16 %v6036
        %v7243 = vunpack.c.l.b16 %v6037
        %v7244 = vunpack.c.h.b16 %v6037
        %v7245 = vunpack.c.l.b16 %v6038
        %v7246 = vunpack.c.h.b16 %v6038
        %v7247 = vunpack.c.l.b16 %v6039
        %v7248 = vunpack.c.h.b16 %v6039
        %v7249 = vunpack.c.l.b16 %v6040
        %v7250 = vunpack.c.h.b16 %v6040
        %v7251 = vunpack.c.l.b16 %v6041
        %v7252 = vunpack.c.h.b16 %v6041
        %v7253 = vunpack.c.l.b16 %v6042
        %v7254 = vunpack.c.h.b16 %v6042
        %v7255 = vunpack.c.l.b16 %v6043
        %v7256 = vunpack.c.h.b16 %v6043
        %v7257 = vunpack.c.l.b16 %v6044
        %v7258 = vunpack.c.h.b16 %v6044
        %v7259 = vunpack.c.l.b16 %v6045
        %v7260 = vunpack.c.h.b16 %v6045
        %v7261 = vunpack.c.l.b16 %v6046
        %v7262 = vunpack.c.h.b16 %v6046
        %v7263 = vunpack.c.l.b16 %v6047
        %v7264 = vunpack.c.h.b16 %v6047
        %v7265 = vunpack.c.l.b16 %v6048
        %v7266 = vunpack.c.h.b16 %v6048
        %v7267 = vunpack.c.l.b16 %v6049
        %v7268 = vunpack.c.h.b16 %v6049
        %v7269 = vunpack.c.l.b16 %v6050
        %v7270 = vunpack.c.h.b16 %v6050
        %v7271 = vunpack.c.l.b16 %v6051
        %v7272 = vunpack.c.h.b16 %v6051
        %v7273 = vunpack.c.l.b16 %v6052
        %v7274 = vunpack.c.h.b16 %v6052
        %v7275 = vunpack.c.l.b16 %v6053
        %v7276 = vunpack.c.h.b16 %v6053
        %v7277 = vunpack.c.l.b16 %v6054
        %v7278 = vunpack.c.h.b16 %v6054
        %v7279 = vunpack.c.l.b16 %v6055
        %v7280 = vunpack.c.h.b16 %v6055
        %v7281 = vunpack.c.l.b16 %v6056
        %v7282 = vunpack.c.h.b16 %v6056
        %v7283 = vunpack.c.l.b16 %v6057
        %v7284 = vunpack.c.h.b16 %v6057
        %v7285 = vunpack.c.l.b16 %v6058
        %v7286 = vunpack.c.h.b16 %v6058
        %v7287 = vunpack.c.l.b16 %v6059
        %v7288 = vunpack.c.h.b16 %v6059
        %v7289 = vunpack.c.l.b16 %v6060
        %v7290 = vunpack.c.h.b16 %v6060
        %v7291 = vunpack.c.l.b16 %v6061
        %v7292 = vunpack.c.h.b16 %v6061
        %v7293 = vunpack.c.l.b16 %v6062
        %v7294 = vunpack.c.h.b16 %v6062
        %v7295 = vunpack.c.l.b16 %v6063
        %v7296 = vunpack.c.h.b16 %v6063
        %v7297 = vunpack.c.l.b16 %v6064
        %v7298 = vunpack.c.h.b16 %v6064
        %v7299 = vunpack.c.l.b16 %v6065
        %v7300 = vunpack.c.h.b16 %v6065
        %v7301 = vunpack.c.l.b16 %v6066
        %v7302 = vunpack.c.h.b16 %v6066
        %v7303 = vunpack.c.l.b16 %v6067
        %v7304 = vunpack.c.h.b16 %v6067
        %v7305 = vunpack.c.l.b16 %v6068
        %v7306 = vunpack.c.h.b16 %v6068
        %v7307 = vunpack.c.l.b16 %v6069
        %v7308 = vunpack.c.h.b16 %v6069
        %v7309 = vunpack.c.l.b16 %v6070
        %v7310 = vunpack.c.h.b16 %v6070
        %v7311 = vunpack.c.l.b16 %v6071
        %v7312 = vunpack.c.h.b16 %v6071
        %v7313 = vunpack.c.l.b16 %v6072
        %v7314 = vunpack.c.h.b16 %v6072
        %v7315 = vunpack.c.l.b16 %v6073
        %v7316 = vunpack.c.h.b16 %v6073
        %v7317 = vunpack.c.l.b16 %v6074
        %v7318 = vunpack.c.h.b16 %v6074
        %v7319 = vunpack.c.l.b16 %v6075
        %v7320 = vunpack.c.h.b16 %v6075
        %v7321 = vunpack.c.l.b16 %v6076
        %v7322 = vunpack.c.h.b16 %v6076
        %v7323 = vunpack.c.l.b16 %v6077
        %v7324 = vunpack.c.h.b16 %v6077
        %v7325 = vunpack.c.l.b16 %v6078
        %v7326 = vunpack.c.h.b16 %v6078
        %v7327 = vunpack.c.l.b16 %v6079
        %v7328 = vunpack.c.h.b16 %v6079
        %v7329 = vunpack.c.l.b16 %v6080
        %v7330 = vunpack.c.h.b16 %v6080
        %v7331 = vunpack.c.l.b16 %v6081
        %v7332 = vunpack.c.h.b16 %v6081
        %v7333 = vunpack.c.l.b16 %v6082
        %v7334 = vunpack.c.h.b16 %v6082
        %v7335 = vunpack.c.l.b16 %v6083
        %v7336 = vunpack.c.h.b16 %v6083
        %v7337 = vunpack.c.l.b16 %v6084
        %v7338 = vunpack.c.h.b16 %v6084
        %v7339 = vunpack.c.l.b16 %v6085
        %v7340 = vunpack.c.h.b16 %v6085
        %v7341 = vunpack.c.l.b16 %v6086
        %v7342 = vunpack.c.h.b16 %v6086
        %v7343 = vunpack.c.l.b16 %v6087
        %v7344 = vunpack.c.h.b16 %v6087
        %v7345 = vunpack.c.l.b16 %v6088
        %v7346 = vunpack.c.h.b16 %v6088
        %v7347 = vunpack.c.l.b16 %v6089
        %v7348 = vunpack.c.h.b16 %v6089
        %v7349 = vunpack.c.l.b16 %v6090
        %v7350 = vunpack.c.h.b16 %v6090
        %v7351 = vunpack.c.l.b16 %v6091
        %v7352 = vunpack.c.h.b16 %v6091
        %v7353 = vunpack.c.l.b16 %v6092
        %v7354 = vunpack.c.h.b16 %v6092
        %v7355 = vunpack.c.l.b16 %v6093
        %v7356 = vunpack.c.h.b16 %v6093
        %v7357 = vunpack.c.l.b16 %v6094
        %v7358 = vunpack.c.h.b16 %v6094
        %v7359 = vunpack.c.l.b16 %v6095
        %v7360 = vunpack.c.h.b16 %v6095
        %v7361 = vunpack.c.l.b16 %v6096
        %v7362 = vunpack.c.h.b16 %v6096
        %v7363 = vunpack.c.l.b16 %v6097
        %v7364 = vunpack.c.h.b16 %v6097
        %v7365 = vunpack.c.l.b16 %v6098
        %v7366 = vunpack.c.h.b16 %v6098
        %v7367 = vunpack.c.l.b16 %v6099
        %v7368 = vunpack.c.h.b16 %v6099
        %v7369 = vunpack.c.l.b16 %v6100
        %v7370 = vunpack.c.h.b16 %v6100
        %v7371 = vunpack.c.l.b16 %v6101
        %v7372 = vunpack.c.h.b16 %v6101
        %v7373 = vunpack.c.l.b16 %v6102
        %v7374 = vunpack.c.h.b16 %v6102
        %v7375 = vunpack.c.l.b16 %v6103
        %v7376 = vunpack.c.h.b16 %v6103
        %v7377 = vunpack.c.l.b16 %v6104
        %v7378 = vunpack.c.h.b16 %v6104
        %v7379 = vunpack.c.l.b16 %v6105
        %v7380 = vunpack.c.h.b16 %v6105
        %v7381 = vunpack.c.l.b16 %v6106
        %v7382 = vunpack.c.h.b16 %v6106
        %v7383 = vunpack.c.l.b16 %v6107
        %v7384 = vunpack.c.h.b16 %v6107
        %v7385 = vunpack.c.l.b16 %v6108
        %v7386 = vunpack.c.h.b16 %v6108
        %v7387 = vunpack.c.l.b16 %v6109
        %v7388 = vunpack.c.h.b16 %v6109
        %v7389 = vunpack.c.l.b16 %v6110
        %v7390 = vunpack.c.h.b16 %v6110
        %v7391 = vunpack.c.l.b16 %v6111
        %v7392 = vunpack.c.h.b16 %v6111
        %v7393 = vunpack.c.l.b16 %v6112
        %v7394 = vunpack.c.h.b16 %v6112
        %v7395 = vunpack.c.l.b16 %v6113
        %v7396 = vunpack.c.h.b16 %v6113
        %v7397 = vunpack.c.l.b16 %v6114
        %v7398 = vunpack.c.h.b16 %v6114
        %v7399 = vunpack.c.l.b16 %v6115
        %v7400 = vunpack.c.h.b16 %v6115
        %v7401 = vunpack.c.l.b16 %v6116
        %v7402 = vunpack.c.h.b16 %v6116
        %v7403 = vunpack.c.l.b16 %v6117
        %v7404 = vunpack.c.h.b16 %v6117
        %v7405 = vunpack.c.l.b16 %v6118
        %v7406 = vunpack.c.h.b16 %v6118
        %v7407 = vunpack.c.l.b16 %v6119
        %v7408 = vunpack.c.h.b16 %v6119
        %v7409 = vunpack.c.l.b16 %v6120
        %v7410 = vunpack.c.h.b16 %v6120
        %v7411 = vunpack.c.l.b16 %v6121
        %v7412 = vunpack.c.h.b16 %v6121
        %v7413 = vunpack.c.l.b16 %v6122
        %v7414 = vunpack.c.h.b16 %v6122
        %v7415 = vunpack.c.l.b16 %v6123
        %v7416 = vunpack.c.h.b16 %v6123
        %v7417 = vunpack.c.l.b16 %v6124
        %v7418 = vunpack.c.h.b16 %v6124
        %v7419 = vunpack.c.l.b16 %v6125
        %v7420 = vunpack.c.h.b16 %v6125
        %v7421 = vunpack.c.l.b16 %v6126
        %v7422 = vunpack.c.h.b16 %v6126
        %v7423 = vunpack.c.l.b16 %v6127
        %v7424 = vunpack.c.h.b16 %v6127
        %v7425 = vunpack.c.l.b16 %v6128
        %v7426 = vunpack.c.h.b16 %v6128
        %v7427 = vunpack.c.l.b16 %v6129
        %v7428 = vunpack.c.h.b16 %v6129
        %v7429 = vunpack.c.l.b16 %v6130
        %v7430 = vunpack.c.h.b16 %v6130
        %v7431 = vunpack.c.l.b16 %v6131
        %v7432 = vunpack.c.h.b16 %v6131
        %v7433 = vunpack.c.l.b16 %v6132
        %v7434 = vunpack.c.h.b16 %v6132
        %v7435 = vunpack.c.l.b16 %v6133
        %v7436 = vunpack.c.h.b16 %v6133
        %v7437 = vunpack.c.l.b16 %v6134
        %v7438 = vunpack.c.h.b16 %v6134
        %v7439 = vunpack.c.l.b16 %v6135
        %v7440 = vunpack.c.h.b16 %v6135
        %v7441 = vunpack.c.l.b16 %v6136
        %v7442 = vunpack.c.h.b16 %v6136
        %v7443 = vunpack.c.l.b16 %v6137
        %v7444 = vunpack.c.h.b16 %v6137
        %v7445 = vunpack.c.l.b16 %v6138
        %v7446 = vunpack.c.h.b16 %v6138
        %v7447 = vunpack.c.l.b16 %v6139
        %v7448 = vunpack.c.h.b16 %v6139
        %v7449 = vunpack.c.l.b16 %v6140
        %v7450 = vunpack.c.h.b16 %v6140
        %v7451 = vunpack.c.l.b16 %v6141
        %v7452 = vunpack.c.h.b16 %v6141
        %v7453 = vunpack.c.l.b16 %v6142
        %v7454 = vunpack.c.h.b16 %v6142
        %v7455 = vunpack.c.l.b16 %v6143
        %v7456 = vunpack.c.h.b16 %v6143
        %v7457 = vunpack.c.l.b16 %v6144
        %v7458 = vunpack.c.h.b16 %v6144
        %v7459 = vunpack.c.l.b16 %v6145
        %v7460 = vunpack.c.h.b16 %v6145
        %v7461 = vunpack.c.l.b16 %v6146
        %v7462 = vunpack.c.h.b16 %v6146
        %v7463 = vunpack.c.l.b16 %v6147
        %v7464 = vunpack.c.h.b16 %v6147
        %v7465 = vunpack.c.l.b16 %v6148
        %v7466 = vunpack.c.h.b16 %v6148
        %v7467 = vunpack.c.l.b16 %v6149
        %v7468 = vunpack.c.h.b16 %v6149
        %v7469 = vunpack.c.l.b16 %v6150
        %v7470 = vunpack.c.h.b16 %v6150
        %v7471 = vunpack.c.l.b16 %v6151
        %v7472 = vunpack.c.h.b16 %v6151
        %v7473 = vunpack.c.l.b16 %v6152
        %v7474 = vunpack.c.h.b16 %v6152
        %v7475 = vunpack.c.l.b16 %v6153
        %v7476 = vunpack.c.h.b16 %v6153
        %v7477 = vunpack.c.l.b16 %v6154
        %v7478 = vunpack.c.h.b16 %v6154
        %v7479 = vunpack.c.l.b16 %v6155
        %v7480 = vunpack.c.h.b16 %v6155
        %v7481 = vunpack.c.l.b16 %v6156
        %v7482 = vunpack.c.h.b16 %v6156
        %v7483 = vunpack.c.l.b16 %v6157
        %v7484 = vunpack.c.h.b16 %v6157
        %v7485 = vunpack.c.l.b16 %v6158
        %v7486 = vunpack.c.h.b16 %v6158
        %v7487 = vunpack.c.l.b16 %v6159
        %v7488 = vunpack.c.h.b16 %v6159
        %v7489 = vunpack.c.l.b16 %v6160
        %v7490 = vunpack.c.h.b16 %v6160
        %v7491 = vunpack.c.l.b16 %v6161
        %v7492 = vunpack.c.h.b16 %v6161
        %v7493 = vunpack.c.l.b16 %v6162
        %v7494 = vunpack.c.h.b16 %v6162
        %v7495 = vunpack.c.l.b16 %v6163
        %v7496 = vunpack.c.h.b16 %v6163
        %v7497 = vunpack.c.l.b16 %v6164
        %v7498 = vunpack.c.h.b16 %v6164
        %v7499 = vunpack.c.l.b16 %v6165
        %v7500 = vunpack.c.h.b16 %v6165
        %v7501 = vunpack.c.l.b16 %v6166
        %v7502 = vunpack.c.h.b16 %v6166
        %v7503 = vunpack.c.l.b16 %v6167
        %v7504 = vunpack.c.h.b16 %v6167
        %v7505 = vunpack.c.l.b16 %v6168
        %v7506 = vunpack.c.h.b16 %v6168
        %v7507 = vunpack.c.l.b16 %v6169
        %v7508 = vunpack.c.h.b16 %v6169
        %v7509 = vunpack.c.l.b16 %v6170
        %v7510 = vunpack.c.h.b16 %v6170
        %v7511 = vunpack.c.l.b16 %v6171
        %v7512 = vunpack.c.h.b16 %v6171
        %v7513 = vunpack.c.l.b16 %v6172
        %v7514 = vunpack.c.h.b16 %v6172
        %v7515 = vunpack.c.l.b16 %v6173
        %v7516 = vunpack.c.h.b16 %v6173
        %v7517 = vunpack.c.l.b16 %v6174
        %v7518 = vunpack.c.h.b16 %v6174
        %v7519 = vunpack.c.l.b16 %v6175
        %v7520 = vunpack.c.h.b16 %v6175
        %v7521 = vunpack.c.l.b16 %v6176
        %v7522 = vunpack.c.h.b16 %v6176
        %v7523 = vunpack.c.l.b16 %v6177
        %v7524 = vunpack.c.h.b16 %v6177
        %v7525 = vunpack.c.l.b16 %v6178
        %v7526 = vunpack.c.h.b16 %v6178
        %v7527 = vunpack.c.l.b16 %v6179
        %v7528 = vunpack.c.h.b16 %v6179
        %v7529 = vunpack.c.l.b16 %v6180
        %v7530 = vunpack.c.h.b16 %v6180
        %v7531 = vunpack.c.l.b16 %v6181
        %v7532 = vunpack.c.h.b16 %v6181
        %v7533 = vunpack.c.l.b16 %v6182
        %v7534 = vunpack.c.h.b16 %v6182
        %v7535 = vunpack.c.l.b16 %v6183
        %v7536 = vunpack.c.h.b16 %v6183
        %v7537 = vunpack.c.l.b16 %v6184
        %v7538 = vunpack.c.h.b16 %v6184
        %v7539 = vunpack.c.l.b16 %v6185
        %v7540 = vunpack.c.h.b16 %v6185
        %v7541 = vunpack.c.l.b16 %v6186
        %v7542 = vunpack.c.h.b16 %v6186
        %v7543 = vunpack.c.l.b16 %v6187
        %v7544 = vunpack.c.h.b16 %v6187
        %v7545 = vunpack.c.l.b16 %v6188
        %v7546 = vunpack.c.h.b16 %v6188
        %v7547 = vunpack.c.l.b16 %v6189
        %v7548 = vunpack.c.h.b16 %v6189
        %v7549 = vunpack.c.l.b16 %v6190
        %v7550 = vunpack.c.h.b16 %v6190
        %v7551 = vunpack.c.l.b16 %v6191
        %v7552 = vunpack.c.h.b16 %v6191
        %v7553 = vunpack.c.l.b16 %v6192
        %v7554 = vunpack.c.h.b16 %v6192
        %v7555 = vunpack.c.l.b16 %v6193
        %v7556 = vunpack.c.h.b16 %v6193
        %v7557 = vunpack.c.l.b16 %v6194
        %v7558 = vunpack.c.h.b16 %v6194
        %v7559 = vunpack.c.l.b16 %v6195
        %v7560 = vunpack.c.h.b16 %v6195
        %v7561 = vunpack.c.l.b16 %v6196
        %v7562 = vunpack.c.h.b16 %v6196
        %v7563 = vunpack.c.l.b16 %v6197
        %v7564 = vunpack.c.h.b16 %v6197
        %v7565 = vunpack.c.l.b16 %v6198
        %v7566 = vunpack.c.h.b16 %v6198
        %v7567 = vunpack.c.l.b16 %v6199
        %v7568 = vunpack.c.h.b16 %v6199
        %v7569 = vunpack.c.l.b16 %v6200
        %v7570 = vunpack.c.h.b16 %v6200
        %v7571 = vunpack.c.l.b16 %v6201
        %v7572 = vunpack.c.h.b16 %v6201
        %v7573 = vunpack.c.l.b16 %v6202
        %v7574 = vunpack.c.h.b16 %v6202
        %v7575 = vunpack.c.l.b16 %v6203
        %v7576 = vunpack.c.h.b16 %v6203
        %v7577 = vunpack.c.l.b16 %v6204
        %v7578 = vunpack.c.h.b16 %v6204
        %v7579 = vunpack.c.l.b16 %v6205
        %v7580 = vunpack.c.h.b16 %v6205
        %v7581 = vunpack.c.l.b16 %v6206
        %v7582 = vunpack.c.h.b16 %v6206
        %v7583 = vunpack.c.l.b16 %v6207
        %v7584 = vunpack.c.h.b16 %v6207
        %v7585 = vunpack.c.l.b16 %v6208
        %v7586 = vunpack.c.h.b16 %v6208
        %v7587 = vunpack.c.l.b16 %v6209
        %v7588 = vunpack.c.h.b16 %v6209
        %v7589 = vunpack.c.l.b16 %v6210
        %v7590 = vunpack.c.h.b16 %v6210
        %v7591 = vunpack.c.l.b16 %v6211
        %v7592 = vunpack.c.h.b16 %v6211
        %v7593 = vunpack.c.l.b16 %v6212
        %v7594 = vunpack.c.h.b16 %v6212
        %v7595 = vunpack.c.l.b16 %v6213
        %v7596 = vunpack.c.h.b16 %v6213
        %v7597 = vunpack.c.l.b16 %v6214
        %v7598 = vunpack.c.h.b16 %v6214
        %v7599 = vunpack.c.l.b16 %v6215
        %v7600 = vunpack.c.h.b16 %v6215
        %v7601 = vunpack.c.l.b16 %v6216
        %v7602 = vunpack.c.h.b16 %v6216
        %v7603 = vunpack.c.l.b16 %v6217
        %v7604 = vunpack.c.h.b16 %v6217
        %v7605 = vunpack.c.l.b16 %v6218
        %v7606 = vunpack.c.h.b16 %v6218
        %v7607 = vunpack.c.l.b16 %v6219
        %v7608 = vunpack.c.h.b16 %v6219
        %v7609 = vunpack.c.l.b16 %v6220
        %v7610 = vunpack.c.h.b16 %v6220
        %v7611 = vunpack.c.l.b16 %v6221
        %v7612 = vunpack.c.h.b16 %v6221
        %v7613 = vunpack.c.l.b16 %v6222
        %v7614 = vunpack.c.h.b16 %v6222
        %v7615 = vunpack.c.l.b16 %v6223
        %v7616 = vunpack.c.h.b16 %v6223
        %v7617 = vunpack.c.l.b16 %v6224
        %v7618 = vunpack.c.h.b16 %v6224
        %v7619 = vunpack.c.l.b16 %v6225
        %v7620 = vunpack.c.h.b16 %v6225
        %v7621 = vunpack.c.l.b16 %v6226
        %v7622 = vunpack.c.h.b16 %v6226
        %v7623 = vunpack.c.l.b16 %v6227
        %v7624 = vunpack.c.h.b16 %v6227
        %v7625 = vunpack.c.l.b16 %v6228
        %v7626 = vunpack.c.h.b16 %v6228
        %v7627 = vunpack.c.l.b16 %v6229
        %v7628 = vunpack.c.h.b16 %v6229
        %v7629 = vunpack.c.l.b16 %v6230
        %v7630 = vunpack.c.h.b16 %v6230
        %v7631 = vunpack.c.l.b16 %v6231
        %v7632 = vunpack.c.h.b16 %v6231
        %v7633 = vunpack.c.l.b16 %v6232
        %v7634 = vunpack.c.h.b16 %v6232
        %v7635 = vunpack.c.l.b16 %v6233
        %v7636 = vunpack.c.h.b16 %v6233
        %v7637 = vunpack.c.l.b16 %v6234
        %v7638 = vunpack.c.h.b16 %v6234
        %v7639 = vunpack.c.l.b16 %v6235
        %v7640 = vunpack.c.h.b16 %v6235
        %v7641 = vunpack.c.l.b16 %v6236
        %v7642 = vunpack.c.h.b16 %v6236
        %v7643 = vunpack.c.l.b16 %v6237
        %v7644 = vunpack.c.h.b16 %v6237
        %v7645 = vunpack.c.l.b16 %v6238
        %v7646 = vunpack.c.h.b16 %v6238
        %v7647 = vunpack.c.l.b16 %v6239
        %v7648 = vunpack.c.h.b16 %v6239
        %v7649 = vunpack.c.l.b16 %v6240
        %v7650 = vunpack.c.h.b16 %v6240
        %v7651 = vunpack.c.l.b16 %v6241
        %v7652 = vunpack.c.h.b16 %v6241
        %v7653 = vunpack.c.l.b16 %v6242
        %v7654 = vunpack.c.h.b16 %v6242
        %v7655 = vunpack.c.l.b16 %v6243
        %v7656 = vunpack.c.h.b16 %v6243
        %v7657 = vunpack.c.l.b16 %v6244
        %v7658 = vunpack.c.h.b16 %v6244
        %v7659 = vunpack.c.l.b16 %v6245
        %v7660 = vunpack.c.h.b16 %v6245
        %v7661 = vunpack.c.l.b16 %v6246
        %v7662 = vunpack.c.h.b16 %v6246
        %v7663 = vunpack.c.l.b16 %v6247
        %v7664 = vunpack.c.h.b16 %v6247
        %v7665 = vunpack.c.l.b16 %v6248
        %v7666 = vunpack.c.h.b16 %v6248
        %v7667 = vunpack.c.l.b16 %v6249
        %v7668 = vunpack.c.h.b16 %v6249
        %v7669 = vunpack.c.l.b16 %v6250
        %v7670 = vunpack.c.h.b16 %v6250
        %v7671 = vunpack.c.l.b16 %v6251
        %v7672 = vunpack.c.h.b16 %v6251
        %v7673 = vunpack.c.l.b16 %v6252
        %v7674 = vunpack.c.h.b16 %v6252
        %v7675 = vunpack.c.l.b16 %v6253
        %v7676 = vunpack.c.h.b16 %v6253
        %v7677 = vunpack.c.l.b16 %v6254
        %v7678 = vunpack.c.h.b16 %v6254
        %v7679 = vunpack.c.l.b16 %v6255
        %v7680 = vunpack.c.h.b16 %v6255
        %v7681 = vunpack.c.l.b16 %v6256
        %v7682 = vunpack.c.h.b16 %v6256
        %v7683 = vunpack.c.l.b16 %v6257
        %v7684 = vunpack.c.h.b16 %v6257
        %v7685 = vunpack.c.l.b16 %v6258
        %v7686 = vunpack.c.h.b16 %v6258
        %v7687 = vunpack.c.l.b16 %v6259
        %v7688 = vunpack.c.h.b16 %v6259
        %v7689 = vunpack.c.l.b16 %v6260
        %v7690 = vunpack.c.h.b16 %v6260
        %v7691 = vunpack.c.l.b16 %v6261
        %v7692 = vunpack.c.h.b16 %v6261
        %v7693 = vunpack.c.l.b16 %v6262
        %v7694 = vunpack.c.h.b16 %v6262
        %v7695 = vunpack.c.l.b16 %v6263
        %v7696 = vunpack.c.h.b16 %v6263
        %v7697 = vunpack.c.l.b16 %v6264
        %v7698 = vunpack.c.h.b16 %v6264
        %v7699 = vunpack.c.l.b16 %v6265
        %v7700 = vunpack.c.h.b16 %v6265
        %v7701 = vunpack.c.l.b16 %v6266
        %v7702 = vunpack.c.h.b16 %v6266
        %v7703 = vunpack.c.l.b16 %v6267
        %v7704 = vunpack.c.h.b16 %v6267
        %v7705 = vunpack.c.l.b16 %v6268
        %v7706 = vunpack.c.h.b16 %v6268
        %v7707 = vunpack.c.l.b16 %v6269
        %v7708 = vunpack.c.h.b16 %v6269
        %v7709 = vunpack.c.l.b16 %v6270
        %v7710 = vunpack.c.h.b16 %v6270
        %v7711 = vunpack.c.l.b16 %v6271
        %v7712 = vunpack.c.h.b16 %v6271
        %v7713 = vunpack.c.l.b16 %v6272
        %v7714 = vunpack.c.h.b16 %v6272
        %v7715 = vunpack.c.l.b16 %v6273
        %v7716 = vunpack.c.h.b16 %v6273
        %v7717 = vunpack.c.l.b16 %v6274
        %v7718 = vunpack.c.h.b16 %v6274
        %v7719 = vunpack.c.l.b16 %v6275
        %v7720 = vunpack.c.h.b16 %v6275
        %v7721 = vunpack.c.l.b16 %v6276
        %v7722 = vunpack.c.h.b16 %v6276
        %v7723 = vunpack.c.l.b16 %v6277
        %v7724 = vunpack.c.h.b16 %v6277
        %v7725 = vunpack.c.l.b16 %v6278
        %v7726 = vunpack.c.h.b16 %v6278
        %v7727 = vunpack.c.l.b16 %v6279
        %v7728 = vunpack.c.h.b16 %v6279
        %v7729 = vunpack.c.l.b16 %v6280
        %v7730 = vunpack.c.h.b16 %v6280
        %v7731 = vunpack.c.l.b16 %v6281
        %v7732 = vunpack.c.h.b16 %v6281
        %v7733 = vunpack.c.l.b16 %v6282
        %v7734 = vunpack.c.h.b16 %v6282
        %v7735 = vunpack.c.l.b16 %v6283
        %v7736 = vunpack.c.h.b16 %v6283
        %v7737 = vunpack.c.l.b16 %v6284
        %v7738 = vunpack.c.h.b16 %v6284
        %v7739 = vunpack.c.l.b16 %v6285
        %v7740 = vunpack.c.h.b16 %v6285
        %v7741 = vunpack.c.l.b16 %v6286
        %v7742 = vunpack.c.h.b16 %v6286
        %v7743 = vunpack.c.l.b16 %v6287
        %v7744 = vunpack.c.h.b16 %v6287
        %v7745 = vunpack.c.l.b16 %v6288
        %v7746 = vunpack.c.h.b16 %v6288
        %v7747 = vunpack.c.l.b16 %v6289
        %v7748 = vunpack.c.h.b16 %v6289
        %v7749 = vunpack.c.l.b16 %v6290
        %v7750 = vunpack.c.h.b16 %v6290
        %v7751 = vunpack.c.l.b16 %v6291
        %v7752 = vunpack.c.h.b16 %v6291
        %v7753 = vunpack.c.l.b16 %v6292
        %v7754 = vunpack.c.h.b16 %v6292
        %v7755 = vunpack.c.l.b16 %v6293
        %v7756 = vunpack.c.h.b16 %v6293
        %v7757 = vunpack.c.l.b16 %v6294
        %v7758 = vunpack.c.h.b16 %v6294
        %v7759 = vunpack.c.l.b16 %v6295
        %v7760 = vunpack.c.h.b16 %v6295
        %v7761 = vunpack.c.l.b16 %v6296
        %v7762 = vunpack.c.h.b16 %v6296
        %v7763 = vunpack.c.l.b16 %v6297
        %v7764 = vunpack.c.h.b16 %v6297
        %v7765 = vunpack.c.l.b16 %v6298
        %v7766 = vunpack.c.h.b16 %v6298
        %v7767 = vunpack.c.l.b16 %v6299
        %v7768 = vunpack.c.h.b16 %v6299
        %v7769 = vunpack.c.l.b16 %v6300
        %v7770 = vunpack.c.h.b16 %v6300
        %v7771 = vunpack.c.l.b16 %v6301
        %v7772 = vunpack.c.h.b16 %v6301
        %v7773 = vunpack.c.l.b16 %v6302
        %v7774 = vunpack.c.h.b16 %v6302
        %v7775 = vunpack.c.l.b16 %v6303
        %v7776 = vunpack.c.h.b16 %v6303
        %v7777 = vunpack.c.l.b16 %v6304
        %v7778 = vunpack.c.h.b16 %v6304
        %v7779 = vunpack.c.l.b16 %v6305
        %v7780 = vunpack.c.h.b16 %v6305
        %v7781 = vunpack.c.l.b16 %v6306
        %v7782 = vunpack.c.h.b16 %v6306
        %v7783 = vunpack.c.l.b16 %v6307
        %v7784 = vunpack.c.h.b16 %v6307
        %v7785 = vunpack.c.l.b16 %v6308
        %v7786 = vunpack.c.h.b16 %v6308
        %v7787 = vunpack.c.l.b16 %v6309
        %v7788 = vunpack.c.h.b16 %v6309
        %v7789 = vunpack.c.l.b16 %v6310
        %v7790 = vunpack.c.h.b16 %v6310
        %v7791 = vunpack.c.l.b16 %v6311
        %v7792 = vunpack.c.h.b16 %v6311
        %v7793 = vunpack.c.l.b16 %v6312
        %v7794 = vunpack.c.h.b16 %v6312
        %v7795 = vunpack.c.l.b16 %v6313
        %v7796 = vunpack.c.h.b16 %v6313
        %v7797 = vunpack.c.l.b16 %v6314
        %v7798 = vunpack.c.h.b16 %v6314
        %v7799 = vunpack.c.l.b16 %v6315
        %v7800 = vunpack.c.h.b16 %v6315
        %v7801 = vunpack.c.l.b16 %v6316
        %v7802 = vunpack.c.h.b16 %v6316
        %v7803 = vunpack.c.l.b16 %v6317
        %v7804 = vunpack.c.h.b16 %v6317
        %v7805 = vunpack.c.l.b16 %v6318
        %v7806 = vunpack.c.h.b16 %v6318
        %v7807 = vunpack.c.l.b16 %v6319
        %v7808 = vunpack.c.h.b16 %v6319
        %v7809 = vunpack.c.l.b16 %v6320
        %v7810 = vunpack.c.h.b16 %v6320
        %v7811 = vunpack.c.l.b16 %v6321
        %v7812 = vunpack.c.h.b16 %v6321
        %v7813 = vunpack.c.l.b16 %v6322
        %v7814 = vunpack.c.h.b16 %v6322
        %v7815 = vunpack.c.l.b16 %v6323
        %v7816 = vunpack.c.h.b16 %v6323
        %v7817 = vunpack.c.l.b16 %v6324
        %v7818 = vunpack.c.h.b16 %v6324
        %v7819 = vunpack.c.l.b16 %v6325
        %v7820 = vunpack.c.h.b16 %v6325
        %v7821 = vunpack.c.l.b16 %v6326
        %v7822 = vunpack.c.h.b16 %v6326
        %v7823 = vunpack.c.l.b16 %v6327
        %v7824 = vunpack.c.h.b16 %v6327
        %v7825 = vunpack.c.l.b16 %v6328
        %v7826 = vunpack.c.h.b16 %v6328
        %v7827 = vunpack.c.l.b16 %v6329
        %v7828 = vunpack.c.h.b16 %v6329
        %v7829 = vunpack.c.l.b16 %v6330
        %v7830 = vunpack.c.h.b16 %v6330
        %v7831 = vunpack.c.l.b16 %v6331
        %v7832 = vunpack.c.h.b16 %v6331
        %v7833 = vunpack.c.l.b16 %v6332
        %v7834 = vunpack.c.h.b16 %v6332
        %v7835 = vunpack.c.l.b16 %v6333
        %v7836 = vunpack.c.h.b16 %v6333
        %v7837 = vunpack.c.l.b16 %v6334
        %v7838 = vunpack.c.h.b16 %v6334
        %v7839 = vunpack.c.l.b16 %v6335
        %v7840 = vunpack.c.h.b16 %v6335
        %v7841 = vunpack.c.l.b16 %v6336
        %v7842 = vunpack.c.h.b16 %v6336
        %v7843 = vunpack.c.l.b16 %v6337
        %v7844 = vunpack.c.h.b16 %v6337
        %v7845 = vunpack.c.l.b16 %v6338
        %v7846 = vunpack.c.h.b16 %v6338
        %v7847 = vunpack.c.l.b16 %v6339
        %v7848 = vunpack.c.h.b16 %v6339
        %v7849 = vunpack.c.l.b16 %v6340
        %v7850 = vunpack.c.h.b16 %v6340
        %v7851 = vunpack.c.l.b16 %v6341
        %v7852 = vunpack.c.h.b16 %v6341
        %v7853 = vunpack.c.l.b16 %v6342
        %v7854 = vunpack.c.h.b16 %v6342
        %v7855 = vunpack.c.l.b16 %v6343
        %v7856 = vunpack.c.h.b16 %v6343
        %v7857 = vunpack.c.l.b16 %v6344
        %v7858 = vunpack.c.h.b16 %v6344
        %v7859 = vunpack.c.l.b16 %v6345
        %v7860 = vunpack.c.h.b16 %v6345
        %v7861 = vunpack.c.l.b16 %v6346
        %v7862 = vunpack.c.h.b16 %v6346
        %v7863 = vunpack.c.l.b16 %v6347
        %v7864 = vunpack.c.h.b16 %v6347
        %v7865 = vunpack.c.l.b16 %v6348
        %v7866 = vunpack.c.h.b16 %v6348
        %v7867 = vunpack.c.l.b16 %v6349
        %v7868 = vunpack.c.h.b16 %v6349
        %v7869 = vunpack.c.l.b16 %v6350
        %v7870 = vunpack.c.h.b16 %v6350
        %v7871 = vunpack.c.l.b16 %v6351
        %v7872 = vunpack.c.h.b16 %v6351
        %v7873 = vunpack.c.l.b16 %v6352
        %v7874 = vunpack.c.h.b16 %v6352
        %v7875 = vunpack.c.l.b16 %v6353
        %v7876 = vunpack.c.h.b16 %v6353
        %v7877 = vunpack.c.l.b16 %v6354
        %v7878 = vunpack.c.h.b16 %v6354
        %v7879 = vunpack.c.l.b16 %v6355
        %v7880 = vunpack.c.h.b16 %v6355
        %v7881 = vunpack.c.l.b16 %v6356
        %v7882 = vunpack.c.h.b16 %v6356
        %v7883 = vunpack.c.l.b16 %v6357
        %v7884 = vunpack.c.h.b16 %v6357
        %v7885 = vunpack.c.l.b16 %v6358
        %v7886 = vunpack.c.h.b16 %v6358
        %v7887 = vunpack.c.l.b16 %v6359
        %v7888 = vunpack.c.h.b16 %v6359
        %v7889 = vunpack.c.l.b16 %v6360
        %v7890 = vunpack.c.h.b16 %v6360
        %v7891 = vunpack.c.l.b16 %v6361
        %v7892 = vunpack.c.h.b16 %v6361
        %v7893 = vunpack.c.l.b16 %v6362
        %v7894 = vunpack.c.h.b16 %v6362
        %v7895 = vunpack.c.l.b16 %v6363
        %v7896 = vunpack.c.h.b16 %v6363
        %v7897 = vunpack.c.l.b16 %v6364
        %v7898 = vunpack.c.h.b16 %v6364
        %v7899 = vunpack.c.l.b16 %v6365
        %v7900 = vunpack.c.h.b16 %v6365
        %v7901 = vunpack.c.l.b16 %v6366
        %v7902 = vunpack.c.h.b16 %v6366
        %v7903 = vunpack.c.l.b16 %v6367
        %v7904 = vunpack.c.h.b16 %v6367
        %v7905 = vunpack.c.l.b16 %v6368
        %v7906 = vunpack.c.h.b16 %v6368
        %v7907 = vunpack.c.l.b16 %v6369
        %v7908 = vunpack.c.h.b16 %v6369
        %v7909 = vunpack.c.l.b16 %v6370
        %v7910 = vunpack.c.h.b16 %v6370
        %v7911 = vunpack.c.l.b16 %v6371
        %v7912 = vunpack.c.h.b16 %v6371
        %v7913 = vunpack.c.l.b16 %v6372
        %v7914 = vunpack.c.h.b16 %v6372
        %v7915 = vunpack.c.l.b16 %v6373
        %v7916 = vunpack.c.h.b16 %v6373
        %v7917 = vunpack.c.l.b16 %v6374
        %v7918 = vunpack.c.h.b16 %v6374
        %v7919 = vunpack.c.l.b16 %v6375
        %v7920 = vunpack.c.h.b16 %v6375
        %v7921 = vunpack.c.l.b16 %v6376
        %v7922 = vunpack.c.h.b16 %v6376
        %v7923 = vunpack.c.l.b16 %v6377
        %v7924 = vunpack.c.h.b16 %v6377
        %v7925 = vunpack.c.l.b16 %v6378
        %v7926 = vunpack.c.h.b16 %v6378
        %v7927 = vunpack.c.l.b16 %v6379
        %v7928 = vunpack.c.h.b16 %v6379
        %v7929 = vunpack.c.l.b16 %v6380
        %v7930 = vunpack.c.h.b16 %v6380
        %v7931 = vunpack.c.l.b16 %v6381
        %v7932 = vunpack.c.h.b16 %v6381
        %v7933 = vunpack.c.l.b16 %v6382
        %v7934 = vunpack.c.h.b16 %v6382
        %v7935 = vunpack.c.l.b16 %v6383
        %v7936 = vunpack.c.h.b16 %v6383
        %v7937 = vunpack.c.l.b16 %v6384
        %v7938 = vunpack.c.h.b16 %v6384
        %v7939 = vunpack.c.l.b16 %v6385
        %v7940 = vunpack.c.h.b16 %v6385
        %v7941 = vunpack.c.l.b16 %v6386
        %v7942 = vunpack.c.h.b16 %v6386
        %v7943 = vunpack.c.l.b16 %v6387
        %v7944 = vunpack.c.h.b16 %v6387
        %v7945 = vunpack.c.l.b16 %v6388
        %v7946 = vunpack.c.h.b16 %v6388
        %v7947 = vunpack.c.l.b16 %v6389
        %v7948 = vunpack.c.h.b16 %v6389
        %v7949 = vunpack.c.l.b16 %v6390
        %v7950 = vunpack.c.h.b16 %v6390
        %v7951 = vunpack.c.l.b16 %v6391
        %v7952 = vunpack.c.h.b16 %v6391
        %v7953 = vunpack.c.l.b16 %v6392
        %v7954 = vunpack.c.h.b16 %v6392
        %v7955 = vunpack.c.l.b16 %v6393
        %v7956 = vunpack.c.h.b16 %v6393
        %v7957 = vunpack.c.l.b16 %v6394
        %v7958 = vunpack.c.h.b16 %v6394
        %v7959 = vunpack.c.l.b16 %v6395
        %v7960 = vunpack.c.h.b16 %v6395
        %v7961 = vunpack.c.l.b16 %v6396
        %v7962 = vunpack.c.h.b16 %v6396
        %v7963 = vunpack.c.l.b16 %v6397
        %v7964 = vunpack.c.h.b16 %v6397
        %v7965 = vunpack.c.l.b16 %v6398
        %v7966 = vunpack.c.h.b16 %v6398
        %v7967 = vunpack.c.l.b16 %v6399
        %v7968 = vunpack.c.h.b16 %v6399
        %v7969 = vunpack.c.l.b16 %v6400
        %v7970 = vunpack.c.h.b16 %v6400
        %v7971 = vunpack.c.l.b16 %v6401
        %v7972 = vunpack.c.h.b16 %v6401
        %v7973 = vunpack.c.l.b16 %v6402
        %v7974 = vunpack.c.h.b16 %v6402
        %v7975 = vunpack.c.l.b16 %v6403
        %v7976 = vunpack.c.h.b16 %v6403
        %v7977 = vunpack.c.l.b16 %v6404
        %v7978 = vunpack.c.h.b16 %v6404
        %v7979 = vunpack.c.l.b16 %v6405
        %v7980 = vunpack.c.h.b16 %v6405
        %v7981 = vunpack.c.l.b16 %v6406
        %v7982 = vunpack.c.h.b16 %v6406
        %v7983 = vunpack.c.l.b16 %v6407
        %v7984 = vunpack.c.h.b16 %v6407
        %v7985 = vunpack.c.l.b16 %v6408
        %v7986 = vunpack.c.h.b16 %v6408
        %v7987 = vunpack.c.l.b16 %v6409
        %v7988 = vunpack.c.h.b16 %v6409
        %v7989 = vunpack.c.l.b16 %v6410
        %v7990 = vunpack.c.h.b16 %v6410
        %v7991 = vunpack.c.l.b16 %v6411
        %v7992 = vunpack.c.h.b16 %v6411
        %v7993 = vunpack.c.l.b16 %v6412
        %v7994 = vunpack.c.h.b16 %v6412
        %v7995 = vunpack.c.l.b16 %v6413
        %v7996 = vunpack.c.h.b16 %v6413
        %v7997 = vunpack.c.l.b16 %v6414
        %v7998 = vunpack.c.h.b16 %v6414
        %v7999 = vunpack.c.l.b16 %v6415
        %v8000 = vunpack.c.h.b16 %v6415
        %v8001 = vunpack.c.l.b16 %v6416
        %v8002 = vunpack.c.h.b16 %v6416
        %v8003 = vunpack.c.l.b16 %v6417
        %v8004 = vunpack.c.h.b16 %v6417
        %v8005 = vunpack.c.l.b16 %v6418
        %v8006 = vunpack.c.h.b16 %v6418
        %v8007 = vunpack.c.l.b16 %v6419
        %v8008 = vunpack.c.h.b16 %v6419
        %v8009 = vunpack.c.l.b16 %v6420
        %v8010 = vunpack.c.h.b16 %v6420
        %v8011 = vunpack.c.l.b16 %v6421
        %v8012 = vunpack.c.h.b16 %v6421
        %v8013 = vunpack.c.l.b16 %v6422
        %v8014 = vunpack.c.h.b16 %v6422
        %v8015 = vunpack.c.l.b16 %v6423
        %v8016 = vunpack.c.h.b16 %v6423
        %v8017 = vunpack.c.l.b16 %v6424
        %v8018 = vunpack.c.h.b16 %v6424
        %v8019 = vunpack.c.l.b16 %v6425
        %v8020 = vunpack.c.h.b16 %v6425
        %v8021 = vunpack.c.l.b16 %v6426
        %v8022 = vunpack.c.h.b16 %v6426
        %v8023 = vunpack.c.l.b16 %v6427
        %v8024 = vunpack.c.h.b16 %v6427
        %v8025 = vunpack.c.l.b16 %v6428
        %v8026 = vunpack.c.h.b16 %v6428
        %v8027 = vunpack.c.l.b16 %v6429
        %v8028 = vunpack.c.h.b16 %v6429
        %v8029 = vunpack.c.l.b16 %v6430
        %v8030 = vunpack.c.h.b16 %v6430
        %v8031 = vunpack.c.l.b16 %v6431
        %v8032 = vunpack.c.h.b16 %v6431
        %v8033 = vunpack.c.l.b16 %v6432
        %v8034 = vunpack.c.h.b16 %v6432
        %v8035 = vunpack.c.l.b16 %v6433
        %v8036 = vunpack.c.h.b16 %v6433
        %v8037 = vunpack.c.l.b16 %v6434
        %v8038 = vunpack.c.h.b16 %v6434
        %v8039 = vunpack.c.l.b16 %v6435
        %v8040 = vunpack.c.h.b16 %v6435
        %v8041 = vunpack.c.l.b16 %v6436
        %v8042 = vunpack.c.h.b16 %v6436
        %v8043 = vunpack.c.l.b16 %v6437
        %v8044 = vunpack.c.h.b16 %v6437
        %v8045 = vunpack.c.l.b16 %v6438
        %v8046 = vunpack.c.h.b16 %v6438
        %v8047 = vunpack.c.l.b16 %v6439
        %v8048 = vunpack.c.h.b16 %v6439
        %v8049 = vunpack.c.l.b16 %v6440
        %v8050 = vunpack.c.h.b16 %v6440
        %v8051 = vunpack.c.l.b16 %v6441
        %v8052 = vunpack.c.h.b16 %v6441
        %v8053 = vunpack.c.l.b16 %v6442
        %v8054 = vunpack.c.h.b16 %v6442
        %v8055 = vunpack.c.l.b16 %v6443
        %v8056 = vunpack.c.h.b16 %v6443
        %v8057 = vunpack.c.l.b16 %v6444
        %v8058 = vunpack.c.h.b16 %v6444
        %v8059 = vunpack.c.l.b16 %v6445
        %v8060 = vunpack.c.h.b16 %v6445
        %v8061 = vunpack.c.l.b16 %v6446
        %v8062 = vunpack.c.h.b16 %v6446
        %v8063 = vunpack.c.l.b16 %v6447
        %v8064 = vunpack.c.h.b16 %v6447
        %v8065 = vunpack.c.l.b16 %v6448
        %v8066 = vunpack.c.h.b16 %v6448
        %v8067 = vunpack.c.l.b16 %v6449
        %v8068 = vunpack.c.h.b16 %v6449
        %v8069 = vunpack.c.l.b16 %v6450
        %v8070 = vunpack.c.h.b16 %v6450
        %v8071 = vunpack.c.l.b16 %v6451
        %v8072 = vunpack.c.h.b16 %v6451
        %v8073 = vunpack.c.l.b16 %v6452
        %v8074 = vunpack.c.h.b16 %v6452
        %v8075 = vunpack.c.l.b16 %v6453
        %v8076 = vunpack.c.h.b16 %v6453
        %v8077 = vunpack.c.l.b16 %v6454
        %v8078 = vunpack.c.h.b16 %v6454
        %v8079 = vunpack.c.l.b16 %v6455
        %v8080 = vunpack.c.h.b16 %v6455
        %v8081 = vunpack.c.l.b16 %v6456
        %v8082 = vunpack.c.h.b16 %v6456
        %v8083 = vunpack.c.l.b16 %v6457
        %v8084 = vunpack.c.h.b16 %v6457
        %v8085 = vunpack.c.l.b16 %v6458
        %v8086 = vunpack.c.h.b16 %v6458
        %v8087 = vunpack.c.l.b16 %v6459
        %v8088 = vunpack.c.h.b16 %v6459
        %v8089 = vunpack.c.l.b16 %v6460
        %v8090 = vunpack.c.h.b16 %v6460
        %v8091 = vunpack.c.l.b16 %v6461
        %v8092 = vunpack.c.h.b16 %v6461
        %v8093 = vunpack.c.l.b16 %v6462
        %v8094 = vunpack.c.h.b16 %v6462
        %v8095 = vunpack.c.l.b16 %v6463
        %v8096 = vunpack.c.h.b16 %v6463
        %v8097 = vunpack.c.l.b16 %v6464
        %v8098 = vunpack.c.h.b16 %v6464
        %v8099 = vunpack.c.l.b16 %v6465
        %v8100 = vunpack.c.h.b16 %v6465
        %v8101 = vunpack.c.l.b16 %v6466
        %v8102 = vunpack.c.h.b16 %v6466
        %v8103 = vunpack.c.l.b16 %v6467
        %v8104 = vunpack.c.h.b16 %v6467
        %v8105 = vunpack.c.l.b16 %v6468
        %v8106 = vunpack.c.h.b16 %v6468
        %v8107 = vunpack.c.l.b16 %v6469
        %v8108 = vunpack.c.h.b16 %v6469
        %v8109 = vunpack.c.l.b16 %v6470
        %v8110 = vunpack.c.h.b16 %v6470
        %v8111 = vunpack.c.l.b16 %v6471
        %v8112 = vunpack.c.h.b16 %v6471
        %v8113 = vunpack.c.l.b16 %v6472
        %v8114 = vunpack.c.h.b16 %v6472
        %v8115 = vunpack.c.l.b16 %v6473
        %v8116 = vunpack.c.h.b16 %v6473
        %v8117 = vunpack.c.l.b16 %v6474
        %v8118 = vunpack.c.h.b16 %v6474
        %v8119 = vunpack.c.l.b16 %v6475
        %v8120 = vunpack.c.h.b16 %v6475
        %v8121 = vunpack.c.l.b16 %v6476
        %v8122 = vunpack.c.h.b16 %v6476
        %v8123 = vunpack.c.l.b16 %v6477
        %v8124 = vunpack.c.h.b16 %v6477
        %v8125 = vunpack.c.l.b16 %v6478
        %v8126 = vunpack.c.h.b16 %v6478
        %v8127 = vunpack.c.l.b16 %v6479
        %v8128 = vunpack.c.h.b16 %v6479
        %v8129 = vunpack.c.l.b16 %v6480
        %v8130 = vunpack.c.h.b16 %v6480
        %v8131 = vunpack.c.l.b16 %v6481
        %v8132 = vunpack.c.h.b16 %v6481
        %v8133 = vunpack.c.l.b16 %v6482
        %v8134 = vunpack.c.h.b16 %v6482
        %v8135 = vunpack.c.l.b16 %v6483
        %v8136 = vunpack.c.h.b16 %v6483
        %v8137 = vunpack.c.l.b16 %v6484
        %v8138 = vunpack.c.h.b16 %v6484
        %v8139 = vunpack.c.l.b16 %v6485
        %v8140 = vunpack.c.h.b16 %v6485
        %v8141 = vunpack.c.l.b16 %v6486
        %v8142 = vunpack.c.h.b16 %v6486
        %v8143 = vunpack.c.l.b16 %v6487
        %v8144 = vunpack.c.h.b16 %v6487
        %v8145 = vunpack.c.l.b16 %v6488
        %v8146 = vunpack.c.h.b16 %v6488
        %v8147 = vunpack.c.l.b16 %v6489
        %v8148 = vunpack.c.h.b16 %v6489
        %v8149 = vunpack.c.l.b16 %v6490
        %v8150 = vunpack.c.h.b16 %v6490
        %v8151 = vunpack.c.l.b16 %v6491
        %v8152 = vunpack.c.h.b16 %v6491
        %v8153 = vunpack.c.l.b16 %v6492
        %v8154 = vunpack.c.h.b16 %v6492
        %v8155 = vunpack.c.l.b16 %v6493
        %v8156 = vunpack.c.h.b16 %v6493
        %v8157 = vunpack.c.l.b16 %v6494
        %v8158 = vunpack.c.h.b16 %v6494
        %v8159 = vunpack.c.l.b16 %v6495
        %v8160 = vunpack.c.h.b16 %v6495
        %v8161 = vunpack.c.l.b16 %v6496
        %v8162 = vunpack.c.h.b16 %v6496
        %v8163 = vunpack.c.l.b16 %v6497
        %v8164 = vunpack.c.h.b16 %v6497
        %v8165 = vunpack.c.l.b16 %v6498
        %v8166 = vunpack.c.h.b16 %v6498
        %v8167 = vunpack.c.l.b16 %v6499
        %v8168 = vunpack.c.h.b16 %v6499
        %v8169 = vunpack.c.l.b16 %v6500
        %v8170 = vunpack.c.h.b16 %v6500
        %v8171 = vunpack.c.l.b16 %v6501
        %v8172 = vunpack.c.h.b16 %v6501
        %v8173 = vunpack.c.l.b16 %v6502
        %v8174 = vunpack.c.h.b16 %v6502
        %v8175 = vunpack.c.l.b16 %v6503
        %v8176 = vunpack.c.h.b16 %v6503
        %v8177 = vunpack.c.l.b16 %v6504
        %v8178 = vunpack.c.h.b16 %v6504
        %v8179 = vunpack.c.l.b16 %v6505
        %v8180 = vunpack.c.h.b16 %v6505
        %v8181 = vunpack.c.l.b16 %v6506
        %v8182 = vunpack.c.h.b16 %v6506
        %v8183 = vunpack.c.l.b16 %v6507
        %v8184 = vunpack.c.h.b16 %v6507
        %v8185 = vunpack.c.l.b16 %v6508
        %v8186 = vunpack.c.h.b16 %v6508
        %v8187 = vunpack.c.l.b16 %v6509
        %v8188 = vunpack.c.h.b16 %v6509
        %v8189 = vunpack.c.l.b16 %v6510
        %v8190 = vunpack.c.h.b16 %v6510
        %v8191 = vunpack.c.l.b16 %v6511
        %v8192 = vunpack.c.h.b16 %v6511
        %v8193 = vunpack.c.l.b16 %v6512
        %v8194 = vunpack.c.h.b16 %v6512
        %v8195 = vunpack.c.l.b16 %v6513
        %v8196 = vunpack.c.h.b16 %v6513
        %v8197 = vunpack.c.l.b16 %v6514
        %v8198 = vunpack.c.h.b16 %v6514
        %v8199 = vunpack.c.l.b16 %v6515
        %v8200 = vunpack.c.h.b16 %v6515
        %v8201 = vunpack.c.l.b16 %v6516
        %v8202 = vunpack.c.h.b16 %v6516
        %v8203 = vunpack.c.l.b16 %v6517
        %v8204 = vunpack.c.h.b16 %v6517
        %v8205 = vunpack.c.l.b16 %v6518
        %v8206 = vunpack.c.h.b16 %v6518
        %v8207 = vunpack.c.l.b16 %v6519
        %v8208 = vunpack.c.h.b16 %v6519
        %v8209 = vunpack.c.l.b16 %v6520
        %v8210 = vunpack.c.h.b16 %v6520
        %v8211 = vunpack.c.l.b16 %v6521
        %v8212 = vunpack.c.h.b16 %v6521
        %v8213 = vunpack.c.l.b16 %v6522
        %v8214 = vunpack.c.h.b16 %v6522
        %v8215 = vunpack.c.l.b16 %v6523
        %v8216 = vunpack.c.h.b16 %v6523
        %v8217 = vunpack.c.l.b16 %v6524
        %v8218 = vunpack.c.h.b16 %v6524
        %v8219 = vunpack.c.l.b16 %v6525
        %v8220 = vunpack.c.h.b16 %v6525
        %v8221 = vunpack.c.l.b16 %v6526
        %v8222 = vunpack.c.h.b16 %v6526
        %v8223 = vunpack.c.l.b16 %v6527
        %v8224 = vunpack.c.h.b16 %v6527
        %v8225 = vunpack.c.l.b16 %v6528
        %v8226 = vunpack.c.h.b16 %v6528
        %v8227 = vunpack.c.l.b16 %v6529
        %v8228 = vunpack.c.h.b16 %v6529
        %v8229 = vunpack.c.l.b16 %v6530
        %v8230 = vunpack.c.h.b16 %v6530
        %v8231 = vunpack.c.l.b16 %v6531
        %v8232 = vunpack.c.h.b16 %v6531
        %v8233 = vunpack.c.l.b16 %v6532
        %v8234 = vunpack.c.h.b16 %v6532
        %v8235 = vunpack.c.l.b16 %v6533
        %v8236 = vunpack.c.h.b16 %v6533
        %v8237 = vunpack.c.l.b16 %v6534
        %v8238 = vunpack.c.h.b16 %v6534
        %v8239 = vunpack.c.l.b16 %v6535
        %v8240 = vunpack.c.h.b16 %v6535
        %v8241 = vunpack.c.l.b16 %v6536
        %v8242 = vunpack.c.h.b16 %v6536
        %v8243 = vunpack.c.l.b16 %v6537
        %v8244 = vunpack.c.h.b16 %v6537
        %v8245 = vunpack.c.l.b16 %v6538
        %v8246 = vunpack.c.h.b16 %v6538
        %v8247 = vunpack.c.l.b16 %v6539
        %v8248 = vunpack.c.h.b16 %v6539
        %v8249 = vunpack.c.l.b16 %v6540
        %v8250 = vunpack.c.h.b16 %v6540
        %v8251 = vunpack.c.l.b16 %v6541
        %v8252 = vunpack.c.h.b16 %v6541
        %v8253 = vunpack.c.l.b16 %v6542
        %v8254 = vunpack.c.h.b16 %v6542
        %v8255 = vunpack.c.l.b16 %v6543
        %v8256 = vunpack.c.h.b16 %v6543
        %v8257 = vunpack.c.l.b16 %v6544
        %v8258 = vunpack.c.h.b16 %v6544
        %v8259 = vunpack.c.l.b16 %v6545
        %v8260 = vunpack.c.h.b16 %v6545
        %v8261 = vunpack.c.l.b16 %v6546
        %v8262 = vunpack.c.h.b16 %v6546
        %v8263 = vunpack.c.l.b16 %v6547
        %v8264 = vunpack.c.h.b16 %v6547
        %v8265 = vunpack.c.l.b16 %v6548
        %v8266 = vunpack.c.h.b16 %v6548
        %v8267 = vunpack.c.l.b16 %v6549
        %v8268 = vunpack.c.h.b16 %v6549
        %v8269 = vunpack.c.l.b16 %v6550
        %v8270 = vunpack.c.h.b16 %v6550
        %v8271 = vunpack.c.l.b16 %v6551
        %v8272 = vunpack.c.h.b16 %v6551
        %v8273 = vunpack.c.l.b16 %v6552
        %v8274 = vunpack.c.h.b16 %v6552
        %v8275 = vunpack.c.l.b16 %v6553
        %v8276 = vunpack.c.h.b16 %v6553
        %v8277 = vunpack.c.l.b16 %v6554
        %v8278 = vunpack.c.h.b16 %v6554
        %v8279 = vunpack.c.l.b16 %v6555
        %v8280 = vunpack.c.h.b16 %v6555
        %v8281 = vunpack.c.l.b16 %v6556
        %v8282 = vunpack.c.h.b16 %v6556
        %v8283 = vunpack.c.l.b16 %v6557
        %v8284 = vunpack.c.h.b16 %v6557
        %v8285 = vunpack.c.l.b16 %v6558
        %v8286 = vunpack.c.h.b16 %v6558
        %v8287 = vunpack.c.l.b16 %v6559
        %v8288 = vunpack.c.h.b16 %v6559
        %v8289 = vunpack.c.l.b16 %v6560
        %v8290 = vunpack.c.h.b16 %v6560
        %v8291 = vunpack.c.l.b16 %v6561
        %v8292 = vunpack.c.h.b16 %v6561
        %v8293 = vunpack.c.l.b16 %v6562
        %v8294 = vunpack.c.h.b16 %v6562
        %v8295 = vunpack.c.l.b16 %v6563
        %v8296 = vunpack.c.h.b16 %v6563
        %v8297 = vunpack.c.l.b16 %v6564
        %v8298 = vunpack.c.h.b16 %v6564
        %v8299 = vunpack.c.l.b16 %v6565
        %v8300 = vunpack.c.h.b16 %v6565
        %v8301 = vunpack.c.l.b16 %v6566
        %v8302 = vunpack.c.h.b16 %v6566
        %v8303 = vunpack.c.l.b16 %v6567
        %v8304 = vunpack.c.h.b16 %v6567
        %v8305 = vunpack.c.l.b16 %v6568
        %v8306 = vunpack.c.h.b16 %v6568
        %v8307 = vunpack.c.l.b16 %v6569
        %v8308 = vunpack.c.h.b16 %v6569
        %v8309 = vunpack.c.l.b16 %v6570
        %v8310 = vunpack.c.h.b16 %v6570
        %v8311 = vpack.c.b16 %v7161, %v7159
        %v8312 = vpack.c.b16 %v7162, %v7160
        %v8313 = vpack.c.b16 %v7165, %v7163
        %v8314 = vpack.c.b16 %v7166, %v7164
        %v8315 = vpack.c.b16 %v7169, %v7167
        %v8316 = vpack.c.b16 %v7170, %v7168
        %v8317 = vpack.c.b16 %v7173, %v7171
        %v8318 = vpack.c.b16 %v7174, %v7172
        %v8319 = vpack.c.b16 %v7177, %v7175
        %v8320 = vpack.c.b16 %v7178, %v7176
        %v8321 = vpack.c.b16 %v7181, %v7179
        %v8322 = vpack.c.b16 %v7182, %v7180
        %v8323 = vpack.c.b16 %v7185, %v7183
        %v8324 = vpack.c.b16 %v7186, %v7184
        %v8325 = vpack.c.b16 %v7189, %v7187
        %v8326 = vpack.c.b16 %v7190, %v7188
        %v8327 = vpack.c.b16 %v7193, %v7191
        %v8328 = vpack.c.b16 %v7194, %v7192
        %v8329 = vpack.c.b16 %v7197, %v7195
        %v8330 = vpack.c.b16 %v7198, %v7196
        %v8331 = vpack.c.b16 %v7201, %v7199
        %v8332 = vpack.c.b16 %v7202, %v7200
        %v8333 = vpack.c.b16 %v7205, %v7203
        %v8334 = vpack.c.b16 %v7206, %v7204
        %v8335 = vpack.c.b16 %v7209, %v7207
        %v8336 = vpack.c.b16 %v7210, %v7208
        %v8337 = vpack.c.b16 %v7213, %v7211
        %v8338 = vpack.c.b16 %v7214, %v7212
        %v8339 = vpack.c.b16 %v7217, %v7215
        %v8340 = vpack.c.b16 %v7218, %v7216
        %v8341 = vpack.c.b16 %v7221, %v7219
        %v8342 = vpack.c.b16 %v7222, %v7220
        %v8343 = vpack.c.b16 %v7225, %v7223
        %v8344 = vpack.c.b16 %v7226, %v7224
        %v8345 = vpack.c.b16 %v7229, %v7227
        %v8346 = vpack.c.b16 %v7230, %v7228
        %v8347 = vpack.c.b16 %v7233, %v7231
        %v8348 = vpack.c.b16 %v7234, %v7232
        %v8349 = vpack.c.b16 %v7237, %v7235
        %v8350 = vpack.c.b16 %v7238, %v7236
        %v8351 = vpack.c.b16 %v7241, %v7239
        %v8352 = vpack.c.b16 %v7242, %v7240
        %v8353 = vpack.c.b16 %v7245, %v7243
        %v8354 = vpack.c.b16 %v7246, %v7244
        %v8355 = vpack.c.b16 %v7249, %v7247
        %v8356 = vpack.c.b16 %v7250, %v7248
        %v8357 = vpack.c.b16 %v7253, %v7251
        %v8358 = vpack.c.b16 %v7254, %v7252
        %v8359 = vpack.c.b16 %v7257, %v7255
        %v8360 = vpack.c.b16 %v7258, %v7256
        %v8361 = vpack.c.b16 %v7261, %v7259
        %v8362 = vpack.c.b16 %v7262, %v7260
        %v8363 = vpack.c.b16 %v7265, %v7263
        %v8364 = vpack.c.b16 %v7266, %v7264
        %v8365 = vpack.c.b16 %v7269, %v7267
        %v8366 = vpack.c.b16 %v7270, %v7268
        %v8367 = vpack.c.b16 %v7273, %v7271
        %v8368 = vpack.c.b16 %v7274, %v7272
        %v8369 = vpack.c.b16 %v7277, %v7275
        %v8370 = vpack.c.b16 %v7278, %v7276
        %v8371 = vpack.c.b16 %v7281, %v7279
        %v8372 = vpack.c.b16 %v7282, %v7280
        %v8373 = vpack.c.b16 %v7285, %v7283
        %v8374 = vpack.c.b16 %v7286, %v7284
        %v8375 = vpack.c.b16 %v7289, %v7287
        %v8376 = vpack.c.b16 %v7290, %v7288
        %v8377 = vpack.c.b16 %v7293, %v7291
        %v8378 = vpack.c.b16 %v7294, %v7292
        %v8379 = vpack.c.b16 %v7297, %v7295
        %v8380 = vpack.c.b16 %v7298, %v7296
        %v8381 = vpack.c.b16 %v7301, %v7299
        %v8382 = vpack.c.b16 %v7302, %v7300
        %v8383 = vpack.c.b16 %v7305, %v7303
        %v8384 = vpack.c.b16 %v7306, %v7304
        %v8385 = vpack.c.b16 %v7309, %v7307
        %v8386 = vpack.c.b16 %v7310, %v7308
        %v8387 = vpack.c.b16 %v7313, %v7311
        %v8388 = vpack.c.b16 %v7314, %v7312
        %v8389 = vpack.c.b16 %v7317, %v7315
        %v8390 = vpack.c.b16 %v7318, %v7316
        %v8391 = vpack.c.b16 %v7321, %v7319
        %v8392 = vpack.c.b16 %v7322, %v7320
        %v8393 = vpack.c.b16 %v7325, %v7323
        %v8394 = vpack.c.b16 %v7326, %v7324
        %v8395 = vpack.c.b16 %v7329, %v7327
        %v8396 = vpack.c.b16 %v7330, %v7328
        %v8397 = vpack.c.b16 %v7333, %v7331
        %v8398 = vpack.c.b16 %v7334, %v7332
        %v8399 = vpack.c.b16 %v7337, %v7335
        %v8400 = vpack.c.b16 %v7338, %v7336
        %v8401 = vpack.c.b16 %v7341, %v7339
        %v8402 = vpack.c.b16 %v7342, %v7340
        %v8403 = vpack.c.b16 %v7345, %v7343
        %v8404 = vpack.c.b16 %v7346, %v7344
        %v8405 = vpack.c.b16 %v7349, %v7347
        %v8406 = vpack.c.b16 %v7350, %v7348
        %v8407 = vpack.c.b16 %v7353, %v7351
        %v8408 = vpack.c.b16 %v7354, %v7352
        %v8409 = vpack.c.b16 %v7357, %v7355
        %v8410 = vpack.c.b16 %v7358, %v7356
        %v8411 = vpack.c.b16 %v7361, %v7359
        %v8412 = vpack.c.b16 %v7362, %v7360
        %v8413 = vpack.c.b16 %v7365, %v7363
        %v8414 = vpack.c.b16 %v7366, %v7364
        %v8415 = vpack.c.b16 %v7369, %v7367
        %v8416 = vpack.c.b16 %v7370, %v7368
        %v8417 = vpack.c.b16 %v7373, %v7371
        %v8418 = vpack.c.b16 %v7374, %v7372
        %v8419 = vpack.c.b16 %v7377, %v7375
        %v8420 = vpack.c.b16 %v7378, %v7376
        %v8421 = vpack.c.b16 %v7381, %v7379
        %v8422 = vpack.c.b16 %v7382, %v7380
        %v8423 = vpack.c.b16 %v7385, %v7383
        %v8424 = vpack.c.b16 %v7386, %v7384
        %v8425 = vpack.c.b16 %v7389, %v7387
        %v8426 = vpack.c.b16 %v7390, %v7388
        %v8427 = vpack.c.b16 %v7393, %v7391
        %v8428 = vpack.c.b16 %v7394, %v7392
        %v8429 = vpack.c.b16 %v7397, %v7395
        %v8430 = vpack.c.b16 %v7398, %v7396
        %v8431 = vpack.c.b16 %v7401, %v7399
        %v8432 = vpack.c.b16 %v7402, %v7400
        %v8433 = vpack.c.b16 %v7405, %v7403
        %v8434 = vpack.c.b16 %v7406, %v7404
        %v8435 = vpack.c.b16 %v7409, %v7407
        %v8436 = vpack.c.b16 %v7410, %v7408
        %v8437 = vpack.c.b16 %v7413, %v7411
        %v8438 = vpack.c.b16 %v7414, %v7412
        %v8439 = vpack.c.b16 %v7417, %v7415
        %v8440 = vpack.c.b16 %v7418, %v7416
        %v8441 = vpack.c.b16 %v7421, %v7419
        %v8442 = vpack.c.b16 %v7422, %v7420
        %v8443 = vpack.c.b16 %v7425, %v7423
        %v8444 = vpack.c.b16 %v7426, %v7424
        %v8445 = vpack.c.b16 %v7429, %v7427
        %v8446 = vpack.c.b16 %v7430, %v7428
        %v8447 = vpack.c.b16 %v7433, %v7431
        %v8448 = vpack.c.b16 %v7434, %v7432
        %v8449 = vpack.c.b16 %v7437, %v7435
        %v8450 = vpack.c.b16 %v7438, %v7436
        %v8451 = vpack.c.b16 %v7441, %v7439
        %v8452 = vpack.c.b16 %v7442, %v7440
        %v8453 = vpack.c.b16 %v7445, %v7443
        %v8454 = vpack.c.b16 %v7446, %v7444
        %v8455 = vpack.c.b16 %v7449, %v7447
        %v8456 = vpack.c.b16 %v7450, %v7448
        %v8457 = vpack.c.b16 %v7453, %v7451
        %v8458 = vpack.c.b16 %v7454, %v7452
        %v8459 = vpack.c.b16 %v7457, %v7455
        %v8460 = vpack.c.b16 %v7458, %v7456
        %v8461 = vpack.c.b16 %v7461, %v7459
        %v8462 = vpack.c.b16 %v7462, %v7460
        %v8463 = vpack.c.b16 %v7465, %v7463
        %v8464 = vpack.c.b16 %v7466, %v7464
        %v8465 = vpack.c.b16 %v7469, %v7467
        %v8466 = vpack.c.b16 %v7470, %v7468
        %v8467 = vpack.c.b16 %v7473, %v7471
        %v8468 = vpack.c.b16 %v7474, %v7472
        %v8469 = vpack.c.b16 %v7477, %v7475
        %v8470 = vpack.c.b16 %v7478, %v7476
        %v8471 = vpack.c.b16 %v7481, %v7479
        %v8472 = vpack.c.b16 %v7482, %v7480
        %v8473 = vpack.c.b16 %v7485, %v7483
        %v8474 = vpack.c.b16 %v7486, %v7484
        %v8475 = vpack.c.b16 %v7489, %v7487
        %v8476 = vpack.c.b16 %v7490, %v7488
        %v8477 = vpack.c.b16 %v7493, %v7491
        %v8478 = vpack.c.b16 %v7494, %v7492
        %v8479 = vpack.c.b16 %v7497, %v7495
        %v8480 = vpack.c.b16 %v7498, %v7496
        %v8481 = vpack.c.b16 %v7501, %v7499
        %v8482 = vpack.c.b16 %v7502, %v7500
        %v8483 = vpack.c.b16 %v7505, %v7503
        %v8484 = vpack.c.b16 %v7506, %v7504
        %v8485 = vpack.c.b16 %v7509, %v7507
        %v8486 = vpack.c.b16 %v7510, %v7508
        %v8487 = vpack.c.b16 %v7513, %v7511
        %v8488 = vpack.c.b16 %v7514, %v7512
        %v8489 = vpack.c.b16 %v7517, %v7515
        %v8490 = vpack.c.b16 %v7518, %v7516
        %v8491 = vpack.c.b16 %v7521, %v7519
        %v8492 = vpack.c.b16 %v7522, %v7520
        %v8493 = vpack.c.b16 %v7525, %v7523
        %v8494 = vpack.c.b16 %v7526, %v7524
        %v8495 = vpack.c.b16 %v7529, %v7527
        %v8496 = vpack.c.b16 %v7530, %v7528
        %v8497 = vpack.c.b16 %v7533, %v7531
        %v8498 = vpack.c.b16 %v7534, %v7532
        %v8499 = vpack.c.b16 %v7537, %v7535
        %v8500 = vpack.c.b16 %v7538, %v7536
        %v8501 = vpack.c.b16 %v7541, %v7539
        %v8502 = vpack.c.b16 %v7542, %v7540
        %v8503 = vpack.c.b16 %v7545, %v7543
        %v8504 = vpack.c.b16 %v7546, %v7544
        %v8505 = vpack.c.b16 %v7549, %v7547
        %v8506 = vpack.c.b16 %v7550, %v7548
        %v8507 = vpack.c.b16 %v7553, %v7551
        %v8508 = vpack.c.b16 %v7554, %v7552
        %v8509 = vpack.c.b16 %v7557, %v7555
        %v8510 = vpack.c.b16 %v7558, %v7556
        %v8511 = vpack.c.b16 %v7561, %v7559
        %v8512 = vpack.c.b16 %v7562, %v7560
        %v8513 = vpack.c.b16 %v7565, %v7563
        %v8514 = vpack.c.b16 %v7566, %v7564
        %v8515 = vpack.c.b16 %v7569, %v7567
        %v8516 = vpack.c.b16 %v7570, %v7568
        %v8517 = vpack.c.b16 %v7573, %v7571
        %v8518 = vpack.c.b16 %v7574, %v7572
        %v8519 = vpack.c.b16 %v7577, %v7575
        %v8520 = vpack.c.b16 %v7578, %v7576
        %v8521 = vpack.c.b16 %v7581, %v7579
        %v8522 = vpack.c.b16 %v7582, %v7580
        %v8523 = vpack.c.b16 %v7585, %v7583
        %v8524 = vpack.c.b16 %v7586, %v7584
        %v8525 = vpack.c.b16 %v7589, %v7587
        %v8526 = vpack.c.b16 %v7590, %v7588
        %v8527 = vpack.c.b16 %v7593, %v7591
        %v8528 = vpack.c.b16 %v7594, %v7592
        %v8529 = vpack.c.b16 %v7597, %v7595
        %v8530 = vpack.c.b16 %v7598, %v7596
        %v8531 = vpack.c.b16 %v7601, %v7599
        %v8532 = vpack.c.b16 %v7602, %v7600
        %v8533 = vpack.c.b16 %v7605, %v7603
        %v8534 = vpack.c.b16 %v7606, %v7604
        %v8535 = vpack.c.b16 %v7609, %v7607
        %v8536 = vpack.c.b16 %v7610, %v7608
        %v8537 = vpack.c.b16 %v7613, %v7611
        %v8538 = vpack.c.b16 %v7614, %v7612
        %v8539 = vpack.c.b16 %v7617, %v7615
        %v8540 = vpack.c.b16 %v7618, %v7616
        %v8541 = vpack.c.b16 %v7621, %v7619
        %v8542 = vpack.c.b16 %v7622, %v7620
        %v8543 = vpack.c.b16 %v7625, %v7623
        %v8544 = vpack.c.b16 %v7626, %v7624
        %v8545 = vpack.c.b16 %v7629, %v7627
        %v8546 = vpack.c.b16 %v7630, %v7628
        %v8547 = vpack.c.b16 %v7633, %v7631
        %v8548 = vpack.c.b16 %v7634, %v7632
        %v8549 = vpack.c.b16 %v7637, %v7635
        %v8550 = vpack.c.b16 %v7638, %v7636
        %v8551 = vpack.c.b16 %v7641, %v7639
        %v8552 = vpack.c.b16 %v7642, %v7640
        %v8553 = vpack.c.b16 %v7645, %v7643
        %v8554 = vpack.c.b16 %v7646, %v7644
        %v8555 = vpack.c.b16 %v7649, %v7647
        %v8556 = vpack.c.b16 %v7650, %v7648
        %v8557 = vpack.c.b16 %v7653, %v7651
        %v8558 = vpack.c.b16 %v7654, %v7652
        %v8559 = vpack.c.b16 %v7657, %v7655
        %v8560 = vpack.c.b16 %v7658, %v7656
        %v8561 = vpack.c.b16 %v7661, %v7659
        %v8562 = vpack.c.b16 %v7662, %v7660
        %v8563 = vpack.c.b16 %v7665, %v7663
        %v8564 = vpack.c.b16 %v7666, %v7664
        %v8565 = vpack.c.b16 %v7669, %v7667
        %v8566 = vpack.c.b16 %v7670, %v7668
        %v8567 = vpack.c.b16 %v7673, %v7671
        %v8568 = vpack.c.b16 %v7674, %v7672
        %v8569 = vpack.c.b16 %v7677, %v7675
        %v8570 = vpack.c.b16 %v7678, %v7676
        %v8571 = vpack.c.b16 %v7681, %v7679
        %v8572 = vpack.c.b16 %v7682, %v7680
        %v8573 = vpack.c.b16 %v7685, %v7683
        %v8574 = vpack.c.b16 %v7686, %v7684
        %v8575 = vpack.c.b16 %v7689, %v7687
        %v8576 = vpack.c.b16 %v7690, %v7688
        %v8577 = vpack.c.b16 %v7693, %v7691
        %v8578 = vpack.c.b16 %v7694, %v7692
        %v8579 = vpack.c.b16 %v7697, %v7695
        %v8580 = vpack.c.b16 %v7698, %v7696
        %v8581 = vpack.c.b16 %v7701, %v7699
        %v8582 = vpack.c.b16 %v7702, %v7700
        %v8583 = vpack.c.b16 %v7705, %v7703
        %v8584 = vpack.c.b16 %v7706, %v7704
        %v8585 = vpack.c.b16 %v7709, %v7707
        %v8586 = vpack.c.b16 %v7710, %v7708
        %v8587 = vpack.c.b16 %v7713, %v7711
        %v8588 = vpack.c.b16 %v7714, %v7712
        %v8589 = vpack.c.b16 %v7717, %v7715
        %v8590 = vpack.c.b16 %v7718, %v7716
        %v8591 = vpack.c.b16 %v7721, %v7719
        %v8592 = vpack.c.b16 %v7722, %v7720
        %v8593 = vpack.c.b16 %v7725, %v7723
        %v8594 = vpack.c.b16 %v7726, %v7724
        %v8595 = vpack.c.b16 %v7729, %v7727
        %v8596 = vpack.c.b16 %v7730, %v7728
        %v8597 = vpack.c.b16 %v7733, %v7731
        %v8598 = vpack.c.b16 %v7734, %v7732
        %v8599 = vpack.c.b16 %v7737, %v7735
        %v8600 = vpack.c.b16 %v7738, %v7736
        %v8601 = vpack.c.b16 %v7741, %v7739
        %v8602 = vpack.c.b16 %v7742, %v7740
        %v8603 = vpack.c.b16 %v7745, %v7743
        %v8604 = vpack.c.b16 %v7746, %v7744
        %v8605 = vpack.c.b16 %v7749, %v7747
        %v8606 = vpack.c.b16 %v7750, %v7748
        %v8607 = vpack.c.b16 %v7753, %v7751
        %v8608 = vpack.c.b16 %v7754, %v7752
        %v8609 = vpack.c.b16 %v7757, %v7755
        %v8610 = vpack.c.b16 %v7758, %v7756
        %v8611 = vpack.c.b16 %v7761, %v7759
        %v8612 = vpack.c.b16 %v7762, %v7760
        %v8613 = vpack.c.b16 %v7765, %v7763
        %v8614 = vpack.c.b16 %v7766, %v7764
        %v8615 = vpack.c.b16 %v7769, %v7767
        %v8616 = vpack.c.b16 %v7770, %v7768
        %v8617 = vpack.c.b16 %v7773, %v7771
        %v8618 = vpack.c.b16 %v7774, %v7772
        %v8619 = vpack.c.b16 %v7777, %v7775
        %v8620 = vpack.c.b16 %v7778, %v7776
        %v8621 = vpack.c.b16 %v7781, %v7779
        %v8622 = vpack.c.b16 %v7782, %v7780
        %v8623 = vpack.c.b16 %v7785, %v7783
        %v8624 = vpack.c.b16 %v7786, %v7784
        %v8625 = vpack.c.b16 %v7789, %v7787
        %v8626 = vpack.c.b16 %v7790, %v7788
        %v8627 = vpack.c.b16 %v7793, %v7791
        %v8628 = vpack.c.b16 %v7794, %v7792
        %v8629 = vpack.c.b16 %v7797, %v7795
        %v8630 = vpack.c.b16 %v7798, %v7796
        %v8631 = vpack.c.b16 %v7801, %v7799
        %v8632 = vpack.c.b16 %v7802, %v7800
        %v8633 = vpack.c.b16 %v7805, %v7803
        %v8634 = vpack.c.b16 %v7806, %v7804
        %v8635 = vpack.c.b16 %v7809, %v7807
        %v8636 = vpack.c.b16 %v7810, %v7808
        %v8637 = vpack.c.b16 %v7813, %v7811
        %v8638 = vpack.c.b16 %v7814, %v7812
        %v8639 = vpack.c.b16 %v7817, %v7815
        %v8640 = vpack.c.b16 %v7818, %v7816
        %v8641 = vpack.c.b16 %v7821, %v7819
        %v8642 = vpack.c.b16 %v7822, %v7820
        %v8643 = vpack.c.b16 %v7825, %v7823
        %v8644 = vpack.c.b16 %v7826, %v7824
        %v8645 = vpack.c.b16 %v7829, %v7827
        %v8646 = vpack.c.b16 %v7830, %v7828
        %v8647 = vpack.c.b16 %v7833, %v7831
        %v8648 = vpack.c.b16 %v7834, %v7832
        %v8649 = vpack.c.b16 %v7837, %v7835
        %v8650 = vpack.c.b16 %v7838, %v7836
        %v8651 = vpack.c.b16 %v7841, %v7839
        %v8652 = vpack.c.b16 %v7842, %v7840
        %v8653 = vpack.c.b16 %v7845, %v7843
        %v8654 = vpack.c.b16 %v7846, %v7844
        %v8655 = vpack.c.b16 %v7849, %v7847
        %v8656 = vpack.c.b16 %v7850, %v7848
        %v8657 = vpack.c.b16 %v7853, %v7851
        %v8658 = vpack.c.b16 %v7854, %v7852
        %v8659 = vpack.c.b16 %v7857, %v7855
        %v8660 = vpack.c.b16 %v7858, %v7856
        %v8661 = vpack.c.b16 %v7861, %v7859
        %v8662 = vpack.c.b16 %v7862, %v7860
        %v8663 = vpack.c.b16 %v7865, %v7863
        %v8664 = vpack.c.b16 %v7866, %v7864
        %v8665 = vpack.c.b16 %v7869, %v7867
        %v8666 = vpack.c.b16 %v7870, %v7868
        %v8667 = vpack.c.b16 %v7873, %v7871
        %v8668 = vpack.c.b16 %v7874, %v7872
        %v8669 = vpack.c.b16 %v7877, %v7875
        %v8670 = vpack.c.b16 %v7878, %v7876
        %v8671 = vpack.c.b16 %v7881, %v7879
        %v8672 = vpack.c.b16 %v7882, %v7880
        %v8673 = vpack.c.b16 %v7885, %v7883
        %v8674 = vpack.c.b16 %v7886, %v7884
        %v8675 = vpack.c.b16 %v7889, %v7887
        %v8676 = vpack.c.b16 %v7890, %v7888
        %v8677 = vpack.c.b16 %v7893, %v7891
        %v8678 = vpack.c.b16 %v7894, %v7892
        %v8679 = vpack.c.b16 %v7897, %v7895
        %v8680 = vpack.c.b16 %v7898, %v7896
        %v8681 = vpack.c.b16 %v7901, %v7899
        %v8682 = vpack.c.b16 %v7902, %v7900
        %v8683 = vpack.c.b16 %v7905, %v7903
        %v8684 = vpack.c.b16 %v7906, %v7904
        %v8685 = vpack.c.b16 %v7909, %v7907
        %v8686 = vpack.c.b16 %v7910, %v7908
        %v8687 = vpack.c.b16 %v7913, %v7911
        %v8688 = vpack.c.b16 %v7914, %v7912
        %v8689 = vpack.c.b16 %v7917, %v7915
        %v8690 = vpack.c.b16 %v7918, %v7916
        %v8691 = vpack.c.b16 %v7921, %v7919
        %v8692 = vpack.c.b16 %v7922, %v7920
        %v8693 = vpack.c.b16 %v7925, %v7923
        %v8694 = vpack.c.b16 %v7926, %v7924
        %v8695 = vpack.c.b16 %v7929, %v7927
        %v8696 = vpack.c.b16 %v7930, %v7928
        %v8697 = vpack.c.b16 %v7933, %v7931
        %v8698 = vpack.c.b16 %v7934, %v7932
        %v8699 = vpack.c.b16 %v7937, %v7935
        %v8700 = vpack.c.b16 %v7938, %v7936
        %v8701 = vpack.c.b16 %v7941, %v7939
        %v8702 = vpack.c.b16 %v7942, %v7940
        %v8703 = vpack.c.b16 %v7945, %v7943
        %v8704 = vpack.c.b16 %v7946, %v7944
        %v8705 = vpack.c.b16 %v7949, %v7947
        %v8706 = vpack.c.b16 %v7950, %v7948
        %v8707 = vpack.c.b16 %v7953, %v7951
        %v8708 = vpack.c.b16 %v7954, %v7952
        %v8709 = vpack.c.b16 %v7957, %v7955
        %v8710 = vpack.c.b16 %v7958, %v7956
        %v8711 = vpack.c.b16 %v7961, %v7959
        %v8712 = vpack.c.b16 %v7962, %v7960
        %v8713 = vpack.c.b16 %v7965, %v7963
        %v8714 = vpack.c.b16 %v7966, %v7964
        %v8715 = vpack.c.b16 %v7969, %v7967
        %v8716 = vpack.c.b16 %v7970, %v7968
        %v8717 = vpack.c.b16 %v7973, %v7971
        %v8718 = vpack.c.b16 %v7974, %v7972
        %v8719 = vpack.c.b16 %v7977, %v7975
        %v8720 = vpack.c.b16 %v7978, %v7976
        %v8721 = vpack.c.b16 %v7981, %v7979
        %v8722 = vpack.c.b16 %v7982, %v7980
        %v8723 = vpack.c.b16 %v7985, %v7983
        %v8724 = vpack.c.b16 %v7986, %v7984
        %v8725 = vpack.c.b16 %v7989, %v7987
        %v8726 = vpack.c.b16 %v7990, %v7988
        %v8727 = vpack.c.b16 %v7993, %v7991
        %v8728 = vpack.c.b16 %v7994, %v7992
        %v8729 = vpack.c.b16 %v7997, %v7995
        %v8730 = vpack.c.b16 %v7998, %v7996
        %v8731 = vpack.c.b16 %v8001, %v7999
        %v8732 = vpack.c.b16 %v8002, %v8000
        %v8733 = vpack.c.b16 %v8005, %v8003
        %v8734 = vpack.c.b16 %v8006, %v8004
        %v8735 = vpack.c.b16 %v8009, %v8007
        %v8736 = vpack.c.b16 %v8010, %v8008
        %v8737 = vpack.c.b16 %v8013, %v8011
        %v8738 = vpack.c.b16 %v8014, %v8012
        %v8739 = vpack.c.b16 %v8017, %v8015
        %v8740 = vpack.c.b16 %v8018, %v8016
        %v8741 = vpack.c.b16 %v8021, %v8019
        %v8742 = vpack.c.b16 %v8022, %v8020
        %v8743 = vpack.c.b16 %v8025, %v8023
        %v8744 = vpack.c.b16 %v8026, %v8024
        %v8745 = vpack.c.b16 %v8029, %v8027
        %v8746 = vpack.c.b16 %v8030, %v8028
        %v8747 = vpack.c.b16 %v8033, %v8031
        %v8748 = vpack.c.b16 %v8034, %v8032
        %v8749 = vpack.c.b16 %v8037, %v8035
        %v8750 = vpack.c.b16 %v8038, %v8036
        %v8751 = vpack.c.b16 %v8041, %v8039
        %v8752 = vpack.c.b16 %v8042, %v8040
        %v8753 = vpack.c.b16 %v8045, %v8043
        %v8754 = vpack.c.b16 %v8046, %v8044
        %v8755 = vpack.c.b16 %v8049, %v8047
        %v8756 = vpack.c.b16 %v8050, %v8048
        %v8757 = vpack.c.b16 %v8053, %v8051
        %v8758 = vpack.c.b16 %v8054, %v8052
        %v8759 = vpack.c.b16 %v8057, %v8055
        %v8760 = vpack.c.b16 %v8058, %v8056
        %v8761 = vpack.c.b16 %v8061, %v8059
        %v8762 = vpack.c.b16 %v8062, %v8060
        %v8763 = vpack.c.b16 %v8065, %v8063
        %v8764 = vpack.c.b16 %v8066, %v8064
        %v8765 = vpack.c.b16 %v8069, %v8067
        %v8766 = vpack.c.b16 %v8070, %v8068
        %v8767 = vpack.c.b16 %v8073, %v8071
        %v8768 = vpack.c.b16 %v8074, %v8072
        %v8769 = vpack.c.b16 %v8077, %v8075
        %v8770 = vpack.c.b16 %v8078, %v8076
        %v8771 = vpack.c.b16 %v8081, %v8079
        %v8772 = vpack.c.b16 %v8082, %v8080
        %v8773 = vpack.c.b16 %v8085, %v8083
        %v8774 = vpack.c.b16 %v8086, %v8084
        %v8775 = vpack.c.b16 %v8089, %v8087
        %v8776 = vpack.c.b16 %v8090, %v8088
        %v8777 = vpack.c.b16 %v8093, %v8091
        %v8778 = vpack.c.b16 %v8094, %v8092
        %v8779 = vpack.c.b16 %v8097, %v8095
        %v8780 = vpack.c.b16 %v8098, %v8096
        %v8781 = vpack.c.b16 %v8101, %v8099
        %v8782 = vpack.c.b16 %v8102, %v8100
        %v8783 = vpack.c.b16 %v8105, %v8103
        %v8784 = vpack.c.b16 %v8106, %v8104
        %v8785 = vpack.c.b16 %v8109, %v8107
        %v8786 = vpack.c.b16 %v8110, %v8108
        %v8787 = vpack.c.b16 %v8113, %v8111
        %v8788 = vpack.c.b16 %v8114, %v8112
        %v8789 = vpack.c.b16 %v8117, %v8115
        %v8790 = vpack.c.b16 %v8118, %v8116
        %v8791 = vpack.c.b16 %v8121, %v8119
        %v8792 = vpack.c.b16 %v8122, %v8120
        %v8793 = vpack.c.b16 %v8125, %v8123
        %v8794 = vpack.c.b16 %v8126, %v8124
        %v8795 = vpack.c.b16 %v8129, %v8127
        %v8796 = vpack.c.b16 %v8130, %v8128
        %v8797 = vpack.c.b16 %v8133, %v8131
        %v8798 = vpack.c.b16 %v8134, %v8132
        %v8799 = vpack.c.b16 %v8137, %v8135
        %v8800 = vpack.c.b16 %v8138, %v8136
        %v8801 = vpack.c.b16 %v8141, %v8139
        %v8802 = vpack.c.b16 %v8142, %v8140
        %v8803 = vpack.c.b16 %v8145, %v8143
        %v8804 = vpack.c.b16 %v8146, %v8144
        %v8805 = vpack.c.b16 %v8149, %v8147
        %v8806 = vpack.c.b16 %v8150, %v8148
        %v8807 = vpack.c.b16 %v8153, %v8151
        %v8808 = vpack.c.b16 %v8154, %v8152
        %v8809 = vpack.c.b16 %v8157, %v8155
        %v8810 = vpack.c.b16 %v8158, %v8156
        %v8811 = vpack.c.b16 %v8161, %v8159
        %v8812 = vpack.c.b16 %v8162, %v8160
        %v8813 = vpack.c.b16 %v8165, %v8163
        %v8814 = vpack.c.b16 %v8166, %v8164
        %v8815 = vpack.c.b16 %v8169, %v8167
        %v8816 = vpack.c.b16 %v8170, %v8168
        %v8817 = vpack.c.b16 %v8173, %v8171
        %v8818 = vpack.c.b16 %v8174, %v8172
        %v8819 = vpack.c.b16 %v8177, %v8175
        %v8820 = vpack.c.b16 %v8178, %v8176
        %v8821 = vpack.c.b16 %v8181, %v8179
        %v8822 = vpack.c.b16 %v8182, %v8180
        %v8823 = vpack.c.b16 %v8185, %v8183
        %v8824 = vpack.c.b16 %v8186, %v8184
        %v8825 = vpack.c.b16 %v8189, %v8187
        %v8826 = vpack.c.b16 %v8190, %v8188
        %v8827 = vpack.c.b16 %v8193, %v8191
        %v8828 = vpack.c.b16 %v8194, %v8192
        %v8829 = vpack.c.b16 %v8197, %v8195
        %v8830 = vpack.c.b16 %v8198, %v8196
        %v8831 = vpack.c.b16 %v8201, %v8199
        %v8832 = vpack.c.b16 %v8202, %v8200
        %v8833 = vpack.c.b16 %v8205, %v8203
        %v8834 = vpack.c.b16 %v8206, %v8204
        %v8835 = vpack.c.b16 %v8209, %v8207
        %v8836 = vpack.c.b16 %v8210, %v8208
        %v8837 = vpack.c.b16 %v8213, %v8211
        %v8838 = vpack.c.b16 %v8214, %v8212
        %v8839 = vpack.c.b16 %v8217, %v8215
        %v8840 = vpack.c.b16 %v8218, %v8216
        %v8841 = vpack.c.b16 %v8221, %v8219
        %v8842 = vpack.c.b16 %v8222, %v8220
        %v8843 = vpack.c.b16 %v8225, %v8223
        %v8844 = vpack.c.b16 %v8226, %v8224
        %v8845 = vpack.c.b16 %v8229, %v8227
        %v8846 = vpack.c.b16 %v8230, %v8228
        %v8847 = vpack.c.b16 %v8233, %v8231
        %v8848 = vpack.c.b16 %v8234, %v8232
        %v8849 = vpack.c.b16 %v8237, %v8235
        %v8850 = vpack.c.b16 %v8238, %v8236
        %v8851 = vpack.c.b16 %v8241, %v8239
        %v8852 = vpack.c.b16 %v8242, %v8240
        %v8853 = vpack.c.b16 %v8245, %v8243
        %v8854 = vpack.c.b16 %v8246, %v8244
        %v8855 = vpack.c.b16 %v8249, %v8247
        %v8856 = vpack.c.b16 %v8250, %v8248
        %v8857 = vpack.c.b16 %v8253, %v8251
        %v8858 = vpack.c.b16 %v8254, %v8252
        %v8859 = vpack.c.b16 %v8257, %v8255
        %v8860 = vpack.c.b16 %v8258, %v8256
        %v8861 = vpack.c.b16 %v8261, %v8259
        %v8862 = vpack.c.b16 %v8262, %v8260
        %v8863 = vpack.c.b16 %v8265, %v8263
        %v8864 = vpack.c.b16 %v8266, %v8264
        %v8865 = vpack.c.b16 %v8269, %v8267
        %v8866 = vpack.c.b16 %v8270, %v8268
        %v8867 = vpack.c.b16 %v8273, %v8271
        %v8868 = vpack.c.b16 %v8274, %v8272
        %v8869 = vpack.c.b16 %v8277, %v8275
        %v8870 = vpack.c.b16 %v8278, %v8276
        %v8871 = vpack.c.b16 %v8281, %v8279
        %v8872 = vpack.c.b16 %v8282, %v8280
        %v8873 = vpack.c.b16 %v8285, %v8283
        %v8874 = vpack.c.b16 %v8286, %v8284
        %v8875 = vpack.c.b16 %v8289, %v8287
        %v8876 = vpack.c.b16 %v8290, %v8288
        %v8877 = vpack.c.b16 %v8293, %v8291
        %v8878 = vpack.c.b16 %v8294, %v8292
        %v8879 = vpack.c.b16 %v8297, %v8295
        %v8880 = vpack.c.b16 %v8298, %v8296
        %v8881 = vpack.c.b16 %v8301, %v8299
        %v8882 = vpack.c.b16 %v8302, %v8300
        %v8883 = vpack.c.b16 %v8305, %v8303
        %v8884 = vpack.c.b16 %v8306, %v8304
        %v8885 = vpack.c.b16 %v8309, %v8307
        %v8886 = vpack.c.b16 %v8310, %v8308
        %9463 = vmatprep.subr.bf16.mxu0 %v8312
        %9464 = vmatpush1.bf16.msra.mxu0 %v8311
        %9465 = vmatprep.subr.bf16.mxu0 %v8314
        %9466 = vmatpush1.bf16.msra.mxu0 %v8313
        %9467 = vmatprep.subr.bf16.mxu0 %v8316
        %9468 = vmatpush1.bf16.msra.mxu0 %v8315
        %9469 = vmatprep.subr.bf16.mxu0 %v8318
        %9470 = vmatpush1.bf16.msra.mxu0 %v8317
        %9471 = vmatprep.subr.bf16.mxu0 %v8320
        %9472 = vmatpush1.bf16.msra.mxu0 %v8319
        %9473 = vmatprep.subr.bf16.mxu0 %v8322
        %9474 = vmatpush1.bf16.msra.mxu0 %v8321
        %9475 = vmatprep.subr.bf16.mxu0 %v8324
        %9476 = vmatpush1.bf16.msra.mxu0 %v8323
        %9477 = vmatprep.subr.bf16.mxu0 %v8326
        %9478 = vmatpush1.bf16.msra.mxu0 %v8325
        %9479 = vmatprep.subr.bf16.mxu0 %v8328
        %9480 = vmatpush1.bf16.msra.mxu0 %v8327
        %9481 = vmatprep.subr.bf16.mxu0 %v8330
        %9482 = vmatpush1.bf16.msra.mxu0 %v8329
        %9483 = vmatprep.subr.bf16.mxu0 %v8332
        %9484 = vmatpush1.bf16.msra.mxu0 %v8331
        %9485 = vmatprep.subr.bf16.mxu0 %v8334
        %9486 = vmatpush1.bf16.msra.mxu0 %v8333
        %9487 = vmatprep.subr.bf16.mxu0 %v8336
        %9488 = vmatpush1.bf16.msra.mxu0 %v8335
        %9489 = vmatprep.subr.bf16.mxu0 %v8338
        %9490 = vmatpush1.bf16.msra.mxu0 %v8337
        %9491 = vmatprep.subr.bf16.mxu0 %v8340
        %9492 = vmatpush1.bf16.msra.mxu0 %v8339
        %9493 = vmatprep.subr.bf16.mxu0 %v8342
        %9494 = vmatpush1.bf16.msra.mxu0 %v8341
        %9495 = vmatprep.mubr.bf16.mxu0 %v4249
        %9496 = vmatmul.mubr.bf16.gmra.mrb[0].mxu0 %v4248
        %v9497 = vpop.f32.mrb[0].mxu0
        %v9498 = vadd.f32 %v6576, %v9497
        %v9499 = vpop.f32.mrb[0].mxu0
        %v9500 = vadd.f32 %v6580, %v9499
        %v9501 = vpop.f32.mrb[0].mxu0
        %v9502 = vadd.f32 %v6576, %v9501
        %v9503 = vpop.f32.mrb[0].mxu0
        %v9504 = vadd.f32 %v6580, %v9503
        %9505 = vmatprep.mubr.bf16.mxu0 %v4253
        %9506 = vmatmul.mubr.bf16.gmra.mrb[0].mxu0 %v4252
        %v9507 = vpop.f32.mrb[0].mxu0
        %v9508 = vadd.f32 %v6576, %v9507
        %v9509 = vpop.f32.mrb[0].mxu0
        %v9510 = vadd.f32 %v6580, %v9509
        %v9511 = vpop.f32.mrb[0].mxu0
        %v9512 = vadd.f32 %v6576, %v9511
        %v9513 = vpop.f32.mrb[0].mxu0
        %v9514 = vadd.f32 %v6580, %v9513
        %9515 = vmatprep.mubr.bf16.mxu0 %v4257
        %9516 = vmatmul.mubr.bf16.gmra.mrb[0].mxu0 %v4256
        %v9517 = vpop.f32.mrb[0].mxu0
        %v9518 = vadd.f32 %v6576, %v9517
        %v9519 = vpop.f32.mrb[0].mxu0
        %v9520 = vadd.f32 %v6580, %v9519
        %v9521 = vpop.f32.mrb[0].mxu0
        %v9522 = vadd.f32 %v6576, %v9521
        %v9523 = vpop.f32.mrb[0].mxu0
        %v9524 = vadd.f32 %v6580, %v9523
        %9525 = vmatprep.mubr.bf16.mxu0 %v4261
        %9526 = vmatmul.mubr.bf16.gmra.mrb[0].mxu0 %v4260
        %v9527 = vpop.f32.mrb[0].mxu0
        %v9528 = vadd.f32 %v6576, %v9527
        %v9529 = vpop.f32.mrb[0].mxu0
        %v9530 = vadd.f32 %v6580, %v9529
        %v9531 = vpop.f32.mrb[0].mxu0
        %v9532 = vadd.f32 %v6576, %v9531
        %v9533 = vpop.f32.mrb[0].mxu0
        %v9534 = vadd.f32 %v6580, %v9533
        %9535 = vdwg.mxu0
        %9536 = vmatprep.subr.bf16.mxu0 %v8344
        %9537 = vmatpush1.bf16.msra.mxu0 %v8343
        %9538 = vmatprep.subr.bf16.mxu0 %v8346
        %9539 = vmatpush1.bf16.msra.mxu0 %v8345
        %9540 = vmatprep.subr.bf16.mxu0 %v8348
        %9541 = vmatpush1.bf16.msra.mxu0 %v8347
        %9542 = vmatprep.subr.bf16.mxu0 %v8350
        %9543 = vmatpush1.bf16.msra.mxu0 %v8349
        %9544 = vmatprep.subr.bf16.mxu0 %v8352
        %9545 = vmatpush1.bf16.msra.mxu0 %v8351
        %9546 = vmatprep.subr.bf16.mxu0 %v8354
        %9547 = vmatpush1.bf16.msra.mxu0 %v8353
        %9548 = vmatprep.subr.bf16.mxu0 %v8356
        %9549 = vmatpush1.bf16.msra.mxu0 %v8355
        %9550 = vmatprep.subr.bf16.mxu0 %v8358
        %9551 = vmatpush1.bf16.msra.mxu0 %v8357
        %9552 = vmatprep.subr.bf16.mxu0 %v8360
        %9553 = vmatpush1.bf16.msra.mxu0 %v8359
        %9554 = vmatprep.subr.bf16.mxu0 %v8362
        %9555 = vmatpush1.bf16.msra.mxu0 %v8361
        %9556 = vmatprep.subr.bf16.mxu0 %v8364
        %9557 = vmatpush1.bf16.msra.mxu0 %v8363
        %9558 = vmatprep.subr.bf16.mxu0 %v8366
        %9559 = vmatpush1.bf16.msra.mxu0 %v8365
        %9560 = vmatprep.subr.bf16.mxu0 %v8368
        %9561 = vmatpush1.bf16.msra.mxu0 %v8367
        %9562 = vmatprep.subr.bf16.mxu0 %v8370
        %9563 = vmatpush1.bf16.msra.mxu0 %v8369
        %9564 = vmatprep.subr.bf16.mxu0 %v8372
        %9565 = vmatpush1.bf16.msra.mxu0 %v8371
        %9566 = vmatprep.subr.bf16.mxu0 %v8374
        %9567 = vmatpush1.bf16.msra.mxu0 %v8373
        %9568 = vmatprep.mubr.bf16.mxu0 %v4251
        %9569 = vmatmul.mubr.bf16.gmra.mrb[0].mxu0 %v4250
        %v9570 = vpop.f32.mrb[0].mxu0
        %v9571 = vadd.f32 %v9498, %v9570
        %v9572 = vpop.f32.mrb[0].mxu0
        %v9573 = vadd.f32 %v9500, %v9572
        %v9574 = vpop.f32.mrb[0].mxu0
        %v9575 = vadd.f32 %v9502, %v9574
        %v9576 = vpop.f32.mrb[0].mxu0
        %v9577 = vadd.f32 %v9504, %v9576
        %9578 = vmatprep.mubr.bf16.mxu0 %v4255
        %9579 = vmatmul.mubr.bf16.gmra.mrb[0].mxu0 %v4254
        %v9580 = vpop.f32.mrb[0].mxu0
        %v9581 = vadd.f32 %v9508, %v9580
        %v9582 = vpop.f32.mrb[0].mxu0
        %v9583 = vadd.f32 %v9510, %v9582
        %v9584 = vpop.f32.mrb[0].mxu0
        %v9585 = vadd.f32 %v9512, %v9584
        %v9586 = vpop.f32.mrb[0].mxu0
        %v9587 = vadd.f32 %v9514, %v9586
        %9588 = vmatprep.mubr.bf16.mxu0 %v4259
        %9589 = vmatmul.mubr.bf16.gmra.mrb[0].mxu0 %v4258
        %v9590 = vpop.f32.mrb[0].mxu0
        %v9591 = vadd.f32 %v9518, %v9590
        %v9592 = vpop.f32.mrb[0].mxu0
        %v9593 = vadd.f32 %v9520, %v9592
        %v9594 = vpop.f32.mrb[0].mxu0
        %v9595 = vadd.f32 %v9522, %v9594
        %v9596 = vpop.f32.mrb[0].mxu0
        %v9597 = vadd.f32 %v9524, %v9596
        %9598 = vmatprep.mubr.bf16.mxu0 %v4263
        %9599 = vmatmul.mubr.bf16.gmra.mrb[0].mxu0 %v4262
        %v9600 = vpop.f32.mrb[0].mxu0
        %v9601 = vadd.f32 %v9528, %v9600
        %v9602 = vpop.f32.mrb[0].mxu0
        %v9603 = vadd.f32 %v9530, %v9602
        %v9604 = vpop.f32.mrb[0].mxu0
        %v9605 = vadd.f32 %v9532, %v9604
        %v9606 = vpop.f32.mrb[0].mxu0
        %v9607 = vadd.f32 %v9534, %v9606
        %9608 = vdwg.mxu0
        %9609 = vmatprep.subr.bf16.mxu0 %v8376
        %9610 = vmatpush1.bf16.msra.mxu0 %v8375
        %9611 = vmatprep.subr.bf16.mxu0 %v8378
        %9612 = vmatpush1.bf16.msra.mxu0 %v8377
        %9613 = vmatprep.subr.bf16.mxu0 %v8380
        %9614 = vmatpush1.bf16.msra.mxu0 %v8379
        %9615 = vmatprep.subr.bf16.mxu0 %v8382
        %9616 = vmatpush1.bf16.msra.mxu0 %v8381
        %9617 = vmatprep.subr.bf16.mxu0 %v8384
        %9618 = vmatpush1.bf16.msra.mxu0 %v8383
        %9619 = vmatprep.subr.bf16.mxu0 %v8386
        %9620 = vmatpush1.bf16.msra.mxu0 %v8385
        %9621 = vmatprep.subr.bf16.mxu0 %v8388
        %9622 = vmatpush1.bf16.msra.mxu0 %v8387
        %9623 = vmatprep.subr.bf16.mxu0 %v8390
        %9624 = vmatpush1.bf16.msra.mxu0 %v8389
        %9625 = vmatprep.subr.bf16.mxu0 %v8392
        %9626 = vmatpush1.bf16.msra.mxu0 %v8391
        %9627 = vmatprep.subr.bf16.mxu0 %v8394
        %9628 = vmatpush1.bf16.msra.mxu0 %v8393
        %9629 = vmatprep.subr.bf16.mxu0 %v8396
        %9630 = vmatpush1.bf16.msra.mxu0 %v8395
        %9631 = vmatprep.subr.bf16.mxu0 %v8398
        %9632 = vmatpush1.bf16.msra.mxu0 %v8397
        %9633 = vmatprep.subr.bf16.mxu0 %v8400
        %9634 = vmatpush1.bf16.msra.mxu0 %v8399
        %9635 = vmatprep.subr.bf16.mxu0 %v8402
        %9636 = vmatpush1.bf16.msra.mxu0 %v8401
        %9637 = vmatprep.subr.bf16.mxu0 %v8404
        %9638 = vmatpush1.bf16.msra.mxu0 %v8403
        %9639 = vmatprep.subr.bf16.mxu0 %v8406
        %9640 = vmatpush1.bf16.msra.mxu0 %v8405
        %9641 = vmatprep.mubr.bf16.mxu0 %v4522
        %9642 = vmatmul.mubr.bf16.gmra.mrb[0].mxu0 %v4521
        %v9643 = vpop.f32.mrb[0].mxu0
        %v9644 = vadd.f32 %v9571, %v9643
        %v9645 = vpop.f32.mrb[0].mxu0
        %v9646 = vadd.f32 %v9573, %v9645
        %v9647 = vpop.f32.mrb[0].mxu0
        %v9648 = vadd.f32 %v9575, %v9647
        %v9649 = vpop.f32.mrb[0].mxu0
        %v9650 = vadd.f32 %v9577, %v9649
        %9651 = vmatprep.mubr.bf16.mxu0 %v4526
        %9652 = vmatmul.mubr.bf16.gmra.mrb[0].mxu0 %v4525
        %v9653 = vpop.f32.mrb[0].mxu0
        %v9654 = vadd.f32 %v9581, %v9653
        %v9655 = vpop.f32.mrb[0].mxu0
        %v9656 = vadd.f32 %v9583, %v9655
        %v9657 = vpop.f32.mrb[0].mxu0
        %v9658 = vadd.f32 %v9585, %v9657
        %v9659 = vpop.f32.mrb[0].mxu0
        %v9660 = vadd.f32 %v9587, %v9659
        %9661 = vmatprep.mubr.bf16.mxu0 %v4530
        %9662 = vmatmul.mubr.bf16.gmra.mrb[0].mxu0 %v4529
        %v9663 = vpop.f32.mrb[0].mxu0
        %v9664 = vadd.f32 %v9591, %v9663
        %v9665 = vpop.f32.mrb[0].mxu0
        %v9666 = vadd.f32 %v9593, %v9665
        %v9667 = vpop.f32.mrb[0].mxu0
        %v9668 = vadd.f32 %v9595, %v9667
        %v9669 = vpop.f32.mrb[0].mxu0
        %v9670 = vadd.f32 %v9597, %v9669
        %9671 = vmatprep.mubr.bf16.mxu0 %v4534
        %9672 = vmatmul.mubr.bf16.gmra.mrb[0].mxu0 %v4533
        %v9673 = vpop.f32.mrb[0].mxu0
        %v9674 = vadd.f32 %v9601, %v9673
        %v9675 = vpop.f32.mrb[0].mxu0
        %v9676 = vadd.f32 %v9603, %v9675
        %v9677 = vpop.f32.mrb[0].mxu0
        %v9678 = vadd.f32 %v9605, %v9677
        %v9679 = vpop.f32.mrb[0].mxu0
        %v9680 = vadd.f32 %v9607, %v9679
        %9681 = vdwg.mxu0
        %9682 = vmatprep.subr.bf16.mxu0 %v8408
        %9683 = vmatpush1.bf16.msra.mxu0 %v8407
        %9684 = vmatprep.subr.bf16.mxu0 %v8410
        %9685 = vmatpush1.bf16.msra.mxu0 %v8409
        %9686 = vmatprep.subr.bf16.mxu0 %v8412
        %9687 = vmatpush1.bf16.msra.mxu0 %v8411
        %9688 = vmatprep.subr.bf16.mxu0 %v8414
        %9689 = vmatpush1.bf16.msra.mxu0 %v8413
        %9690 = vmatprep.subr.bf16.mxu0 %v8416
        %9691 = vmatpush1.bf16.msra.mxu0 %v8415
        %9692 = vmatprep.subr.bf16.mxu0 %v8418
        %9693 = vmatpush1.bf16.msra.mxu0 %v8417
        %9694 = vmatprep.subr.bf16.mxu0 %v8420
        %9695 = vmatpush1.bf16.msra.mxu0 %v8419
        %9696 = vmatprep.subr.bf16.mxu0 %v8422
        %9697 = vmatpush1.bf16.msra.mxu0 %v8421
        %9698 = vmatprep.subr.bf16.mxu0 %v8424
        %9699 = vmatpush1.bf16.msra.mxu0 %v8423
        %9700 = vmatprep.subr.bf16.mxu0 %v8426
        %9701 = vmatpush1.bf16.msra.mxu0 %v8425
        %9702 = vmatprep.subr.bf16.mxu0 %v8428
        %9703 = vmatpush1.bf16.msra.mxu0 %v8427
        %9704 = vmatprep.subr.bf16.mxu0 %v8430
        %9705 = vmatpush1.bf16.msra.mxu0 %v8429
        %9706 = vmatprep.subr.bf16.mxu0 %v8432
        %9707 = vmatpush1.bf16.msra.mxu0 %v8431
        %9708 = vmatprep.subr.bf16.mxu0 %v8434
        %9709 = vmatpush1.bf16.msra.mxu0 %v8433
        %9710 = vmatprep.subr.bf16.mxu0 %v8436
        %9711 = vmatpush1.bf16.msra.mxu0 %v8435
        %9712 = vmatprep.subr.bf16.mxu0 %v8438
        %9713 = vmatpush1.bf16.msra.mxu0 %v8437
        %9714 = vmatprep.mubr.bf16.mxu0 %v4524
        %9715 = vmatmul.mubr.bf16.gmra.mrb[0].mxu0 %v4523
        %v9716 = vpop.f32.mrb[0].mxu0
        %v9717 = vadd.f32 %v9644, %v9716
        %v9718 = vpop.f32.mrb[0].mxu0
        %v9719 = vadd.f32 %v9646, %v9718
        %v9720 = vpop.f32.mrb[0].mxu0
        %v9721 = vadd.f32 %v9648, %v9720
        %v9722 = vpop.f32.mrb[0].mxu0
        %v9723 = vadd.f32 %v9650, %v9722
        %9724 = vmatprep.mubr.bf16.mxu0 %v4528
        %9725 = vmatmul.mubr.bf16.gmra.mrb[0].mxu0 %v4527
        %v9726 = vpop.f32.mrb[0].mxu0
        %v9727 = vadd.f32 %v9654, %v9726
        %v9728 = vpop.f32.mrb[0].mxu0
        %v9729 = vadd.f32 %v9656, %v9728
        %v9730 = vpop.f32.mrb[0].mxu0
        %v9731 = vadd.f32 %v9658, %v9730
        %v9732 = vpop.f32.mrb[0].mxu0
        %v9733 = vadd.f32 %v9660, %v9732
        %9734 = vmatprep.mubr.bf16.mxu0 %v4532
        %9735 = vmatmul.mubr.bf16.gmra.mrb[0].mxu0 %v4531
        %v9736 = vpop.f32.mrb[0].mxu0
        %v9737 = vadd.f32 %v9664, %v9736
        %v9738 = vpop.f32.mrb[0].mxu0
        %v9739 = vadd.f32 %v9666, %v9738
        %v9740 = vpop.f32.mrb[0].mxu0
        %v9741 = vadd.f32 %v9668, %v9740
        %v9742 = vpop.f32.mrb[0].mxu0
        %v9743 = vadd.f32 %v9670, %v9742
        %9744 = vmatprep.mubr.bf16.mxu0 %v4536
        %9745 = vmatmul.mubr.bf16.gmra.mrb[0].mxu0 %v4535
        %v9746 = vpop.f32.mrb[0].mxu0
        %v9747 = vadd.f32 %v9674, %v9746
        %v9748 = vpop.f32.mrb[0].mxu0
        %v9749 = vadd.f32 %v9676, %v9748
        %v9750 = vpop.f32.mrb[0].mxu0
        %v9751 = vadd.f32 %v9678, %v9750
        %v9752 = vpop.f32.mrb[0].mxu0
        %v9753 = vadd.f32 %v9680, %v9752
        %9754 = vdwg.mxu0
        %9755 = vmatprep.subr.bf16.mxu0 %v8440
        %9756 = vmatpush1.bf16.msra.mxu0 %v8439
        %9757 = vmatprep.subr.bf16.mxu0 %v8442
        %9758 = vmatpush1.bf16.msra.mxu0 %v8441
        %9759 = vmatprep.subr.bf16.mxu0 %v8444
        %9760 = vmatpush1.bf16.msra.mxu0 %v8443
        %9761 = vmatprep.subr.bf16.mxu0 %v8446
        %9762 = vmatpush1.bf16.msra.mxu0 %v8445
        %9763 = vmatprep.subr.bf16.mxu0 %v8448
        %9764 = vmatpush1.bf16.msra.mxu0 %v8447
        %9765 = vmatprep.subr.bf16.mxu0 %v8450
        %9766 = vmatpush1.bf16.msra.mxu0 %v8449
        %9767 = vmatprep.subr.bf16.mxu0 %v8452
        %9768 = vmatpush1.bf16.msra.mxu0 %v8451
        %9769 = vmatprep.subr.bf16.mxu0 %v8454
        %9770 = vmatpush1.bf16.msra.mxu0 %v8453
        %9771 = vmatprep.subr.bf16.mxu0 %v8456
        %9772 = vmatpush1.bf16.msra.mxu0 %v8455
        %9773 = vmatprep.subr.bf16.mxu0 %v8458
        %9774 = vmatpush1.bf16.msra.mxu0 %v8457
        %9775 = vmatprep.subr.bf16.mxu0 %v8460
        %9776 = vmatpush1.bf16.msra.mxu0 %v8459
        %9777 = vmatprep.subr.bf16.mxu0 %v8462
        %9778 = vmatpush1.bf16.msra.mxu0 %v8461
        %9779 = vmatprep.subr.bf16.mxu0 %v8464
        %9780 = vmatpush1.bf16.msra.mxu0 %v8463
        %9781 = vmatprep.subr.bf16.mxu0 %v8466
        %9782 = vmatpush1.bf16.msra.mxu0 %v8465
        %9783 = vmatprep.subr.bf16.mxu0 %v8468
        %9784 = vmatpush1.bf16.msra.mxu0 %v8467
        %9785 = vmatprep.subr.bf16.mxu0 %v8470
        %9786 = vmatpush1.bf16.msra.mxu0 %v8469
        %9787 = vmatprep.mubr.bf16.mxu0 %v4795
        %9788 = vmatmul.mubr.bf16.gmra.mrb[0].mxu0 %v4794
        %v9789 = vpop.f32.mrb[0].mxu0
        %v9790 = vadd.f32 %v9717, %v9789
        %v9791 = vpop.f32.mrb[0].mxu0
        %v9792 = vadd.f32 %v9719, %v9791
        %v9793 = vpop.f32.mrb[0].mxu0
        %v9794 = vadd.f32 %v9721, %v9793
        %v9795 = vpop.f32.mrb[0].mxu0
        %v9796 = vadd.f32 %v9723, %v9795
        %9797 = vmatprep.mubr.bf16.mxu0 %v4799
        %9798 = vmatmul.mubr.bf16.gmra.mrb[0].mxu0 %v4798
        %v9799 = vpop.f32.mrb[0].mxu0
        %v9800 = vadd.f32 %v9727, %v9799
        %v9801 = vpop.f32.mrb[0].mxu0
        %v9802 = vadd.f32 %v9729, %v9801
        %v9803 = vpop.f32.mrb[0].mxu0
        %v9804 = vadd.f32 %v9731, %v9803
        %v9805 = vpop.f32.mrb[0].mxu0
        %v9806 = vadd.f32 %v9733, %v9805
        %9807 = vmatprep.mubr.bf16.mxu0 %v4803
        %9808 = vmatmul.mubr.bf16.gmra.mrb[0].mxu0 %v4802
        %v9809 = vpop.f32.mrb[0].mxu0
        %v9810 = vadd.f32 %v9737, %v9809
        %v9811 = vpop.f32.mrb[0].mxu0
        %v9812 = vadd.f32 %v9739, %v9811
        %v9813 = vpop.f32.mrb[0].mxu0
        %v9814 = vadd.f32 %v9741, %v9813
        %v9815 = vpop.f32.mrb[0].mxu0
        %v9816 = vadd.f32 %v9743, %v9815
        %9817 = vmatprep.mubr.bf16.mxu0 %v4807
        %9818 = vmatmul.mubr.bf16.gmra.mrb[0].mxu0 %v4806
        %v9819 = vpop.f32.mrb[0].mxu0
        %v9820 = vadd.f32 %v9747, %v9819
        %v9821 = vpop.f32.mrb[0].mxu0
        %v9822 = vadd.f32 %v9749, %v9821
        %v9823 = vpop.f32.mrb[0].mxu0
        %v9824 = vadd.f32 %v9751, %v9823
        %v9825 = vpop.f32.mrb[0].mxu0
        %v9826 = vadd.f32 %v9753, %v9825
        %9827 = vdwg.mxu0
        %9828 = vmatprep.subr.bf16.mxu0 %v8472
        %9829 = vmatpush1.bf16.msra.mxu0 %v8471
        %9830 = vmatprep.subr.bf16.mxu0 %v8474
        %9831 = vmatpush1.bf16.msra.mxu0 %v8473
        %9832 = vmatprep.subr.bf16.mxu0 %v8476
        %9833 = vmatpush1.bf16.msra.mxu0 %v8475
        %9834 = vmatprep.subr.bf16.mxu0 %v8478
        %9835 = vmatpush1.bf16.msra.mxu0 %v8477
        %9836 = vmatprep.subr.bf16.mxu0 %v8480
        %9837 = vmatpush1.bf16.msra.mxu0 %v8479
        %9838 = vmatprep.subr.bf16.mxu0 %v8482
        %9839 = vmatpush1.bf16.msra.mxu0 %v8481
        %9840 = vmatprep.subr.bf16.mxu0 %v8484
        %9841 = vmatpush1.bf16.msra.mxu0 %v8483
        %9842 = vmatprep.subr.bf16.mxu0 %v8486
        %9843 = vmatpush1.bf16.msra.mxu0 %v8485
        %9844 = vmatprep.subr.bf16.mxu0 %v8488
        %9845 = vmatpush1.bf16.msra.mxu0 %v8487
        %9846 = vmatprep.subr.bf16.mxu0 %v8490
        %9847 = vmatpush1.bf16.msra.mxu0 %v8489
        %9848 = vmatprep.subr.bf16.mxu0 %v8492
        %9849 = vmatpush1.bf16.msra.mxu0 %v8491
        %9850 = vmatprep.subr.bf16.mxu0 %v8494
        %9851 = vmatpush1.bf16.msra.mxu0 %v8493
        %9852 = vmatprep.subr.bf16.mxu0 %v8496
        %9853 = vmatpush1.bf16.msra.mxu0 %v8495
        %9854 = vmatprep.subr.bf16.mxu0 %v8498
        %9855 = vmatpush1.bf16.msra.mxu0 %v8497
        %9856 = vmatprep.subr.bf16.mxu0 %v8500
        %9857 = vmatpush1.bf16.msra.mxu0 %v8499
        %9858 = vmatprep.subr.bf16.mxu0 %v8502
        %9859 = vmatpush1.bf16.msra.mxu0 %v8501
        %9860 = vmatprep.mubr.bf16.mxu0 %v4797
        %9861 = vmatmul.mubr.bf16.gmra.mrb[0].mxu0 %v4796
        %v9862 = vpop.f32.mrb[0].mxu0
        %v9863 = vadd.f32 %v9790, %v9862
        %v9864 = vpop.f32.mrb[0].mxu0
        %v9865 = vadd.f32 %v9792, %v9864
        %v9866 = vpop.f32.mrb[0].mxu0
        %v9867 = vadd.f32 %v9794, %v9866
        %v9868 = vpop.f32.mrb[0].mxu0
        %v9869 = vadd.f32 %v9796, %v9868
        %9870 = vmatprep.mubr.bf16.mxu0 %v4801
        %9871 = vmatmul.mubr.bf16.gmra.mrb[0].mxu0 %v4800
        %v9872 = vpop.f32.mrb[0].mxu0
        %v9873 = vadd.f32 %v9800, %v9872
        %v9874 = vpop.f32.mrb[0].mxu0
        %v9875 = vadd.f32 %v9802, %v9874
        %v9876 = vpop.f32.mrb[0].mxu0
        %v9877 = vadd.f32 %v9804, %v9876
        %v9878 = vpop.f32.mrb[0].mxu0
        %v9879 = vadd.f32 %v9806, %v9878
        %9880 = vmatprep.mubr.bf16.mxu0 %v4805
        %9881 = vmatmul.mubr.bf16.gmra.mrb[0].mxu0 %v4804
        %v9882 = vpop.f32.mrb[0].mxu0
        %v9883 = vadd.f32 %v9810, %v9882
        %v9884 = vpop.f32.mrb[0].mxu0
        %v9885 = vadd.f32 %v9812, %v9884
        %v9886 = vpop.f32.mrb[0].mxu0
        %v9887 = vadd.f32 %v9814, %v9886
        %v9888 = vpop.f32.mrb[0].mxu0
        %v9889 = vadd.f32 %v9816, %v9888
        %9890 = vmatprep.mubr.bf16.mxu0 %v4809
        %9891 = vmatmul.mubr.bf16.gmra.mrb[0].mxu0 %v4808
        %v9892 = vpop.f32.mrb[0].mxu0
        %v9893 = vadd.f32 %v9820, %v9892
        %v9894 = vpop.f32.mrb[0].mxu0
        %v9895 = vadd.f32 %v9822, %v9894
        %v9896 = vpop.f32.mrb[0].mxu0
        %v9897 = vadd.f32 %v9824, %v9896
        %v9898 = vpop.f32.mrb[0].mxu0
        %v9899 = vadd.f32 %v9826, %v9898
        %9900 = vdwg.mxu0
        %9901 = vmatprep.subr.bf16.mxu0 %v8504
        %9902 = vmatpush1.bf16.msra.mxu0 %v8503
        %9903 = vmatprep.subr.bf16.mxu0 %v8506
        %9904 = vmatpush1.bf16.msra.mxu0 %v8505
        %9905 = vmatprep.subr.bf16.mxu0 %v8508
        %9906 = vmatpush1.bf16.msra.mxu0 %v8507
        %9907 = vmatprep.subr.bf16.mxu0 %v8510
        %9908 = vmatpush1.bf16.msra.mxu0 %v8509
        %9909 = vmatprep.subr.bf16.mxu0 %v8512
        %9910 = vmatpush1.bf16.msra.mxu0 %v8511
        %9911 = vmatprep.subr.bf16.mxu0 %v8514
        %9912 = vmatpush1.bf16.msra.mxu0 %v8513
        %9913 = vmatprep.subr.bf16.mxu0 %v8516
        %9914 = vmatpush1.bf16.msra.mxu0 %v8515
        %9915 = vmatprep.subr.bf16.mxu0 %v8518
        %9916 = vmatpush1.bf16.msra.mxu0 %v8517
        %9917 = vmatprep.subr.bf16.mxu0 %v8520
        %9918 = vmatpush1.bf16.msra.mxu0 %v8519
        %9919 = vmatprep.subr.bf16.mxu0 %v8522
        %9920 = vmatpush1.bf16.msra.mxu0 %v8521
        %9921 = vmatprep.subr.bf16.mxu0 %v8524
        %9922 = vmatpush1.bf16.msra.mxu0 %v8523
        %9923 = vmatprep.subr.bf16.mxu0 %v8526
        %9924 = vmatpush1.bf16.msra.mxu0 %v8525
        %9925 = vmatprep.subr.bf16.mxu0 %v8528
        %9926 = vmatpush1.bf16.msra.mxu0 %v8527
        %9927 = vmatprep.subr.bf16.mxu0 %v8530
        %9928 = vmatpush1.bf16.msra.mxu0 %v8529
        %9929 = vmatprep.subr.bf16.mxu0 %v8532
        %9930 = vmatpush1.bf16.msra.mxu0 %v8531
        %9931 = vmatprep.subr.bf16.mxu0 %v8534
        %9932 = vmatpush1.bf16.msra.mxu0 %v8533
        %9933 = vmatprep.mubr.bf16.mxu0 %v4843
        %9934 = vmatmul.mubr.bf16.gmra.mrb[0].mxu0 %v4842
        %v9935 = vpop.f32.mrb[0].mxu0
        %v9936 = vadd.f32 %v9863, %v9935
        %v9937 = vpop.f32.mrb[0].mxu0
        %v9938 = vadd.f32 %v9865, %v9937
        %v9939 = vpop.f32.mrb[0].mxu0
        %v9940 = vadd.f32 %v9867, %v9939
        %v9941 = vpop.f32.mrb[0].mxu0
        %v9942 = vadd.f32 %v9869, %v9941
        %9943 = vmatprep.mubr.bf16.mxu0 %v4847
        %9944 = vmatmul.mubr.bf16.gmra.mrb[0].mxu0 %v4846
        %v9945 = vpop.f32.mrb[0].mxu0
        %v9946 = vadd.f32 %v9873, %v9945
        %v9947 = vpop.f32.mrb[0].mxu0
        %v9948 = vadd.f32 %v9875, %v9947
        %v9949 = vpop.f32.mrb[0].mxu0
        %v9950 = vadd.f32 %v9877, %v9949
        %v9951 = vpop.f32.mrb[0].mxu0
        %v9952 = vadd.f32 %v9879, %v9951
        %9953 = vmatprep.mubr.bf16.mxu0 %v4851
        %9954 = vmatmul.mubr.bf16.gmra.mrb[0].mxu0 %v4850
        %v9955 = vpop.f32.mrb[0].mxu0
        %v9956 = vadd.f32 %v9883, %v9955
        %v9957 = vpop.f32.mrb[0].mxu0
        %v9958 = vadd.f32 %v9885, %v9957
        %v9959 = vpop.f32.mrb[0].mxu0
        %v9960 = vadd.f32 %v9887, %v9959
        %v9961 = vpop.f32.mrb[0].mxu0
        %v9962 = vadd.f32 %v9889, %v9961
        %9963 = vmatprep.mubr.bf16.mxu0 %v4855
        %9964 = vmatmul.mubr.bf16.gmra.mrb[0].mxu0 %v4854
        %v9965 = vpop.f32.mrb[0].mxu0
        %v9966 = vadd.f32 %v9893, %v9965
        %v9967 = vpop.f32.mrb[0].mxu0
        %v9968 = vadd.f32 %v9895, %v9967
        %v9969 = vpop.f32.mrb[0].mxu0
        %v9970 = vadd.f32 %v9897, %v9969
        %v9971 = vpop.f32.mrb[0].mxu0
        %v9972 = vadd.f32 %v9899, %v9971
        %9973 = vdwg.mxu0
        %9974 = vmatprep.subr.bf16.mxu0 %v8536
        %9975 = vmatpush1.bf16.msra.mxu0 %v8535
        %9976 = vmatprep.subr.bf16.mxu0 %v8538
        %9977 = vmatpush1.bf16.msra.mxu0 %v8537
        %9978 = vmatprep.subr.bf16.mxu0 %v8540
        %9979 = vmatpush1.bf16.msra.mxu0 %v8539
        %9980 = vmatprep.subr.bf16.mxu0 %v8542
        %9981 = vmatpush1.bf16.msra.mxu0 %v8541
        %9982 = vmatprep.subr.bf16.mxu0 %v8544
        %9983 = vmatpush1.bf16.msra.mxu0 %v8543
        %9984 = vmatprep.subr.bf16.mxu0 %v8546
        %9985 = vmatpush1.bf16.msra.mxu0 %v8545
        %9986 = vmatprep.subr.bf16.mxu0 %v8548
        %9987 = vmatpush1.bf16.msra.mxu0 %v8547
        %9988 = vmatprep.subr.bf16.mxu0 %v8550
        %9989 = vmatpush1.bf16.msra.mxu0 %v8549
        %9990 = vmatprep.subr.bf16.mxu0 %v8552
        %9991 = vmatpush1.bf16.msra.mxu0 %v8551
        %9992 = vmatprep.subr.bf16.mxu0 %v8554
        %9993 = vmatpush1.bf16.msra.mxu0 %v8553
        %9994 = vmatprep.subr.bf16.mxu0 %v8556
        %9995 = vmatpush1.bf16.msra.mxu0 %v8555
        %9996 = vmatprep.subr.bf16.mxu0 %v8558
        %9997 = vmatpush1.bf16.msra.mxu0 %v8557
        %9998 = vmatprep.subr.bf16.mxu0 %v8560
        %9999 = vmatpush1.bf16.msra.mxu0 %v8559
        %10000 = vmatprep.subr.bf16.mxu0 %v8562
        %10001 = vmatpush1.bf16.msra.mxu0 %v8561
        %10002 = vmatprep.subr.bf16.mxu0 %v8564
        %10003 = vmatpush1.bf16.msra.mxu0 %v8563
        %10004 = vmatprep.subr.bf16.mxu0 %v8566
        %10005 = vmatpush1.bf16.msra.mxu0 %v8565
        %10006 = vmatprep.mubr.bf16.mxu0 %v4845
        %10007 = vmatmul.mubr.bf16.gmra.mrb[0].mxu0 %v4844
        %v10008 = vpop.f32.mrb[0].mxu0
        %v10009 = vadd.f32 %v9936, %v10008
        %v10010 = vpop.f32.mrb[0].mxu0
        %v10011 = vadd.f32 %v9938, %v10010
        %v10012 = vpop.f32.mrb[0].mxu0
        %v10013 = vadd.f32 %v9940, %v10012
        %v10014 = vpop.f32.mrb[0].mxu0
        %v10015 = vadd.f32 %v9942, %v10014
        %10016 = vmatprep.mubr.bf16.mxu0 %v4849
        %10017 = vmatmul.mubr.bf16.gmra.mrb[0].mxu0 %v4848
        %v10018 = vpop.f32.mrb[0].mxu0
        %v10019 = vadd.f32 %v9946, %v10018
        %v10020 = vpop.f32.mrb[0].mxu0
        %v10021 = vadd.f32 %v9948, %v10020
        %v10022 = vpop.f32.mrb[0].mxu0
        %v10023 = vadd.f32 %v9950, %v10022
        %v10024 = vpop.f32.mrb[0].mxu0
        %v10025 = vadd.f32 %v9952, %v10024
        %10026 = vmatprep.mubr.bf16.mxu0 %v4853
        %10027 = vmatmul.mubr.bf16.gmra.mrb[0].mxu0 %v4852
        %v10028 = vpop.f32.mrb[0].mxu0
        %v10029 = vadd.f32 %v9956, %v10028
        %v10030 = vpop.f32.mrb[0].mxu0
        %v10031 = vadd.f32 %v9958, %v10030
        %v10032 = vpop.f32.mrb[0].mxu0
        %v10033 = vadd.f32 %v9960, %v10032
        %v10034 = vpop.f32.mrb[0].mxu0
        %v10035 = vadd.f32 %v9962, %v10034
        %10036 = vmatprep.mubr.bf16.mxu0 %v4857
        %10037 = vmatmul.mubr.bf16.gmra.mrb[0].mxu0 %v4856
        %v10038 = vpop.f32.mrb[0].mxu0
        %v10039 = vadd.f32 %v9966, %v10038
        %v10040 = vpop.f32.mrb[0].mxu0
        %v10041 = vadd.f32 %v9968, %v10040
        %v10042 = vpop.f32.mrb[0].mxu0
        %v10043 = vadd.f32 %v9970, %v10042
        %v10044 = vpop.f32.mrb[0].mxu0
        %v10045 = vadd.f32 %v9972, %v10044
        %10046 = vdwg.mxu0
        %10047 = vmatprep.subr.bf16.mxu0 %v8568
        %10048 = vmatpush1.bf16.msra.mxu0 %v8567
        %10049 = vmatprep.subr.bf16.mxu0 %v8570
        %10050 = vmatpush1.bf16.msra.mxu0 %v8569
        %10051 = vmatprep.subr.bf16.mxu0 %v8572
        %10052 = vmatpush1.bf16.msra.mxu0 %v8571
        %10053 = vmatprep.subr.bf16.mxu0 %v8574
        %10054 = vmatpush1.bf16.msra.mxu0 %v8573
        %10055 = vmatprep.subr.bf16.mxu0 %v8576
        %10056 = vmatpush1.bf16.msra.mxu0 %v8575
        %10057 = vmatprep.subr.bf16.mxu0 %v8578
        %10058 = vmatpush1.bf16.msra.mxu0 %v8577
        %10059 = vmatprep.subr.bf16.mxu0 %v8580
        %10060 = vmatpush1.bf16.msra.mxu0 %v8579
        %10061 = vmatprep.subr.bf16.mxu0 %v8582
        %10062 = vmatpush1.bf16.msra.mxu0 %v8581
        %10063 = vmatprep.subr.bf16.mxu0 %v8584
        %10064 = vmatpush1.bf16.msra.mxu0 %v8583
        %10065 = vmatprep.subr.bf16.mxu0 %v8586
        %10066 = vmatpush1.bf16.msra.mxu0 %v8585
        %10067 = vmatprep.subr.bf16.mxu0 %v8588
        %10068 = vmatpush1.bf16.msra.mxu0 %v8587
        %10069 = vmatprep.subr.bf16.mxu0 %v8590
        %10070 = vmatpush1.bf16.msra.mxu0 %v8589
        %10071 = vmatprep.subr.bf16.mxu0 %v8592
        %10072 = vmatpush1.bf16.msra.mxu0 %v8591
        %10073 = vmatprep.subr.bf16.mxu0 %v8594
        %10074 = vmatpush1.bf16.msra.mxu0 %v8593
        %10075 = vmatprep.subr.bf16.mxu0 %v8596
        %10076 = vmatpush1.bf16.msra.mxu0 %v8595
        %10077 = vmatprep.subr.bf16.mxu0 %v8598
        %10078 = vmatpush1.bf16.msra.mxu0 %v8597
        %10079 = vmatprep.mubr.bf16.mxu0 %v5115
        %10080 = vmatmul.mubr.bf16.gmra.mrb[0].mxu0 %v5114
        %v10081 = vpop.f32.mrb[0].mxu0
        %v10082 = vadd.f32 %v10009, %v10081
        %v10083 = vpop.f32.mrb[0].mxu0
        %v10084 = vadd.f32 %v10011, %v10083
        %v10085 = vpop.f32.mrb[0].mxu0
        %v10086 = vadd.f32 %v10013, %v10085
        %v10087 = vpop.f32.mrb[0].mxu0
        %v10088 = vadd.f32 %v10015, %v10087
        %10089 = vmatprep.mubr.bf16.mxu0 %v5119
        %10090 = vmatmul.mubr.bf16.gmra.mrb[0].mxu0 %v5118
        %v10091 = vpop.f32.mrb[0].mxu0
        %v10092 = vadd.f32 %v10019, %v10091
        %v10093 = vpop.f32.mrb[0].mxu0
        %v10094 = vadd.f32 %v10021, %v10093
        %v10095 = vpop.f32.mrb[0].mxu0
        %v10096 = vadd.f32 %v10023, %v10095
        %v10097 = vpop.f32.mrb[0].mxu0
        %v10098 = vadd.f32 %v10025, %v10097
        %10099 = vmatprep.mubr.bf16.mxu0 %v5123
        %10100 = vmatmul.mubr.bf16.gmra.mrb[0].mxu0 %v5122
        %v10101 = vpop.f32.mrb[0].mxu0
        %v10102 = vadd.f32 %v10029, %v10101
        %v10103 = vpop.f32.mrb[0].mxu0
        %v10104 = vadd.f32 %v10031, %v10103
        %v10105 = vpop.f32.mrb[0].mxu0
        %v10106 = vadd.f32 %v10033, %v10105
        %v10107 = vpop.f32.mrb[0].mxu0
        %v10108 = vadd.f32 %v10035, %v10107
        %10109 = vmatprep.mubr.bf16.mxu0 %v5127
        %10110 = vmatmul.mubr.bf16.gmra.mrb[0].mxu0 %v5126
        %v10111 = vpop.f32.mrb[0].mxu0
        %v10112 = vadd.f32 %v10039, %v10111
        %v10113 = vpop.f32.mrb[0].mxu0
        %v10114 = vadd.f32 %v10041, %v10113
        %v10115 = vpop.f32.mrb[0].mxu0
        %v10116 = vadd.f32 %v10043, %v10115
        %v10117 = vpop.f32.mrb[0].mxu0
        %v10118 = vadd.f32 %v10045, %v10117
        %10119 = vdwg.mxu0
        %10120 = vmatprep.subr.bf16.mxu0 %v8600
        %10121 = vmatpush1.bf16.msra.mxu0 %v8599
        %10122 = vmatprep.subr.bf16.mxu0 %v8602
        %10123 = vmatpush1.bf16.msra.mxu0 %v8601
        %10124 = vmatprep.subr.bf16.mxu0 %v8604
        %10125 = vmatpush1.bf16.msra.mxu0 %v8603
        %10126 = vmatprep.subr.bf16.mxu0 %v8606
        %10127 = vmatpush1.bf16.msra.mxu0 %v8605
        %10128 = vmatprep.subr.bf16.mxu0 %v8608
        %10129 = vmatpush1.bf16.msra.mxu0 %v8607
        %10130 = vmatprep.subr.bf16.mxu0 %v8610
        %10131 = vmatpush1.bf16.msra.mxu0 %v8609
        %10132 = vmatprep.subr.bf16.mxu0 %v8612
        %10133 = vmatpush1.bf16.msra.mxu0 %v8611
        %10134 = vmatprep.subr.bf16.mxu0 %v8614
        %10135 = vmatpush1.bf16.msra.mxu0 %v8613
        %10136 = vmatprep.subr.bf16.mxu0 %v8616
        %10137 = vmatpush1.bf16.msra.mxu0 %v8615
        %10138 = vmatprep.subr.bf16.mxu0 %v8618
        %10139 = vmatpush1.bf16.msra.mxu0 %v8617
        %10140 = vmatprep.subr.bf16.mxu0 %v8620
        %10141 = vmatpush1.bf16.msra.mxu0 %v8619
        %10142 = vmatprep.subr.bf16.mxu0 %v8622
        %10143 = vmatpush1.bf16.msra.mxu0 %v8621
        %10144 = vmatprep.subr.bf16.mxu0 %v8624
        %10145 = vmatpush1.bf16.msra.mxu0 %v8623
        %10146 = vmatprep.subr.bf16.mxu0 %v8626
        %10147 = vmatpush1.bf16.msra.mxu0 %v8625
        %10148 = vmatprep.subr.bf16.mxu0 %v8628
        %10149 = vmatpush1.bf16.msra.mxu0 %v8627
        %10150 = vmatprep.subr.bf16.mxu0 %v8630
        %10151 = vmatpush1.bf16.msra.mxu0 %v8629
        %10152 = vmatprep.mubr.bf16.mxu0 %v5117
        %10153 = vmatmul.mubr.bf16.gmra.mrb[0].mxu0 %v5116
        %v10154 = vpop.f32.mrb[0].mxu0
        %v10155 = vadd.f32 %v10082, %v10154
        %v10156 = vpop.f32.mrb[0].mxu0
        %v10157 = vadd.f32 %v10084, %v10156
        %v10158 = vpop.f32.mrb[0].mxu0
        %v10159 = vadd.f32 %v10086, %v10158
        %v10160 = vpop.f32.mrb[0].mxu0
        %v10161 = vadd.f32 %v10088, %v10160
        %10162 = vmatprep.mubr.bf16.mxu0 %v5121
        %10163 = vmatmul.mubr.bf16.gmra.mrb[0].mxu0 %v5120
        %v10164 = vpop.f32.mrb[0].mxu0
        %v10165 = vadd.f32 %v10092, %v10164
        %v10166 = vpop.f32.mrb[0].mxu0
        %v10167 = vadd.f32 %v10094, %v10166
        %v10168 = vpop.f32.mrb[0].mxu0
        %v10169 = vadd.f32 %v10096, %v10168
        %v10170 = vpop.f32.mrb[0].mxu0
        %v10171 = vadd.f32 %v10098, %v10170
        %10172 = vmatprep.mubr.bf16.mxu0 %v5125
        %10173 = vmatmul.mubr.bf16.gmra.mrb[0].mxu0 %v5124
        %v10174 = vpop.f32.mrb[0].mxu0
        %v10175 = vadd.f32 %v10102, %v10174
        %v10176 = vpop.f32.mrb[0].mxu0
        %v10177 = vadd.f32 %v10104, %v10176
        %v10178 = vpop.f32.mrb[0].mxu0
        %v10179 = vadd.f32 %v10106, %v10178
        %v10180 = vpop.f32.mrb[0].mxu0
        %v10181 = vadd.f32 %v10108, %v10180
        %10182 = vmatprep.mubr.bf16.mxu0 %v5129
        %10183 = vmatmul.mubr.bf16.gmra.mrb[0].mxu0 %v5128
        %v10184 = vpop.f32.mrb[0].mxu0
        %v10185 = vadd.f32 %v10112, %v10184
        %v10186 = vpop.f32.mrb[0].mxu0
        %v10187 = vadd.f32 %v10114, %v10186
        %v10188 = vpop.f32.mrb[0].mxu0
        %v10189 = vadd.f32 %v10116, %v10188
        %v10190 = vpop.f32.mrb[0].mxu0
        %v10191 = vadd.f32 %v10118, %v10190
        %10192 = vdwg.mxu0
        %10193 = vmatprep.subr.bf16.mxu0 %v8632
        %10194 = vmatpush1.bf16.msra.mxu0 %v8631
        %10195 = vmatprep.subr.bf16.mxu0 %v8634
        %10196 = vmatpush1.bf16.msra.mxu0 %v8633
        %10197 = vmatprep.subr.bf16.mxu0 %v8636
        %10198 = vmatpush1.bf16.msra.mxu0 %v8635
        %10199 = vmatprep.subr.bf16.mxu0 %v8638
        %10200 = vmatpush1.bf16.msra.mxu0 %v8637
        %10201 = vmatprep.subr.bf16.mxu0 %v8640
        %10202 = vmatpush1.bf16.msra.mxu0 %v8639
        %10203 = vmatprep.subr.bf16.mxu0 %v8642
        %10204 = vmatpush1.bf16.msra.mxu0 %v8641
        %10205 = vmatprep.subr.bf16.mxu0 %v8644
        %10206 = vmatpush1.bf16.msra.mxu0 %v8643
        %10207 = vmatprep.subr.bf16.mxu0 %v8646
        %10208 = vmatpush1.bf16.msra.mxu0 %v8645
        %10209 = vmatprep.subr.bf16.mxu0 %v8648
        %10210 = vmatpush1.bf16.msra.mxu0 %v8647
        %10211 = vmatprep.subr.bf16.mxu0 %v8650
        %10212 = vmatpush1.bf16.msra.mxu0 %v8649
        %10213 = vmatprep.subr.bf16.mxu0 %v8652
        %10214 = vmatpush1.bf16.msra.mxu0 %v8651
        %10215 = vmatprep.subr.bf16.mxu0 %v8654
        %10216 = vmatpush1.bf16.msra.mxu0 %v8653
        %10217 = vmatprep.subr.bf16.mxu0 %v8656
        %10218 = vmatpush1.bf16.msra.mxu0 %v8655
        %10219 = vmatprep.subr.bf16.mxu0 %v8658
        %10220 = vmatpush1.bf16.msra.mxu0 %v8657
        %10221 = vmatprep.subr.bf16.mxu0 %v8660
        %10222 = vmatpush1.bf16.msra.mxu0 %v8659
        %10223 = vmatprep.subr.bf16.mxu0 %v8662
        %10224 = vmatpush1.bf16.msra.mxu0 %v8661
        %10225 = vmatprep.mubr.bf16.mxu0 %v5387
        %10226 = vmatmul.mubr.bf16.gmra.mrb[0].mxu0 %v5386
        %v10227 = vpop.f32.mrb[0].mxu0
        %v10228 = vadd.f32 %v10155, %v10227
        %v10229 = vpop.f32.mrb[0].mxu0
        %v10230 = vadd.f32 %v10157, %v10229
        %v10231 = vpop.f32.mrb[0].mxu0
        %v10232 = vadd.f32 %v10159, %v10231
        %v10233 = vpop.f32.mrb[0].mxu0
        %v10234 = vadd.f32 %v10161, %v10233
        %10235 = vmatprep.mubr.bf16.mxu0 %v5391
        %10236 = vmatmul.mubr.bf16.gmra.mrb[0].mxu0 %v5390
        %v10237 = vpop.f32.mrb[0].mxu0
        %v10238 = vadd.f32 %v10165, %v10237
        %v10239 = vpop.f32.mrb[0].mxu0
        %v10240 = vadd.f32 %v10167, %v10239
        %v10241 = vpop.f32.mrb[0].mxu0
        %v10242 = vadd.f32 %v10169, %v10241
        %v10243 = vpop.f32.mrb[0].mxu0
        %v10244 = vadd.f32 %v10171, %v10243
        %10245 = vmatprep.mubr.bf16.mxu0 %v5395
        %10246 = vmatmul.mubr.bf16.gmra.mrb[0].mxu0 %v5394
        %v10247 = vpop.f32.mrb[0].mxu0
        %v10248 = vadd.f32 %v10175, %v10247
        %v10249 = vpop.f32.mrb[0].mxu0
        %v10250 = vadd.f32 %v10177, %v10249
        %v10251 = vpop.f32.mrb[0].mxu0
        %v10252 = vadd.f32 %v10179, %v10251
        %v10253 = vpop.f32.mrb[0].mxu0
        %v10254 = vadd.f32 %v10181, %v10253
        %10255 = vmatprep.mubr.bf16.mxu0 %v5399
        %10256 = vmatmul.mubr.bf16.gmra.mrb[0].mxu0 %v5398
        %v10257 = vpop.f32.mrb[0].mxu0
        %v10258 = vadd.f32 %v10185, %v10257
        %v10259 = vpop.f32.mrb[0].mxu0
        %v10260 = vadd.f32 %v10187, %v10259
        %v10261 = vpop.f32.mrb[0].mxu0
        %v10262 = vadd.f32 %v10189, %v10261
        %v10263 = vpop.f32.mrb[0].mxu0
        %v10264 = vadd.f32 %v10191, %v10263
        %10265 = vdwg.mxu0
        %10266 = vmatprep.subr.bf16.mxu0 %v8664
        %10267 = vmatpush1.bf16.msra.mxu0 %v8663
        %10268 = vmatprep.subr.bf16.mxu0 %v8666
        %10269 = vmatpush1.bf16.msra.mxu0 %v8665
        %10270 = vmatprep.subr.bf16.mxu0 %v8668
        %10271 = vmatpush1.bf16.msra.mxu0 %v8667
        %10272 = vmatprep.subr.bf16.mxu0 %v8670
        %10273 = vmatpush1.bf16.msra.mxu0 %v8669
        %10274 = vmatprep.subr.bf16.mxu0 %v8672
        %10275 = vmatpush1.bf16.msra.mxu0 %v8671
        %10276 = vmatprep.subr.bf16.mxu0 %v8674
        %10277 = vmatpush1.bf16.msra.mxu0 %v8673
        %10278 = vmatprep.subr.bf16.mxu0 %v8676
        %10279 = vmatpush1.bf16.msra.mxu0 %v8675
        %10280 = vmatprep.subr.bf16.mxu0 %v8678
        %10281 = vmatpush1.bf16.msra.mxu0 %v8677
        %10282 = vmatprep.subr.bf16.mxu0 %v8680
        %10283 = vmatpush1.bf16.msra.mxu0 %v8679
        %10284 = vmatprep.subr.bf16.mxu0 %v8682
        %10285 = vmatpush1.bf16.msra.mxu0 %v8681
        %10286 = vmatprep.subr.bf16.mxu0 %v8684
        %10287 = vmatpush1.bf16.msra.mxu0 %v8683
        %10288 = vmatprep.subr.bf16.mxu0 %v8686
        %10289 = vmatpush1.bf16.msra.mxu0 %v8685
        %10290 = vmatprep.subr.bf16.mxu0 %v8688
        %10291 = vmatpush1.bf16.msra.mxu0 %v8687
        %10292 = vmatprep.subr.bf16.mxu0 %v8690
        %10293 = vmatpush1.bf16.msra.mxu0 %v8689
        %10294 = vmatprep.subr.bf16.mxu0 %v8692
        %10295 = vmatpush1.bf16.msra.mxu0 %v8691
        %10296 = vmatprep.subr.bf16.mxu0 %v8694
        %10297 = vmatpush1.bf16.msra.mxu0 %v8693
        %10298 = vmatprep.mubr.bf16.mxu0 %v5389
        %10299 = vmatmul.mubr.bf16.gmra.mrb[0].mxu0 %v5388
        %v10300 = vpop.f32.mrb[0].mxu0
        %v10301 = vadd.f32 %v10228, %v10300
        %v10302 = vpop.f32.mrb[0].mxu0
        %v10303 = vadd.f32 %v10230, %v10302
        %v10304 = vpop.f32.mrb[0].mxu0
        %v10305 = vadd.f32 %v10232, %v10304
        %v10306 = vpop.f32.mrb[0].mxu0
        %v10307 = vadd.f32 %v10234, %v10306
        %10308 = vmatprep.mubr.bf16.mxu0 %v5393
        %10309 = vmatmul.mubr.bf16.gmra.mrb[0].mxu0 %v5392
        %v10310 = vpop.f32.mrb[0].mxu0
        %v10311 = vadd.f32 %v10238, %v10310
        %v10312 = vpop.f32.mrb[0].mxu0
        %v10313 = vadd.f32 %v10240, %v10312
        %v10314 = vpop.f32.mrb[0].mxu0
        %v10315 = vadd.f32 %v10242, %v10314
        %v10316 = vpop.f32.mrb[0].mxu0
        %v10317 = vadd.f32 %v10244, %v10316
        %10318 = vmatprep.mubr.bf16.mxu0 %v5397
        %10319 = vmatmul.mubr.bf16.gmra.mrb[0].mxu0 %v5396
        %v10320 = vpop.f32.mrb[0].mxu0
        %v10321 = vadd.f32 %v10248, %v10320
        %v10322 = vpop.f32.mrb[0].mxu0
        %v10323 = vadd.f32 %v10250, %v10322
        %v10324 = vpop.f32.mrb[0].mxu0
        %v10325 = vadd.f32 %v10252, %v10324
        %v10326 = vpop.f32.mrb[0].mxu0
        %v10327 = vadd.f32 %v10254, %v10326
        %10328 = vmatprep.mubr.bf16.mxu0 %v5401
        %10329 = vmatmul.mubr.bf16.gmra.mrb[0].mxu0 %v5400
        %v10330 = vpop.f32.mrb[0].mxu0
        %v10331 = vadd.f32 %v10258, %v10330
        %v10332 = vpop.f32.mrb[0].mxu0
        %v10333 = vadd.f32 %v10260, %v10332
        %v10334 = vpop.f32.mrb[0].mxu0
        %v10335 = vadd.f32 %v10262, %v10334
        %v10336 = vpop.f32.mrb[0].mxu0
        %v10337 = vadd.f32 %v10264, %v10336
        %10338 = vdwg.mxu0
        %10339 = vmatprep.subr.bf16.mxu0 %v8696
        %10340 = vmatpush1.bf16.msra.mxu0 %v8695
        %10341 = vmatprep.subr.bf16.mxu0 %v8698
        %10342 = vmatpush1.bf16.msra.mxu0 %v8697
        %10343 = vmatprep.subr.bf16.mxu0 %v8700
        %10344 = vmatpush1.bf16.msra.mxu0 %v8699
        %10345 = vmatprep.subr.bf16.mxu0 %v8702
        %10346 = vmatpush1.bf16.msra.mxu0 %v8701
        %10347 = vmatprep.subr.bf16.mxu0 %v8704
        %10348 = vmatpush1.bf16.msra.mxu0 %v8703
        %10349 = vmatprep.subr.bf16.mxu0 %v8706
        %10350 = vmatpush1.bf16.msra.mxu0 %v8705
        %10351 = vmatprep.subr.bf16.mxu0 %v8708
        %10352 = vmatpush1.bf16.msra.mxu0 %v8707
        %10353 = vmatprep.subr.bf16.mxu0 %v8710
        %10354 = vmatpush1.bf16.msra.mxu0 %v8709
        %10355 = vmatprep.subr.bf16.mxu0 %v8712
        %10356 = vmatpush1.bf16.msra.mxu0 %v8711
        %10357 = vmatprep.subr.bf16.mxu0 %v8714
        %10358 = vmatpush1.bf16.msra.mxu0 %v8713
        %10359 = vmatprep.subr.bf16.mxu0 %v8716
        %10360 = vmatpush1.bf16.msra.mxu0 %v8715
        %10361 = vmatprep.subr.bf16.mxu0 %v8718
        %10362 = vmatpush1.bf16.msra.mxu0 %v8717
        %10363 = vmatprep.subr.bf16.mxu0 %v8720
        %10364 = vmatpush1.bf16.msra.mxu0 %v8719
        %10365 = vmatprep.subr.bf16.mxu0 %v8722
        %10366 = vmatpush1.bf16.msra.mxu0 %v8721
        %10367 = vmatprep.subr.bf16.mxu0 %v8724
        %10368 = vmatpush1.bf16.msra.mxu0 %v8723
        %10369 = vmatprep.subr.bf16.mxu0 %v8726
        %10370 = vmatpush1.bf16.msra.mxu0 %v8725
        %10371 = vmatprep.mubr.bf16.mxu0 %v5436
        %10372 = vmatmul.mubr.bf16.gmra.mrb[0].mxu0 %v5435
        %v10373 = vpop.f32.mrb[0].mxu0
        %v10374 = vadd.f32 %v10301, %v10373
        %v10375 = vpop.f32.mrb[0].mxu0
        %v10376 = vadd.f32 %v10303, %v10375
        %v10377 = vpop.f32.mrb[0].mxu0
        %v10378 = vadd.f32 %v10305, %v10377
        %v10379 = vpop.f32.mrb[0].mxu0
        %v10380 = vadd.f32 %v10307, %v10379
        %10381 = vmatprep.mubr.bf16.mxu0 %v5440
        %10382 = vmatmul.mubr.bf16.gmra.mrb[0].mxu0 %v5439
        %v10383 = vpop.f32.mrb[0].mxu0
        %v10384 = vadd.f32 %v10311, %v10383
        %v10385 = vpop.f32.mrb[0].mxu0
        %v10386 = vadd.f32 %v10313, %v10385
        %v10387 = vpop.f32.mrb[0].mxu0
        %v10388 = vadd.f32 %v10315, %v10387
        %v10389 = vpop.f32.mrb[0].mxu0
        %v10390 = vadd.f32 %v10317, %v10389
        %10391 = vmatprep.mubr.bf16.mxu0 %v5444
        %10392 = vmatmul.mubr.bf16.gmra.mrb[0].mxu0 %v5443
        %v10393 = vpop.f32.mrb[0].mxu0
        %v10394 = vadd.f32 %v10321, %v10393
        %v10395 = vpop.f32.mrb[0].mxu0
        %v10396 = vadd.f32 %v10323, %v10395
        %v10397 = vpop.f32.mrb[0].mxu0
        %v10398 = vadd.f32 %v10325, %v10397
        %v10399 = vpop.f32.mrb[0].mxu0
        %v10400 = vadd.f32 %v10327, %v10399
        %10401 = vmatprep.mubr.bf16.mxu0 %v5448
        %10402 = vmatmul.mubr.bf16.gmra.mrb[0].mxu0 %v5447
        %v10403 = vpop.f32.mrb[0].mxu0
        %v10404 = vadd.f32 %v10331, %v10403
        %v10405 = vpop.f32.mrb[0].mxu0
        %v10406 = vadd.f32 %v10333, %v10405
        %v10407 = vpop.f32.mrb[0].mxu0
        %v10408 = vadd.f32 %v10335, %v10407
        %v10409 = vpop.f32.mrb[0].mxu0
        %v10410 = vadd.f32 %v10337, %v10409
        %10411 = vdwg.mxu0
        %10412 = vmatprep.subr.bf16.mxu0 %v8728
        %10413 = vmatpush1.bf16.msra.mxu0 %v8727
        %10414 = vmatprep.subr.bf16.mxu0 %v8730
        %10415 = vmatpush1.bf16.msra.mxu0 %v8729
        %10416 = vmatprep.subr.bf16.mxu0 %v8732
        %10417 = vmatpush1.bf16.msra.mxu0 %v8731
        %10418 = vmatprep.subr.bf16.mxu0 %v8734
        %10419 = vmatpush1.bf16.msra.mxu0 %v8733
        %10420 = vmatprep.subr.bf16.mxu0 %v8736
        %10421 = vmatpush1.bf16.msra.mxu0 %v8735
        %10422 = vmatprep.subr.bf16.mxu0 %v8738
        %10423 = vmatpush1.bf16.msra.mxu0 %v8737
        %10424 = vmatprep.subr.bf16.mxu0 %v8740
        %10425 = vmatpush1.bf16.msra.mxu0 %v8739
        %10426 = vmatprep.subr.bf16.mxu0 %v8742
        %10427 = vmatpush1.bf16.msra.mxu0 %v8741
        %10428 = vmatprep.subr.bf16.mxu0 %v8744
        %10429 = vmatpush1.bf16.msra.mxu0 %v8743
        %10430 = vmatprep.subr.bf16.mxu0 %v8746
        %10431 = vmatpush1.bf16.msra.mxu0 %v8745
        %10432 = vmatprep.subr.bf16.mxu0 %v8748
        %10433 = vmatpush1.bf16.msra.mxu0 %v8747
        %10434 = vmatprep.subr.bf16.mxu0 %v8750
        %10435 = vmatpush1.bf16.msra.mxu0 %v8749
        %10436 = vmatprep.subr.bf16.mxu0 %v8752
        %10437 = vmatpush1.bf16.msra.mxu0 %v8751
        %10438 = vmatprep.subr.bf16.mxu0 %v8754
        %10439 = vmatpush1.bf16.msra.mxu0 %v8753
        %10440 = vmatprep.subr.bf16.mxu0 %v8756
        %10441 = vmatpush1.bf16.msra.mxu0 %v8755
        %10442 = vmatprep.subr.bf16.mxu0 %v8758
        %10443 = vmatpush1.bf16.msra.mxu0 %v8757
        %10444 = vmatprep.mubr.bf16.mxu0 %v5438
        %10445 = vmatmul.mubr.bf16.gmra.mrb[0].mxu0 %v5437
        %v10446 = vpop.f32.mrb[0].mxu0
        %v10447 = vadd.f32 %v10374, %v10446
        %v10448 = vpop.f32.mrb[0].mxu0
        %v10449 = vadd.f32 %v10376, %v10448
        %v10450 = vpop.f32.mrb[0].mxu0
        %v10451 = vadd.f32 %v10378, %v10450
        %v10452 = vpop.f32.mrb[0].mxu0
        %v10453 = vadd.f32 %v10380, %v10452
        %10454 = vmatprep.mubr.bf16.mxu0 %v5442
        %10455 = vmatmul.mubr.bf16.gmra.mrb[0].mxu0 %v5441
        %v10456 = vpop.f32.mrb[0].mxu0
        %v10457 = vadd.f32 %v10384, %v10456
        %v10458 = vpop.f32.mrb[0].mxu0
        %v10459 = vadd.f32 %v10386, %v10458
        %v10460 = vpop.f32.mrb[0].mxu0
        %v10461 = vadd.f32 %v10388, %v10460
        %v10462 = vpop.f32.mrb[0].mxu0
        %v10463 = vadd.f32 %v10390, %v10462
        %10464 = vmatprep.mubr.bf16.mxu0 %v5446
        %10465 = vmatmul.mubr.bf16.gmra.mrb[0].mxu0 %v5445
        %v10466 = vpop.f32.mrb[0].mxu0
        %v10467 = vadd.f32 %v10394, %v10466
        %v10468 = vpop.f32.mrb[0].mxu0
        %v10469 = vadd.f32 %v10396, %v10468
        %v10470 = vpop.f32.mrb[0].mxu0
        %v10471 = vadd.f32 %v10398, %v10470
        %v10472 = vpop.f32.mrb[0].mxu0
        %v10473 = vadd.f32 %v10400, %v10472
        %10474 = vmatprep.mubr.bf16.mxu0 %v5450
        %10475 = vmatmul.mubr.bf16.gmra.mrb[0].mxu0 %v5449
        %v10476 = vpop.f32.mrb[0].mxu0
        %v10477 = vadd.f32 %v10404, %v10476
        %v10478 = vpop.f32.mrb[0].mxu0
        %v10479 = vadd.f32 %v10406, %v10478
        %v10480 = vpop.f32.mrb[0].mxu0
        %v10481 = vadd.f32 %v10408, %v10480
        %v10482 = vpop.f32.mrb[0].mxu0
        %v10483 = vadd.f32 %v10410, %v10482
        %10484 = vdwg.mxu0
        %10485 = vmatprep.subr.bf16.mxu0 %v8760
        %10486 = vmatpush1.bf16.msra.mxu0 %v8759
        %10487 = vmatprep.subr.bf16.mxu0 %v8762
        %10488 = vmatpush1.bf16.msra.mxu0 %v8761
        %10489 = vmatprep.subr.bf16.mxu0 %v8764
        %10490 = vmatpush1.bf16.msra.mxu0 %v8763
        %10491 = vmatprep.subr.bf16.mxu0 %v8766
        %10492 = vmatpush1.bf16.msra.mxu0 %v8765
        %10493 = vmatprep.subr.bf16.mxu0 %v8768
        %10494 = vmatpush1.bf16.msra.mxu0 %v8767
        %10495 = vmatprep.subr.bf16.mxu0 %v8770
        %10496 = vmatpush1.bf16.msra.mxu0 %v8769
        %10497 = vmatprep.subr.bf16.mxu0 %v8772
        %10498 = vmatpush1.bf16.msra.mxu0 %v8771
        %10499 = vmatprep.subr.bf16.mxu0 %v8774
        %10500 = vmatpush1.bf16.msra.mxu0 %v8773
        %10501 = vmatprep.subr.bf16.mxu0 %v8776
        %10502 = vmatpush1.bf16.msra.mxu0 %v8775
        %10503 = vmatprep.subr.bf16.mxu0 %v8778
        %10504 = vmatpush1.bf16.msra.mxu0 %v8777
        %10505 = vmatprep.subr.bf16.mxu0 %v8780
        %10506 = vmatpush1.bf16.msra.mxu0 %v8779
        %10507 = vmatprep.subr.bf16.mxu0 %v8782
        %10508 = vmatpush1.bf16.msra.mxu0 %v8781
        %10509 = vmatprep.subr.bf16.mxu0 %v8784
        %10510 = vmatpush1.bf16.msra.mxu0 %v8783
        %10511 = vmatprep.subr.bf16.mxu0 %v8786
        %10512 = vmatpush1.bf16.msra.mxu0 %v8785
        %10513 = vmatprep.subr.bf16.mxu0 %v8788
        %10514 = vmatpush1.bf16.msra.mxu0 %v8787
        %10515 = vmatprep.subr.bf16.mxu0 %v8790
        %10516 = vmatpush1.bf16.msra.mxu0 %v8789
        %10517 = vmatprep.mubr.bf16.mxu0 %v5708
        %10518 = vmatmul.mubr.bf16.gmra.mrb[0].mxu0 %v5707
        %v10519 = vpop.f32.mrb[0].mxu0
        %v10520 = vadd.f32 %v10447, %v10519
        %v10521 = vpop.f32.mrb[0].mxu0
        %v10522 = vadd.f32 %v10449, %v10521
        %v10523 = vpop.f32.mrb[0].mxu0
        %v10524 = vadd.f32 %v10451, %v10523
        %v10525 = vpop.f32.mrb[0].mxu0
        %v10526 = vadd.f32 %v10453, %v10525
        %10527 = vmatprep.mubr.bf16.mxu0 %v5712
        %10528 = vmatmul.mubr.bf16.gmra.mrb[0].mxu0 %v5711
        %v10529 = vpop.f32.mrb[0].mxu0
        %v10530 = vadd.f32 %v10457, %v10529
        %v10531 = vpop.f32.mrb[0].mxu0
        %v10532 = vadd.f32 %v10459, %v10531
        %v10533 = vpop.f32.mrb[0].mxu0
        %v10534 = vadd.f32 %v10461, %v10533
        %v10535 = vpop.f32.mrb[0].mxu0
        %v10536 = vadd.f32 %v10463, %v10535
        %10537 = vmatprep.mubr.bf16.mxu0 %v5716
        %10538 = vmatmul.mubr.bf16.gmra.mrb[0].mxu0 %v5715
        %v10539 = vpop.f32.mrb[0].mxu0
        %v10540 = vadd.f32 %v10467, %v10539
        %v10541 = vpop.f32.mrb[0].mxu0
        %v10542 = vadd.f32 %v10469, %v10541
        %v10543 = vpop.f32.mrb[0].mxu0
        %v10544 = vadd.f32 %v10471, %v10543
        %v10545 = vpop.f32.mrb[0].mxu0
        %v10546 = vadd.f32 %v10473, %v10545
        %10547 = vmatprep.mubr.bf16.mxu0 %v5720
        %10548 = vmatmul.mubr.bf16.gmra.mrb[0].mxu0 %v5719
        %v10549 = vpop.f32.mrb[0].mxu0
        %v10550 = vadd.f32 %v10477, %v10549
        %v10551 = vpop.f32.mrb[0].mxu0
        %v10552 = vadd.f32 %v10479, %v10551
        %v10553 = vpop.f32.mrb[0].mxu0
        %v10554 = vadd.f32 %v10481, %v10553
        %v10555 = vpop.f32.mrb[0].mxu0
        %v10556 = vadd.f32 %v10483, %v10555
        %10557 = vdwg.mxu0
        %10558 = vmatprep.subr.bf16.mxu0 %v8792
        %10559 = vmatpush1.bf16.msra.mxu0 %v8791
        %10560 = vmatprep.subr.bf16.mxu0 %v8794
        %10561 = vmatpush1.bf16.msra.mxu0 %v8793
        %10562 = vmatprep.subr.bf16.mxu0 %v8796
        %10563 = vmatpush1.bf16.msra.mxu0 %v8795
        %10564 = vmatprep.subr.bf16.mxu0 %v8798
        %10565 = vmatpush1.bf16.msra.mxu0 %v8797
        %10566 = vmatprep.subr.bf16.mxu0 %v8800
        %10567 = vmatpush1.bf16.msra.mxu0 %v8799
        %10568 = vmatprep.subr.bf16.mxu0 %v8802
        %10569 = vmatpush1.bf16.msra.mxu0 %v8801
        %10570 = vmatprep.subr.bf16.mxu0 %v8804
        %10571 = vmatpush1.bf16.msra.mxu0 %v8803
        %10572 = vmatprep.subr.bf16.mxu0 %v8806
        %10573 = vmatpush1.bf16.msra.mxu0 %v8805
        %10574 = vmatprep.subr.bf16.mxu0 %v8808
        %10575 = vmatpush1.bf16.msra.mxu0 %v8807
        %10576 = vmatprep.subr.bf16.mxu0 %v8810
        %10577 = vmatpush1.bf16.msra.mxu0 %v8809
        %10578 = vmatprep.subr.bf16.mxu0 %v8812
        %10579 = vmatpush1.bf16.msra.mxu0 %v8811
        %10580 = vmatprep.subr.bf16.mxu0 %v8814
        %10581 = vmatpush1.bf16.msra.mxu0 %v8813
        %10582 = vmatprep.subr.bf16.mxu0 %v8816
        %10583 = vmatpush1.bf16.msra.mxu0 %v8815
        %10584 = vmatprep.subr.bf16.mxu0 %v8818
        %10585 = vmatpush1.bf16.msra.mxu0 %v8817
        %10586 = vmatprep.subr.bf16.mxu0 %v8820
        %10587 = vmatpush1.bf16.msra.mxu0 %v8819
        %10588 = vmatprep.subr.bf16.mxu0 %v8822
        %10589 = vmatpush1.bf16.msra.mxu0 %v8821
        %10590 = vmatprep.mubr.bf16.mxu0 %v5710
        %10591 = vmatmul.mubr.bf16.gmra.mrb[0].mxu0 %v5709
        %v10592 = vpop.f32.mrb[0].mxu0
        %v10593 = vadd.f32 %v10520, %v10592
        %v10594 = vpop.f32.mrb[0].mxu0
        %v10595 = vadd.f32 %v10522, %v10594
        %v10596 = vpop.f32.mrb[0].mxu0
        %v10597 = vadd.f32 %v10524, %v10596
        %v10598 = vpop.f32.mrb[0].mxu0
        %v10599 = vadd.f32 %v10526, %v10598
        %10600 = vmatprep.mubr.bf16.mxu0 %v5714
        %10601 = vmatmul.mubr.bf16.gmra.mrb[0].mxu0 %v5713
        %v10602 = vpop.f32.mrb[0].mxu0
        %v10603 = vadd.f32 %v10530, %v10602
        %v10604 = vpop.f32.mrb[0].mxu0
        %v10605 = vadd.f32 %v10532, %v10604
        %v10606 = vpop.f32.mrb[0].mxu0
        %v10607 = vadd.f32 %v10534, %v10606
        %v10608 = vpop.f32.mrb[0].mxu0
        %v10609 = vadd.f32 %v10536, %v10608
        %10610 = vmatprep.mubr.bf16.mxu0 %v5718
        %10611 = vmatmul.mubr.bf16.gmra.mrb[0].mxu0 %v5717
        %v10612 = vpop.f32.mrb[0].mxu0
        %v10613 = vadd.f32 %v10540, %v10612
        %v10614 = vpop.f32.mrb[0].mxu0
        %v10615 = vadd.f32 %v10542, %v10614
        %v10616 = vpop.f32.mrb[0].mxu0
        %v10617 = vadd.f32 %v10544, %v10616
        %v10618 = vpop.f32.mrb[0].mxu0
        %v10619 = vadd.f32 %v10546, %v10618
        %10620 = vmatprep.mubr.bf16.mxu0 %v5722
        %10621 = vmatmul.mubr.bf16.gmra.mrb[0].mxu0 %v5721
        %v10622 = vpop.f32.mrb[0].mxu0
        %v10623 = vadd.f32 %v10550, %v10622
        %v10624 = vpop.f32.mrb[0].mxu0
        %v10625 = vadd.f32 %v10552, %v10624
        %v10626 = vpop.f32.mrb[0].mxu0
        %v10627 = vadd.f32 %v10554, %v10626
        %v10628 = vpop.f32.mrb[0].mxu0
        %v10629 = vadd.f32 %v10556, %v10628
        %10630 = vdwg.mxu0
        %10631 = vmatprep.subr.bf16.mxu0 %v8824
        %10632 = vmatpush1.bf16.msra.mxu0 %v8823
        %10633 = vmatprep.subr.bf16.mxu0 %v8826
        %10634 = vmatpush1.bf16.msra.mxu0 %v8825
        %10635 = vmatprep.subr.bf16.mxu0 %v8828
        %10636 = vmatpush1.bf16.msra.mxu0 %v8827
        %10637 = vmatprep.subr.bf16.mxu0 %v8830
        %10638 = vmatpush1.bf16.msra.mxu0 %v8829
        %10639 = vmatprep.subr.bf16.mxu0 %v8832
        %10640 = vmatpush1.bf16.msra.mxu0 %v8831
        %10641 = vmatprep.subr.bf16.mxu0 %v8834
        %10642 = vmatpush1.bf16.msra.mxu0 %v8833
        %10643 = vmatprep.subr.bf16.mxu0 %v8836
        %10644 = vmatpush1.bf16.msra.mxu0 %v8835
        %10645 = vmatprep.subr.bf16.mxu0 %v8838
        %10646 = vmatpush1.bf16.msra.mxu0 %v8837
        %10647 = vmatprep.subr.bf16.mxu0 %v8840
        %10648 = vmatpush1.bf16.msra.mxu0 %v8839
        %10649 = vmatprep.subr.bf16.mxu0 %v8842
        %10650 = vmatpush1.bf16.msra.mxu0 %v8841
        %10651 = vmatprep.subr.bf16.mxu0 %v8844
        %10652 = vmatpush1.bf16.msra.mxu0 %v8843
        %10653 = vmatprep.subr.bf16.mxu0 %v8846
        %10654 = vmatpush1.bf16.msra.mxu0 %v8845
        %10655 = vmatprep.subr.bf16.mxu0 %v8848
        %10656 = vmatpush1.bf16.msra.mxu0 %v8847
        %10657 = vmatprep.subr.bf16.mxu0 %v8850
        %10658 = vmatpush1.bf16.msra.mxu0 %v8849
        %10659 = vmatprep.subr.bf16.mxu0 %v8852
        %10660 = vmatpush1.bf16.msra.mxu0 %v8851
        %10661 = vmatprep.subr.bf16.mxu0 %v8854
        %10662 = vmatpush1.bf16.msra.mxu0 %v8853
        %10663 = vmatprep.mubr.bf16.mxu0 %v5980
        %10664 = vmatmul.mubr.bf16.gmra.mrb[0].mxu0 %v5979
        %v10665 = vpop.f32.mrb[0].mxu0
        %v10666 = vadd.f32 %v10593, %v10665
        %v10667 = vpop.f32.mrb[0].mxu0
        %v10668 = vadd.f32 %v10595, %v10667
        %v10669 = vpop.f32.mrb[0].mxu0
        %v10670 = vadd.f32 %v10597, %v10669
        %v10671 = vpop.f32.mrb[0].mxu0
        %v10672 = vadd.f32 %v10599, %v10671
        %10673 = vmatprep.mubr.bf16.mxu0 %v5984
        %10674 = vmatmul.mubr.bf16.gmra.mrb[0].mxu0 %v5983
        %v10675 = vpop.f32.mrb[0].mxu0
        %v10676 = vadd.f32 %v10603, %v10675
        %v10677 = vpop.f32.mrb[0].mxu0
        %v10678 = vadd.f32 %v10605, %v10677
        %v10679 = vpop.f32.mrb[0].mxu0
        %v10680 = vadd.f32 %v10607, %v10679
        %v10681 = vpop.f32.mrb[0].mxu0
        %v10682 = vadd.f32 %v10609, %v10681
        %10683 = vmatprep.mubr.bf16.mxu0 %v5988
        %10684 = vmatmul.mubr.bf16.gmra.mrb[0].mxu0 %v5987
        %v10685 = vpop.f32.mrb[0].mxu0
        %v10686 = vadd.f32 %v10613, %v10685
        %v10687 = vpop.f32.mrb[0].mxu0
        %v10688 = vadd.f32 %v10615, %v10687
        %v10689 = vpop.f32.mrb[0].mxu0
        %v10690 = vadd.f32 %v10617, %v10689
        %v10691 = vpop.f32.mrb[0].mxu0
        %v10692 = vadd.f32 %v10619, %v10691
        %10693 = vmatprep.mubr.bf16.mxu0 %v5992
        %10694 = vmatmul.mubr.bf16.gmra.mrb[0].mxu0 %v5991
        %v10695 = vpop.f32.mrb[0].mxu0
        %v10696 = vadd.f32 %v10623, %v10695
        %v10697 = vpop.f32.mrb[0].mxu0
        %v10698 = vadd.f32 %v10625, %v10697
        %v10699 = vpop.f32.mrb[0].mxu0
        %v10700 = vadd.f32 %v10627, %v10699
        %v10701 = vpop.f32.mrb[0].mxu0
        %v10702 = vadd.f32 %v10629, %v10701
        %10703 = vdwg.mxu0
        %10704 = vmatprep.subr.bf16.mxu0 %v8856
        %10705 = vmatpush1.bf16.msra.mxu0 %v8855
        %10706 = vmatprep.subr.bf16.mxu0 %v8858
        %10707 = vmatpush1.bf16.msra.mxu0 %v8857
        %10708 = vmatprep.subr.bf16.mxu0 %v8860
        %10709 = vmatpush1.bf16.msra.mxu0 %v8859
        %10710 = vmatprep.subr.bf16.mxu0 %v8862
        %10711 = vmatpush1.bf16.msra.mxu0 %v8861
        %10712 = vmatprep.subr.bf16.mxu0 %v8864
        %10713 = vmatpush1.bf16.msra.mxu0 %v8863
        %10714 = vmatprep.subr.bf16.mxu0 %v8866
        %10715 = vmatpush1.bf16.msra.mxu0 %v8865
        %10716 = vmatprep.subr.bf16.mxu0 %v8868
        %10717 = vmatpush1.bf16.msra.mxu0 %v8867
        %10718 = vmatprep.subr.bf16.mxu0 %v8870
        %10719 = vmatpush1.bf16.msra.mxu0 %v8869
        %10720 = vmatprep.subr.bf16.mxu0 %v8872
        %10721 = vmatpush1.bf16.msra.mxu0 %v8871
        %10722 = vmatprep.subr.bf16.mxu0 %v8874
        %10723 = vmatpush1.bf16.msra.mxu0 %v8873
        %10724 = vmatprep.subr.bf16.mxu0 %v8876
        %10725 = vmatpush1.bf16.msra.mxu0 %v8875
        %10726 = vmatprep.subr.bf16.mxu0 %v8878
        %10727 = vmatpush1.bf16.msra.mxu0 %v8877
        %10728 = vmatprep.subr.bf16.mxu0 %v8880
        %10729 = vmatpush1.bf16.msra.mxu0 %v8879
        %10730 = vmatprep.subr.bf16.mxu0 %v8882
        %10731 = vmatpush1.bf16.msra.mxu0 %v8881
        %10732 = vmatprep.subr.bf16.mxu0 %v8884
        %10733 = vmatpush1.bf16.msra.mxu0 %v8883
        %10734 = vmatprep.subr.bf16.mxu0 %v8886
        %10735 = vmatpush1.bf16.msra.mxu0 %v8885
        %10736 = vmatprep.mubr.bf16.mxu0 %v5982
        %10737 = vmatmul.mubr.bf16.gmra.mrb[0].mxu0 %v5981
        %v10738 = vpop.f32.mrb[0].mxu0
        %v10739 = vadd.f32 %v10666, %v10738
        %v10740 = vpop.f32.mrb[0].mxu0
        %v10741 = vadd.f32 %v10668, %v10740
        %v10742 = vpop.f32.mrb[0].mxu0
        %v10743 = vadd.f32 %v10670, %v10742
        %v10744 = vpop.f32.mrb[0].mxu0
        %v10745 = vadd.f32 %v10672, %v10744
        %10746 = vmatprep.mubr.bf16.mxu0 %v5986
        %10747 = vmatmul.mubr.bf16.gmra.mrb[0].mxu0 %v5985
        %v10748 = vpop.f32.mrb[0].mxu0
        %v10749 = vadd.f32 %v10676, %v10748
        %v10750 = vpop.f32.mrb[0].mxu0
        %v10751 = vadd.f32 %v10678, %v10750
        %v10752 = vpop.f32.mrb[0].mxu0
        %v10753 = vadd.f32 %v10680, %v10752
        %v10754 = vpop.f32.mrb[0].mxu0
        %v10755 = vadd.f32 %v10682, %v10754
        %10756 = vmatprep.mubr.bf16.mxu0 %v5990
        %10757 = vmatmul.mubr.bf16.gmra.mrb[0].mxu0 %v5989
        %v10758 = vpop.f32.mrb[0].mxu0
        %v10759 = vadd.f32 %v10686, %v10758
        %v10760 = vpop.f32.mrb[0].mxu0
        %v10761 = vadd.f32 %v10688, %v10760
        %v10762 = vpop.f32.mrb[0].mxu0
        %v10763 = vadd.f32 %v10690, %v10762
        %v10764 = vpop.f32.mrb[0].mxu0
        %v10765 = vadd.f32 %v10692, %v10764
        %10766 = vmatprep.mubr.bf16.mxu0 %v5994
        %10767 = vmatmul.mubr.bf16.gmra.mrb[0].mxu0 %v5993
        %v10768 = vpop.f32.mrb[0].mxu0
        %v10769 = vadd.f32 %v10696, %v10768
        %v10770 = vpop.f32.mrb[0].mxu0
        %v10771 = vadd.f32 %v10698, %v10770
        %v10772 = vpop.f32.mrb[0].mxu0
        %v10773 = vadd.f32 %v10700, %v10772
        %v10774 = vpop.f32.mrb[0].mxu0
        %v10775 = vadd.f32 %v10702, %v10774
        %10776 = vdwg.mxu0
        %v10777 = vmax.f32 %v10739, 0.0
        %v10778 = vmax.f32 %v10741, 0.0
        %v10779 = vmax.f32 %v10743, 0.0
        %v10780 = vmax.f32 %v10745, 0.0
        %v10781 = vmax.f32 %v10749, 0.0
        %v10782 = vmax.f32 %v10751, 0.0
        %v10783 = vmax.f32 %v10753, 0.0
        %v10784 = vmax.f32 %v10755, 0.0
        %v10785 = vmax.f32 %v10759, 0.0
        %v10786 = vmax.f32 %v10761, 0.0
        %v10787 = vmax.f32 %v10763, 0.0
        %v10788 = vmax.f32 %v10765, 0.0
        %v10789 = vmax.f32 %v10769, 0.0
        %v10790 = vmax.f32 %v10771, 0.0
        %v10791 = vmax.f32 %v10773, 0.0
        %v10792 = vmax.f32 %v10775, 0.0
        %10793 = vst [vmem:[%s360] sm:$0xff] %v10777
        %10794 = vst [vmem:[%s360 + $0x8] sm:$0xff] %v10778
        %10795 = vst [vmem:[%s360 + $0x10] sm:$0xff] %v10779
        %10796 = vst [vmem:[%s360 + $0x18] sm:$0xff] %v10780
        %10797 = vst [vmem:[%s360 + $0x20] sm:$0xff] %v10781
        %10798 = vst [vmem:[%s360 + $0x28] sm:$0xff] %v10782
        %10799 = vst [vmem:[%s360 + $0x30] sm:$0xff] %v10783
        %10800 = vst [vmem:[%s360 + $0x38] sm:$0xff] %v10784
        %10801 = vst [vmem:[%s360 + $0x40] sm:$0xff] %v10785
        %10802 = vst [vmem:[%s360 + $0x48] sm:$0xff] %v10786
        %10803 = vst [vmem:[%s360 + $0x50] sm:$0xff] %v10787
        %10804 = vst [vmem:[%s360 + $0x58] sm:$0xff] %v10788
        %10805 = vst [vmem:[%s360 + $0x60] sm:$0xff] %v10789
        %10806 = vst [vmem:[%s360 + $0x68] sm:$0xff] %v10790
        %10807 = vst [vmem:[%s360 + $0x70] sm:$0xff] %v10791
        %10808 = vst [vmem:[%s360 + $0x78] sm:$0xff] %v10792
        %p10809 = scmp.lt.s32.totalorder %s22, 1
        %s10810 = scalar_select %p10809, %s22, 1
        %s10811 = smul.addr %s10810, 16
        %s10812 = smul.addr %s10811, 8
        %s10813 = scalar_lea.vmem %s7, %s10812
        // Predicated region
        $region73: #{hyper_dec_forward_pallas.1} parent=47 // pred_check
          %p10814 = pneg %p192
        $region74: #{hyper_dec_forward_pallas.1} parent=47 // pred_check_branch
          %10816 = sbr.rel (%p10814) target = $region76
        $region75: #{hyper_dec_forward_pallas.1} parent=47 // pred_region
          _
        $region76: #{hyper_dec_forward_pallas.1} parent=47 // pred_fallthru
          _
      $region48: #{hyper_dec_forward_pallas.1} parent=5 // pred_fallthru
        _
      %p10817 = scmp.le.s32.totalorder 2, %s17
      // Predicated region
      $region77: #{hyper_dec_forward_pallas.1} parent=5 // pred_check
        %p10818 = pneg %p10817
      $region78: #{hyper_dec_forward_pallas.1} parent=5 // pred_check_branch
        %10820 = sbr.rel (%p10818) target = $region80
      $region79: #{hyper_dec_forward_pallas.1} parent=5 // pred_region
        %s10821 = ssub.s32 %s17, 2
        // Predicated region
        $region81: #{hyper_dec_forward_pallas.1} parent=79 // pred_check
          %p10822 = pneg %p198
        $region82: #{hyper_dec_forward_pallas.1} parent=79 // pred_check_branch
          %10824 = sbr.rel (%p10822) target = $region84
        $region83: #{hyper_dec_forward_pallas.1} parent=79 // pred_region
          %p10825 = scmp.lt.s32.totalorder %s23, 1
          %s10826 = scalar_select %p10825, %s23, 1
          %s10827 = smul.addr %s10826, 16
          %s10828 = smul.addr %s10827, 8
          %s10829 = scalar_lea.vmem %s7, %s10828
        $region84: #{hyper_dec_forward_pallas.1} parent=79 // pred_fallthru
          _
      $region80: #{hyper_dec_forward_pallas.1} parent=5 // pred_fallthru
        _
    $region6: #{hyper_dec_forward_pallas.1} parent=1 // loop_footer
      %s21 = sadd.s32 1, %s17
    $region7: #{hyper_dec_forward_pallas.1} parent=1 // loop_footer_branch
      %16 = sbr.rel target = $region3
    $region8: #{hyper_dec_forward_pallas.1} parent=1 // loop_exit
      _
    %10830 = vsyncpa [#allocation5], 1
    %s10831 = scalar_lea.sflag [#allocation5], 1
    %10832 = vsyncpa %s10831, 1
    %10833 = vsyncpa [#allocation7], 1
    %10834 = vsyncpa [#allocation10], 1
    %10835 = vsyncpa [#allocation13], 1

</llo_original>
